<compile_context>
chip_gen: v7x
topology: tpu7x:2x2x1
jax: 0.10.0
libtpu: 0.0.40
codegen_flags: <defaults>
</compile_context>

<pallas_src>
import jax
import jax.numpy as jnp
from jax import lax
from jax.experimental import pallas as pl
from jax.experimental.pallas import tpu as pltpu


def _round_up(x, m):
    return (x + m - 1) // m * m


# --------------------------------------------------------------------------- #
# Kernel 1: conv(5x5) + maxpool(2) + relu for NB images per grid step.         #
#   One (NB*4*S, F) @ (F, 128) MXU matmul, then max over the 4 pool offsets.   #
# --------------------------------------------------------------------------- #
def _conv_pool_relu_kernel(p_ref, w_ref, b_ref, o_ref):
    # p_ref: (NB, 4, S, Fp)  -- im2col patches; axis 1 = 2x2 pool-window offsets
    # w_ref: (Fp, Cpad)      -- (K*K*Cin -> Cout) weight matrix, zero padded
    # b_ref: (1, Cpad)       -- bias (padding lanes are zero)
    # o_ref: (NB, S, Cpad)   -- relu(maxpool(conv)) in (image, spatial, channel) layout
    nb, _, s, fp = p_ref.shape
    c_pad = w_ref.shape[1]
    # Single steady-state MXU pass over all NB images x 4 pool offsets.
    # S is a multiple of 8 and Fp/Cpad multiples of 128, so the reshapes are free.
    acc = jnp.dot(p_ref[...].reshape(nb * 4 * s, fp), w_ref[...],
                  preferred_element_type=jnp.float32)
    acc4 = acc.reshape(nb, 4, s, c_pad)
    acc = jnp.maximum(jnp.maximum(acc4[:, 0], acc4[:, 1]),
                      jnp.maximum(acc4[:, 2], acc4[:, 3]))      # 2x2 max-pool
    o_ref[...] = jnp.maximum(acc + b_ref[...], 0.0)


def _extract_conv_pool_patches(x_nhwc, ksize):
    """x: (B, H, W, C) NHWC -> (patches, Hp, Wp).

    patches: (B, 4, round_up(Hp*Wp, 8), round_up(K*K*C, 128)); axis 1 enumerates the
    2x2 max-pool window offsets so conv+pool+relu becomes matmul+max+relu in-kernel.
    Spatial rows are zero-padded to a sublane multiple (conv2: 42 -> 48) and the
    patch feature dim to a lane multiple; the pads carry zeros and are discarded
    later.  Pure layout (slices / transpose / pad) -- heavy compute stays in Pallas.
    """
    b, h, w, c = x_nhwc.shape
    ho, wo = h - ksize + 1, w - ksize + 1
    cols = [x_nhwc[:, kh:kh + ho, kw:kw + wo, :]
            for kh in range(ksize) for kw in range(ksize)]
    patches = jnp.concatenate(cols, axis=-1)                 # (B, Ho, Wo, K*K*C)
    hp, wp = ho // 2, wo // 2                                 # floor, as F.max_pool2d
    f = ksize * ksize * c
    patches = patches[:, :2 * hp, :2 * wp, :]
    patches = patches.reshape(b, hp, 2, wp, 2, f)
    patches = patches.transpose(0, 2, 4, 1, 3, 5)             # (B, 2, 2, Hp, Wp, F)
    patches = patches.reshape(b, 4, hp * wp, f)
    s_pad = _round_up(hp * wp, 8)                             # sublane-align spatial
    f_pad = _round_up(f, 128)                                 # lane-align features
    patches = jnp.pad(patches, ((0, 0), (0, 0),
                                (0, s_pad - hp * wp), (0, f_pad - f)))
    return patches, hp, wp


def _conv_weight_mat(w_oihw, f_pad, c_pad):
    """(Cout, Cin, K, K) -> (f_pad, c_pad) matmul weight, zero padded."""
    c_out, c_in, k, _ = w_oihw.shape
    wm = jnp.transpose(w_oihw, (2, 3, 1, 0)).reshape(k * k * c_in, c_out)
    return jnp.pad(wm, ((0, f_pad - k * k * c_in), (0, c_pad - c_out)))


def _conv_pool_relu(patches, wmat, bias_row, nb):
    bc, _, s, f_pad = patches.shape
    c_pad = wmat.shape[1]
    steps = bc // nb
    if steps >= 3:
        # 3-deep input buffering keeps the patch-DMA queue full across steps
        # (conv steps have more DMA than compute); only worth it on longer grids.
        p_spec = pl.BlockSpec((nb, 4, s, f_pad), lambda i: (i, 0, 0, 0),
                              pipeline_mode=pl.Buffered(3))
    else:
        p_spec = pl.BlockSpec((nb, 4, s, f_pad), lambda i: (i, 0, 0, 0))
    return pl.pallas_call(
        _conv_pool_relu_kernel,
        out_shape=jax.ShapeDtypeStruct((bc, s, c_pad), jnp.float32),
        grid_spec=pltpu.PrefetchScalarGridSpec(
            num_scalar_prefetch=0,
            grid=(steps,),
            in_specs=[
                p_spec,
                pl.BlockSpec((f_pad, c_pad), lambda i: (0, 0)),
                pl.BlockSpec((1, c_pad), lambda i: (0, 0)),
            ],
            out_specs=pl.BlockSpec((nb, s, c_pad), lambda i: (i, 0, 0)),
        ),
        compiler_params=pltpu.CompilerParams(
            dimension_semantics=("parallel",)),
    )(patches, wmat, bias_row)


# --------------------------------------------------------------------------- #
# Kernel 2: fused head.                                                        #
#   text: EmbeddingBag(mean, padding_idx=0) as bf16 counts @ emb_table, + fc   #
#   cnn : fc1 + relu, fc2 + relu (fc1 rows pre-permuted to padded flatten)     #
#   both: LayerNorm, concat (as two split matmuls), final fc, relu             #
# --------------------------------------------------------------------------- #
def _head_kernel(counts_ref, emb_ref, twt_ref, tbias_ref,
                 feat_ref, w1t_ref, b1_ref, w2t_ref, b2_ref,
                 g_t_ref, bt_ln_ref, g_c_ref, bc_ln_ref,
                 wft_ref, wfc_ref, bf_ref, out_ref):
    f32 = jnp.float32

    # --- text branch: bag mean on the MXU (bf16 operands, f32 accumulation) ---
    counts = counts_ref[...]                                          # (TB, V) bf16
    bag_sum = jnp.dot(counts, emb_ref[...], preferred_element_type=f32)  # (TB, D)
    n_tok = jnp.sum(counts.astype(f32), axis=-1, keepdims=True)       # non-padding count
    bag_mean = bag_sum / jnp.maximum(n_tok, 1.0)                      # empty bag -> 0
    text_logits = (jnp.dot(bag_mean, twt_ref[...], preferred_element_type=f32)
                   + tbias_ref[...])

    # --- CNN fully-connected head (features already in padded flatten order) ---
    h = jnp.dot(feat_ref[...], w1t_ref[...], preferred_element_type=f32) + b1_ref[...]
    h = jnp.maximum(h, 0.0)
    cnn_logits = jnp.dot(h, w2t_ref[...], preferred_element_type=f32) + b2_ref[...]
    cnn_logits = jnp.maximum(cnn_logits, 0.0)

    # --- LayerNorm(num_class), eps matches nn.LayerNorm default ---
    def layer_norm(x, gamma, beta, eps=1e-5):
        mu = jnp.mean(x, axis=-1, keepdims=True)
        xc = x - mu
        var = jnp.mean(xc * xc, axis=-1, keepdims=True)
        return xc * jax.lax.rsqrt(var + eps) * gamma + beta

    t_n = layer_norm(text_logits, g_t_ref[...], bt_ln_ref[...])
    c_n = layer_norm(cnn_logits, g_c_ref[...], bc_ln_ref[...])

    # cat([text, cnn]) @ W.T + b == text @ W[:, :C].T + cnn @ W[:, C:].T + b
    out = (jnp.dot(t_n, wft_ref[...], preferred_element_type=f32)
           + jnp.dot(c_n, wfc_ref[...], preferred_element_type=f32)
           + bf_ref[...])
    out_ref[...] = jnp.maximum(out, 0.0)


# --------------------------------------------------------------------------- #
# Full forward pass                                                            #
# --------------------------------------------------------------------------- #
@jax.jit
def custom_text_cnn_cat_forward(audio, ids, offsets, p):
    B = audio.shape[0]
    C = p['fc2_w'].shape[0]        # num_class / num_labels
    CPAD = 128                     # lane-dense pad for small channel dims
    NB = min(4, B)                 # images per conv grid step (4-8 amortizes step cost)
    Bc = _round_up(B, NB)

    # ---------------- CNN branch ----------------
    x = jnp.transpose(audio, (0, 2, 3, 1)).astype(jnp.float32)        # NHWC
    if Bc != B:
        x = jnp.pad(x, ((0, Bc - B), (0, 0), (0, 0), (0, 0)))

    c1 = p['conv1_w'].shape[0]
    patches1, hp1, wp1 = _extract_conv_pool_patches(x, 5)
    w1m = _conv_weight_mat(p['conv1_w'], patches1.shape[-1], CPAD)
    b1r = jnp.pad(p['conv1_b'], (0, CPAD - c1)).reshape(1, CPAD)
    y1 = _conv_pool_relu(patches1, w1m, b1r, NB)                      # (Bc, 288, 128)

    c2 = p['conv2_w'].shape[0]
    x2 = y1[:, :hp1 * wp1, :c1].reshape(Bc, hp1, wp1, c1)
    patches2, hp2, wp2 = _extract_conv_pool_patches(x2, 5)
    w2m = _conv_weight_mat(p['conv2_w'], patches2.shape[-1], CPAD)
    b2r = jnp.pad(p['conv2_b'], (0, CPAD - c2)).reshape(1, CPAD)
    y2 = _conv_pool_relu(patches2, w2m, b2r, NB)                      # (Bc, 48, 128)

    s2 = hp2 * wp2                                                    # 42
    s2_pad = y2.shape[1]                                              # 48
    feat_dim = s2_pad * CPAD                                          # 6144 (padded)
    # Padded (spatial, channel) features are consumed directly by fc1; the PyTorch
    # NCHW flatten order is folded into the fc1 weight-row permutation (B-independent).
    feat = y2.reshape(Bc, feat_dim)[:B]                               # free reshape

    hid = p['fc1_w'].shape[0]
    w1t = jnp.transpose(p['fc1_w']).reshape(c2, s2, hid)              # rows were c*42+s
    w1t = jnp.transpose(w1t, (1, 0, 2))                               # -> [s, c, :]
    w1t_pad = (jnp.zeros((s2_pad, CPAD, hid), jnp.float32)
               .at[:s2, :c2, :].set(w1t)
               .reshape(feat_dim, hid))                               # zero rows kill pads

    # ---------------- Text branch: bag -> non-padding count matrix ----------------
    vocab, d = p['emb_w'].shape
    n_tok = ids.shape[0]
    pos = jnp.arange(n_tok, dtype=jnp.int32)
    # Assumes offsets are sorted with offsets[0] == 0 (PyTorch EmbeddingBag layout).
    bag = jnp.searchsorted(offsets.astype(jnp.int32), pos, side='right') - 1
    valid = (ids != 0).astype(jnp.float32)            # padding_idx = 0 is excluded

    # Head tile: keep TB <= 128 (v7x has 64 MiB VMEM total) and give the grid >= 2
    # "parallel" steps at moderate batch so both v7x TensorCores get work; the extra
    # step on single-TC v5e/v6e costs only ~0.35 us.
    TB = min(128, max(8, _round_up(pl.cdiv(B, 2), 8)))
    Bp = _round_up(B, TB)

    # Counts are exact small integers -> bf16 halves HBM/VMEM for the (TB, vocab)
    # block and doubles the MXU rate of counts @ emb.
    counts = (jnp.zeros((Bp, vocab), jnp.float32)
              .at[bag, ids.astype(jnp.int32)].add(valid)
              .astype(jnp.bfloat16))
    emb_bf16 = p['emb_w'].astype(jnp.bfloat16)
    feat_p = jnp.zeros((Bp, feat_dim), jnp.float32).at[:B].set(feat)

    # final fc (2C -> C), split into text/cnn halves, zero-padded to 128 lanes
    wf = p['fc_w']
    wf_t = jnp.zeros((C, CPAD), jnp.float32).at[:, :C].set(jnp.transpose(wf[:, :C]))
    wf_c = jnp.zeros((C, CPAD), jnp.float32).at[:, :C].set(jnp.transpose(wf[:, C:]))
    bf = jnp.zeros((1, CPAD), jnp.float32).at[0, :C].set(p['fc_b'])

    out = pl.pallas_call(
        _head_kernel,
        out_shape=jax.ShapeDtypeStruct((Bp, CPAD), jnp.float32),
        grid_spec=pltpu.PrefetchScalarGridSpec(
            num_scalar_prefetch=0,
            grid=(Bp // TB,),
            in_specs=[
                pl.BlockSpec((TB, vocab), lambda i: (i, 0)),       # counts (bf16)
                pl.BlockSpec((vocab, d), lambda i: (0, 0)),        # embedding (bf16)
                pl.BlockSpec((d, C), lambda i: (0, 0)),            # text fc W^T
                pl.BlockSpec((1, C), lambda i: (0, 0)),            # text fc b
                pl.BlockSpec((TB, feat_dim), lambda i: (i, 0)),    # cnn features
                pl.BlockSpec((feat_dim, hid), lambda i: (0, 0)),   # fc1 W^T (permuted)
                pl.BlockSpec((1, hid), lambda i: (0, 0)),          # fc1 b
                pl.BlockSpec((hid, C), lambda i: (0, 0)),          # fc2 W^T
                pl.BlockSpec((1, C), lambda i: (0, 0)),            # fc2 b
                pl.BlockSpec((1, C), lambda i: (0, 0)),            # text LN gamma
                pl.BlockSpec((1, C), lambda i: (0, 0)),            # text LN beta
                pl.BlockSpec((1, C), lambda i: (0, 0)),            # cnn LN gamma
                pl.BlockSpec((1, C), lambda i: (0, 0)),            # cnn LN beta
                pl.BlockSpec((C, CPAD), lambda i: (0, 0)),         # final W (text)^T
                pl.BlockSpec((C, CPAD), lambda i: (0, 0)),         # final W (cnn)^T
                pl.BlockSpec((1, CPAD), lambda i: (0, 0)),         # final b
            ],
            out_specs=pl.BlockSpec((TB, CPAD), lambda i: (i, 0)),  # lane-dense output
        ),
        compiler_params=pltpu.CompilerParams(
            dimension_semantics=("parallel",),
            # 32 MiB is within the scoped default on v5e/v6e and v7x's 64 MiB total.
            vmem_limit_bytes=32 * 1024 * 1024),
    )(counts, emb_bf16,
      jnp.transpose(p['t_fc_w']), p['t_fc_b'].reshape(1, C),
      feat_p, w1t_pad, p['fc1_b'].reshape(1, hid),
      jnp.transpose(p['fc2_w']), p['fc2_b'].reshape(1, C),
      p['ln_t_g'].reshape(1, C), p['ln_t_b'].reshape(1, C),
      p['ln_c_g'].reshape(1, C), p['ln_c_b'].reshape(1, C),
      wf_t, wf_c, bf)

    return out[:B, :C]


# --------------------------------------------------------------------------- #
# Pure-JAX reference (PyTorch semantics, eval mode)                            #
# --------------------------------------------------------------------------- #
def reference_forward(audio, ids, offsets, p):
    relu = lambda v: jnp.maximum(v, 0.0)

    def conv2d(x, w, b):
        y = lax.conv_general_dilated(x, w, (1, 1), 'VALID',
                                     dimension_numbers=('NCHW', 'OIHW', 'NCHW'))
        return y + b[None, :, None, None]

    def maxpool2(x):
        return lax.reduce_window(x, -jnp.inf, lax.max,
                                 (1, 1, 2, 2), (1, 1, 2, 2), 'VALID')

    x = relu(maxpool2(conv2d(audio, p['conv1_w'], p['conv1_b'])))
    x = relu(maxpool2(conv2d(x, p['conv2_w'], p['conv2_b'])))
    B = x.shape[0]
    x = x.reshape(B, -1)
    x = relu(x @ p['fc1_w'].T + p['fc1_b'])
    cnn_logits = relu(x @ p['fc2_w'].T + p['fc2_b'])

    n_tok = ids.shape[0]
    offs = [int(v) for v in offsets] + [n_tok]
    bags = []
    for i in range(B):
        tok = ids[offs[i]:offs[i + 1]]
        mask = (tok != 0).astype(jnp.float32)
        rows = p['emb_w'][tok]
        s = jnp.sum(rows * mask[:, None], axis=0)
        cnt = jnp.maximum(jnp.sum(mask), 1.0)
        bags.append(s / cnt)
    embedded = jnp.stack(bags, axis=0)
    text_logits = embedded @ p['t_fc_w'].T + p['t_fc_b']

    def layer_norm(v, g, b, eps=1e-5):
        mu = jnp.mean(v, axis=-1, keepdims=True)
        var = jnp.mean((v - mu) ** 2, axis=-1, keepdims=True)
        return (v - mu) / jnp.sqrt(var + eps) * g + b

    t = layer_norm(text_logits, p['ln_t_g'], p['ln_t_b'])
    c = layer_norm(cnn_logits, p['ln_c_g'], p['ln_c_b'])
    cat = jnp.concatenate([t, c], axis=-1)
    return relu(cat @ p['fc_w'].T + p['fc_b'])


# --------------------------------------------------------------------------- #
# Deterministic parameters / inputs                                            #
# --------------------------------------------------------------------------- #
def init_params(key, vocab_size, text_embed_dim, num_class=5):
    ks = jax.random.split(key, 12)
    p = {}
    p['conv1_w'] = 0.10 * jax.random.normal(ks[0], (32, 3, 5, 5), jnp.float32)
    p['conv1_b'] = 0.10 * jax.random.normal(ks[1], (32,), jnp.float32)
    p['conv2_w'] = 0.05 * jax.random.normal(ks[2], (64, 32, 5, 5), jnp.float32)
    p['conv2_b'] = 0.10 * jax.random.normal(ks[3], (64,), jnp.float32)
    p['fc1_w'] = 0.02 * jax.random.normal(ks[4], (50, 2688), jnp.float32)
    p['fc1_b'] = 0.10 * jax.random.normal(ks[5], (50,), jnp.float32)
    p['fc2_w'] = 0.10 * jax.random.normal(ks[6], (num_class, 50), jnp.float32)
    p['fc2_b'] = 0.50 * jax.random.normal(ks[7], (num_class,), jnp.float32)
    # TextClassificationModel.init_weights(): U(-0.5, 0.5), zero fc bias.
    p['emb_w'] = jax.random.uniform(ks[8], (vocab_size, text_embed_dim),
                                    minval=-0.5, maxval=0.5, dtype=jnp.float32)
    p['t_fc_w'] = jax.random.uniform(ks[9], (num_class, text_embed_dim),
                                     minval=-0.5, maxval=0.5, dtype=jnp.float32)
    p['t_fc_b'] = jnp.zeros((num_class,), jnp.float32)
    # LayerNorms: PyTorch default init (weight=1, bias=0).
    p['ln_t_g'] = jnp.ones((num_class,), jnp.float32)
    p['ln_t_b'] = jnp.zeros((num_class,), jnp.float32)
    p['ln_c_g'] = jnp.ones((num_class,), jnp.float32)
    p['ln_c_b'] = jnp.zeros((num_class,), jnp.float32)
    # Final fc: Linear(2*num_class -> num_class)
    p['fc_w'] = 0.30 * jax.random.normal(ks[10], (num_class, 2 * num_class), jnp.float32)
    p['fc_b'] = 0.30 * jax.random.normal(ks[11], (num_class,), jnp.float32)
    return p


if __name__ == "__main__":
    key = jax.random.PRNGKey(0)
    k_param, k_audio, k_ids = jax.random.split(key, 3)

    B = 2
    vocab_size, text_embed_dim, num_class = 50, 32, 5
    params = init_params(k_param, vocab_size, text_embed_dim, num_class)

    # Image input sized so CNNet's flatten matches fc1's 2688 = 64*6*7:
    # (36,40) -conv5-> (32,36) -pool-> (16,18) -conv5-> (12,14) -pool-> (6,7).
    audio = jax.random.normal(k_audio, (B, 3, 36, 40), jnp.float32)

    # Flat token stream + bag offsets (EmbeddingBag layout); 0 is padding_idx.
    ids = jax.random.randint(k_ids, (12,), 1, vocab_size, dtype=jnp.int32)
    ids = ids.at[2].set(0).at[9].set(0)          # inject padding tokens
    offsets = jnp.array([0, 7], dtype=jnp.int32)

    out = custom_text_cnn_cat_forward(audio, ids, offsets, params)
    out = jax.block_until_ready(out)
    assert out.shape == (B, num_class)

    ref = reference_forward(audio, ids, offsets, params)
    # Tolerance covers bf16-operand MXU passes (TPU default matmul precision plus the
    # explicit bf16 embedding-table cast) vs the XLA f32 reference decomposition.
    assert jnp.allclose(out, ref, atol=3e-2, rtol=3e-2), (out, ref)

    print("KERNEL_OK")
</pallas_src>

<mosaic_0001>
module attributes {stable_mosaic.version = 11 : i64} {
  func.func @_conv_pool_relu_kernel(%arg0: i32, %arg1: memref<2x4x288x128xf32, #tpu.memory_space<vmem>>, %arg2: memref<128x128xf32, #tpu.memory_space<vmem>>, %arg3: memref<1x128xf32, #tpu.memory_space<vmem>>, %arg4: memref<2x288x128xf32, #tpu.memory_space<vmem>>) attributes {dimension_semantics = [#tpu.dimension_semantics<parallel>], iteration_bounds = array<i64: 1>, scalar_prefetch = 0 : i64, scratch_operands = 0 : i64, tpu.core_type = #tpu.core_type<tc>, window_params = [{transform_indices = @transform_0, window_bounds = array<i64: 2, 4, 288, 128>}, {pipeline_mode = #tpu.pipeline_mode<synchronous>, transform_indices = @transform_1, window_bounds = array<i64: 128, 128>}, {pipeline_mode = #tpu.pipeline_mode<synchronous>, transform_indices = @transform_2, window_bounds = array<i64: 1, 128>}, {transform_indices = @transform_3, window_bounds = array<i64: 2, 288, 128>}]} {
    %c0 = arith.constant 0 : index
    %c0_0 = arith.constant 0 : index
    %c0_1 = arith.constant 0 : index
    %c0_2 = arith.constant 0 : index
    %0 = vector.load %arg1[%c0, %c0_0, %c0_1, %c0_2] : memref<2x4x288x128xf32, #tpu.memory_space<vmem>>, vector<2x4x288x128xf32>
    %1 = vector.shape_cast %0 : vector<2x4x288x128xf32> to vector<2304x128xf32>
    %c0_3 = arith.constant 0 : index
    %c0_4 = arith.constant 0 : index
    %2 = vector.load %arg2[%c0_3, %c0_4] : memref<128x128xf32, #tpu.memory_space<vmem>>, vector<128x128xf32>
    %cst = arith.constant dense<0.000000e+00> : vector<2304x128xf32>
    %3 = tpu.matmul %1, %2, %cst {dimension_numbers = #tpu.dot_dimension_numbers<[1], [0], [0], [1], [0, 0, 1, 1], [], []>} : vector<2304x128xf32>, vector<128x128xf32>, vector<2304x128xf32> -> vector<2304x128xf32>
    %4 = vector.shape_cast %3 : vector<2304x128xf32> to vector<2x4x288x128xf32>
    %5 = vector.extract_strided_slice %4 {offsets = [0, 0, 0, 0], sizes = [2, 1, 288, 128], strides = [1, 1, 1, 1]} : vector<2x4x288x128xf32> to vector<2x1x288x128xf32>
    %6 = vector.shape_cast %5 : vector<2x1x288x128xf32> to vector<2x288x128xf32>
    %7 = vector.extract_strided_slice %4 {offsets = [0, 1, 0, 0], sizes = [2, 1, 288, 128], strides = [1, 1, 1, 1]} : vector<2x4x288x128xf32> to vector<2x1x288x128xf32>
    %8 = vector.shape_cast %7 : vector<2x1x288x128xf32> to vector<2x288x128xf32>
    %9 = arith.maximumf %6, %8 : vector<2x288x128xf32>
    %10 = vector.extract_strided_slice %4 {offsets = [0, 2, 0, 0], sizes = [2, 1, 288, 128], strides = [1, 1, 1, 1]} : vector<2x4x288x128xf32> to vector<2x1x288x128xf32>
    %11 = vector.shape_cast %10 : vector<2x1x288x128xf32> to vector<2x288x128xf32>
    %12 = vector.extract_strided_slice %4 {offsets = [0, 3, 0, 0], sizes = [2, 1, 288, 128], strides = [1, 1, 1, 1]} : vector<2x4x288x128xf32> to vector<2x1x288x128xf32>
    %13 = vector.shape_cast %12 : vector<2x1x288x128xf32> to vector<2x288x128xf32>
    %14 = arith.maximumf %11, %13 : vector<2x288x128xf32>
    %15 = arith.maximumf %9, %14 : vector<2x288x128xf32>
    %c0_5 = arith.constant 0 : index
    %c0_6 = arith.constant 0 : index
    %16 = vector.load %arg3[%c0_5, %c0_6] : memref<1x128xf32, #tpu.memory_space<vmem>>, vector<1x128xf32>
    %17 = vector.shape_cast %16 : vector<1x128xf32> to vector<1x1x128xf32>
    %18 = vector.broadcast %17 : vector<1x1x128xf32> to vector<2x288x128xf32>
    %19 = arith.addf %15, %18 : vector<2x288x128xf32>
    %cst_7 = arith.constant 0.000000e+00 : f32
    %20 = vector.broadcast %cst_7 : f32 to vector<2x288x128xf32>
    %21 = arith.maximumf %19, %20 : vector<2x288x128xf32>
    %c0_8 = arith.constant 0 : index
    %c0_9 = arith.constant 0 : index
    %c0_10 = arith.constant 0 : index
    %22 = vector.load %arg4[%c0_8, %c0_9, %c0_10] : memref<2x288x128xf32, #tpu.memory_space<vmem>>, vector<2x288x128xf32>
    tpu.vector_store %arg4[%c0_8, %c0_9, %c0_10], %21 {strides = array<i32>} : memref<2x288x128xf32, #tpu.memory_space<vmem>>, vector<2x288x128xf32>,
    return
  }
  func.func @transform_0(%arg0: i32) -> (i32, i32, i32, i32) {
    %c0_i32 = arith.constant 0 : i32
    %c0_i32_0 = arith.constant 0 : i32
    %c0_i32_1 = arith.constant 0 : i32
    %c0_i32_2 = arith.constant 0 : i32
    return %arg0, %c0_i32, %c0_i32_0, %c0_i32_1 : i32, i32, i32, i32
  }
  func.func @transform_1(%arg0: i32) -> (i32, i32) {
    %c0_i32 = arith.constant 0 : i32
    %c0_i32_0 = arith.constant 0 : i32
    %c0_i32_1 = arith.constant 0 : i32
    return %c0_i32, %c0_i32_0 : i32, i32
  }
  func.func @transform_2(%arg0: i32) -> (i32, i32) {
    %c0_i32 = arith.constant 0 : i32
    %c0_i32_0 = arith.constant 0 : i32
    %c0_i32_1 = arith.constant 0 : i32
    return %c0_i32, %c0_i32_0 : i32, i32
  }
  func.func @transform_3(%arg0: i32) -> (i32, i32, i32) {
    %c0_i32 = arith.constant 0 : i32
    %c0_i32_0 = arith.constant 0 : i32
    %c0_i32_1 = arith.constant 0 : i32
    return %arg0, %c0_i32, %c0_i32_0 : i32, i32, i32
  }
}

module attributes {stable_mosaic.version = 11 : i64} {
  func.func @_conv_pool_relu_kernel(%arg0: i32, %arg1: memref<2x4x48x896xf32, #tpu.memory_space<vmem>>, %arg2: memref<896x128xf32, #tpu.memory_space<vmem>>, %arg3: memref<1x128xf32, #tpu.memory_space<vmem>>, %arg4: memref<2x48x128xf32, #tpu.memory_space<vmem>>) attributes {dimension_semantics = [#tpu.dimension_semantics<parallel>], iteration_bounds = array<i64: 1>, scalar_prefetch = 0 : i64, scratch_operands = 0 : i64, tpu.core_type = #tpu.core_type<tc>, window_params = [{transform_indices = @transform_0, window_bounds = array<i64: 2, 4, 48, 896>}, {pipeline_mode = #tpu.pipeline_mode<synchronous>, transform_indices = @transform_1, window_bounds = array<i64: 896, 128>}, {pipeline_mode = #tpu.pipeline_mode<synchronous>, transform_indices = @transform_2, window_bounds = array<i64: 1, 128>}, {transform_indices = @transform_3, window_bounds = array<i64: 2, 48, 128>}]} {
    %c0 = arith.constant 0 : index
    %c0_0 = arith.constant 0 : index
    %c0_1 = arith.constant 0 : index
    %c0_2 = arith.constant 0 : index
    %0 = vector.load %arg1[%c0, %c0_0, %c0_1, %c0_2] : memref<2x4x48x896xf32, #tpu.memory_space<vmem>>, vector<2x4x48x896xf32>
    %1 = vector.shape_cast %0 : vector<2x4x48x896xf32> to vector<384x896xf32>
    %c0_3 = arith.constant 0 : index
    %c0_4 = arith.constant 0 : index
    %2 = vector.load %arg2[%c0_3, %c0_4] : memref<896x128xf32, #tpu.memory_space<vmem>>, vector<896x128xf32>
    %cst = arith.constant dense<0.000000e+00> : vector<384x128xf32>
    %3 = tpu.matmul %1, %2, %cst {dimension_numbers = #tpu.dot_dimension_numbers<[1], [0], [0], [1], [0, 0, 1, 1], [], []>} : vector<384x896xf32>, vector<896x128xf32>, vector<384x128xf32> -> vector<384x128xf32>
    %4 = vector.shape_cast %3 : vector<384x128xf32> to vector<2x4x48x128xf32>
    %5 = vector.extract_strided_slice %4 {offsets = [0, 0, 0, 0], sizes = [2, 1, 48, 128], strides = [1, 1, 1, 1]} : vector<2x4x48x128xf32> to vector<2x1x48x128xf32>
    %6 = vector.shape_cast %5 : vector<2x1x48x128xf32> to vector<2x48x128xf32>
    %7 = vector.extract_strided_slice %4 {offsets = [0, 1, 0, 0], sizes = [2, 1, 48, 128], strides = [1, 1, 1, 1]} : vector<2x4x48x128xf32> to vector<2x1x48x128xf32>
    %8 = vector.shape_cast %7 : vector<2x1x48x128xf32> to vector<2x48x128xf32>
    %9 = arith.maximumf %6, %8 : vector<2x48x128xf32>
    %10 = vector.extract_strided_slice %4 {offsets = [0, 2, 0, 0], sizes = [2, 1, 48, 128], strides = [1, 1, 1, 1]} : vector<2x4x48x128xf32> to vector<2x1x48x128xf32>
    %11 = vector.shape_cast %10 : vector<2x1x48x128xf32> to vector<2x48x128xf32>
    %12 = vector.extract_strided_slice %4 {offsets = [0, 3, 0, 0], sizes = [2, 1, 48, 128], strides = [1, 1, 1, 1]} : vector<2x4x48x128xf32> to vector<2x1x48x128xf32>
    %13 = vector.shape_cast %12 : vector<2x1x48x128xf32> to vector<2x48x128xf32>
    %14 = arith.maximumf %11, %13 : vector<2x48x128xf32>
    %15 = arith.maximumf %9, %14 : vector<2x48x128xf32>
    %c0_5 = arith.constant 0 : index
    %c0_6 = arith.constant 0 : index
    %16 = vector.load %arg3[%c0_5, %c0_6] : memref<1x128xf32, #tpu.memory_space<vmem>>, vector<1x128xf32>
    %17 = vector.shape_cast %16 : vector<1x128xf32> to vector<1x1x128xf32>
    %18 = vector.broadcast %17 : vector<1x1x128xf32> to vector<2x48x128xf32>
    %19 = arith.addf %15, %18 : vector<2x48x128xf32>
    %cst_7 = arith.constant 0.000000e+00 : f32
    %20 = vector.broadcast %cst_7 : f32 to vector<2x48x128xf32>
    %21 = arith.maximumf %19, %20 : vector<2x48x128xf32>
    %c0_8 = arith.constant 0 : index
    %c0_9 = arith.constant 0 : index
    %c0_10 = arith.constant 0 : index
    %22 = vector.load %arg4[%c0_8, %c0_9, %c0_10] : memref<2x48x128xf32, #tpu.memory_space<vmem>>, vector<2x48x128xf32>
    tpu.vector_store %arg4[%c0_8, %c0_9, %c0_10], %21 {strides = array<i32>} : memref<2x48x128xf32, #tpu.memory_space<vmem>>, vector<2x48x128xf32>,
    return
  }
  func.func @transform_0(%arg0: i32) -> (i32, i32, i32, i32) {
    %c0_i32 = arith.constant 0 : i32
    %c0_i32_0 = arith.constant 0 : i32
    %c0_i32_1 = arith.constant 0 : i32
    %c0_i32_2 = arith.constant 0 : i32
    return %arg0, %c0_i32, %c0_i32_0, %c0_i32_1 : i32, i32, i32, i32
  }
  func.func @transform_1(%arg0: i32) -> (i32, i32) {
    %c0_i32 = arith.constant 0 : i32
    %c0_i32_0 = arith.constant 0 : i32
    %c0_i32_1 = arith.constant 0 : i32
    return %c0_i32, %c0_i32_0 : i32, i32
  }
  func.func @transform_2(%arg0: i32) -> (i32, i32) {
    %c0_i32 = arith.constant 0 : i32
    %c0_i32_0 = arith.constant 0 : i32
    %c0_i32_1 = arith.constant 0 : i32
    return %c0_i32, %c0_i32_0 : i32, i32
  }
  func.func @transform_3(%arg0: i32) -> (i32, i32, i32) {
    %c0_i32 = arith.constant 0 : i32
    %c0_i32_0 = arith.constant 0 : i32
    %c0_i32_1 = arith.constant 0 : i32
    return %arg0, %c0_i32, %c0_i32_0 : i32, i32, i32
  }
}

module attributes {stable_mosaic.version = 11 : i64} {
  func.func @_head_kernel(%arg0: i32, %arg1: memref<8x50xbf16, #tpu.memory_space<vmem>>, %arg2: memref<50x32xbf16, #tpu.memory_space<vmem>>, %arg3: memref<32x5xf32, #tpu.memory_space<vmem>>, %arg4: memref<1x5xf32, #tpu.memory_space<vmem>>, %arg5: memref<8x6144xf32, #tpu.memory_space<vmem>>, %arg6: memref<6144x50xf32, #tpu.memory_space<vmem>>, %arg7: memref<1x50xf32, #tpu.memory_space<vmem>>, %arg8: memref<50x5xf32, #tpu.memory_space<vmem>>, %arg9: memref<1x5xf32, #tpu.memory_space<vmem>>, %arg10: memref<1x5xf32, #tpu.memory_space<vmem>>, %arg11: memref<1x5xf32, #tpu.memory_space<vmem>>, %arg12: memref<1x5xf32, #tpu.memory_space<vmem>>, %arg13: memref<1x5xf32, #tpu.memory_space<vmem>>, %arg14: memref<5x128xf32, #tpu.memory_space<vmem>>, %arg15: memref<5x128xf32, #tpu.memory_space<vmem>>, %arg16: memref<1x128xf32, #tpu.memory_space<vmem>>, %arg17: memref<8x128xf32, #tpu.memory_space<vmem>>) attributes {dimension_semantics = [#tpu.dimension_semantics<parallel>], iteration_bounds = array<i64: 1>, scalar_prefetch = 0 : i64, scratch_operands = 0 : i64, tpu.core_type = #tpu.core_type<tc>, window_params = [{transform_indices = @transform_0, window_bounds = array<i64: 8, 50>}, {pipeline_mode = #tpu.pipeline_mode<synchronous>, transform_indices = @transform_1, window_bounds = array<i64: 50, 32>}, {pipeline_mode = #tpu.pipeline_mode<synchronous>, transform_indices = @transform_2, window_bounds = array<i64: 32, 5>}, {pipeline_mode = #tpu.pipeline_mode<synchronous>, transform_indices = @transform_3, window_bounds = array<i64: 1, 5>}, {transform_indices = @transform_4, window_bounds = array<i64: 8, 6144>}, {pipeline_mode = #tpu.pipeline_mode<synchronous>, transform_indices = @transform_5, window_bounds = array<i64: 6144, 50>}, {pipeline_mode = #tpu.pipeline_mode<synchronous>, transform_indices = @transform_6, window_bounds = array<i64: 1, 50>}, {pipeline_mode = #tpu.pipeline_mode<synchronous>, transform_indices = @transform_7, window_bounds = array<i64: 50, 5>}, {pipeline_mode = #tpu.pipeline_mode<synchronous>, transform_indices = @transform_8, window_bounds = array<i64: 1, 5>}, {pipeline_mode = #tpu.pipeline_mode<synchronous>, transform_indices = @transform_9, window_bounds = array<i64: 1, 5>}, {pipeline_mode = #tpu.pipeline_mode<synchronous>, transform_indices = @transform_10, window_bounds = array<i64: 1, 5>}, {pipeline_mode = #tpu.pipeline_mode<synchronous>, transform_indices = @transform_11, window_bounds = array<i64: 1, 5>}, {pipeline_mode = #tpu.pipeline_mode<synchronous>, transform_indices = @transform_12, window_bounds = array<i64: 1, 5>}, {pipeline_mode = #tpu.pipeline_mode<synchronous>, transform_indices = @transform_13, window_bounds = array<i64: 5, 128>}, {pipeline_mode = #tpu.pipeline_mode<synchronous>, transform_indices = @transform_14, window_bounds = array<i64: 5, 128>}, {pipeline_mode = #tpu.pipeline_mode<synchronous>, transform_indices = @transform_15, window_bounds = array<i64: 1, 128>}, {transform_indices = @transform_16, window_bounds = array<i64: 8, 128>}]} {
    %c0 = arith.constant 0 : index
    %c0_0 = arith.constant 0 : index
    %0 = vector.load %arg1[%c0, %c0_0] : memref<8x50xbf16, #tpu.memory_space<vmem>>, vector<8x50xbf16>
    %c0_1 = arith.constant 0 : index
    %c0_2 = arith.constant 0 : index
    %1 = vector.load %arg2[%c0_1, %c0_2] : memref<50x32xbf16, #tpu.memory_space<vmem>>, vector<50x32xbf16>
    %cst = arith.constant dense<0.000000e+00> : vector<8x32xf32>
    %2 = tpu.matmul %0, %1, %cst {dimension_numbers = #tpu.dot_dimension_numbers<[1], [0], [0], [1], [0, 0, 1, 1], [], []>} : vector<8x50xbf16>, vector<50x32xbf16>, vector<8x32xf32> -> vector<8x32xf32>
    %3 = arith.extf %0 : vector<8x50xbf16> to vector<8x50xf32>
    %cst_3 = arith.constant dense<0.000000e+00> : vector<8xf32>
    %4 = vector.multi_reduction <add>, %3, %cst_3 [1] : vector<8x50xf32> to vector<8xf32>
    %5 = vector.shape_cast %4 : vector<8xf32> to vector<8x1xf32>
    %cst_4 = arith.constant 1.000000e+00 : f32
    %6 = vector.broadcast %cst_4 : f32 to vector<8x1xf32>
    %7 = arith.maximumf %5, %6 : vector<8x1xf32>
    %8 = vector.broadcast %7 : vector<8x1xf32> to vector<8x32xf32>
    %9 = arith.divf %2, %8 : vector<8x32xf32>
    %c0_5 = arith.constant 0 : index
    %c0_6 = arith.constant 0 : index
    %10 = vector.load %arg3[%c0_5, %c0_6] : memref<32x5xf32, #tpu.memory_space<vmem>>, vector<32x5xf32>
    %cst_7 = arith.constant dense<0.000000e+00> : vector<8x5xf32>
    %11 = tpu.matmul %9, %10, %cst_7 {dimension_numbers = #tpu.dot_dimension_numbers<[1], [0], [0], [1], [0, 0, 1, 1], [], []>} : vector<8x32xf32>, vector<32x5xf32>, vector<8x5xf32> -> vector<8x5xf32>
    %c0_8 = arith.constant 0 : index
    %c0_9 = arith.constant 0 : index
    %12 = vector.load %arg4[%c0_8, %c0_9] : memref<1x5xf32, #tpu.memory_space<vmem>>, vector<1x5xf32>
    %13 = vector.broadcast %12 : vector<1x5xf32> to vector<8x5xf32>
    %14 = arith.addf %11, %13 : vector<8x5xf32>
    %c0_10 = arith.constant 0 : index
    %c0_11 = arith.constant 0 : index
    %15 = vector.load %arg5[%c0_10, %c0_11] : memref<8x6144xf32, #tpu.memory_space<vmem>>, vector<8x6144xf32>
    %c0_12 = arith.constant 0 : index
    %c0_13 = arith.constant 0 : index
    %16 = vector.load %arg6[%c0_12, %c0_13] : memref<6144x50xf32, #tpu.memory_space<vmem>>, vector<6144x50xf32>
    %cst_14 = arith.constant dense<0.000000e+00> : vector<8x50xf32>
    %17 = tpu.matmul %15, %16, %cst_14 {dimension_numbers = #tpu.dot_dimension_numbers<[1], [0], [0], [1], [0, 0, 1, 1], [], []>} : vector<8x6144xf32>, vector<6144x50xf32>, vector<8x50xf32> -> vector<8x50xf32>
    %c0_15 = arith.constant 0 : index
    %c0_16 = arith.constant 0 : index
    %18 = vector.load %arg7[%c0_15, %c0_16] : memref<1x50xf32, #tpu.memory_space<vmem>>, vector<1x50xf32>
    %19 = vector.broadcast %18 : vector<1x50xf32> to vector<8x50xf32>
    %20 = arith.addf %17, %19 : vector<8x50xf32>
    %cst_17 = arith.constant 0.000000e+00 : f32
    %21 = vector.broadcast %cst_17 : f32 to vector<8x50xf32>
    %22 = arith.maximumf %20, %21 : vector<8x50xf32>
    %c0_18 = arith.constant 0 : index
    %c0_19 = arith.constant 0 : index
    %23 = vector.load %arg8[%c0_18, %c0_19] : memref<50x5xf32, #tpu.memory_space<vmem>>, vector<50x5xf32>
    %cst_20 = arith.constant dense<0.000000e+00> : vector<8x5xf32>
    %24 = tpu.matmul %22, %23, %cst_20 {dimension_numbers = #tpu.dot_dimension_numbers<[1], [0], [0], [1], [0, 0, 1, 1], [], []>} : vector<8x50xf32>, vector<50x5xf32>, vector<8x5xf32> -> vector<8x5xf32>
    %c0_21 = arith.constant 0 : index
    %c0_22 = arith.constant 0 : index
    %25 = vector.load %arg9[%c0_21, %c0_22] : memref<1x5xf32, #tpu.memory_space<vmem>>, vector<1x5xf32>
    %26 = vector.broadcast %25 : vector<1x5xf32> to vector<8x5xf32>
    %27 = arith.addf %24, %26 : vector<8x5xf32>
    %cst_23 = arith.constant 0.000000e+00 : f32
    %28 = vector.broadcast %cst_23 : f32 to vector<8x5xf32>
    %29 = arith.maximumf %27, %28 : vector<8x5xf32>
    %c0_24 = arith.constant 0 : index
    %c0_25 = arith.constant 0 : index
    %30 = vector.load %arg10[%c0_24, %c0_25] : memref<1x5xf32, #tpu.memory_space<vmem>>, vector<1x5xf32>
    %c0_26 = arith.constant 0 : index
    %c0_27 = arith.constant 0 : index
    %31 = vector.load %arg11[%c0_26, %c0_27] : memref<1x5xf32, #tpu.memory_space<vmem>>, vector<1x5xf32>
    %cst_28 = arith.constant dense<0.000000e+00> : vector<8xf32>
    %32 = vector.multi_reduction <add>, %14, %cst_28 [1] : vector<8x5xf32> to vector<8xf32>
    %33 = vector.shape_cast %32 : vector<8xf32> to vector<8x1xf32>
    %cst_29 = arith.constant 5.000000e+00 : f32
    %34 = vector.broadcast %cst_29 : f32 to vector<8x1xf32>
    %35 = arith.divf %33, %34 : vector<8x1xf32>
    %36 = vector.broadcast %35 : vector<8x1xf32> to vector<8x5xf32>
    %37 = arith.subf %14, %36 : vector<8x5xf32>
    %38 = arith.mulf %37, %37 : vector<8x5xf32>
    %cst_30 = arith.constant dense<0.000000e+00> : vector<8xf32>
    %39 = vector.multi_reduction <add>, %38, %cst_30 [1] : vector<8x5xf32> to vector<8xf32>
    %40 = vector.shape_cast %39 : vector<8xf32> to vector<8x1xf32>
    %cst_31 = arith.constant 5.000000e+00 : f32
    %41 = vector.broadcast %cst_31 : f32 to vector<8x1xf32>
    %42 = arith.divf %40, %41 : vector<8x1xf32>
    %cst_32 = arith.constant 9.99999974E-6 : f32
    %43 = vector.broadcast %cst_32 : f32 to vector<8x1xf32>
    %44 = arith.addf %42, %43 : vector<8x1xf32>
    %45 = math.rsqrt %44 : vector<8x1xf32>
    %46 = vector.broadcast %45 : vector<8x1xf32> to vector<8x5xf32>
    %47 = arith.mulf %37, %46 : vector<8x5xf32>
    %48 = vector.broadcast %30 : vector<1x5xf32> to vector<8x5xf32>
    %49 = arith.mulf %47, %48 : vector<8x5xf32>
    %50 = vector.broadcast %31 : vector<1x5xf32> to vector<8x5xf32>
    %51 = arith.addf %49, %50 : vector<8x5xf32>
    %c0_33 = arith.constant 0 : index
    %c0_34 = arith.constant 0 : index
    %52 = vector.load %arg12[%c0_33, %c0_34] : memref<1x5xf32, #tpu.memory_space<vmem>>, vector<1x5xf32>
    %c0_35 = arith.constant 0 : index
    %c0_36 = arith.constant 0 : index
    %53 = vector.load %arg13[%c0_35, %c0_36] : memref<1x5xf32, #tpu.memory_space<vmem>>, vector<1x5xf32>
    %cst_37 = arith.constant dense<0.000000e+00> : vector<8xf32>
    %54 = vector.multi_reduction <add>, %29, %cst_37 [1] : vector<8x5xf32> to vector<8xf32>
    %55 = vector.shape_cast %54 : vector<8xf32> to vector<8x1xf32>
    %cst_38 = arith.constant 5.000000e+00 : f32
    %56 = vector.broadcast %cst_38 : f32 to vector<8x1xf32>
    %57 = arith.divf %55, %56 : vector<8x1xf32>
    %58 = vector.broadcast %57 : vector<8x1xf32> to vector<8x5xf32>
    %59 = arith.subf %29, %58 : vector<8x5xf32>
    %60 = arith.mulf %59, %59 : vector<8x5xf32>
    %cst_39 = arith.constant dense<0.000000e+00> : vector<8xf32>
    %61 = vector.multi_reduction <add>, %60, %cst_39 [1] : vector<8x5xf32> to vector<8xf32>
    %62 = vector.shape_cast %61 : vector<8xf32> to vector<8x1xf32>
    %cst_40 = arith.constant 5.000000e+00 : f32
    %63 = vector.broadcast %cst_40 : f32 to vector<8x1xf32>
    %64 = arith.divf %62, %63 : vector<8x1xf32>
    %cst_41 = arith.constant 9.99999974E-6 : f32
    %65 = vector.broadcast %cst_41 : f32 to vector<8x1xf32>
    %66 = arith.addf %64, %65 : vector<8x1xf32>
    %67 = math.rsqrt %66 : vector<8x1xf32>
    %68 = vector.broadcast %67 : vector<8x1xf32> to vector<8x5xf32>
    %69 = arith.mulf %59, %68 : vector<8x5xf32>
    %70 = vector.broadcast %52 : vector<1x5xf32> to vector<8x5xf32>
    %71 = arith.mulf %69, %70 : vector<8x5xf32>
    %72 = vector.broadcast %53 : vector<1x5xf32> to vector<8x5xf32>
    %73 = arith.addf %71, %72 : vector<8x5xf32>
    %c0_42 = arith.constant 0 : index
    %c0_43 = arith.constant 0 : index
    %74 = vector.load %arg14[%c0_42, %c0_43] : memref<5x128xf32, #tpu.memory_space<vmem>>, vector<5x128xf32>
    %cst_44 = arith.constant dense<0.000000e+00> : vector<8x128xf32>
    %75 = tpu.matmul %51, %74, %cst_44 {dimension_numbers = #tpu.dot_dimension_numbers<[1], [0], [0], [1], [0, 0, 1, 1], [], []>} : vector<8x5xf32>, vector<5x128xf32>, vector<8x128xf32> -> vector<8x128xf32>
    %c0_45 = arith.constant 0 : index
    %c0_46 = arith.constant 0 : index
    %76 = vector.load %arg15[%c0_45, %c0_46] : memref<5x128xf32, #tpu.memory_space<vmem>>, vector<5x128xf32>
    %cst_47 = arith.constant dense<0.000000e+00> : vector<8x128xf32>
    %77 = tpu.matmul %73, %76, %cst_47 {dimension_numbers = #tpu.dot_dimension_numbers<[1], [0], [0], [1], [0, 0, 1, 1], [], []>} : vector<8x5xf32>, vector<5x128xf32>, vector<8x128xf32> -> vector<8x128xf32>
    %78 = arith.addf %75, %77 : vector<8x128xf32>
    %c0_48 = arith.constant 0 : index
    %c0_49 = arith.constant 0 : index
    %79 = vector.load %arg16[%c0_48, %c0_49] : memref<1x128xf32, #tpu.memory_space<vmem>>, vector<1x128xf32>
    %80 = vector.broadcast %79 : vector<1x128xf32> to vector<8x128xf32>
    %81 = arith.addf %78, %80 : vector<8x128xf32>
    %cst_50 = arith.constant 0.000000e+00 : f32
    %82 = vector.broadcast %cst_50 : f32 to vector<8x128xf32>
    %83 = arith.maximumf %81, %82 : vector<8x128xf32>
    %c0_51 = arith.constant 0 : index
    %c0_52 = arith.constant 0 : index
    %84 = vector.load %arg17[%c0_51, %c0_52] : memref<8x128xf32, #tpu.memory_space<vmem>>, vector<8x128xf32>
    tpu.vector_store %arg17[%c0_51, %c0_52], %83 {strides = array<i32>} : memref<8x128xf32, #tpu.memory_space<vmem>>, vector<8x128xf32>,
    return
  }
  func.func @transform_0(%arg0: i32) -> (i32, i32) {
    %c0_i32 = arith.constant 0 : i32
    %c0_i32_0 = arith.constant 0 : i32
    return %arg0, %c0_i32 : i32, i32
  }
  func.func @transform_1(%arg0: i32) -> (i32, i32) {
    %c0_i32 = arith.constant 0 : i32
    %c0_i32_0 = arith.constant 0 : i32
    %c0_i32_1 = arith.constant 0 : i32
    return %c0_i32, %c0_i32_0 : i32, i32
  }
  func.func @transform_2(%arg0: i32) -> (i32, i32) {
    %c0_i32 = arith.constant 0 : i32
    %c0_i32_0 = arith.constant 0 : i32
    %c0_i32_1 = arith.constant 0 : i32
    return %c0_i32, %c0_i32_0 : i32, i32
  }
  func.func @transform_3(%arg0: i32) -> (i32, i32) {
    %c0_i32 = arith.constant 0 : i32
    %c0_i32_0 = arith.constant 0 : i32
    %c0_i32_1 = arith.constant 0 : i32
    return %c0_i32, %c0_i32_0 : i32, i32
  }
  func.func @transform_4(%arg0: i32) -> (i32, i32) {
    %c0_i32 = arith.constant 0 : i32
    %c0_i32_0 = arith.constant 0 : i32
    return %arg0, %c0_i32 : i32, i32
  }
  func.func @transform_5(%arg0: i32) -> (i32, i32) {
    %c0_i32 = arith.constant 0 : i32
    %c0_i32_0 = arith.constant 0 : i32
    %c0_i32_1 = arith.constant 0 : i32
    return %c0_i32, %c0_i32_0 : i32, i32
  }
  func.func @transform_6(%arg0: i32) -> (i32, i32) {
    %c0_i32 = arith.constant 0 : i32
    %c0_i32_0 = arith.constant 0 : i32
    %c0_i32_1 = arith.constant 0 : i32
    return %c0_i32, %c0_i32_0 : i32, i32
  }
  func.func @transform_7(%arg0: i32) -> (i32, i32) {
    %c0_i32 = arith.constant 0 : i32
    %c0_i32_0 = arith.constant 0 : i32
    %c0_i32_1 = arith.constant 0 : i32
    return %c0_i32, %c0_i32_0 : i32, i32
  }
  func.func @transform_8(%arg0: i32) -> (i32, i32) {
    %c0_i32 = arith.constant 0 : i32
    %c0_i32_0 = arith.constant 0 : i32
    %c0_i32_1 = arith.constant 0 : i32
    return %c0_i32, %c0_i32_0 : i32, i32
  }
  func.func @transform_9(%arg0: i32) -> (i32, i32) {
    %c0_i32 = arith.constant 0 : i32
    %c0_i32_0 = arith.constant 0 : i32
    %c0_i32_1 = arith.constant 0 : i32
    return %c0_i32, %c0_i32_0 : i32, i32
  }
  func.func @transform_10(%arg0: i32) -> (i32, i32) {
    %c0_i32 = arith.constant 0 : i32
    %c0_i32_0 = arith.constant 0 : i32
    %c0_i32_1 = arith.constant 0 : i32
    return %c0_i32, %c0_i32_0 : i32, i32
  }
  func.func @transform_11(%arg0: i32) -> (i32, i32) {
    %c0_i32 = arith.constant 0 : i32
    %c0_i32_0 = arith.constant 0 : i32
    %c0_i32_1 = arith.constant 0 : i32
    return %c0_i32, %c0_i32_0 : i32, i32
  }
  func.func @transform_12(%arg0: i32) -> (i32, i32) {
    %c0_i32 = arith.constant 0 : i32
    %c0_i32_0 = arith.constant 0 : i32
    %c0_i32_1 = arith.constant 0 : i32
    return %c0_i32, %c0_i32_0 : i32, i32
  }
  func.func @transform_13(%arg0: i32) -> (i32, i32) {
    %c0_i32 = arith.constant 0 : i32
    %c0_i32_0 = arith.constant 0 : i32
    %c0_i32_1 = arith.constant 0 : i32
    return %c0_i32, %c0_i32_0 : i32, i32
  }
  func.func @transform_14(%arg0: i32) -> (i32, i32) {
    %c0_i32 = arith.constant 0 : i32
    %c0_i32_0 = arith.constant 0 : i32
    %c0_i32_1 = arith.constant 0 : i32
    return %c0_i32, %c0_i32_0 : i32, i32
  }
  func.func @transform_15(%arg0: i32) -> (i32, i32) {
    %c0_i32 = arith.constant 0 : i32
    %c0_i32_0 = arith.constant 0 : i32
    %c0_i32_1 = arith.constant 0 : i32
    return %c0_i32, %c0_i32_0 : i32, i32
  }
  func.func @transform_16(%arg0: i32) -> (i32, i32) {
    %c0_i32 = arith.constant 0 : i32
    %c0_i32_0 = arith.constant 0 : i32
    return %arg0, %c0_i32 : i32, i32
  }
}

</mosaic_0001>

<llo_original>
// kernel: custom_text_cnn_cat_forward.3
$region0: #{custom_text_cnn_cat_forward.3}
  #allocation0 [shape = 'u32[]', space=smem, size = 0x4, offset = 0x4, fixed_abs, tag = 'smem constant byte address 0x4 - core index']
  #allocation1 [shape = 'u32[144,128]{1,0:T(1,128)}', space=vmem, size = 0x12000, scoped, tag = 'internal scratch']
  %s0 = inlined_call_operand.vmem [shape: f32[2,4,288,128], index: 0, kind: input, shape index: {}]
  %s1 = inlined_call_operand.vmem [shape: f32[128,128], index: 1, kind: input, shape index: {}]
  %s2 = inlined_call_operand.vmem [shape: f32[1,128], index: 2, kind: input, shape index: {}]
  %s3 = inlined_call_operand.vmem [shape: f32[2,288,128], index: 3, kind: output, shape index: {}]
  %s4 = sld [smem:[#allocation0]]
  $region22: #{custom_text_cnn_cat_forward.3} parent=0
    _
  %s6 = ssub.s32 1, %s4
  %s7 = scalar_select 0, %s6, %s4
  // Predicated region
  $region2: #{custom_text_cnn_cat_forward.3} parent=0 // pred_check
    _
  $region3: #{custom_text_cnn_cat_forward.3} parent=0 // pred_check_branch
    %9 = sbr.rel (0) target = $region5
  $region4: #{custom_text_cnn_cat_forward.3} parent=0 // pred_region
    _
  $region5: #{custom_text_cnn_cat_forward.3} parent=0 // pred_fallthru
    _
  // Predicated region
  $region6: #{custom_text_cnn_cat_forward.3} parent=0 // pred_check
    _
  $region7: #{custom_text_cnn_cat_forward.3} parent=0 // pred_check_branch
    %11 = sbr.rel (0) target = $region9
  $region8: #{custom_text_cnn_cat_forward.3} parent=0 // pred_region
    _
  $region9: #{custom_text_cnn_cat_forward.3} parent=0 // pred_fallthru
    _
  // Predicated region
  $region10: #{custom_text_cnn_cat_forward.3} parent=0 // pred_check
    _
  $region11: #{custom_text_cnn_cat_forward.3} parent=0 // pred_check_branch
    %13 = sbr.rel (0) target = $region13
  $region12: #{custom_text_cnn_cat_forward.3} parent=0 // pred_region
    _
  $region13: #{custom_text_cnn_cat_forward.3} parent=0 // pred_fallthru
    _
  %v14 = vld [vmem:[%s0] sm:$0xff]
  %v15 = vld [vmem:[%s0 + $0x8] sm:$0xff]
  %v16 = vld [vmem:[%s0 + $0x10] sm:$0xff]
  %v17 = vld [vmem:[%s0 + $0x18] sm:$0xff]
  %v18 = vld [vmem:[%s0 + $0x20] sm:$0xff]
  %v19 = vld [vmem:[%s0 + $0x28] sm:$0xff]
  %v20 = vld [vmem:[%s0 + $0x30] sm:$0xff]
  %v21 = vld [vmem:[%s0 + $0x38] sm:$0xff]
  %v22 = vld [vmem:[%s0 + $0x40] sm:$0xff]
  %v23 = vld [vmem:[%s0 + $0x48] sm:$0xff]
  %v24 = vld [vmem:[%s0 + $0x50] sm:$0xff]
  %v25 = vld [vmem:[%s0 + $0x58] sm:$0xff]
  %v26 = vld [vmem:[%s0 + $0x60] sm:$0xff]
  %v27 = vld [vmem:[%s0 + $0x68] sm:$0xff]
  %v28 = vld [vmem:[%s0 + $0x70] sm:$0xff]
  %v29 = vld [vmem:[%s0 + $0x78] sm:$0xff]
  %v30 = vld [vmem:[%s0 + $0x80] sm:$0xff]
  %v31 = vld [vmem:[%s0 + $0x88] sm:$0xff]
  %v32 = vld [vmem:[%s0 + $0x90] sm:$0xff]
  %v33 = vld [vmem:[%s0 + $0x98] sm:$0xff]
  %v34 = vld [vmem:[%s0 + $0xa0] sm:$0xff]
  %v35 = vld [vmem:[%s0 + $0xa8] sm:$0xff]
  %v36 = vld [vmem:[%s0 + $0xb0] sm:$0xff]
  %v37 = vld [vmem:[%s0 + $0xb8] sm:$0xff]
  %v38 = vld [vmem:[%s0 + $0xc0] sm:$0xff]
  %v39 = vld [vmem:[%s0 + $0xc8] sm:$0xff]
  %v40 = vld [vmem:[%s0 + $0xd0] sm:$0xff]
  %v41 = vld [vmem:[%s0 + $0xd8] sm:$0xff]
  %v42 = vld [vmem:[%s0 + $0xe0] sm:$0xff]
  %v43 = vld [vmem:[%s0 + $0xe8] sm:$0xff]
  %v44 = vld [vmem:[%s0 + $0xf0] sm:$0xff]
  %v45 = vld [vmem:[%s0 + $0xf8] sm:$0xff]
  %v46 = vld [vmem:[%s0 + $0x100] sm:$0xff]
  %v47 = vld [vmem:[%s0 + $0x108] sm:$0xff]
  %v48 = vld [vmem:[%s0 + $0x110] sm:$0xff]
  %v49 = vld [vmem:[%s0 + $0x118] sm:$0xff]
  %v50 = vld [vmem:[%s0 + $0x120] sm:$0xff]
  %v51 = vld [vmem:[%s0 + $0x128] sm:$0xff]
  %v52 = vld [vmem:[%s0 + $0x130] sm:$0xff]
  %v53 = vld [vmem:[%s0 + $0x138] sm:$0xff]
  %v54 = vld [vmem:[%s0 + $0x140] sm:$0xff]
  %v55 = vld [vmem:[%s0 + $0x148] sm:$0xff]
  %v56 = vld [vmem:[%s0 + $0x150] sm:$0xff]
  %v57 = vld [vmem:[%s0 + $0x158] sm:$0xff]
  %v58 = vld [vmem:[%s0 + $0x160] sm:$0xff]
  %v59 = vld [vmem:[%s0 + $0x168] sm:$0xff]
  %v60 = vld [vmem:[%s0 + $0x170] sm:$0xff]
  %v61 = vld [vmem:[%s0 + $0x178] sm:$0xff]
  %v62 = vld [vmem:[%s0 + $0x180] sm:$0xff]
  %v63 = vld [vmem:[%s0 + $0x188] sm:$0xff]
  %v64 = vld [vmem:[%s0 + $0x190] sm:$0xff]
  %v65 = vld [vmem:[%s0 + $0x198] sm:$0xff]
  %v66 = vld [vmem:[%s0 + $0x1a0] sm:$0xff]
  %v67 = vld [vmem:[%s0 + $0x1a8] sm:$0xff]
  %v68 = vld [vmem:[%s0 + $0x1b0] sm:$0xff]
  %v69 = vld [vmem:[%s0 + $0x1b8] sm:$0xff]
  %v70 = vld [vmem:[%s0 + $0x1c0] sm:$0xff]
  %v71 = vld [vmem:[%s0 + $0x1c8] sm:$0xff]
  %v72 = vld [vmem:[%s0 + $0x1d0] sm:$0xff]
  %v73 = vld [vmem:[%s0 + $0x1d8] sm:$0xff]
  %v74 = vld [vmem:[%s0 + $0x1e0] sm:$0xff]
  %v75 = vld [vmem:[%s0 + $0x1e8] sm:$0xff]
  %v76 = vld [vmem:[%s0 + $0x1f0] sm:$0xff]
  %v77 = vld [vmem:[%s0 + $0x1f8] sm:$0xff]
  %v78 = vld [vmem:[%s0 + $0x200] sm:$0xff]
  %v79 = vld [vmem:[%s0 + $0x208] sm:$0xff]
  %v80 = vld [vmem:[%s0 + $0x210] sm:$0xff]
  %v81 = vld [vmem:[%s0 + $0x218] sm:$0xff]
  %v82 = vld [vmem:[%s0 + $0x220] sm:$0xff]
  %v83 = vld [vmem:[%s0 + $0x228] sm:$0xff]
  %v84 = vld [vmem:[%s0 + $0x230] sm:$0xff]
  %v85 = vld [vmem:[%s0 + $0x238] sm:$0xff]
  %v86 = vld [vmem:[%s0 + $0x240] sm:$0xff]
  %v87 = vld [vmem:[%s0 + $0x248] sm:$0xff]
  %v88 = vld [vmem:[%s0 + $0x250] sm:$0xff]
  %v89 = vld [vmem:[%s0 + $0x258] sm:$0xff]
  %v90 = vld [vmem:[%s0 + $0x260] sm:$0xff]
  %v91 = vld [vmem:[%s0 + $0x268] sm:$0xff]
  %v92 = vld [vmem:[%s0 + $0x270] sm:$0xff]
  %v93 = vld [vmem:[%s0 + $0x278] sm:$0xff]
  %v94 = vld [vmem:[%s0 + $0x280] sm:$0xff]
  %v95 = vld [vmem:[%s0 + $0x288] sm:$0xff]
  %v96 = vld [vmem:[%s0 + $0x290] sm:$0xff]
  %v97 = vld [vmem:[%s0 + $0x298] sm:$0xff]
  %v98 = vld [vmem:[%s0 + $0x2a0] sm:$0xff]
  %v99 = vld [vmem:[%s0 + $0x2a8] sm:$0xff]
  %v100 = vld [vmem:[%s0 + $0x2b0] sm:$0xff]
  %v101 = vld [vmem:[%s0 + $0x2b8] sm:$0xff]
  %v102 = vld [vmem:[%s0 + $0x2c0] sm:$0xff]
  %v103 = vld [vmem:[%s0 + $0x2c8] sm:$0xff]
  %v104 = vld [vmem:[%s0 + $0x2d0] sm:$0xff]
  %v105 = vld [vmem:[%s0 + $0x2d8] sm:$0xff]
  %v106 = vld [vmem:[%s0 + $0x2e0] sm:$0xff]
  %v107 = vld [vmem:[%s0 + $0x2e8] sm:$0xff]
  %v108 = vld [vmem:[%s0 + $0x2f0] sm:$0xff]
  %v109 = vld [vmem:[%s0 + $0x2f8] sm:$0xff]
  %v110 = vld [vmem:[%s0 + $0x300] sm:$0xff]
  %v111 = vld [vmem:[%s0 + $0x308] sm:$0xff]
  %v112 = vld [vmem:[%s0 + $0x310] sm:$0xff]
  %v113 = vld [vmem:[%s0 + $0x318] sm:$0xff]
  %v114 = vld [vmem:[%s0 + $0x320] sm:$0xff]
  %v115 = vld [vmem:[%s0 + $0x328] sm:$0xff]
  %v116 = vld [vmem:[%s0 + $0x330] sm:$0xff]
  %v117 = vld [vmem:[%s0 + $0x338] sm:$0xff]
  %v118 = vld [vmem:[%s0 + $0x340] sm:$0xff]
  %v119 = vld [vmem:[%s0 + $0x348] sm:$0xff]
  %v120 = vld [vmem:[%s0 + $0x350] sm:$0xff]
  %v121 = vld [vmem:[%s0 + $0x358] sm:$0xff]
  %v122 = vld [vmem:[%s0 + $0x360] sm:$0xff]
  %v123 = vld [vmem:[%s0 + $0x368] sm:$0xff]
  %v124 = vld [vmem:[%s0 + $0x370] sm:$0xff]
  %v125 = vld [vmem:[%s0 + $0x378] sm:$0xff]
  %v126 = vld [vmem:[%s0 + $0x380] sm:$0xff]
  %v127 = vld [vmem:[%s0 + $0x388] sm:$0xff]
  %v128 = vld [vmem:[%s0 + $0x390] sm:$0xff]
  %v129 = vld [vmem:[%s0 + $0x398] sm:$0xff]
  %v130 = vld [vmem:[%s0 + $0x3a0] sm:$0xff]
  %v131 = vld [vmem:[%s0 + $0x3a8] sm:$0xff]
  %v132 = vld [vmem:[%s0 + $0x3b0] sm:$0xff]
  %v133 = vld [vmem:[%s0 + $0x3b8] sm:$0xff]
  %v134 = vld [vmem:[%s0 + $0x3c0] sm:$0xff]
  %v135 = vld [vmem:[%s0 + $0x3c8] sm:$0xff]
  %v136 = vld [vmem:[%s0 + $0x3d0] sm:$0xff]
  %v137 = vld [vmem:[%s0 + $0x3d8] sm:$0xff]
  %v138 = vld [vmem:[%s0 + $0x3e0] sm:$0xff]
  %v139 = vld [vmem:[%s0 + $0x3e8] sm:$0xff]
  %v140 = vld [vmem:[%s0 + $0x3f0] sm:$0xff]
  %v141 = vld [vmem:[%s0 + $0x3f8] sm:$0xff]
  %v142 = vld [vmem:[%s0 + $0x400] sm:$0xff]
  %v143 = vld [vmem:[%s0 + $0x408] sm:$0xff]
  %v144 = vld [vmem:[%s0 + $0x410] sm:$0xff]
  %v145 = vld [vmem:[%s0 + $0x418] sm:$0xff]
  %v146 = vld [vmem:[%s0 + $0x420] sm:$0xff]
  %v147 = vld [vmem:[%s0 + $0x428] sm:$0xff]
  %v148 = vld [vmem:[%s0 + $0x430] sm:$0xff]
  %v149 = vld [vmem:[%s0 + $0x438] sm:$0xff]
  %v150 = vld [vmem:[%s0 + $0x440] sm:$0xff]
  %v151 = vld [vmem:[%s0 + $0x448] sm:$0xff]
  %v152 = vld [vmem:[%s0 + $0x450] sm:$0xff]
  %v153 = vld [vmem:[%s0 + $0x458] sm:$0xff]
  %v154 = vld [vmem:[%s0 + $0x460] sm:$0xff]
  %v155 = vld [vmem:[%s0 + $0x468] sm:$0xff]
  %v156 = vld [vmem:[%s0 + $0x470] sm:$0xff]
  %v157 = vld [vmem:[%s0 + $0x478] sm:$0xff]
  %v158 = vld [vmem:[%s0 + $0x480] sm:$0xff]
  %v159 = vld [vmem:[%s0 + $0x488] sm:$0xff]
  %v160 = vld [vmem:[%s0 + $0x490] sm:$0xff]
  %v161 = vld [vmem:[%s0 + $0x498] sm:$0xff]
  %v162 = vld [vmem:[%s0 + $0x4a0] sm:$0xff]
  %v163 = vld [vmem:[%s0 + $0x4a8] sm:$0xff]
  %v164 = vld [vmem:[%s0 + $0x4b0] sm:$0xff]
  %v165 = vld [vmem:[%s0 + $0x4b8] sm:$0xff]
  %v166 = vld [vmem:[%s0 + $0x4c0] sm:$0xff]
  %v167 = vld [vmem:[%s0 + $0x4c8] sm:$0xff]
  %v168 = vld [vmem:[%s0 + $0x4d0] sm:$0xff]
  %v169 = vld [vmem:[%s0 + $0x4d8] sm:$0xff]
  %v170 = vld [vmem:[%s0 + $0x4e0] sm:$0xff]
  %v171 = vld [vmem:[%s0 + $0x4e8] sm:$0xff]
  %v172 = vld [vmem:[%s0 + $0x4f0] sm:$0xff]
  %v173 = vld [vmem:[%s0 + $0x4f8] sm:$0xff]
  %v174 = vld [vmem:[%s0 + $0x500] sm:$0xff]
  %v175 = vld [vmem:[%s0 + $0x508] sm:$0xff]
  %v176 = vld [vmem:[%s0 + $0x510] sm:$0xff]
  %v177 = vld [vmem:[%s0 + $0x518] sm:$0xff]
  %v178 = vld [vmem:[%s0 + $0x520] sm:$0xff]
  %v179 = vld [vmem:[%s0 + $0x528] sm:$0xff]
  %v180 = vld [vmem:[%s0 + $0x530] sm:$0xff]
  %v181 = vld [vmem:[%s0 + $0x538] sm:$0xff]
  %v182 = vld [vmem:[%s0 + $0x540] sm:$0xff]
  %v183 = vld [vmem:[%s0 + $0x548] sm:$0xff]
  %v184 = vld [vmem:[%s0 + $0x550] sm:$0xff]
  %v185 = vld [vmem:[%s0 + $0x558] sm:$0xff]
  %v186 = vld [vmem:[%s0 + $0x560] sm:$0xff]
  %v187 = vld [vmem:[%s0 + $0x568] sm:$0xff]
  %v188 = vld [vmem:[%s0 + $0x570] sm:$0xff]
  %v189 = vld [vmem:[%s0 + $0x578] sm:$0xff]
  %v190 = vld [vmem:[%s0 + $0x580] sm:$0xff]
  %v191 = vld [vmem:[%s0 + $0x588] sm:$0xff]
  %v192 = vld [vmem:[%s0 + $0x590] sm:$0xff]
  %v193 = vld [vmem:[%s0 + $0x598] sm:$0xff]
  %v194 = vld [vmem:[%s0 + $0x5a0] sm:$0xff]
  %v195 = vld [vmem:[%s0 + $0x5a8] sm:$0xff]
  %v196 = vld [vmem:[%s0 + $0x5b0] sm:$0xff]
  %v197 = vld [vmem:[%s0 + $0x5b8] sm:$0xff]
  %v198 = vld [vmem:[%s0 + $0x5c0] sm:$0xff]
  %v199 = vld [vmem:[%s0 + $0x5c8] sm:$0xff]
  %v200 = vld [vmem:[%s0 + $0x5d0] sm:$0xff]
  %v201 = vld [vmem:[%s0 + $0x5d8] sm:$0xff]
  %v202 = vld [vmem:[%s0 + $0x5e0] sm:$0xff]
  %v203 = vld [vmem:[%s0 + $0x5e8] sm:$0xff]
  %v204 = vld [vmem:[%s0 + $0x5f0] sm:$0xff]
  %v205 = vld [vmem:[%s0 + $0x5f8] sm:$0xff]
  %v206 = vld [vmem:[%s0 + $0x600] sm:$0xff]
  %v207 = vld [vmem:[%s0 + $0x608] sm:$0xff]
  %v208 = vld [vmem:[%s0 + $0x610] sm:$0xff]
  %v209 = vld [vmem:[%s0 + $0x618] sm:$0xff]
  %v210 = vld [vmem:[%s0 + $0x620] sm:$0xff]
  %v211 = vld [vmem:[%s0 + $0x628] sm:$0xff]
  %v212 = vld [vmem:[%s0 + $0x630] sm:$0xff]
  %v213 = vld [vmem:[%s0 + $0x638] sm:$0xff]
  %v214 = vld [vmem:[%s0 + $0x640] sm:$0xff]
  %v215 = vld [vmem:[%s0 + $0x648] sm:$0xff]
  %v216 = vld [vmem:[%s0 + $0x650] sm:$0xff]
  %v217 = vld [vmem:[%s0 + $0x658] sm:$0xff]
  %v218 = vld [vmem:[%s0 + $0x660] sm:$0xff]
  %v219 = vld [vmem:[%s0 + $0x668] sm:$0xff]
  %v220 = vld [vmem:[%s0 + $0x670] sm:$0xff]
  %v221 = vld [vmem:[%s0 + $0x678] sm:$0xff]
  %v222 = vld [vmem:[%s0 + $0x680] sm:$0xff]
  %v223 = vld [vmem:[%s0 + $0x688] sm:$0xff]
  %v224 = vld [vmem:[%s0 + $0x690] sm:$0xff]
  %v225 = vld [vmem:[%s0 + $0x698] sm:$0xff]
  %v226 = vld [vmem:[%s0 + $0x6a0] sm:$0xff]
  %v227 = vld [vmem:[%s0 + $0x6a8] sm:$0xff]
  %v228 = vld [vmem:[%s0 + $0x6b0] sm:$0xff]
  %v229 = vld [vmem:[%s0 + $0x6b8] sm:$0xff]
  %v230 = vld [vmem:[%s0 + $0x6c0] sm:$0xff]
  %v231 = vld [vmem:[%s0 + $0x6c8] sm:$0xff]
  %v232 = vld [vmem:[%s0 + $0x6d0] sm:$0xff]
  %v233 = vld [vmem:[%s0 + $0x6d8] sm:$0xff]
  %v234 = vld [vmem:[%s0 + $0x6e0] sm:$0xff]
  %v235 = vld [vmem:[%s0 + $0x6e8] sm:$0xff]
  %v236 = vld [vmem:[%s0 + $0x6f0] sm:$0xff]
  %v237 = vld [vmem:[%s0 + $0x6f8] sm:$0xff]
  %v238 = vld [vmem:[%s0 + $0x700] sm:$0xff]
  %v239 = vld [vmem:[%s0 + $0x708] sm:$0xff]
  %v240 = vld [vmem:[%s0 + $0x710] sm:$0xff]
  %v241 = vld [vmem:[%s0 + $0x718] sm:$0xff]
  %v242 = vld [vmem:[%s0 + $0x720] sm:$0xff]
  %v243 = vld [vmem:[%s0 + $0x728] sm:$0xff]
  %v244 = vld [vmem:[%s0 + $0x730] sm:$0xff]
  %v245 = vld [vmem:[%s0 + $0x738] sm:$0xff]
  %v246 = vld [vmem:[%s0 + $0x740] sm:$0xff]
  %v247 = vld [vmem:[%s0 + $0x748] sm:$0xff]
  %v248 = vld [vmem:[%s0 + $0x750] sm:$0xff]
  %v249 = vld [vmem:[%s0 + $0x758] sm:$0xff]
  %v250 = vld [vmem:[%s0 + $0x760] sm:$0xff]
  %v251 = vld [vmem:[%s0 + $0x768] sm:$0xff]
  %v252 = vld [vmem:[%s0 + $0x770] sm:$0xff]
  %v253 = vld [vmem:[%s0 + $0x778] sm:$0xff]
  %v254 = vld [vmem:[%s0 + $0x780] sm:$0xff]
  %v255 = vld [vmem:[%s0 + $0x788] sm:$0xff]
  %v256 = vld [vmem:[%s0 + $0x790] sm:$0xff]
  %v257 = vld [vmem:[%s0 + $0x798] sm:$0xff]
  %v258 = vld [vmem:[%s0 + $0x7a0] sm:$0xff]
  %v259 = vld [vmem:[%s0 + $0x7a8] sm:$0xff]
  %v260 = vld [vmem:[%s0 + $0x7b0] sm:$0xff]
  %v261 = vld [vmem:[%s0 + $0x7b8] sm:$0xff]
  %v262 = vld [vmem:[%s0 + $0x7c0] sm:$0xff]
  %v263 = vld [vmem:[%s0 + $0x7c8] sm:$0xff]
  %v264 = vld [vmem:[%s0 + $0x7d0] sm:$0xff]
  %v265 = vld [vmem:[%s0 + $0x7d8] sm:$0xff]
  %v266 = vld [vmem:[%s0 + $0x7e0] sm:$0xff]
  %v267 = vld [vmem:[%s0 + $0x7e8] sm:$0xff]
  %v268 = vld [vmem:[%s0 + $0x7f0] sm:$0xff]
  %v269 = vld [vmem:[%s0 + $0x7f8] sm:$0xff]
  %v270 = vld [vmem:[%s0 + $0x800] sm:$0xff]
  %v271 = vld [vmem:[%s0 + $0x808] sm:$0xff]
  %v272 = vld [vmem:[%s0 + $0x810] sm:$0xff]
  %v273 = vld [vmem:[%s0 + $0x818] sm:$0xff]
  %v274 = vld [vmem:[%s0 + $0x820] sm:$0xff]
  %v275 = vld [vmem:[%s0 + $0x828] sm:$0xff]
  %v276 = vld [vmem:[%s0 + $0x830] sm:$0xff]
  %v277 = vld [vmem:[%s0 + $0x838] sm:$0xff]
  %v278 = vld [vmem:[%s0 + $0x840] sm:$0xff]
  %v279 = vld [vmem:[%s0 + $0x848] sm:$0xff]
  %v280 = vld [vmem:[%s0 + $0x850] sm:$0xff]
  %v281 = vld [vmem:[%s0 + $0x858] sm:$0xff]
  %v282 = vld [vmem:[%s0 + $0x860] sm:$0xff]
  %v283 = vld [vmem:[%s0 + $0x868] sm:$0xff]
  %v284 = vld [vmem:[%s0 + $0x870] sm:$0xff]
  %v285 = vld [vmem:[%s0 + $0x878] sm:$0xff]
  %v286 = vld [vmem:[%s0 + $0x880] sm:$0xff]
  %v287 = vld [vmem:[%s0 + $0x888] sm:$0xff]
  %v288 = vld [vmem:[%s0 + $0x890] sm:$0xff]
  %v289 = vld [vmem:[%s0 + $0x898] sm:$0xff]
  %v290 = vld [vmem:[%s0 + $0x8a0] sm:$0xff]
  %v291 = vld [vmem:[%s0 + $0x8a8] sm:$0xff]
  %v292 = vld [vmem:[%s0 + $0x8b0] sm:$0xff]
  %v293 = vld [vmem:[%s0 + $0x8b8] sm:$0xff]
  %v294 = vld [vmem:[%s0 + $0x8c0] sm:$0xff]
  %v295 = vld [vmem:[%s0 + $0x8c8] sm:$0xff]
  %v296 = vld [vmem:[%s0 + $0x8d0] sm:$0xff]
  %v297 = vld [vmem:[%s0 + $0x8d8] sm:$0xff]
  %v298 = vld [vmem:[%s0 + $0x8e0] sm:$0xff]
  %v299 = vld [vmem:[%s0 + $0x8e8] sm:$0xff]
  %v300 = vld [vmem:[%s0 + $0x8f0] sm:$0xff]
  %v301 = vld [vmem:[%s0 + $0x8f8] sm:$0xff]
  %v302 = vld [vmem:[%s1] sm:$0xff]
  %v303 = vld [vmem:[%s1 + $0x8] sm:$0xff]
  %v304 = vld [vmem:[%s1 + $0x10] sm:$0xff]
  %v305 = vld [vmem:[%s1 + $0x18] sm:$0xff]
  %v306 = vld [vmem:[%s1 + $0x20] sm:$0xff]
  %v307 = vld [vmem:[%s1 + $0x28] sm:$0xff]
  %v308 = vld [vmem:[%s1 + $0x30] sm:$0xff]
  %v309 = vld [vmem:[%s1 + $0x38] sm:$0xff]
  %v310 = vld [vmem:[%s1 + $0x40] sm:$0xff]
  %v311 = vld [vmem:[%s1 + $0x48] sm:$0xff]
  %v312 = vld [vmem:[%s1 + $0x50] sm:$0xff]
  %v313 = vld [vmem:[%s1 + $0x58] sm:$0xff]
  %v314 = vld [vmem:[%s1 + $0x60] sm:$0xff]
  %v315 = vld [vmem:[%s1 + $0x68] sm:$0xff]
  %v316 = vld [vmem:[%s1 + $0x70] sm:$0xff]
  %v317 = vld [vmem:[%s1 + $0x78] sm:$0xff]
  %318 = vmatprep.subr.mxu0 0.0
  %319 = vmatpush1.msra.mxu0 %v302
  %320 = vmatprep.subr.mxu0 0.0
  %321 = vmatpush1.msra.mxu0 %v303
  %322 = vmatprep.subr.mxu0 0.0
  %323 = vmatpush1.msra.mxu0 %v304
  %324 = vmatprep.subr.mxu0 0.0
  %325 = vmatpush1.msra.mxu0 %v305
  %326 = vmatprep.subr.mxu0 0.0
  %327 = vmatpush1.msra.mxu0 %v306
  %328 = vmatprep.subr.mxu0 0.0
  %329 = vmatpush1.msra.mxu0 %v307
  %330 = vmatprep.subr.mxu0 0.0
  %331 = vmatpush1.msra.mxu0 %v308
  %332 = vmatprep.subr.mxu0 0.0
  %333 = vmatpush1.msra.mxu0 %v309
  %334 = vmatprep.subr.mxu0 0.0
  %335 = vmatpush1.msra.mxu0 %v310
  %336 = vmatprep.subr.mxu0 0.0
  %337 = vmatpush1.msra.mxu0 %v311
  %338 = vmatprep.subr.mxu0 0.0
  %339 = vmatpush1.msra.mxu0 %v312
  %340 = vmatprep.subr.mxu0 0.0
  %341 = vmatpush1.msra.mxu0 %v313
  %342 = vmatprep.subr.mxu0 0.0
  %343 = vmatpush1.msra.mxu0 %v314
  %344 = vmatprep.subr.mxu0 0.0
  %345 = vmatpush1.msra.mxu0 %v315
  %346 = vmatprep.subr.mxu0 0.0
  %347 = vmatpush1.msra.mxu0 %v316
  %348 = vmatprep.subr.mxu0 0.0
  %349 = vmatpush1.msra.mxu0 %v317
  %350 = vmatprep.subr.mxu0 0.0
  %351 = vmatpush1.msra.mxu0 0.0
  %352 = vmatprep.subr.mxu0 0.0
  %353 = vmatpush1.msra.mxu0 0.0
  %354 = vmatprep.subr.mxu0 0.0
  %355 = vmatpush1.msra.mxu0 0.0
  %356 = vmatprep.subr.mxu0 0.0
  %357 = vmatpush1.msra.mxu0 0.0
  %358 = vmatprep.subr.mxu0 0.0
  %359 = vmatpush1.msra.mxu0 0.0
  %360 = vmatprep.subr.mxu0 0.0
  %361 = vmatpush1.msra.mxu0 0.0
  %362 = vmatprep.subr.mxu0 0.0
  %363 = vmatpush1.msra.mxu0 0.0
  %364 = vmatprep.subr.mxu0 0.0
  %365 = vmatpush1.msra.mxu0 0.0
  %366 = vmatprep.subr.mxu0 0.0
  %367 = vmatpush1.msra.mxu0 0.0
  %368 = vmatprep.subr.mxu0 0.0
  %369 = vmatpush1.msra.mxu0 0.0
  %370 = vmatprep.subr.mxu0 0.0
  %371 = vmatpush1.msra.mxu0 0.0
  %372 = vmatprep.subr.mxu0 0.0
  %373 = vmatpush1.msra.mxu0 0.0
  %374 = vmatprep.subr.mxu0 0.0
  %375 = vmatpush1.msra.mxu0 0.0
  %376 = vmatprep.subr.mxu0 0.0
  %377 = vmatpush1.msra.mxu0 0.0
  %378 = vmatprep.subr.mxu0 0.0
  %379 = vmatpush1.msra.mxu0 0.0
  %380 = vmatprep.subr.mxu0 0.0
  %381 = vmatpush1.msra.mxu0 0.0
  %382 = vmatprep.mubr.f32.mxu0 0.0
  %383 = vmatmul.mubr.f32.gmra.mrb[0].mxu0 %v14
  %v384 = vpop.f32.mrb[0].mxu0
  %v385 = vadd.f32 0.0, %v384
  %v386 = vpop.f32.mrb[0].mxu0
  %387 = vmatprep.mubr.f32.mxu0 0.0
  %388 = vmatmul.mubr.f32.gmra.mrb[0].mxu0 %v15
  %v389 = vpop.f32.mrb[0].mxu0
  %v390 = vadd.f32 0.0, %v389
  %v391 = vpop.f32.mrb[0].mxu0
  %392 = vmatprep.mubr.f32.mxu0 0.0
  %393 = vmatmul.mubr.f32.gmra.mrb[0].mxu0 %v16
  %v394 = vpop.f32.mrb[0].mxu0
  %v395 = vadd.f32 0.0, %v394
  %v396 = vpop.f32.mrb[0].mxu0
  %397 = vmatprep.mubr.f32.mxu0 0.0
  %398 = vmatmul.mubr.f32.gmra.mrb[0].mxu0 %v17
  %v399 = vpop.f32.mrb[0].mxu0
  %v400 = vadd.f32 0.0, %v399
  %v401 = vpop.f32.mrb[0].mxu0
  %402 = vmatprep.mubr.f32.mxu0 0.0
  %403 = vmatmul.mubr.f32.gmra.mrb[0].mxu0 %v18
  %v404 = vpop.f32.mrb[0].mxu0
  %v405 = vadd.f32 0.0, %v404
  %v406 = vpop.f32.mrb[0].mxu0
  %407 = vmatprep.mubr.f32.mxu0 0.0
  %408 = vmatmul.mubr.f32.gmra.mrb[0].mxu0 %v19
  %v409 = vpop.f32.mrb[0].mxu0
  %v410 = vadd.f32 0.0, %v409
  %v411 = vpop.f32.mrb[0].mxu0
  %412 = vmatprep.mubr.f32.mxu0 0.0
  %413 = vmatmul.mubr.f32.gmra.mrb[0].mxu0 %v20
  %v414 = vpop.f32.mrb[0].mxu0
  %v415 = vadd.f32 0.0, %v414
  %v416 = vpop.f32.mrb[0].mxu0
  %417 = vmatprep.mubr.f32.mxu0 0.0
  %418 = vmatmul.mubr.f32.gmra.mrb[0].mxu0 %v21
  %v419 = vpop.f32.mrb[0].mxu0
  %v420 = vadd.f32 0.0, %v419
  %v421 = vpop.f32.mrb[0].mxu0
  %422 = vmatprep.mubr.f32.mxu0 0.0
  %423 = vmatmul.mubr.f32.gmra.mrb[0].mxu0 %v22
  %v424 = vpop.f32.mrb[0].mxu0
  %v425 = vadd.f32 0.0, %v424
  %v426 = vpop.f32.mrb[0].mxu0
  %427 = vmatprep.mubr.f32.mxu0 0.0
  %428 = vmatmul.mubr.f32.gmra.mrb[0].mxu0 %v23
  %v429 = vpop.f32.mrb[0].mxu0
  %v430 = vadd.f32 0.0, %v429
  %v431 = vpop.f32.mrb[0].mxu0
  %432 = vmatprep.mubr.f32.mxu0 0.0
  %433 = vmatmul.mubr.f32.gmra.mrb[0].mxu0 %v24
  %v434 = vpop.f32.mrb[0].mxu0
  %v435 = vadd.f32 0.0, %v434
  %v436 = vpop.f32.mrb[0].mxu0
  %437 = vmatprep.mubr.f32.mxu0 0.0
  %438 = vmatmul.mubr.f32.gmra.mrb[0].mxu0 %v25
  %v439 = vpop.f32.mrb[0].mxu0
  %v440 = vadd.f32 0.0, %v439
  %v441 = vpop.f32.mrb[0].mxu0
  %442 = vmatprep.mubr.f32.mxu0 0.0
  %443 = vmatmul.mubr.f32.gmra.mrb[0].mxu0 %v26
  %v444 = vpop.f32.mrb[0].mxu0
  %v445 = vadd.f32 0.0, %v444
  %v446 = vpop.f32.mrb[0].mxu0
  %447 = vmatprep.mubr.f32.mxu0 0.0
  %448 = vmatmul.mubr.f32.gmra.mrb[0].mxu0 %v27
  %v449 = vpop.f32.mrb[0].mxu0
  %v450 = vadd.f32 0.0, %v449
  %v451 = vpop.f32.mrb[0].mxu0
  %452 = vmatprep.mubr.f32.mxu0 0.0
  %453 = vmatmul.mubr.f32.gmra.mrb[0].mxu0 %v28
  %v454 = vpop.f32.mrb[0].mxu0
  %v455 = vadd.f32 0.0, %v454
  %v456 = vpop.f32.mrb[0].mxu0
  %457 = vmatprep.mubr.f32.mxu0 0.0
  %458 = vmatmul.mubr.f32.gmra.mrb[0].mxu0 %v29
  %v459 = vpop.f32.mrb[0].mxu0
  %v460 = vadd.f32 0.0, %v459
  %v461 = vpop.f32.mrb[0].mxu0
  %462 = vmatprep.mubr.f32.mxu0 0.0
  %463 = vmatmul.mubr.f32.gmra.mrb[0].mxu0 %v30
  %v464 = vpop.f32.mrb[0].mxu0
  %v465 = vadd.f32 0.0, %v464
  %v466 = vpop.f32.mrb[0].mxu0
  %467 = vmatprep.mubr.f32.mxu0 0.0
  %468 = vmatmul.mubr.f32.gmra.mrb[0].mxu0 %v31
  %v469 = vpop.f32.mrb[0].mxu0
  %v470 = vadd.f32 0.0, %v469
  %v471 = vpop.f32.mrb[0].mxu0
  %472 = vmatprep.mubr.f32.mxu0 0.0
  %473 = vmatmul.mubr.f32.gmra.mrb[0].mxu0 %v32
  %v474 = vpop.f32.mrb[0].mxu0
  %v475 = vadd.f32 0.0, %v474
  %v476 = vpop.f32.mrb[0].mxu0
  %477 = vmatprep.mubr.f32.mxu0 0.0
  %478 = vmatmul.mubr.f32.gmra.mrb[0].mxu0 %v33
  %v479 = vpop.f32.mrb[0].mxu0
  %v480 = vadd.f32 0.0, %v479
  %v481 = vpop.f32.mrb[0].mxu0
  %482 = vmatprep.mubr.f32.mxu0 0.0
  %483 = vmatmul.mubr.f32.gmra.mrb[0].mxu0 %v34
  %v484 = vpop.f32.mrb[0].mxu0
  %v485 = vadd.f32 0.0, %v484
  %v486 = vpop.f32.mrb[0].mxu0
  %487 = vmatprep.mubr.f32.mxu0 0.0
  %488 = vmatmul.mubr.f32.gmra.mrb[0].mxu0 %v35
  %v489 = vpop.f32.mrb[0].mxu0
  %v490 = vadd.f32 0.0, %v489
  %v491 = vpop.f32.mrb[0].mxu0
  %492 = vmatprep.mubr.f32.mxu0 0.0
  %493 = vmatmul.mubr.f32.gmra.mrb[0].mxu0 %v36
  %v494 = vpop.f32.mrb[0].mxu0
  %v495 = vadd.f32 0.0, %v494
  %v496 = vpop.f32.mrb[0].mxu0
  %497 = vmatprep.mubr.f32.mxu0 0.0
  %498 = vmatmul.mubr.f32.gmra.mrb[0].mxu0 %v37
  %v499 = vpop.f32.mrb[0].mxu0
  %v500 = vadd.f32 0.0, %v499
  %v501 = vpop.f32.mrb[0].mxu0
  %502 = vmatprep.mubr.f32.mxu0 0.0
  %503 = vmatmul.mubr.f32.gmra.mrb[0].mxu0 %v38
  %v504 = vpop.f32.mrb[0].mxu0
  %v505 = vadd.f32 0.0, %v504
  %v506 = vpop.f32.mrb[0].mxu0
  %507 = vmatprep.mubr.f32.mxu0 0.0
  %508 = vmatmul.mubr.f32.gmra.mrb[0].mxu0 %v39
  %v509 = vpop.f32.mrb[0].mxu0
  %v510 = vadd.f32 0.0, %v509
  %v511 = vpop.f32.mrb[0].mxu0
  %512 = vmatprep.mubr.f32.mxu0 0.0
  %513 = vmatmul.mubr.f32.gmra.mrb[0].mxu0 %v40
  %v514 = vpop.f32.mrb[0].mxu0
  %v515 = vadd.f32 0.0, %v514
  %v516 = vpop.f32.mrb[0].mxu0
  %517 = vmatprep.mubr.f32.mxu0 0.0
  %518 = vmatmul.mubr.f32.gmra.mrb[0].mxu0 %v41
  %v519 = vpop.f32.mrb[0].mxu0
  %v520 = vadd.f32 0.0, %v519
  %v521 = vpop.f32.mrb[0].mxu0
  %522 = vmatprep.mubr.f32.mxu0 0.0
  %523 = vmatmul.mubr.f32.gmra.mrb[0].mxu0 %v42
  %v524 = vpop.f32.mrb[0].mxu0
  %v525 = vadd.f32 0.0, %v524
  %v526 = vpop.f32.mrb[0].mxu0
  %527 = vmatprep.mubr.f32.mxu0 0.0
  %528 = vmatmul.mubr.f32.gmra.mrb[0].mxu0 %v43
  %v529 = vpop.f32.mrb[0].mxu0
  %v530 = vadd.f32 0.0, %v529
  %v531 = vpop.f32.mrb[0].mxu0
  %532 = vmatprep.mubr.f32.mxu0 0.0
  %533 = vmatmul.mubr.f32.gmra.mrb[0].mxu0 %v44
  %v534 = vpop.f32.mrb[0].mxu0
  %v535 = vadd.f32 0.0, %v534
  %v536 = vpop.f32.mrb[0].mxu0
  %537 = vmatprep.mubr.f32.mxu0 0.0
  %538 = vmatmul.mubr.f32.gmra.mrb[0].mxu0 %v45
  %v539 = vpop.f32.mrb[0].mxu0
  %v540 = vadd.f32 0.0, %v539
  %v541 = vpop.f32.mrb[0].mxu0
  %542 = vmatprep.mubr.f32.mxu0 0.0
  %543 = vmatmul.mubr.f32.gmra.mrb[0].mxu0 %v46
  %v544 = vpop.f32.mrb[0].mxu0
  %v545 = vadd.f32 0.0, %v544
  %v546 = vpop.f32.mrb[0].mxu0
  %547 = vmatprep.mubr.f32.mxu0 0.0
  %548 = vmatmul.mubr.f32.gmra.mrb[0].mxu0 %v47
  %v549 = vpop.f32.mrb[0].mxu0
  %v550 = vadd.f32 0.0, %v549
  %v551 = vpop.f32.mrb[0].mxu0
  %552 = vmatprep.mubr.f32.mxu0 0.0
  %553 = vmatmul.mubr.f32.gmra.mrb[0].mxu0 %v48
  %v554 = vpop.f32.mrb[0].mxu0
  %v555 = vadd.f32 0.0, %v554
  %v556 = vpop.f32.mrb[0].mxu0
  %557 = vmatprep.mubr.f32.mxu0 0.0
  %558 = vmatmul.mubr.f32.gmra.mrb[0].mxu0 %v49
  %v559 = vpop.f32.mrb[0].mxu0
  %v560 = vadd.f32 0.0, %v559
  %v561 = vpop.f32.mrb[0].mxu0
  %562 = vmatprep.mubr.f32.mxu0 0.0
  %563 = vmatmul.mubr.f32.gmra.mrb[0].mxu0 %v50
  %v564 = vpop.f32.mrb[0].mxu0
  %v565 = vadd.f32 0.0, %v564
  %v566 = vpop.f32.mrb[0].mxu0
  %567 = vmatprep.mubr.f32.mxu0 0.0
  %568 = vmatmul.mubr.f32.gmra.mrb[0].mxu0 %v51
  %v569 = vpop.f32.mrb[0].mxu0
  %v570 = vadd.f32 0.0, %v569
  %v571 = vpop.f32.mrb[0].mxu0
  %572 = vmatprep.mubr.f32.mxu0 0.0
  %573 = vmatmul.mubr.f32.gmra.mrb[0].mxu0 %v52
  %v574 = vpop.f32.mrb[0].mxu0
  %v575 = vadd.f32 0.0, %v574
  %v576 = vpop.f32.mrb[0].mxu0
  %577 = vmatprep.mubr.f32.mxu0 0.0
  %578 = vmatmul.mubr.f32.gmra.mrb[0].mxu0 %v53
  %v579 = vpop.f32.mrb[0].mxu0
  %v580 = vadd.f32 0.0, %v579
  %v581 = vpop.f32.mrb[0].mxu0
  %582 = vmatprep.mubr.f32.mxu0 0.0
  %583 = vmatmul.mubr.f32.gmra.mrb[0].mxu0 %v54
  %v584 = vpop.f32.mrb[0].mxu0
  %v585 = vadd.f32 0.0, %v584
  %v586 = vpop.f32.mrb[0].mxu0
  %587 = vmatprep.mubr.f32.mxu0 0.0
  %588 = vmatmul.mubr.f32.gmra.mrb[0].mxu0 %v55
  %v589 = vpop.f32.mrb[0].mxu0
  %v590 = vadd.f32 0.0, %v589
  %v591 = vpop.f32.mrb[0].mxu0
  %592 = vmatprep.mubr.f32.mxu0 0.0
  %593 = vmatmul.mubr.f32.gmra.mrb[0].mxu0 %v56
  %v594 = vpop.f32.mrb[0].mxu0
  %v595 = vadd.f32 0.0, %v594
  %v596 = vpop.f32.mrb[0].mxu0
  %597 = vmatprep.mubr.f32.mxu0 0.0
  %598 = vmatmul.mubr.f32.gmra.mrb[0].mxu0 %v57
  %v599 = vpop.f32.mrb[0].mxu0
  %v600 = vadd.f32 0.0, %v599
  %v601 = vpop.f32.mrb[0].mxu0
  %602 = vmatprep.mubr.f32.mxu0 0.0
  %603 = vmatmul.mubr.f32.gmra.mrb[0].mxu0 %v58
  %v604 = vpop.f32.mrb[0].mxu0
  %v605 = vadd.f32 0.0, %v604
  %v606 = vpop.f32.mrb[0].mxu0
  %607 = vmatprep.mubr.f32.mxu0 0.0
  %608 = vmatmul.mubr.f32.gmra.mrb[0].mxu0 %v59
  %v609 = vpop.f32.mrb[0].mxu0
  %v610 = vadd.f32 0.0, %v609
  %v611 = vpop.f32.mrb[0].mxu0
  %612 = vmatprep.mubr.f32.mxu0 0.0
  %613 = vmatmul.mubr.f32.gmra.mrb[0].mxu0 %v60
  %v614 = vpop.f32.mrb[0].mxu0
  %v615 = vadd.f32 0.0, %v614
  %v616 = vpop.f32.mrb[0].mxu0
  %617 = vmatprep.mubr.f32.mxu0 0.0
  %618 = vmatmul.mubr.f32.gmra.mrb[0].mxu0 %v61
  %v619 = vpop.f32.mrb[0].mxu0
  %v620 = vadd.f32 0.0, %v619
  %v621 = vpop.f32.mrb[0].mxu0
  %622 = vmatprep.mubr.f32.mxu0 0.0
  %623 = vmatmul.mubr.f32.gmra.mrb[0].mxu0 %v62
  %v624 = vpop.f32.mrb[0].mxu0
  %v625 = vadd.f32 0.0, %v624
  %v626 = vpop.f32.mrb[0].mxu0
  %627 = vmatprep.mubr.f32.mxu0 0.0
  %628 = vmatmul.mubr.f32.gmra.mrb[0].mxu0 %v63
  %v629 = vpop.f32.mrb[0].mxu0
  %v630 = vadd.f32 0.0, %v629
  %v631 = vpop.f32.mrb[0].mxu0
  %632 = vmatprep.mubr.f32.mxu0 0.0
  %633 = vmatmul.mubr.f32.gmra.mrb[0].mxu0 %v64
  %v634 = vpop.f32.mrb[0].mxu0
  %v635 = vadd.f32 0.0, %v634
  %v636 = vpop.f32.mrb[0].mxu0
  %637 = vmatprep.mubr.f32.mxu0 0.0
  %638 = vmatmul.mubr.f32.gmra.mrb[0].mxu0 %v65
  %v639 = vpop.f32.mrb[0].mxu0
  %v640 = vadd.f32 0.0, %v639
  %v641 = vpop.f32.mrb[0].mxu0
  %642 = vmatprep.mubr.f32.mxu0 0.0
  %643 = vmatmul.mubr.f32.gmra.mrb[0].mxu0 %v66
  %v644 = vpop.f32.mrb[0].mxu0
  %v645 = vadd.f32 0.0, %v644
  %v646 = vpop.f32.mrb[0].mxu0
  %647 = vmatprep.mubr.f32.mxu0 0.0
  %648 = vmatmul.mubr.f32.gmra.mrb[0].mxu0 %v67
  %v649 = vpop.f32.mrb[0].mxu0
  %v650 = vadd.f32 0.0, %v649
  %v651 = vpop.f32.mrb[0].mxu0
  %652 = vmatprep.mubr.f32.mxu0 0.0
  %653 = vmatmul.mubr.f32.gmra.mrb[0].mxu0 %v68
  %v654 = vpop.f32.mrb[0].mxu0
  %v655 = vadd.f32 0.0, %v654
  %v656 = vpop.f32.mrb[0].mxu0
  %657 = vmatprep.mubr.f32.mxu0 0.0
  %658 = vmatmul.mubr.f32.gmra.mrb[0].mxu0 %v69
  %v659 = vpop.f32.mrb[0].mxu0
  %v660 = vadd.f32 0.0, %v659
  %v661 = vpop.f32.mrb[0].mxu0
  %662 = vmatprep.mubr.f32.mxu0 0.0
  %663 = vmatmul.mubr.f32.gmra.mrb[0].mxu0 %v70
  %v664 = vpop.f32.mrb[0].mxu0
  %v665 = vadd.f32 0.0, %v664
  %v666 = vpop.f32.mrb[0].mxu0
  %667 = vmatprep.mubr.f32.mxu0 0.0
  %668 = vmatmul.mubr.f32.gmra.mrb[0].mxu0 %v71
  %v669 = vpop.f32.mrb[0].mxu0
  %v670 = vadd.f32 0.0, %v669
  %v671 = vpop.f32.mrb[0].mxu0
  %672 = vmatprep.mubr.f32.mxu0 0.0
  %673 = vmatmul.mubr.f32.gmra.mrb[0].mxu0 %v72
  %v674 = vpop.f32.mrb[0].mxu0
  %v675 = vadd.f32 0.0, %v674
  %v676 = vpop.f32.mrb[0].mxu0
  %677 = vmatprep.mubr.f32.mxu0 0.0
  %678 = vmatmul.mubr.f32.gmra.mrb[0].mxu0 %v73
  %v679 = vpop.f32.mrb[0].mxu0
  %v680 = vadd.f32 0.0, %v679
  %v681 = vpop.f32.mrb[0].mxu0
  %682 = vmatprep.mubr.f32.mxu0 0.0
  %683 = vmatmul.mubr.f32.gmra.mrb[0].mxu0 %v74
  %v684 = vpop.f32.mrb[0].mxu0
  %v685 = vadd.f32 0.0, %v684
  %v686 = vpop.f32.mrb[0].mxu0
  %687 = vmatprep.mubr.f32.mxu0 0.0
  %688 = vmatmul.mubr.f32.gmra.mrb[0].mxu0 %v75
  %v689 = vpop.f32.mrb[0].mxu0
  %v690 = vadd.f32 0.0, %v689
  %v691 = vpop.f32.mrb[0].mxu0
  %692 = vmatprep.mubr.f32.mxu0 0.0
  %693 = vmatmul.mubr.f32.gmra.mrb[0].mxu0 %v76
  %v694 = vpop.f32.mrb[0].mxu0
  %v695 = vadd.f32 0.0, %v694
  %v696 = vpop.f32.mrb[0].mxu0
  %697 = vmatprep.mubr.f32.mxu0 0.0
  %698 = vmatmul.mubr.f32.gmra.mrb[0].mxu0 %v77
  %v699 = vpop.f32.mrb[0].mxu0
  %v700 = vadd.f32 0.0, %v699
  %v701 = vpop.f32.mrb[0].mxu0
  %702 = vmatprep.mubr.f32.mxu0 0.0
  %703 = vmatmul.mubr.f32.gmra.mrb[0].mxu0 %v78
  %v704 = vpop.f32.mrb[0].mxu0
  %v705 = vadd.f32 0.0, %v704
  %v706 = vpop.f32.mrb[0].mxu0
  %707 = vmatprep.mubr.f32.mxu0 0.0
  %708 = vmatmul.mubr.f32.gmra.mrb[0].mxu0 %v79
  %v709 = vpop.f32.mrb[0].mxu0
  %v710 = vadd.f32 0.0, %v709
  %v711 = vpop.f32.mrb[0].mxu0
  %712 = vmatprep.mubr.f32.mxu0 0.0
  %713 = vmatmul.mubr.f32.gmra.mrb[0].mxu0 %v80
  %v714 = vpop.f32.mrb[0].mxu0
  %v715 = vadd.f32 0.0, %v714
  %v716 = vpop.f32.mrb[0].mxu0
  %717 = vmatprep.mubr.f32.mxu0 0.0
  %718 = vmatmul.mubr.f32.gmra.mrb[0].mxu0 %v81
  %v719 = vpop.f32.mrb[0].mxu0
  %v720 = vadd.f32 0.0, %v719
  %v721 = vpop.f32.mrb[0].mxu0
  %722 = vmatprep.mubr.f32.mxu0 0.0
  %723 = vmatmul.mubr.f32.gmra.mrb[0].mxu0 %v82
  %v724 = vpop.f32.mrb[0].mxu0
  %v725 = vadd.f32 0.0, %v724
  %v726 = vpop.f32.mrb[0].mxu0
  %727 = vmatprep.mubr.f32.mxu0 0.0
  %728 = vmatmul.mubr.f32.gmra.mrb[0].mxu0 %v83
  %v729 = vpop.f32.mrb[0].mxu0
  %v730 = vadd.f32 0.0, %v729
  %v731 = vpop.f32.mrb[0].mxu0
  %732 = vmatprep.mubr.f32.mxu0 0.0
  %733 = vmatmul.mubr.f32.gmra.mrb[0].mxu0 %v84
  %v734 = vpop.f32.mrb[0].mxu0
  %v735 = vadd.f32 0.0, %v734
  %v736 = vpop.f32.mrb[0].mxu0
  %737 = vmatprep.mubr.f32.mxu0 0.0
  %738 = vmatmul.mubr.f32.gmra.mrb[0].mxu0 %v85
  %v739 = vpop.f32.mrb[0].mxu0
  %v740 = vadd.f32 0.0, %v739
  %v741 = vpop.f32.mrb[0].mxu0
  %742 = vmatprep.mubr.f32.mxu0 0.0
  %743 = vmatmul.mubr.f32.gmra.mrb[0].mxu0 %v86
  %v744 = vpop.f32.mrb[0].mxu0
  %v745 = vadd.f32 0.0, %v744
  %v746 = vpop.f32.mrb[0].mxu0
  %747 = vmatprep.mubr.f32.mxu0 0.0
  %748 = vmatmul.mubr.f32.gmra.mrb[0].mxu0 %v87
  %v749 = vpop.f32.mrb[0].mxu0
  %v750 = vadd.f32 0.0, %v749
  %v751 = vpop.f32.mrb[0].mxu0
  %752 = vmatprep.mubr.f32.mxu0 0.0
  %753 = vmatmul.mubr.f32.gmra.mrb[0].mxu0 %v88
  %v754 = vpop.f32.mrb[0].mxu0
  %v755 = vadd.f32 0.0, %v754
  %v756 = vpop.f32.mrb[0].mxu0
  %757 = vmatprep.mubr.f32.mxu0 0.0
  %758 = vmatmul.mubr.f32.gmra.mrb[0].mxu0 %v89
  %v759 = vpop.f32.mrb[0].mxu0
  %v760 = vadd.f32 0.0, %v759
  %v761 = vpop.f32.mrb[0].mxu0
  %762 = vmatprep.mubr.f32.mxu0 0.0
  %763 = vmatmul.mubr.f32.gmra.mrb[0].mxu0 %v90
  %v764 = vpop.f32.mrb[0].mxu0
  %v765 = vadd.f32 0.0, %v764
  %v766 = vpop.f32.mrb[0].mxu0
  %767 = vmatprep.mubr.f32.mxu0 0.0
  %768 = vmatmul.mubr.f32.gmra.mrb[0].mxu0 %v91
  %v769 = vpop.f32.mrb[0].mxu0
  %v770 = vadd.f32 0.0, %v769
  %v771 = vpop.f32.mrb[0].mxu0
  %772 = vmatprep.mubr.f32.mxu0 0.0
  %773 = vmatmul.mubr.f32.gmra.mrb[0].mxu0 %v92
  %v774 = vpop.f32.mrb[0].mxu0
  %v775 = vadd.f32 0.0, %v774
  %v776 = vpop.f32.mrb[0].mxu0
  %777 = vmatprep.mubr.f32.mxu0 0.0
  %778 = vmatmul.mubr.f32.gmra.mrb[0].mxu0 %v93
  %v779 = vpop.f32.mrb[0].mxu0
  %v780 = vadd.f32 0.0, %v779
  %v781 = vpop.f32.mrb[0].mxu0
  %782 = vmatprep.mubr.f32.mxu0 0.0
  %783 = vmatmul.mubr.f32.gmra.mrb[0].mxu0 %v94
  %v784 = vpop.f32.mrb[0].mxu0
  %v785 = vadd.f32 0.0, %v784
  %v786 = vpop.f32.mrb[0].mxu0
  %787 = vmatprep.mubr.f32.mxu0 0.0
  %788 = vmatmul.mubr.f32.gmra.mrb[0].mxu0 %v95
  %v789 = vpop.f32.mrb[0].mxu0
  %v790 = vadd.f32 0.0, %v789
  %v791 = vpop.f32.mrb[0].mxu0
  %792 = vmatprep.mubr.f32.mxu0 0.0
  %793 = vmatmul.mubr.f32.gmra.mrb[0].mxu0 %v96
  %v794 = vpop.f32.mrb[0].mxu0
  %v795 = vadd.f32 0.0, %v794
  %v796 = vpop.f32.mrb[0].mxu0
  %797 = vmatprep.mubr.f32.mxu0 0.0
  %798 = vmatmul.mubr.f32.gmra.mrb[0].mxu0 %v97
  %v799 = vpop.f32.mrb[0].mxu0
  %v800 = vadd.f32 0.0, %v799
  %v801 = vpop.f32.mrb[0].mxu0
  %802 = vmatprep.mubr.f32.mxu0 0.0
  %803 = vmatmul.mubr.f32.gmra.mrb[0].mxu0 %v98
  %v804 = vpop.f32.mrb[0].mxu0
  %v805 = vadd.f32 0.0, %v804
  %v806 = vpop.f32.mrb[0].mxu0
  %807 = vmatprep.mubr.f32.mxu0 0.0
  %808 = vmatmul.mubr.f32.gmra.mrb[0].mxu0 %v99
  %v809 = vpop.f32.mrb[0].mxu0
  %v810 = vadd.f32 0.0, %v809
  %v811 = vpop.f32.mrb[0].mxu0
  %812 = vmatprep.mubr.f32.mxu0 0.0
  %813 = vmatmul.mubr.f32.gmra.mrb[0].mxu0 %v100
  %v814 = vpop.f32.mrb[0].mxu0
  %v815 = vadd.f32 0.0, %v814
  %v816 = vpop.f32.mrb[0].mxu0
  %817 = vmatprep.mubr.f32.mxu0 0.0
  %818 = vmatmul.mubr.f32.gmra.mrb[0].mxu0 %v101
  %v819 = vpop.f32.mrb[0].mxu0
  %v820 = vadd.f32 0.0, %v819
  %v821 = vpop.f32.mrb[0].mxu0
  %822 = vmatprep.mubr.f32.mxu0 0.0
  %823 = vmatmul.mubr.f32.gmra.mrb[0].mxu0 %v102
  %v824 = vpop.f32.mrb[0].mxu0
  %v825 = vadd.f32 0.0, %v824
  %v826 = vpop.f32.mrb[0].mxu0
  %827 = vmatprep.mubr.f32.mxu0 0.0
  %828 = vmatmul.mubr.f32.gmra.mrb[0].mxu0 %v103
  %v829 = vpop.f32.mrb[0].mxu0
  %v830 = vadd.f32 0.0, %v829
  %v831 = vpop.f32.mrb[0].mxu0
  %832 = vmatprep.mubr.f32.mxu0 0.0
  %833 = vmatmul.mubr.f32.gmra.mrb[0].mxu0 %v104
  %v834 = vpop.f32.mrb[0].mxu0
  %v835 = vadd.f32 0.0, %v834
  %v836 = vpop.f32.mrb[0].mxu0
  %837 = vmatprep.mubr.f32.mxu0 0.0
  %838 = vmatmul.mubr.f32.gmra.mrb[0].mxu0 %v105
  %v839 = vpop.f32.mrb[0].mxu0
  %v840 = vadd.f32 0.0, %v839
  %v841 = vpop.f32.mrb[0].mxu0
  %842 = vmatprep.mubr.f32.mxu0 0.0
  %843 = vmatmul.mubr.f32.gmra.mrb[0].mxu0 %v106
  %v844 = vpop.f32.mrb[0].mxu0
  %v845 = vadd.f32 0.0, %v844
  %v846 = vpop.f32.mrb[0].mxu0
  %847 = vmatprep.mubr.f32.mxu0 0.0
  %848 = vmatmul.mubr.f32.gmra.mrb[0].mxu0 %v107
  %v849 = vpop.f32.mrb[0].mxu0
  %v850 = vadd.f32 0.0, %v849
  %v851 = vpop.f32.mrb[0].mxu0
  %852 = vmatprep.mubr.f32.mxu0 0.0
  %853 = vmatmul.mubr.f32.gmra.mrb[0].mxu0 %v108
  %v854 = vpop.f32.mrb[0].mxu0
  %v855 = vadd.f32 0.0, %v854
  %v856 = vpop.f32.mrb[0].mxu0
  %857 = vmatprep.mubr.f32.mxu0 0.0
  %858 = vmatmul.mubr.f32.gmra.mrb[0].mxu0 %v109
  %v859 = vpop.f32.mrb[0].mxu0
  %v860 = vadd.f32 0.0, %v859
  %v861 = vpop.f32.mrb[0].mxu0
  %862 = vmatprep.mubr.f32.mxu0 0.0
  %863 = vmatmul.mubr.f32.gmra.mrb[0].mxu0 %v110
  %v864 = vpop.f32.mrb[0].mxu0
  %v865 = vadd.f32 0.0, %v864
  %v866 = vpop.f32.mrb[0].mxu0
  %867 = vmatprep.mubr.f32.mxu0 0.0
  %868 = vmatmul.mubr.f32.gmra.mrb[0].mxu0 %v111
  %v869 = vpop.f32.mrb[0].mxu0
  %v870 = vadd.f32 0.0, %v869
  %v871 = vpop.f32.mrb[0].mxu0
  %872 = vmatprep.mubr.f32.mxu0 0.0
  %873 = vmatmul.mubr.f32.gmra.mrb[0].mxu0 %v112
  %v874 = vpop.f32.mrb[0].mxu0
  %v875 = vadd.f32 0.0, %v874
  %v876 = vpop.f32.mrb[0].mxu0
  %877 = vmatprep.mubr.f32.mxu0 0.0
  %878 = vmatmul.mubr.f32.gmra.mrb[0].mxu0 %v113
  %v879 = vpop.f32.mrb[0].mxu0
  %v880 = vadd.f32 0.0, %v879
  %v881 = vpop.f32.mrb[0].mxu0
  %882 = vmatprep.mubr.f32.mxu0 0.0
  %883 = vmatmul.mubr.f32.gmra.mrb[0].mxu0 %v114
  %v884 = vpop.f32.mrb[0].mxu0
  %v885 = vadd.f32 0.0, %v884
  %v886 = vpop.f32.mrb[0].mxu0
  %887 = vmatprep.mubr.f32.mxu0 0.0
  %888 = vmatmul.mubr.f32.gmra.mrb[0].mxu0 %v115
  %v889 = vpop.f32.mrb[0].mxu0
  %v890 = vadd.f32 0.0, %v889
  %v891 = vpop.f32.mrb[0].mxu0
  %892 = vmatprep.mubr.f32.mxu0 0.0
  %893 = vmatmul.mubr.f32.gmra.mrb[0].mxu0 %v116
  %v894 = vpop.f32.mrb[0].mxu0
  %v895 = vadd.f32 0.0, %v894
  %v896 = vpop.f32.mrb[0].mxu0
  %897 = vmatprep.mubr.f32.mxu0 0.0
  %898 = vmatmul.mubr.f32.gmra.mrb[0].mxu0 %v117
  %v899 = vpop.f32.mrb[0].mxu0
  %v900 = vadd.f32 0.0, %v899
  %v901 = vpop.f32.mrb[0].mxu0
  %902 = vmatprep.mubr.f32.mxu0 0.0
  %903 = vmatmul.mubr.f32.gmra.mrb[0].mxu0 %v118
  %v904 = vpop.f32.mrb[0].mxu0
  %v905 = vadd.f32 0.0, %v904
  %v906 = vpop.f32.mrb[0].mxu0
  %907 = vmatprep.mubr.f32.mxu0 0.0
  %908 = vmatmul.mubr.f32.gmra.mrb[0].mxu0 %v119
  %v909 = vpop.f32.mrb[0].mxu0
  %v910 = vadd.f32 0.0, %v909
  %v911 = vpop.f32.mrb[0].mxu0
  %912 = vmatprep.mubr.f32.mxu0 0.0
  %913 = vmatmul.mubr.f32.gmra.mrb[0].mxu0 %v120
  %v914 = vpop.f32.mrb[0].mxu0
  %v915 = vadd.f32 0.0, %v914
  %v916 = vpop.f32.mrb[0].mxu0
  %917 = vmatprep.mubr.f32.mxu0 0.0
  %918 = vmatmul.mubr.f32.gmra.mrb[0].mxu0 %v121
  %v919 = vpop.f32.mrb[0].mxu0
  %v920 = vadd.f32 0.0, %v919
  %v921 = vpop.f32.mrb[0].mxu0
  %922 = vmatprep.mubr.f32.mxu0 0.0
  %923 = vmatmul.mubr.f32.gmra.mrb[0].mxu0 %v122
  %v924 = vpop.f32.mrb[0].mxu0
  %v925 = vadd.f32 0.0, %v924
  %v926 = vpop.f32.mrb[0].mxu0
  %927 = vmatprep.mubr.f32.mxu0 0.0
  %928 = vmatmul.mubr.f32.gmra.mrb[0].mxu0 %v123
  %v929 = vpop.f32.mrb[0].mxu0
  %v930 = vadd.f32 0.0, %v929
  %v931 = vpop.f32.mrb[0].mxu0
  %932 = vmatprep.mubr.f32.mxu0 0.0
  %933 = vmatmul.mubr.f32.gmra.mrb[0].mxu0 %v124
  %v934 = vpop.f32.mrb[0].mxu0
  %v935 = vadd.f32 0.0, %v934
  %v936 = vpop.f32.mrb[0].mxu0
  %937 = vmatprep.mubr.f32.mxu0 0.0
  %938 = vmatmul.mubr.f32.gmra.mrb[0].mxu0 %v125
  %v939 = vpop.f32.mrb[0].mxu0
  %v940 = vadd.f32 0.0, %v939
  %v941 = vpop.f32.mrb[0].mxu0
  %942 = vmatprep.mubr.f32.mxu0 0.0
  %943 = vmatmul.mubr.f32.gmra.mrb[0].mxu0 %v126
  %v944 = vpop.f32.mrb[0].mxu0
  %v945 = vadd.f32 0.0, %v944
  %v946 = vpop.f32.mrb[0].mxu0
  %947 = vmatprep.mubr.f32.mxu0 0.0
  %948 = vmatmul.mubr.f32.gmra.mrb[0].mxu0 %v127
  %v949 = vpop.f32.mrb[0].mxu0
  %v950 = vadd.f32 0.0, %v949
  %v951 = vpop.f32.mrb[0].mxu0
  %952 = vmatprep.mubr.f32.mxu0 0.0
  %953 = vmatmul.mubr.f32.gmra.mrb[0].mxu0 %v128
  %v954 = vpop.f32.mrb[0].mxu0
  %v955 = vadd.f32 0.0, %v954
  %v956 = vpop.f32.mrb[0].mxu0
  %957 = vmatprep.mubr.f32.mxu0 0.0
  %958 = vmatmul.mubr.f32.gmra.mrb[0].mxu0 %v129
  %v959 = vpop.f32.mrb[0].mxu0
  %v960 = vadd.f32 0.0, %v959
  %v961 = vpop.f32.mrb[0].mxu0
  %962 = vmatprep.mubr.f32.mxu0 0.0
  %963 = vmatmul.mubr.f32.gmra.mrb[0].mxu0 %v130
  %v964 = vpop.f32.mrb[0].mxu0
  %v965 = vadd.f32 0.0, %v964
  %v966 = vpop.f32.mrb[0].mxu0
  %967 = vmatprep.mubr.f32.mxu0 0.0
  %968 = vmatmul.mubr.f32.gmra.mrb[0].mxu0 %v131
  %v969 = vpop.f32.mrb[0].mxu0
  %v970 = vadd.f32 0.0, %v969
  %v971 = vpop.f32.mrb[0].mxu0
  %972 = vmatprep.mubr.f32.mxu0 0.0
  %973 = vmatmul.mubr.f32.gmra.mrb[0].mxu0 %v132
  %v974 = vpop.f32.mrb[0].mxu0
  %v975 = vadd.f32 0.0, %v974
  %v976 = vpop.f32.mrb[0].mxu0
  %977 = vmatprep.mubr.f32.mxu0 0.0
  %978 = vmatmul.mubr.f32.gmra.mrb[0].mxu0 %v133
  %v979 = vpop.f32.mrb[0].mxu0
  %v980 = vadd.f32 0.0, %v979
  %v981 = vpop.f32.mrb[0].mxu0
  %982 = vmatprep.mubr.f32.mxu0 0.0
  %983 = vmatmul.mubr.f32.gmra.mrb[0].mxu0 %v134
  %v984 = vpop.f32.mrb[0].mxu0
  %v985 = vadd.f32 0.0, %v984
  %v986 = vpop.f32.mrb[0].mxu0
  %987 = vmatprep.mubr.f32.mxu0 0.0
  %988 = vmatmul.mubr.f32.gmra.mrb[0].mxu0 %v135
  %v989 = vpop.f32.mrb[0].mxu0
  %v990 = vadd.f32 0.0, %v989
  %v991 = vpop.f32.mrb[0].mxu0
  %992 = vmatprep.mubr.f32.mxu0 0.0
  %993 = vmatmul.mubr.f32.gmra.mrb[0].mxu0 %v136
  %v994 = vpop.f32.mrb[0].mxu0
  %v995 = vadd.f32 0.0, %v994
  %v996 = vpop.f32.mrb[0].mxu0
  %997 = vmatprep.mubr.f32.mxu0 0.0
  %998 = vmatmul.mubr.f32.gmra.mrb[0].mxu0 %v137
  %v999 = vpop.f32.mrb[0].mxu0
  %v1000 = vadd.f32 0.0, %v999
  %v1001 = vpop.f32.mrb[0].mxu0
  %1002 = vmatprep.mubr.f32.mxu0 0.0
  %1003 = vmatmul.mubr.f32.gmra.mrb[0].mxu0 %v138
  %v1004 = vpop.f32.mrb[0].mxu0
  %v1005 = vadd.f32 0.0, %v1004
  %v1006 = vpop.f32.mrb[0].mxu0
  %1007 = vmatprep.mubr.f32.mxu0 0.0
  %1008 = vmatmul.mubr.f32.gmra.mrb[0].mxu0 %v139
  %v1009 = vpop.f32.mrb[0].mxu0
  %v1010 = vadd.f32 0.0, %v1009
  %v1011 = vpop.f32.mrb[0].mxu0
  %1012 = vmatprep.mubr.f32.mxu0 0.0
  %1013 = vmatmul.mubr.f32.gmra.mrb[0].mxu0 %v140
  %v1014 = vpop.f32.mrb[0].mxu0
  %v1015 = vadd.f32 0.0, %v1014
  %v1016 = vpop.f32.mrb[0].mxu0
  %1017 = vmatprep.mubr.f32.mxu0 0.0
  %1018 = vmatmul.mubr.f32.gmra.mrb[0].mxu0 %v141
  %v1019 = vpop.f32.mrb[0].mxu0
  %v1020 = vadd.f32 0.0, %v1019
  %v1021 = vpop.f32.mrb[0].mxu0
  %1022 = vmatprep.mubr.f32.mxu0 0.0
  %1023 = vmatmul.mubr.f32.gmra.mrb[0].mxu0 %v142
  %v1024 = vpop.f32.mrb[0].mxu0
  %v1025 = vadd.f32 0.0, %v1024
  %v1026 = vpop.f32.mrb[0].mxu0
  %1027 = vmatprep.mubr.f32.mxu0 0.0
  %1028 = vmatmul.mubr.f32.gmra.mrb[0].mxu0 %v143
  %v1029 = vpop.f32.mrb[0].mxu0
  %v1030 = vadd.f32 0.0, %v1029
  %v1031 = vpop.f32.mrb[0].mxu0
  %1032 = vmatprep.mubr.f32.mxu0 0.0
  %1033 = vmatmul.mubr.f32.gmra.mrb[0].mxu0 %v144
  %v1034 = vpop.f32.mrb[0].mxu0
  %v1035 = vadd.f32 0.0, %v1034
  %v1036 = vpop.f32.mrb[0].mxu0
  %1037 = vmatprep.mubr.f32.mxu0 0.0
  %1038 = vmatmul.mubr.f32.gmra.mrb[0].mxu0 %v145
  %v1039 = vpop.f32.mrb[0].mxu0
  %v1040 = vadd.f32 0.0, %v1039
  %v1041 = vpop.f32.mrb[0].mxu0
  %1042 = vmatprep.mubr.f32.mxu0 0.0
  %1043 = vmatmul.mubr.f32.gmra.mrb[0].mxu0 %v146
  %v1044 = vpop.f32.mrb[0].mxu0
  %v1045 = vadd.f32 0.0, %v1044
  %v1046 = vpop.f32.mrb[0].mxu0
  %1047 = vmatprep.mubr.f32.mxu0 0.0
  %1048 = vmatmul.mubr.f32.gmra.mrb[0].mxu0 %v147
  %v1049 = vpop.f32.mrb[0].mxu0
  %v1050 = vadd.f32 0.0, %v1049
  %v1051 = vpop.f32.mrb[0].mxu0
  %1052 = vmatprep.mubr.f32.mxu0 0.0
  %1053 = vmatmul.mubr.f32.gmra.mrb[0].mxu0 %v148
  %v1054 = vpop.f32.mrb[0].mxu0
  %v1055 = vadd.f32 0.0, %v1054
  %v1056 = vpop.f32.mrb[0].mxu0
  %1057 = vmatprep.mubr.f32.mxu0 0.0
  %1058 = vmatmul.mubr.f32.gmra.mrb[0].mxu0 %v149
  %v1059 = vpop.f32.mrb[0].mxu0
  %v1060 = vadd.f32 0.0, %v1059
  %v1061 = vpop.f32.mrb[0].mxu0
  %1062 = vmatprep.mubr.f32.mxu0 0.0
  %1063 = vmatmul.mubr.f32.gmra.mrb[0].mxu0 %v150
  %v1064 = vpop.f32.mrb[0].mxu0
  %v1065 = vadd.f32 0.0, %v1064
  %v1066 = vpop.f32.mrb[0].mxu0
  %1067 = vmatprep.mubr.f32.mxu0 0.0
  %1068 = vmatmul.mubr.f32.gmra.mrb[0].mxu0 %v151
  %v1069 = vpop.f32.mrb[0].mxu0
  %v1070 = vadd.f32 0.0, %v1069
  %v1071 = vpop.f32.mrb[0].mxu0
  %1072 = vmatprep.mubr.f32.mxu0 0.0
  %1073 = vmatmul.mubr.f32.gmra.mrb[0].mxu0 %v152
  %v1074 = vpop.f32.mrb[0].mxu0
  %v1075 = vadd.f32 0.0, %v1074
  %v1076 = vpop.f32.mrb[0].mxu0
  %1077 = vmatprep.mubr.f32.mxu0 0.0
  %1078 = vmatmul.mubr.f32.gmra.mrb[0].mxu0 %v153
  %v1079 = vpop.f32.mrb[0].mxu0
  %v1080 = vadd.f32 0.0, %v1079
  %v1081 = vpop.f32.mrb[0].mxu0
  %1082 = vmatprep.mubr.f32.mxu0 0.0
  %1083 = vmatmul.mubr.f32.gmra.mrb[0].mxu0 %v154
  %v1084 = vpop.f32.mrb[0].mxu0
  %v1085 = vadd.f32 0.0, %v1084
  %v1086 = vpop.f32.mrb[0].mxu0
  %1087 = vmatprep.mubr.f32.mxu0 0.0
  %1088 = vmatmul.mubr.f32.gmra.mrb[0].mxu0 %v155
  %v1089 = vpop.f32.mrb[0].mxu0
  %v1090 = vadd.f32 0.0, %v1089
  %v1091 = vpop.f32.mrb[0].mxu0
  %1092 = vmatprep.mubr.f32.mxu0 0.0
  %1093 = vmatmul.mubr.f32.gmra.mrb[0].mxu0 %v156
  %v1094 = vpop.f32.mrb[0].mxu0
  %v1095 = vadd.f32 0.0, %v1094
  %v1096 = vpop.f32.mrb[0].mxu0
  %1097 = vmatprep.mubr.f32.mxu0 0.0
  %1098 = vmatmul.mubr.f32.gmra.mrb[0].mxu0 %v157
  %v1099 = vpop.f32.mrb[0].mxu0
  %v1100 = vadd.f32 0.0, %v1099
  %v1101 = vpop.f32.mrb[0].mxu0
  %1102 = vmatprep.mubr.f32.mxu0 0.0
  %1103 = vmatmul.mubr.f32.gmra.mrb[0].mxu0 %v158
  %v1104 = vpop.f32.mrb[0].mxu0
  %v1105 = vadd.f32 0.0, %v1104
  %v1106 = vpop.f32.mrb[0].mxu0
  %1107 = vmatprep.mubr.f32.mxu0 0.0
  %1108 = vmatmul.mubr.f32.gmra.mrb[0].mxu0 %v159
  %v1109 = vpop.f32.mrb[0].mxu0
  %v1110 = vadd.f32 0.0, %v1109
  %v1111 = vpop.f32.mrb[0].mxu0
  %1112 = vmatprep.mubr.f32.mxu0 0.0
  %1113 = vmatmul.mubr.f32.gmra.mrb[0].mxu0 %v160
  %v1114 = vpop.f32.mrb[0].mxu0
  %v1115 = vadd.f32 0.0, %v1114
  %v1116 = vpop.f32.mrb[0].mxu0
  %1117 = vmatprep.mubr.f32.mxu0 0.0
  %1118 = vmatmul.mubr.f32.gmra.mrb[0].mxu0 %v161
  %v1119 = vpop.f32.mrb[0].mxu0
  %v1120 = vadd.f32 0.0, %v1119
  %v1121 = vpop.f32.mrb[0].mxu0
  %1122 = vmatprep.mubr.f32.mxu0 0.0
  %1123 = vmatmul.mubr.f32.gmra.mrb[0].mxu0 %v162
  %v1124 = vpop.f32.mrb[0].mxu0
  %v1125 = vadd.f32 0.0, %v1124
  %v1126 = vpop.f32.mrb[0].mxu0
  %1127 = vmatprep.mubr.f32.mxu0 0.0
  %1128 = vmatmul.mubr.f32.gmra.mrb[0].mxu0 %v163
  %v1129 = vpop.f32.mrb[0].mxu0
  %v1130 = vadd.f32 0.0, %v1129
  %v1131 = vpop.f32.mrb[0].mxu0
  %1132 = vmatprep.mubr.f32.mxu0 0.0
  %1133 = vmatmul.mubr.f32.gmra.mrb[0].mxu0 %v164
  %v1134 = vpop.f32.mrb[0].mxu0
  %v1135 = vadd.f32 0.0, %v1134
  %v1136 = vpop.f32.mrb[0].mxu0
  %1137 = vmatprep.mubr.f32.mxu0 0.0
  %1138 = vmatmul.mubr.f32.gmra.mrb[0].mxu0 %v165
  %v1139 = vpop.f32.mrb[0].mxu0
  %v1140 = vadd.f32 0.0, %v1139
  %v1141 = vpop.f32.mrb[0].mxu0
  %1142 = vmatprep.mubr.f32.mxu0 0.0
  %1143 = vmatmul.mubr.f32.gmra.mrb[0].mxu0 %v166
  %v1144 = vpop.f32.mrb[0].mxu0
  %v1145 = vadd.f32 0.0, %v1144
  %v1146 = vpop.f32.mrb[0].mxu0
  %1147 = vmatprep.mubr.f32.mxu0 0.0
  %1148 = vmatmul.mubr.f32.gmra.mrb[0].mxu0 %v167
  %v1149 = vpop.f32.mrb[0].mxu0
  %v1150 = vadd.f32 0.0, %v1149
  %v1151 = vpop.f32.mrb[0].mxu0
  %1152 = vmatprep.mubr.f32.mxu0 0.0
  %1153 = vmatmul.mubr.f32.gmra.mrb[0].mxu0 %v168
  %v1154 = vpop.f32.mrb[0].mxu0
  %v1155 = vadd.f32 0.0, %v1154
  %v1156 = vpop.f32.mrb[0].mxu0
  %1157 = vmatprep.mubr.f32.mxu0 0.0
  %1158 = vmatmul.mubr.f32.gmra.mrb[0].mxu0 %v169
  %v1159 = vpop.f32.mrb[0].mxu0
  %v1160 = vadd.f32 0.0, %v1159
  %v1161 = vpop.f32.mrb[0].mxu0
  %1162 = vmatprep.mubr.f32.mxu0 0.0
  %1163 = vmatmul.mubr.f32.gmra.mrb[0].mxu0 %v170
  %v1164 = vpop.f32.mrb[0].mxu0
  %v1165 = vadd.f32 0.0, %v1164
  %v1166 = vpop.f32.mrb[0].mxu0
  %1167 = vmatprep.mubr.f32.mxu0 0.0
  %1168 = vmatmul.mubr.f32.gmra.mrb[0].mxu0 %v171
  %v1169 = vpop.f32.mrb[0].mxu0
  %v1170 = vadd.f32 0.0, %v1169
  %v1171 = vpop.f32.mrb[0].mxu0
  %1172 = vmatprep.mubr.f32.mxu0 0.0
  %1173 = vmatmul.mubr.f32.gmra.mrb[0].mxu0 %v172
  %v1174 = vpop.f32.mrb[0].mxu0
  %v1175 = vadd.f32 0.0, %v1174
  %v1176 = vpop.f32.mrb[0].mxu0
  %1177 = vmatprep.mubr.f32.mxu0 0.0
  %1178 = vmatmul.mubr.f32.gmra.mrb[0].mxu0 %v173
  %v1179 = vpop.f32.mrb[0].mxu0
  %v1180 = vadd.f32 0.0, %v1179
  %v1181 = vpop.f32.mrb[0].mxu0
  %1182 = vmatprep.mubr.f32.mxu0 0.0
  %1183 = vmatmul.mubr.f32.gmra.mrb[0].mxu0 %v174
  %v1184 = vpop.f32.mrb[0].mxu0
  %v1185 = vadd.f32 0.0, %v1184
  %v1186 = vpop.f32.mrb[0].mxu0
  %1187 = vmatprep.mubr.f32.mxu0 0.0
  %1188 = vmatmul.mubr.f32.gmra.mrb[0].mxu0 %v175
  %v1189 = vpop.f32.mrb[0].mxu0
  %v1190 = vadd.f32 0.0, %v1189
  %v1191 = vpop.f32.mrb[0].mxu0
  %1192 = vmatprep.mubr.f32.mxu0 0.0
  %1193 = vmatmul.mubr.f32.gmra.mrb[0].mxu0 %v176
  %v1194 = vpop.f32.mrb[0].mxu0
  %v1195 = vadd.f32 0.0, %v1194
  %v1196 = vpop.f32.mrb[0].mxu0
  %1197 = vmatprep.mubr.f32.mxu0 0.0
  %1198 = vmatmul.mubr.f32.gmra.mrb[0].mxu0 %v177
  %v1199 = vpop.f32.mrb[0].mxu0
  %v1200 = vadd.f32 0.0, %v1199
  %v1201 = vpop.f32.mrb[0].mxu0
  %1202 = vmatprep.mubr.f32.mxu0 0.0
  %1203 = vmatmul.mubr.f32.gmra.mrb[0].mxu0 %v178
  %v1204 = vpop.f32.mrb[0].mxu0
  %v1205 = vadd.f32 0.0, %v1204
  %v1206 = vpop.f32.mrb[0].mxu0
  %1207 = vmatprep.mubr.f32.mxu0 0.0
  %1208 = vmatmul.mubr.f32.gmra.mrb[0].mxu0 %v179
  %v1209 = vpop.f32.mrb[0].mxu0
  %v1210 = vadd.f32 0.0, %v1209
  %v1211 = vpop.f32.mrb[0].mxu0
  %1212 = vmatprep.mubr.f32.mxu0 0.0
  %1213 = vmatmul.mubr.f32.gmra.mrb[0].mxu0 %v180
  %v1214 = vpop.f32.mrb[0].mxu0
  %v1215 = vadd.f32 0.0, %v1214
  %v1216 = vpop.f32.mrb[0].mxu0
  %1217 = vmatprep.mubr.f32.mxu0 0.0
  %1218 = vmatmul.mubr.f32.gmra.mrb[0].mxu0 %v181
  %v1219 = vpop.f32.mrb[0].mxu0
  %v1220 = vadd.f32 0.0, %v1219
  %v1221 = vpop.f32.mrb[0].mxu0
  %1222 = vmatprep.mubr.f32.mxu0 0.0
  %1223 = vmatmul.mubr.f32.gmra.mrb[0].mxu0 %v182
  %v1224 = vpop.f32.mrb[0].mxu0
  %v1225 = vadd.f32 0.0, %v1224
  %v1226 = vpop.f32.mrb[0].mxu0
  %1227 = vmatprep.mubr.f32.mxu0 0.0
  %1228 = vmatmul.mubr.f32.gmra.mrb[0].mxu0 %v183
  %v1229 = vpop.f32.mrb[0].mxu0
  %v1230 = vadd.f32 0.0, %v1229
  %v1231 = vpop.f32.mrb[0].mxu0
  %1232 = vmatprep.mubr.f32.mxu0 0.0
  %1233 = vmatmul.mubr.f32.gmra.mrb[0].mxu0 %v184
  %v1234 = vpop.f32.mrb[0].mxu0
  %v1235 = vadd.f32 0.0, %v1234
  %v1236 = vpop.f32.mrb[0].mxu0
  %1237 = vmatprep.mubr.f32.mxu0 0.0
  %1238 = vmatmul.mubr.f32.gmra.mrb[0].mxu0 %v185
  %v1239 = vpop.f32.mrb[0].mxu0
  %v1240 = vadd.f32 0.0, %v1239
  %v1241 = vpop.f32.mrb[0].mxu0
  %1242 = vmatprep.mubr.f32.mxu0 0.0
  %1243 = vmatmul.mubr.f32.gmra.mrb[0].mxu0 %v186
  %v1244 = vpop.f32.mrb[0].mxu0
  %v1245 = vadd.f32 0.0, %v1244
  %v1246 = vpop.f32.mrb[0].mxu0
  %1247 = vmatprep.mubr.f32.mxu0 0.0
  %1248 = vmatmul.mubr.f32.gmra.mrb[0].mxu0 %v187
  %v1249 = vpop.f32.mrb[0].mxu0
  %v1250 = vadd.f32 0.0, %v1249
  %v1251 = vpop.f32.mrb[0].mxu0
  %1252 = vmatprep.mubr.f32.mxu0 0.0
  %1253 = vmatmul.mubr.f32.gmra.mrb[0].mxu0 %v188
  %v1254 = vpop.f32.mrb[0].mxu0
  %v1255 = vadd.f32 0.0, %v1254
  %v1256 = vpop.f32.mrb[0].mxu0
  %1257 = vmatprep.mubr.f32.mxu0 0.0
  %1258 = vmatmul.mubr.f32.gmra.mrb[0].mxu0 %v189
  %v1259 = vpop.f32.mrb[0].mxu0
  %v1260 = vadd.f32 0.0, %v1259
  %v1261 = vpop.f32.mrb[0].mxu0
  %1262 = vmatprep.mubr.f32.mxu0 0.0
  %1263 = vmatmul.mubr.f32.gmra.mrb[0].mxu0 %v190
  %v1264 = vpop.f32.mrb[0].mxu0
  %v1265 = vadd.f32 0.0, %v1264
  %v1266 = vpop.f32.mrb[0].mxu0
  %1267 = vmatprep.mubr.f32.mxu0 0.0
  %1268 = vmatmul.mubr.f32.gmra.mrb[0].mxu0 %v191
  %v1269 = vpop.f32.mrb[0].mxu0
  %v1270 = vadd.f32 0.0, %v1269
  %v1271 = vpop.f32.mrb[0].mxu0
  %1272 = vmatprep.mubr.f32.mxu0 0.0
  %1273 = vmatmul.mubr.f32.gmra.mrb[0].mxu0 %v192
  %v1274 = vpop.f32.mrb[0].mxu0
  %v1275 = vadd.f32 0.0, %v1274
  %v1276 = vpop.f32.mrb[0].mxu0
  %1277 = vmatprep.mubr.f32.mxu0 0.0
  %1278 = vmatmul.mubr.f32.gmra.mrb[0].mxu0 %v193
  %v1279 = vpop.f32.mrb[0].mxu0
  %v1280 = vadd.f32 0.0, %v1279
  %v1281 = vpop.f32.mrb[0].mxu0
  %1282 = vmatprep.mubr.f32.mxu0 0.0
  %1283 = vmatmul.mubr.f32.gmra.mrb[0].mxu0 %v194
  %v1284 = vpop.f32.mrb[0].mxu0
  %v1285 = vadd.f32 0.0, %v1284
  %v1286 = vpop.f32.mrb[0].mxu0
  %1287 = vmatprep.mubr.f32.mxu0 0.0
  %1288 = vmatmul.mubr.f32.gmra.mrb[0].mxu0 %v195
  %v1289 = vpop.f32.mrb[0].mxu0
  %v1290 = vadd.f32 0.0, %v1289
  %v1291 = vpop.f32.mrb[0].mxu0
  %1292 = vmatprep.mubr.f32.mxu0 0.0
  %1293 = vmatmul.mubr.f32.gmra.mrb[0].mxu0 %v196
  %v1294 = vpop.f32.mrb[0].mxu0
  %v1295 = vadd.f32 0.0, %v1294
  %v1296 = vpop.f32.mrb[0].mxu0
  %1297 = vmatprep.mubr.f32.mxu0 0.0
  %1298 = vmatmul.mubr.f32.gmra.mrb[0].mxu0 %v197
  %v1299 = vpop.f32.mrb[0].mxu0
  %v1300 = vadd.f32 0.0, %v1299
  %v1301 = vpop.f32.mrb[0].mxu0
  %1302 = vmatprep.mubr.f32.mxu0 0.0
  %1303 = vmatmul.mubr.f32.gmra.mrb[0].mxu0 %v198
  %v1304 = vpop.f32.mrb[0].mxu0
  %v1305 = vadd.f32 0.0, %v1304
  %v1306 = vpop.f32.mrb[0].mxu0
  %1307 = vmatprep.mubr.f32.mxu0 0.0
  %1308 = vmatmul.mubr.f32.gmra.mrb[0].mxu0 %v199
  %v1309 = vpop.f32.mrb[0].mxu0
  %v1310 = vadd.f32 0.0, %v1309
  %v1311 = vpop.f32.mrb[0].mxu0
  %1312 = vmatprep.mubr.f32.mxu0 0.0
  %1313 = vmatmul.mubr.f32.gmra.mrb[0].mxu0 %v200
  %v1314 = vpop.f32.mrb[0].mxu0
  %v1315 = vadd.f32 0.0, %v1314
  %v1316 = vpop.f32.mrb[0].mxu0
  %1317 = vmatprep.mubr.f32.mxu0 0.0
  %1318 = vmatmul.mubr.f32.gmra.mrb[0].mxu0 %v201
  %v1319 = vpop.f32.mrb[0].mxu0
  %v1320 = vadd.f32 0.0, %v1319
  %v1321 = vpop.f32.mrb[0].mxu0
  %1322 = vmatprep.mubr.f32.mxu0 0.0
  %1323 = vmatmul.mubr.f32.gmra.mrb[0].mxu0 %v202
  %v1324 = vpop.f32.mrb[0].mxu0
  %v1325 = vadd.f32 0.0, %v1324
  %v1326 = vpop.f32.mrb[0].mxu0
  %1327 = vmatprep.mubr.f32.mxu0 0.0
  %1328 = vmatmul.mubr.f32.gmra.mrb[0].mxu0 %v203
  %v1329 = vpop.f32.mrb[0].mxu0
  %v1330 = vadd.f32 0.0, %v1329
  %v1331 = vpop.f32.mrb[0].mxu0
  %1332 = vmatprep.mubr.f32.mxu0 0.0
  %1333 = vmatmul.mubr.f32.gmra.mrb[0].mxu0 %v204
  %v1334 = vpop.f32.mrb[0].mxu0
  %v1335 = vadd.f32 0.0, %v1334
  %v1336 = vpop.f32.mrb[0].mxu0
  %1337 = vmatprep.mubr.f32.mxu0 0.0
  %1338 = vmatmul.mubr.f32.gmra.mrb[0].mxu0 %v205
  %v1339 = vpop.f32.mrb[0].mxu0
  %v1340 = vadd.f32 0.0, %v1339
  %v1341 = vpop.f32.mrb[0].mxu0
  %1342 = vmatprep.mubr.f32.mxu0 0.0
  %1343 = vmatmul.mubr.f32.gmra.mrb[0].mxu0 %v206
  %v1344 = vpop.f32.mrb[0].mxu0
  %v1345 = vadd.f32 0.0, %v1344
  %v1346 = vpop.f32.mrb[0].mxu0
  %1347 = vmatprep.mubr.f32.mxu0 0.0
  %1348 = vmatmul.mubr.f32.gmra.mrb[0].mxu0 %v207
  %v1349 = vpop.f32.mrb[0].mxu0
  %v1350 = vadd.f32 0.0, %v1349
  %v1351 = vpop.f32.mrb[0].mxu0
  %1352 = vmatprep.mubr.f32.mxu0 0.0
  %1353 = vmatmul.mubr.f32.gmra.mrb[0].mxu0 %v208
  %v1354 = vpop.f32.mrb[0].mxu0
  %v1355 = vadd.f32 0.0, %v1354
  %v1356 = vpop.f32.mrb[0].mxu0
  %1357 = vmatprep.mubr.f32.mxu0 0.0
  %1358 = vmatmul.mubr.f32.gmra.mrb[0].mxu0 %v209
  %v1359 = vpop.f32.mrb[0].mxu0
  %v1360 = vadd.f32 0.0, %v1359
  %v1361 = vpop.f32.mrb[0].mxu0
  %1362 = vmatprep.mubr.f32.mxu0 0.0
  %1363 = vmatmul.mubr.f32.gmra.mrb[0].mxu0 %v210
  %v1364 = vpop.f32.mrb[0].mxu0
  %v1365 = vadd.f32 0.0, %v1364
  %v1366 = vpop.f32.mrb[0].mxu0
  %1367 = vmatprep.mubr.f32.mxu0 0.0
  %1368 = vmatmul.mubr.f32.gmra.mrb[0].mxu0 %v211
  %v1369 = vpop.f32.mrb[0].mxu0
  %v1370 = vadd.f32 0.0, %v1369
  %v1371 = vpop.f32.mrb[0].mxu0
  %1372 = vmatprep.mubr.f32.mxu0 0.0
  %1373 = vmatmul.mubr.f32.gmra.mrb[0].mxu0 %v212
  %v1374 = vpop.f32.mrb[0].mxu0
  %v1375 = vadd.f32 0.0, %v1374
  %v1376 = vpop.f32.mrb[0].mxu0
  %1377 = vmatprep.mubr.f32.mxu0 0.0
  %1378 = vmatmul.mubr.f32.gmra.mrb[0].mxu0 %v213
  %v1379 = vpop.f32.mrb[0].mxu0
  %v1380 = vadd.f32 0.0, %v1379
  %v1381 = vpop.f32.mrb[0].mxu0
  %1382 = vmatprep.mubr.f32.mxu0 0.0
  %1383 = vmatmul.mubr.f32.gmra.mrb[0].mxu0 %v214
  %v1384 = vpop.f32.mrb[0].mxu0
  %v1385 = vadd.f32 0.0, %v1384
  %v1386 = vpop.f32.mrb[0].mxu0
  %1387 = vmatprep.mubr.f32.mxu0 0.0
  %1388 = vmatmul.mubr.f32.gmra.mrb[0].mxu0 %v215
  %v1389 = vpop.f32.mrb[0].mxu0
  %v1390 = vadd.f32 0.0, %v1389
  %v1391 = vpop.f32.mrb[0].mxu0
  %1392 = vmatprep.mubr.f32.mxu0 0.0
  %1393 = vmatmul.mubr.f32.gmra.mrb[0].mxu0 %v216
  %v1394 = vpop.f32.mrb[0].mxu0
  %v1395 = vadd.f32 0.0, %v1394
  %v1396 = vpop.f32.mrb[0].mxu0
  %1397 = vmatprep.mubr.f32.mxu0 0.0
  %1398 = vmatmul.mubr.f32.gmra.mrb[0].mxu0 %v217
  %v1399 = vpop.f32.mrb[0].mxu0
  %v1400 = vadd.f32 0.0, %v1399
  %v1401 = vpop.f32.mrb[0].mxu0
  %1402 = vmatprep.mubr.f32.mxu0 0.0
  %1403 = vmatmul.mubr.f32.gmra.mrb[0].mxu0 %v218
  %v1404 = vpop.f32.mrb[0].mxu0
  %v1405 = vadd.f32 0.0, %v1404
  %v1406 = vpop.f32.mrb[0].mxu0
  %1407 = vmatprep.mubr.f32.mxu0 0.0
  %1408 = vmatmul.mubr.f32.gmra.mrb[0].mxu0 %v219
  %v1409 = vpop.f32.mrb[0].mxu0
  %v1410 = vadd.f32 0.0, %v1409
  %v1411 = vpop.f32.mrb[0].mxu0
  %1412 = vmatprep.mubr.f32.mxu0 0.0
  %1413 = vmatmul.mubr.f32.gmra.mrb[0].mxu0 %v220
  %v1414 = vpop.f32.mrb[0].mxu0
  %v1415 = vadd.f32 0.0, %v1414
  %v1416 = vpop.f32.mrb[0].mxu0
  %1417 = vmatprep.mubr.f32.mxu0 0.0
  %1418 = vmatmul.mubr.f32.gmra.mrb[0].mxu0 %v221
  %v1419 = vpop.f32.mrb[0].mxu0
  %v1420 = vadd.f32 0.0, %v1419
  %v1421 = vpop.f32.mrb[0].mxu0
  %1422 = vmatprep.mubr.f32.mxu0 0.0
  %1423 = vmatmul.mubr.f32.gmra.mrb[0].mxu0 %v222
  %v1424 = vpop.f32.mrb[0].mxu0
  %v1425 = vadd.f32 0.0, %v1424
  %v1426 = vpop.f32.mrb[0].mxu0
  %1427 = vmatprep.mubr.f32.mxu0 0.0
  %1428 = vmatmul.mubr.f32.gmra.mrb[0].mxu0 %v223
  %v1429 = vpop.f32.mrb[0].mxu0
  %v1430 = vadd.f32 0.0, %v1429
  %v1431 = vpop.f32.mrb[0].mxu0
  %1432 = vmatprep.mubr.f32.mxu0 0.0
  %1433 = vmatmul.mubr.f32.gmra.mrb[0].mxu0 %v224
  %v1434 = vpop.f32.mrb[0].mxu0
  %v1435 = vadd.f32 0.0, %v1434
  %v1436 = vpop.f32.mrb[0].mxu0
  %1437 = vmatprep.mubr.f32.mxu0 0.0
  %1438 = vmatmul.mubr.f32.gmra.mrb[0].mxu0 %v225
  %v1439 = vpop.f32.mrb[0].mxu0
  %v1440 = vadd.f32 0.0, %v1439
  %v1441 = vpop.f32.mrb[0].mxu0
  %1442 = vmatprep.mubr.f32.mxu0 0.0
  %1443 = vmatmul.mubr.f32.gmra.mrb[0].mxu0 %v226
  %v1444 = vpop.f32.mrb[0].mxu0
  %v1445 = vadd.f32 0.0, %v1444
  %v1446 = vpop.f32.mrb[0].mxu0
  %1447 = vmatprep.mubr.f32.mxu0 0.0
  %1448 = vmatmul.mubr.f32.gmra.mrb[0].mxu0 %v227
  %v1449 = vpop.f32.mrb[0].mxu0
  %v1450 = vadd.f32 0.0, %v1449
  %v1451 = vpop.f32.mrb[0].mxu0
  %1452 = vmatprep.mubr.f32.mxu0 0.0
  %1453 = vmatmul.mubr.f32.gmra.mrb[0].mxu0 %v228
  %v1454 = vpop.f32.mrb[0].mxu0
  %v1455 = vadd.f32 0.0, %v1454
  %v1456 = vpop.f32.mrb[0].mxu0
  %1457 = vmatprep.mubr.f32.mxu0 0.0
  %1458 = vmatmul.mubr.f32.gmra.mrb[0].mxu0 %v229
  %v1459 = vpop.f32.mrb[0].mxu0
  %v1460 = vadd.f32 0.0, %v1459
  %v1461 = vpop.f32.mrb[0].mxu0
  %1462 = vmatprep.mubr.f32.mxu0 0.0
  %1463 = vmatmul.mubr.f32.gmra.mrb[0].mxu0 %v230
  %v1464 = vpop.f32.mrb[0].mxu0
  %v1465 = vadd.f32 0.0, %v1464
  %v1466 = vpop.f32.mrb[0].mxu0
  %1467 = vmatprep.mubr.f32.mxu0 0.0
  %1468 = vmatmul.mubr.f32.gmra.mrb[0].mxu0 %v231
  %v1469 = vpop.f32.mrb[0].mxu0
  %v1470 = vadd.f32 0.0, %v1469
  %v1471 = vpop.f32.mrb[0].mxu0
  %1472 = vmatprep.mubr.f32.mxu0 0.0
  %1473 = vmatmul.mubr.f32.gmra.mrb[0].mxu0 %v232
  %v1474 = vpop.f32.mrb[0].mxu0
  %v1475 = vadd.f32 0.0, %v1474
  %v1476 = vpop.f32.mrb[0].mxu0
  %1477 = vmatprep.mubr.f32.mxu0 0.0
  %1478 = vmatmul.mubr.f32.gmra.mrb[0].mxu0 %v233
  %v1479 = vpop.f32.mrb[0].mxu0
  %v1480 = vadd.f32 0.0, %v1479
  %v1481 = vpop.f32.mrb[0].mxu0
  %1482 = vmatprep.mubr.f32.mxu0 0.0
  %1483 = vmatmul.mubr.f32.gmra.mrb[0].mxu0 %v234
  %v1484 = vpop.f32.mrb[0].mxu0
  %v1485 = vadd.f32 0.0, %v1484
  %v1486 = vpop.f32.mrb[0].mxu0
  %1487 = vmatprep.mubr.f32.mxu0 0.0
  %1488 = vmatmul.mubr.f32.gmra.mrb[0].mxu0 %v235
  %v1489 = vpop.f32.mrb[0].mxu0
  %v1490 = vadd.f32 0.0, %v1489
  %v1491 = vpop.f32.mrb[0].mxu0
  %1492 = vmatprep.mubr.f32.mxu0 0.0
  %1493 = vmatmul.mubr.f32.gmra.mrb[0].mxu0 %v236
  %v1494 = vpop.f32.mrb[0].mxu0
  %v1495 = vadd.f32 0.0, %v1494
  %v1496 = vpop.f32.mrb[0].mxu0
  %1497 = vmatprep.mubr.f32.mxu0 0.0
  %1498 = vmatmul.mubr.f32.gmra.mrb[0].mxu0 %v237
  %v1499 = vpop.f32.mrb[0].mxu0
  %v1500 = vadd.f32 0.0, %v1499
  %v1501 = vpop.f32.mrb[0].mxu0
  %1502 = vmatprep.mubr.f32.mxu0 0.0
  %1503 = vmatmul.mubr.f32.gmra.mrb[0].mxu0 %v238
  %v1504 = vpop.f32.mrb[0].mxu0
  %v1505 = vadd.f32 0.0, %v1504
  %v1506 = vpop.f32.mrb[0].mxu0
  %1507 = vmatprep.mubr.f32.mxu0 0.0
  %1508 = vmatmul.mubr.f32.gmra.mrb[0].mxu0 %v239
  %v1509 = vpop.f32.mrb[0].mxu0
  %v1510 = vadd.f32 0.0, %v1509
  %v1511 = vpop.f32.mrb[0].mxu0
  %1512 = vmatprep.mubr.f32.mxu0 0.0
  %1513 = vmatmul.mubr.f32.gmra.mrb[0].mxu0 %v240
  %v1514 = vpop.f32.mrb[0].mxu0
  %v1515 = vadd.f32 0.0, %v1514
  %v1516 = vpop.f32.mrb[0].mxu0
  %1517 = vmatprep.mubr.f32.mxu0 0.0
  %1518 = vmatmul.mubr.f32.gmra.mrb[0].mxu0 %v241
  %v1519 = vpop.f32.mrb[0].mxu0
  %v1520 = vadd.f32 0.0, %v1519
  %v1521 = vpop.f32.mrb[0].mxu0
  %1522 = vmatprep.mubr.f32.mxu0 0.0
  %1523 = vmatmul.mubr.f32.gmra.mrb[0].mxu0 %v242
  %v1524 = vpop.f32.mrb[0].mxu0
  %v1525 = vadd.f32 0.0, %v1524
  %v1526 = vpop.f32.mrb[0].mxu0
  %1527 = vmatprep.mubr.f32.mxu0 0.0
  %1528 = vmatmul.mubr.f32.gmra.mrb[0].mxu0 %v243
  %v1529 = vpop.f32.mrb[0].mxu0
  %v1530 = vadd.f32 0.0, %v1529
  %v1531 = vpop.f32.mrb[0].mxu0
  %1532 = vmatprep.mubr.f32.mxu0 0.0
  %1533 = vmatmul.mubr.f32.gmra.mrb[0].mxu0 %v244
  %v1534 = vpop.f32.mrb[0].mxu0
  %v1535 = vadd.f32 0.0, %v1534
  %v1536 = vpop.f32.mrb[0].mxu0
  %1537 = vmatprep.mubr.f32.mxu0 0.0
  %1538 = vmatmul.mubr.f32.gmra.mrb[0].mxu0 %v245
  %v1539 = vpop.f32.mrb[0].mxu0
  %v1540 = vadd.f32 0.0, %v1539
  %v1541 = vpop.f32.mrb[0].mxu0
  %1542 = vmatprep.mubr.f32.mxu0 0.0
  %1543 = vmatmul.mubr.f32.gmra.mrb[0].mxu0 %v246
  %v1544 = vpop.f32.mrb[0].mxu0
  %v1545 = vadd.f32 0.0, %v1544
  %v1546 = vpop.f32.mrb[0].mxu0
  %1547 = vmatprep.mubr.f32.mxu0 0.0
  %1548 = vmatmul.mubr.f32.gmra.mrb[0].mxu0 %v247
  %v1549 = vpop.f32.mrb[0].mxu0
  %v1550 = vadd.f32 0.0, %v1549
  %v1551 = vpop.f32.mrb[0].mxu0
  %1552 = vmatprep.mubr.f32.mxu0 0.0
  %1553 = vmatmul.mubr.f32.gmra.mrb[0].mxu0 %v248
  %v1554 = vpop.f32.mrb[0].mxu0
  %v1555 = vadd.f32 0.0, %v1554
  %v1556 = vpop.f32.mrb[0].mxu0
  %1557 = vmatprep.mubr.f32.mxu0 0.0
  %1558 = vmatmul.mubr.f32.gmra.mrb[0].mxu0 %v249
  %v1559 = vpop.f32.mrb[0].mxu0
  %v1560 = vadd.f32 0.0, %v1559
  %v1561 = vpop.f32.mrb[0].mxu0
  %1562 = vmatprep.mubr.f32.mxu0 0.0
  %1563 = vmatmul.mubr.f32.gmra.mrb[0].mxu0 %v250
  %v1564 = vpop.f32.mrb[0].mxu0
  %v1565 = vadd.f32 0.0, %v1564
  %v1566 = vpop.f32.mrb[0].mxu0
  %1567 = vmatprep.mubr.f32.mxu0 0.0
  %1568 = vmatmul.mubr.f32.gmra.mrb[0].mxu0 %v251
  %v1569 = vpop.f32.mrb[0].mxu0
  %v1570 = vadd.f32 0.0, %v1569
  %v1571 = vpop.f32.mrb[0].mxu0
  %1572 = vmatprep.mubr.f32.mxu0 0.0
  %1573 = vmatmul.mubr.f32.gmra.mrb[0].mxu0 %v252
  %v1574 = vpop.f32.mrb[0].mxu0
  %v1575 = vadd.f32 0.0, %v1574
  %v1576 = vpop.f32.mrb[0].mxu0
  %1577 = vmatprep.mubr.f32.mxu0 0.0
  %1578 = vmatmul.mubr.f32.gmra.mrb[0].mxu0 %v253
  %v1579 = vpop.f32.mrb[0].mxu0
  %v1580 = vadd.f32 0.0, %v1579
  %v1581 = vpop.f32.mrb[0].mxu0
  %1582 = vmatprep.mubr.f32.mxu0 0.0
  %1583 = vmatmul.mubr.f32.gmra.mrb[0].mxu0 %v254
  %v1584 = vpop.f32.mrb[0].mxu0
  %v1585 = vadd.f32 0.0, %v1584
  %v1586 = vpop.f32.mrb[0].mxu0
  %1587 = vmatprep.mubr.f32.mxu0 0.0
  %1588 = vmatmul.mubr.f32.gmra.mrb[0].mxu0 %v255
  %v1589 = vpop.f32.mrb[0].mxu0
  %v1590 = vadd.f32 0.0, %v1589
  %v1591 = vpop.f32.mrb[0].mxu0
  %1592 = vmatprep.mubr.f32.mxu0 0.0
  %1593 = vmatmul.mubr.f32.gmra.mrb[0].mxu0 %v256
  %v1594 = vpop.f32.mrb[0].mxu0
  %v1595 = vadd.f32 0.0, %v1594
  %v1596 = vpop.f32.mrb[0].mxu0
  %1597 = vmatprep.mubr.f32.mxu0 0.0
  %1598 = vmatmul.mubr.f32.gmra.mrb[0].mxu0 %v257
  %v1599 = vpop.f32.mrb[0].mxu0
  %v1600 = vadd.f32 0.0, %v1599
  %v1601 = vpop.f32.mrb[0].mxu0
  %1602 = vmatprep.mubr.f32.mxu0 0.0
  %1603 = vmatmul.mubr.f32.gmra.mrb[0].mxu0 %v258
  %v1604 = vpop.f32.mrb[0].mxu0
  %v1605 = vadd.f32 0.0, %v1604
  %v1606 = vpop.f32.mrb[0].mxu0
  %1607 = vmatprep.mubr.f32.mxu0 0.0
  %1608 = vmatmul.mubr.f32.gmra.mrb[0].mxu0 %v259
  %v1609 = vpop.f32.mrb[0].mxu0
  %v1610 = vadd.f32 0.0, %v1609
  %v1611 = vpop.f32.mrb[0].mxu0
  %1612 = vmatprep.mubr.f32.mxu0 0.0
  %1613 = vmatmul.mubr.f32.gmra.mrb[0].mxu0 %v260
  %v1614 = vpop.f32.mrb[0].mxu0
  %v1615 = vadd.f32 0.0, %v1614
  %v1616 = vpop.f32.mrb[0].mxu0
  %1617 = vmatprep.mubr.f32.mxu0 0.0
  %1618 = vmatmul.mubr.f32.gmra.mrb[0].mxu0 %v261
  %v1619 = vpop.f32.mrb[0].mxu0
  %v1620 = vadd.f32 0.0, %v1619
  %v1621 = vpop.f32.mrb[0].mxu0
  %1622 = vmatprep.mubr.f32.mxu0 0.0
  %1623 = vmatmul.mubr.f32.gmra.mrb[0].mxu0 %v262
  %v1624 = vpop.f32.mrb[0].mxu0
  %v1625 = vadd.f32 0.0, %v1624
  %v1626 = vpop.f32.mrb[0].mxu0
  %1627 = vmatprep.mubr.f32.mxu0 0.0
  %1628 = vmatmul.mubr.f32.gmra.mrb[0].mxu0 %v263
  %v1629 = vpop.f32.mrb[0].mxu0
  %v1630 = vadd.f32 0.0, %v1629
  %v1631 = vpop.f32.mrb[0].mxu0
  %1632 = vmatprep.mubr.f32.mxu0 0.0
  %1633 = vmatmul.mubr.f32.gmra.mrb[0].mxu0 %v264
  %v1634 = vpop.f32.mrb[0].mxu0
  %v1635 = vadd.f32 0.0, %v1634
  %v1636 = vpop.f32.mrb[0].mxu0
  %1637 = vmatprep.mubr.f32.mxu0 0.0
  %1638 = vmatmul.mubr.f32.gmra.mrb[0].mxu0 %v265
  %v1639 = vpop.f32.mrb[0].mxu0
  %v1640 = vadd.f32 0.0, %v1639
  %v1641 = vpop.f32.mrb[0].mxu0
  %1642 = vmatprep.mubr.f32.mxu0 0.0
  %1643 = vmatmul.mubr.f32.gmra.mrb[0].mxu0 %v266
  %v1644 = vpop.f32.mrb[0].mxu0
  %v1645 = vadd.f32 0.0, %v1644
  %v1646 = vpop.f32.mrb[0].mxu0
  %1647 = vmatprep.mubr.f32.mxu0 0.0
  %1648 = vmatmul.mubr.f32.gmra.mrb[0].mxu0 %v267
  %v1649 = vpop.f32.mrb[0].mxu0
  %v1650 = vadd.f32 0.0, %v1649
  %v1651 = vpop.f32.mrb[0].mxu0
  %1652 = vmatprep.mubr.f32.mxu0 0.0
  %1653 = vmatmul.mubr.f32.gmra.mrb[0].mxu0 %v268
  %v1654 = vpop.f32.mrb[0].mxu0
  %v1655 = vadd.f32 0.0, %v1654
  %v1656 = vpop.f32.mrb[0].mxu0
  %1657 = vmatprep.mubr.f32.mxu0 0.0
  %1658 = vmatmul.mubr.f32.gmra.mrb[0].mxu0 %v269
  %v1659 = vpop.f32.mrb[0].mxu0
  %v1660 = vadd.f32 0.0, %v1659
  %v1661 = vpop.f32.mrb[0].mxu0
  %1662 = vmatprep.mubr.f32.mxu0 0.0
  %1663 = vmatmul.mubr.f32.gmra.mrb[0].mxu0 %v270
  %v1664 = vpop.f32.mrb[0].mxu0
  %v1665 = vadd.f32 0.0, %v1664
  %v1666 = vpop.f32.mrb[0].mxu0
  %1667 = vmatprep.mubr.f32.mxu0 0.0
  %1668 = vmatmul.mubr.f32.gmra.mrb[0].mxu0 %v271
  %v1669 = vpop.f32.mrb[0].mxu0
  %v1670 = vadd.f32 0.0, %v1669
  %v1671 = vpop.f32.mrb[0].mxu0
  %1672 = vmatprep.mubr.f32.mxu0 0.0
  %1673 = vmatmul.mubr.f32.gmra.mrb[0].mxu0 %v272
  %v1674 = vpop.f32.mrb[0].mxu0
  %v1675 = vadd.f32 0.0, %v1674
  %v1676 = vpop.f32.mrb[0].mxu0
  %1677 = vmatprep.mubr.f32.mxu0 0.0
  %1678 = vmatmul.mubr.f32.gmra.mrb[0].mxu0 %v273
  %v1679 = vpop.f32.mrb[0].mxu0
  %v1680 = vadd.f32 0.0, %v1679
  %v1681 = vpop.f32.mrb[0].mxu0
  %1682 = vmatprep.mubr.f32.mxu0 0.0
  %1683 = vmatmul.mubr.f32.gmra.mrb[0].mxu0 %v274
  %v1684 = vpop.f32.mrb[0].mxu0
  %v1685 = vadd.f32 0.0, %v1684
  %v1686 = vpop.f32.mrb[0].mxu0
  %1687 = vmatprep.mubr.f32.mxu0 0.0
  %1688 = vmatmul.mubr.f32.gmra.mrb[0].mxu0 %v275
  %v1689 = vpop.f32.mrb[0].mxu0
  %v1690 = vadd.f32 0.0, %v1689
  %v1691 = vpop.f32.mrb[0].mxu0
  %1692 = vmatprep.mubr.f32.mxu0 0.0
  %1693 = vmatmul.mubr.f32.gmra.mrb[0].mxu0 %v276
  %v1694 = vpop.f32.mrb[0].mxu0
  %v1695 = vadd.f32 0.0, %v1694
  %v1696 = vpop.f32.mrb[0].mxu0
  %1697 = vmatprep.mubr.f32.mxu0 0.0
  %1698 = vmatmul.mubr.f32.gmra.mrb[0].mxu0 %v277
  %v1699 = vpop.f32.mrb[0].mxu0
  %v1700 = vadd.f32 0.0, %v1699
  %v1701 = vpop.f32.mrb[0].mxu0
  %1702 = vmatprep.mubr.f32.mxu0 0.0
  %1703 = vmatmul.mubr.f32.gmra.mrb[0].mxu0 %v278
  %v1704 = vpop.f32.mrb[0].mxu0
  %v1705 = vadd.f32 0.0, %v1704
  %v1706 = vpop.f32.mrb[0].mxu0
  %1707 = vmatprep.mubr.f32.mxu0 0.0
  %1708 = vmatmul.mubr.f32.gmra.mrb[0].mxu0 %v279
  %v1709 = vpop.f32.mrb[0].mxu0
  %v1710 = vadd.f32 0.0, %v1709
  %v1711 = vpop.f32.mrb[0].mxu0
  %1712 = vmatprep.mubr.f32.mxu0 0.0
  %1713 = vmatmul.mubr.f32.gmra.mrb[0].mxu0 %v280
  %v1714 = vpop.f32.mrb[0].mxu0
  %v1715 = vadd.f32 0.0, %v1714
  %v1716 = vpop.f32.mrb[0].mxu0
  %1717 = vmatprep.mubr.f32.mxu0 0.0
  %1718 = vmatmul.mubr.f32.gmra.mrb[0].mxu0 %v281
  %v1719 = vpop.f32.mrb[0].mxu0
  %v1720 = vadd.f32 0.0, %v1719
  %v1721 = vpop.f32.mrb[0].mxu0
  %1722 = vmatprep.mubr.f32.mxu0 0.0
  %1723 = vmatmul.mubr.f32.gmra.mrb[0].mxu0 %v282
  %v1724 = vpop.f32.mrb[0].mxu0
  %v1725 = vadd.f32 0.0, %v1724
  %v1726 = vpop.f32.mrb[0].mxu0
  %1727 = vmatprep.mubr.f32.mxu0 0.0
  %1728 = vmatmul.mubr.f32.gmra.mrb[0].mxu0 %v283
  %v1729 = vpop.f32.mrb[0].mxu0
  %v1730 = vadd.f32 0.0, %v1729
  %v1731 = vpop.f32.mrb[0].mxu0
  %1732 = vmatprep.mubr.f32.mxu0 0.0
  %1733 = vmatmul.mubr.f32.gmra.mrb[0].mxu0 %v284
  %v1734 = vpop.f32.mrb[0].mxu0
  %v1735 = vadd.f32 0.0, %v1734
  %v1736 = vpop.f32.mrb[0].mxu0
  %1737 = vmatprep.mubr.f32.mxu0 0.0
  %1738 = vmatmul.mubr.f32.gmra.mrb[0].mxu0 %v285
  %v1739 = vpop.f32.mrb[0].mxu0
  %v1740 = vadd.f32 0.0, %v1739
  %v1741 = vpop.f32.mrb[0].mxu0
  %1742 = vmatprep.mubr.f32.mxu0 0.0
  %1743 = vmatmul.mubr.f32.gmra.mrb[0].mxu0 %v286
  %v1744 = vpop.f32.mrb[0].mxu0
  %v1745 = vadd.f32 0.0, %v1744
  %v1746 = vpop.f32.mrb[0].mxu0
  %1747 = vmatprep.mubr.f32.mxu0 0.0
  %1748 = vmatmul.mubr.f32.gmra.mrb[0].mxu0 %v287
  %v1749 = vpop.f32.mrb[0].mxu0
  %v1750 = vadd.f32 0.0, %v1749
  %v1751 = vpop.f32.mrb[0].mxu0
  %1752 = vmatprep.mubr.f32.mxu0 0.0
  %1753 = vmatmul.mubr.f32.gmra.mrb[0].mxu0 %v288
  %v1754 = vpop.f32.mrb[0].mxu0
  %v1755 = vadd.f32 0.0, %v1754
  %v1756 = vpop.f32.mrb[0].mxu0
  %1757 = vmatprep.mubr.f32.mxu0 0.0
  %1758 = vmatmul.mubr.f32.gmra.mrb[0].mxu0 %v289
  %v1759 = vpop.f32.mrb[0].mxu0
  %v1760 = vadd.f32 0.0, %v1759
  %v1761 = vpop.f32.mrb[0].mxu0
  %1762 = vmatprep.mubr.f32.mxu0 0.0
  %1763 = vmatmul.mubr.f32.gmra.mrb[0].mxu0 %v290
  %v1764 = vpop.f32.mrb[0].mxu0
  %v1765 = vadd.f32 0.0, %v1764
  %v1766 = vpop.f32.mrb[0].mxu0
  %1767 = vmatprep.mubr.f32.mxu0 0.0
  %1768 = vmatmul.mubr.f32.gmra.mrb[0].mxu0 %v291
  %v1769 = vpop.f32.mrb[0].mxu0
  %v1770 = vadd.f32 0.0, %v1769
  %v1771 = vpop.f32.mrb[0].mxu0
  %1772 = vmatprep.mubr.f32.mxu0 0.0
  %1773 = vmatmul.mubr.f32.gmra.mrb[0].mxu0 %v292
  %v1774 = vpop.f32.mrb[0].mxu0
  %v1775 = vadd.f32 0.0, %v1774
  %v1776 = vpop.f32.mrb[0].mxu0
  %1777 = vmatprep.mubr.f32.mxu0 0.0
  %1778 = vmatmul.mubr.f32.gmra.mrb[0].mxu0 %v293
  %v1779 = vpop.f32.mrb[0].mxu0
  %v1780 = vadd.f32 0.0, %v1779
  %v1781 = vpop.f32.mrb[0].mxu0
  %1782 = vmatprep.mubr.f32.mxu0 0.0
  %1783 = vmatmul.mubr.f32.gmra.mrb[0].mxu0 %v294
  %v1784 = vpop.f32.mrb[0].mxu0
  %v1785 = vadd.f32 0.0, %v1784
  %v1786 = vpop.f32.mrb[0].mxu0
  %1787 = vmatprep.mubr.f32.mxu0 0.0
  %1788 = vmatmul.mubr.f32.gmra.mrb[0].mxu0 %v295
  %v1789 = vpop.f32.mrb[0].mxu0
  %v1790 = vadd.f32 0.0, %v1789
  %v1791 = vpop.f32.mrb[0].mxu0
  %1792 = vmatprep.mubr.f32.mxu0 0.0
  %1793 = vmatmul.mubr.f32.gmra.mrb[0].mxu0 %v296
  %v1794 = vpop.f32.mrb[0].mxu0
  %v1795 = vadd.f32 0.0, %v1794
  %v1796 = vpop.f32.mrb[0].mxu0
  %1797 = vmatprep.mubr.f32.mxu0 0.0
  %1798 = vmatmul.mubr.f32.gmra.mrb[0].mxu0 %v297
  %v1799 = vpop.f32.mrb[0].mxu0
  %v1800 = vadd.f32 0.0, %v1799
  %v1801 = vpop.f32.mrb[0].mxu0
  %1802 = vmatprep.mubr.f32.mxu0 0.0
  %1803 = vmatmul.mubr.f32.gmra.mrb[0].mxu0 %v298
  %v1804 = vpop.f32.mrb[0].mxu0
  %v1805 = vadd.f32 0.0, %v1804
  %v1806 = vpop.f32.mrb[0].mxu0
  %1807 = vmatprep.mubr.f32.mxu0 0.0
  %1808 = vmatmul.mubr.f32.gmra.mrb[0].mxu0 %v299
  %v1809 = vpop.f32.mrb[0].mxu0
  %v1810 = vadd.f32 0.0, %v1809
  %v1811 = vpop.f32.mrb[0].mxu0
  %1812 = vmatprep.mubr.f32.mxu0 0.0
  %1813 = vmatmul.mubr.f32.gmra.mrb[0].mxu0 %v300
  %v1814 = vpop.f32.mrb[0].mxu0
  %v1815 = vadd.f32 0.0, %v1814
  %v1816 = vpop.f32.mrb[0].mxu0
  %1817 = vmatprep.mubr.f32.mxu0 0.0
  %1818 = vmatmul.mubr.f32.gmra.mrb[0].mxu0 %v301
  %v1819 = vpop.f32.mrb[0].mxu0
  %v1820 = vadd.f32 0.0, %v1819
  %v1821 = vpop.f32.mrb[0].mxu0
  %1822 = vdwg.mxu0
  %v1823 = vmax.f32 %v385, %v565
  %v1824 = vmax.f32 %v390, %v570
  %v1825 = vmax.f32 %v395, %v575
  %v1826 = vmax.f32 %v400, %v580
  %v1827 = vmax.f32 %v405, %v585
  %v1828 = vmax.f32 %v410, %v590
  %v1829 = vmax.f32 %v415, %v595
  %v1830 = vmax.f32 %v420, %v600
  %v1831 = vmax.f32 %v425, %v605
  %v1832 = vmax.f32 %v430, %v610
  %v1833 = vmax.f32 %v435, %v615
  %v1834 = vmax.f32 %v440, %v620
  %v1835 = vmax.f32 %v445, %v625
  %v1836 = vmax.f32 %v450, %v630
  %v1837 = vmax.f32 %v455, %v635
  %v1838 = vmax.f32 %v460, %v640
  %v1839 = vmax.f32 %v465, %v645
  %v1840 = vmax.f32 %v470, %v650
  %v1841 = vmax.f32 %v475, %v655
  %v1842 = vmax.f32 %v480, %v660
  %v1843 = vmax.f32 %v485, %v665
  %v1844 = vmax.f32 %v490, %v670
  %v1845 = vmax.f32 %v495, %v675
  %v1846 = vmax.f32 %v500, %v680
  %v1847 = vmax.f32 %v505, %v685
  %v1848 = vmax.f32 %v510, %v690
  %v1849 = vmax.f32 %v515, %v695
  %v1850 = vmax.f32 %v520, %v700
  %v1851 = vmax.f32 %v525, %v705
  %v1852 = vmax.f32 %v530, %v710
  %v1853 = vmax.f32 %v535, %v715
  %v1854 = vmax.f32 %v540, %v720
  %v1855 = vmax.f32 %v545, %v725
  %v1856 = vmax.f32 %v550, %v730
  %v1857 = vmax.f32 %v555, %v735
  %v1858 = vmax.f32 %v560, %v740
  %v1859 = vmax.f32 %v1105, %v1285
  %v1860 = vmax.f32 %v1110, %v1290
  %v1861 = vmax.f32 %v1115, %v1295
  %v1862 = vmax.f32 %v1120, %v1300
  %v1863 = vmax.f32 %v1125, %v1305
  %v1864 = vmax.f32 %v1130, %v1310
  %v1865 = vmax.f32 %v1135, %v1315
  %v1866 = vmax.f32 %v1140, %v1320
  %v1867 = vmax.f32 %v1145, %v1325
  %v1868 = vmax.f32 %v1150, %v1330
  %v1869 = vmax.f32 %v1155, %v1335
  %v1870 = vmax.f32 %v1160, %v1340
  %v1871 = vmax.f32 %v1165, %v1345
  %v1872 = vmax.f32 %v1170, %v1350
  %v1873 = vmax.f32 %v1175, %v1355
  %v1874 = vmax.f32 %v1180, %v1360
  %v1875 = vmax.f32 %v1185, %v1365
  %v1876 = vmax.f32 %v1190, %v1370
  %v1877 = vmax.f32 %v1195, %v1375
  %v1878 = vmax.f32 %v1200, %v1380
  %v1879 = vmax.f32 %v1205, %v1385
  %v1880 = vmax.f32 %v1210, %v1390
  %v1881 = vmax.f32 %v1215, %v1395
  %v1882 = vmax.f32 %v1220, %v1400
  %v1883 = vmax.f32 %v1225, %v1405
  %v1884 = vmax.f32 %v1230, %v1410
  %v1885 = vmax.f32 %v1235, %v1415
  %v1886 = vmax.f32 %v1240, %v1420
  %v1887 = vmax.f32 %v1245, %v1425
  %v1888 = vmax.f32 %v1250, %v1430
  %v1889 = vmax.f32 %v1255, %v1435
  %v1890 = vmax.f32 %v1260, %v1440
  %v1891 = vmax.f32 %v1265, %v1445
  %v1892 = vmax.f32 %v1270, %v1450
  %v1893 = vmax.f32 %v1275, %v1455
  %v1894 = vmax.f32 %v1280, %v1460
  %v1895 = vmax.f32 %v745, %v925
  %v1896 = vmax.f32 %v750, %v930
  %v1897 = vmax.f32 %v755, %v935
  %v1898 = vmax.f32 %v760, %v940
  %v1899 = vmax.f32 %v765, %v945
  %v1900 = vmax.f32 %v770, %v950
  %v1901 = vmax.f32 %v775, %v955
  %v1902 = vmax.f32 %v780, %v960
  %v1903 = vmax.f32 %v785, %v965
  %v1904 = vmax.f32 %v790, %v970
  %v1905 = vmax.f32 %v795, %v975
  %v1906 = vmax.f32 %v800, %v980
  %v1907 = vmax.f32 %v805, %v985
  %v1908 = vmax.f32 %v810, %v990
  %v1909 = vmax.f32 %v815, %v995
  %v1910 = vmax.f32 %v820, %v1000
  %v1911 = vmax.f32 %v825, %v1005
  %v1912 = vmax.f32 %v830, %v1010
  %v1913 = vmax.f32 %v835, %v1015
  %v1914 = vmax.f32 %v840, %v1020
  %v1915 = vmax.f32 %v845, %v1025
  %v1916 = vmax.f32 %v850, %v1030
  %v1917 = vmax.f32 %v855, %v1035
  %v1918 = vmax.f32 %v860, %v1040
  %v1919 = vmax.f32 %v865, %v1045
  %v1920 = vmax.f32 %v870, %v1050
  %v1921 = vmax.f32 %v875, %v1055
  %v1922 = vmax.f32 %v880, %v1060
  %v1923 = vmax.f32 %v885, %v1065
  %v1924 = vmax.f32 %v890, %v1070
  %v1925 = vmax.f32 %v895, %v1075
  %v1926 = vmax.f32 %v900, %v1080
  %v1927 = vmax.f32 %v905, %v1085
  %v1928 = vmax.f32 %v910, %v1090
  %v1929 = vmax.f32 %v915, %v1095
  %v1930 = vmax.f32 %v920, %v1100
  %v1931 = vmax.f32 %v1465, %v1645
  %v1932 = vmax.f32 %v1470, %v1650
  %v1933 = vmax.f32 %v1475, %v1655
  %v1934 = vmax.f32 %v1480, %v1660
  %v1935 = vmax.f32 %v1485, %v1665
  %v1936 = vmax.f32 %v1490, %v1670
  %v1937 = vmax.f32 %v1495, %v1675
  %v1938 = vmax.f32 %v1500, %v1680
  %v1939 = vmax.f32 %v1505, %v1685
  %v1940 = vmax.f32 %v1510, %v1690
  %v1941 = vmax.f32 %v1515, %v1695
  %v1942 = vmax.f32 %v1520, %v1700
  %v1943 = vmax.f32 %v1525, %v1705
  %v1944 = vmax.f32 %v1530, %v1710
  %v1945 = vmax.f32 %v1535, %v1715
  %v1946 = vmax.f32 %v1540, %v1720
  %v1947 = vmax.f32 %v1545, %v1725
  %v1948 = vmax.f32 %v1550, %v1730
  %v1949 = vmax.f32 %v1555, %v1735
  %v1950 = vmax.f32 %v1560, %v1740
  %v1951 = vmax.f32 %v1565, %v1745
  %v1952 = vmax.f32 %v1570, %v1750
  %v1953 = vmax.f32 %v1575, %v1755
  %v1954 = vmax.f32 %v1580, %v1760
  %v1955 = vmax.f32 %v1585, %v1765
  %v1956 = vmax.f32 %v1590, %v1770
  %v1957 = vmax.f32 %v1595, %v1775
  %v1958 = vmax.f32 %v1600, %v1780
  %v1959 = vmax.f32 %v1605, %v1785
  %v1960 = vmax.f32 %v1610, %v1790
  %v1961 = vmax.f32 %v1615, %v1795
  %v1962 = vmax.f32 %v1620, %v1800
  %v1963 = vmax.f32 %v1625, %v1805
  %v1964 = vmax.f32 %v1630, %v1810
  %v1965 = vmax.f32 %v1635, %v1815
  %v1966 = vmax.f32 %v1640, %v1820
  %v1967 = vmax.f32 %v1823, %v1895
  %v1968 = vmax.f32 %v1824, %v1896
  %v1969 = vmax.f32 %v1825, %v1897
  %v1970 = vmax.f32 %v1826, %v1898
  %v1971 = vmax.f32 %v1827, %v1899
  %v1972 = vmax.f32 %v1828, %v1900
  %v1973 = vmax.f32 %v1829, %v1901
  %v1974 = vmax.f32 %v1830, %v1902
  %v1975 = vmax.f32 %v1831, %v1903
  %v1976 = vmax.f32 %v1832, %v1904
  %v1977 = vmax.f32 %v1833, %v1905
  %v1978 = vmax.f32 %v1834, %v1906
  %v1979 = vmax.f32 %v1835, %v1907
  %v1980 = vmax.f32 %v1836, %v1908
  %v1981 = vmax.f32 %v1837, %v1909
  %v1982 = vmax.f32 %v1838, %v1910
  %v1983 = vmax.f32 %v1839, %v1911
  %v1984 = vmax.f32 %v1840, %v1912
  %v1985 = vmax.f32 %v1841, %v1913
  %v1986 = vmax.f32 %v1842, %v1914
  %v1987 = vmax.f32 %v1843, %v1915
  %v1988 = vmax.f32 %v1844, %v1916
  %v1989 = vmax.f32 %v1845, %v1917
  %v1990 = vmax.f32 %v1846, %v1918
  %v1991 = vmax.f32 %v1847, %v1919
  %v1992 = vmax.f32 %v1848, %v1920
  %v1993 = vmax.f32 %v1849, %v1921
  %v1994 = vmax.f32 %v1850, %v1922
  %v1995 = vmax.f32 %v1851, %v1923
  %v1996 = vmax.f32 %v1852, %v1924
  %v1997 = vmax.f32 %v1853, %v1925
  %v1998 = vmax.f32 %v1854, %v1926
  %v1999 = vmax.f32 %v1855, %v1927
  %v2000 = vmax.f32 %v1856, %v1928
  %v2001 = vmax.f32 %v1857, %v1929
  %v2002 = vmax.f32 %v1858, %v1930
  %v2003 = vmax.f32 %v1859, %v1931
  %v2004 = vmax.f32 %v1860, %v1932
  %v2005 = vmax.f32 %v1861, %v1933
  %v2006 = vmax.f32 %v1862, %v1934
  %v2007 = vmax.f32 %v1863, %v1935
  %v2008 = vmax.f32 %v1864, %v1936
  %v2009 = vmax.f32 %v1865, %v1937
  %v2010 = vmax.f32 %v1866, %v1938
  %v2011 = vmax.f32 %v1867, %v1939
  %v2012 = vmax.f32 %v1868, %v1940
  %v2013 = vmax.f32 %v1869, %v1941
  %v2014 = vmax.f32 %v1870, %v1942
  %v2015 = vmax.f32 %v1871, %v1943
  %v2016 = vmax.f32 %v1872, %v1944
  %v2017 = vmax.f32 %v1873, %v1945
  %v2018 = vmax.f32 %v1874, %v1946
  %v2019 = vmax.f32 %v1875, %v1947
  %v2020 = vmax.f32 %v1876, %v1948
  %v2021 = vmax.f32 %v1877, %v1949
  %v2022 = vmax.f32 %v1878, %v1950
  %v2023 = vmax.f32 %v1879, %v1951
  %v2024 = vmax.f32 %v1880, %v1952
  %v2025 = vmax.f32 %v1881, %v1953
  %v2026 = vmax.f32 %v1882, %v1954
  %v2027 = vmax.f32 %v1883, %v1955
  %v2028 = vmax.f32 %v1884, %v1956
  %v2029 = vmax.f32 %v1885, %v1957
  %v2030 = vmax.f32 %v1886, %v1958
  %v2031 = vmax.f32 %v1887, %v1959
  %v2032 = vmax.f32 %v1888, %v1960
  %v2033 = vmax.f32 %v1889, %v1961
  %v2034 = vmax.f32 %v1890, %v1962
  %v2035 = vmax.f32 %v1891, %v1963
  %v2036 = vmax.f32 %v1892, %v1964
  %v2037 = vmax.f32 %v1893, %v1965
  %v2038 = vmax.f32 %v1894, %v1966
  %v2039 = vld [vmem:[%s2] sm:$0x1]
  %v2041 = vlaneseq
  %v2042 = vshrl.u32 %v2041, 7
  %v2043 = vsub.s32 0, %v2042
  %v2044 = vrot.slane %v2039, %v2043
  %v2046 = vadd.f32 %v1967, %v2044
  %v2047 = vadd.f32 %v1968, %v2044
  %v2048 = vadd.f32 %v1969, %v2044
  %v2049 = vadd.f32 %v1970, %v2044
  %v2050 = vadd.f32 %v1971, %v2044
  %v2051 = vadd.f32 %v1972, %v2044
  %v2052 = vadd.f32 %v1973, %v2044
  %v2053 = vadd.f32 %v1974, %v2044
  %v2054 = vadd.f32 %v1975, %v2044
  %v2055 = vadd.f32 %v1976, %v2044
  %v2056 = vadd.f32 %v1977, %v2044
  %v2057 = vadd.f32 %v1978, %v2044
  %v2058 = vadd.f32 %v1979, %v2044
  %v2059 = vadd.f32 %v1980, %v2044
  %v2060 = vadd.f32 %v1981, %v2044
  %v2061 = vadd.f32 %v1982, %v2044
  %v2062 = vadd.f32 %v1983, %v2044
  %v2063 = vadd.f32 %v1984, %v2044
  %v2064 = vadd.f32 %v1985, %v2044
  %v2065 = vadd.f32 %v1986, %v2044
  %v2066 = vadd.f32 %v1987, %v2044
  %v2067 = vadd.f32 %v1988, %v2044
  %v2068 = vadd.f32 %v1989, %v2044
  %v2069 = vadd.f32 %v1990, %v2044
  %v2070 = vadd.f32 %v1991, %v2044
  %v2071 = vadd.f32 %v1992, %v2044
  %v2072 = vadd.f32 %v1993, %v2044
  %v2073 = vadd.f32 %v1994, %v2044
  %v2074 = vadd.f32 %v1995, %v2044
  %v2075 = vadd.f32 %v1996, %v2044
  %v2076 = vadd.f32 %v1997, %v2044
  %v2077 = vadd.f32 %v1998, %v2044
  %v2078 = vadd.f32 %v1999, %v2044
  %v2079 = vadd.f32 %v2000, %v2044
  %v2080 = vadd.f32 %v2001, %v2044
  %v2081 = vadd.f32 %v2002, %v2044
  %v2082 = vadd.f32 %v2003, %v2044
  %v2083 = vadd.f32 %v2004, %v2044
  %v2084 = vadd.f32 %v2005, %v2044
  %v2085 = vadd.f32 %v2006, %v2044
  %v2086 = vadd.f32 %v2007, %v2044
  %v2087 = vadd.f32 %v2008, %v2044
  %v2088 = vadd.f32 %v2009, %v2044
  %v2089 = vadd.f32 %v2010, %v2044
  %v2090 = vadd.f32 %v2011, %v2044
  %v2091 = vadd.f32 %v2012, %v2044
  %v2092 = vadd.f32 %v2013, %v2044
  %v2093 = vadd.f32 %v2014, %v2044
  %v2094 = vadd.f32 %v2015, %v2044
  %v2095 = vadd.f32 %v2016, %v2044
  %v2096 = vadd.f32 %v2017, %v2044
  %v2097 = vadd.f32 %v2018, %v2044
  %v2098 = vadd.f32 %v2019, %v2044
  %v2099 = vadd.f32 %v2020, %v2044
  %v2100 = vadd.f32 %v2021, %v2044
  %v2101 = vadd.f32 %v2022, %v2044
  %v2102 = vadd.f32 %v2023, %v2044
  %v2103 = vadd.f32 %v2024, %v2044
  %v2104 = vadd.f32 %v2025, %v2044
  %v2105 = vadd.f32 %v2026, %v2044
  %v2106 = vadd.f32 %v2027, %v2044
  %v2107 = vadd.f32 %v2028, %v2044
  %v2108 = vadd.f32 %v2029, %v2044
  %v2109 = vadd.f32 %v2030, %v2044
  %v2110 = vadd.f32 %v2031, %v2044
  %v2111 = vadd.f32 %v2032, %v2044
  %v2112 = vadd.f32 %v2033, %v2044
  %v2113 = vadd.f32 %v2034, %v2044
  %v2114 = vadd.f32 %v2035, %v2044
  %v2115 = vadd.f32 %v2036, %v2044
  %v2116 = vadd.f32 %v2037, %v2044
  %v2117 = vadd.f32 %v2038, %v2044
  %v2118 = vmax.f32 %v2046, 0.0
  %v2119 = vmax.f32 %v2047, 0.0
  %v2120 = vmax.f32 %v2048, 0.0
  %v2121 = vmax.f32 %v2049, 0.0
  %v2122 = vmax.f32 %v2050, 0.0
  %v2123 = vmax.f32 %v2051, 0.0
  %v2124 = vmax.f32 %v2052, 0.0
  %v2125 = vmax.f32 %v2053, 0.0
  %v2126 = vmax.f32 %v2054, 0.0
  %v2127 = vmax.f32 %v2055, 0.0
  %v2128 = vmax.f32 %v2056, 0.0
  %v2129 = vmax.f32 %v2057, 0.0
  %v2130 = vmax.f32 %v2058, 0.0
  %v2131 = vmax.f32 %v2059, 0.0
  %v2132 = vmax.f32 %v2060, 0.0
  %v2133 = vmax.f32 %v2061, 0.0
  %v2134 = vmax.f32 %v2062, 0.0
  %v2135 = vmax.f32 %v2063, 0.0
  %v2136 = vmax.f32 %v2064, 0.0
  %v2137 = vmax.f32 %v2065, 0.0
  %v2138 = vmax.f32 %v2066, 0.0
  %v2139 = vmax.f32 %v2067, 0.0
  %v2140 = vmax.f32 %v2068, 0.0
  %v2141 = vmax.f32 %v2069, 0.0
  %v2142 = vmax.f32 %v2070, 0.0
  %v2143 = vmax.f32 %v2071, 0.0
  %v2144 = vmax.f32 %v2072, 0.0
  %v2145 = vmax.f32 %v2073, 0.0
  %v2146 = vmax.f32 %v2074, 0.0
  %v2147 = vmax.f32 %v2075, 0.0
  %v2148 = vmax.f32 %v2076, 0.0
  %v2149 = vmax.f32 %v2077, 0.0
  %v2150 = vmax.f32 %v2078, 0.0
  %v2151 = vmax.f32 %v2079, 0.0
  %v2152 = vmax.f32 %v2080, 0.0
  %v2153 = vmax.f32 %v2081, 0.0
  %v2154 = vmax.f32 %v2082, 0.0
  %v2155 = vmax.f32 %v2083, 0.0
  %v2156 = vmax.f32 %v2084, 0.0
  %v2157 = vmax.f32 %v2085, 0.0
  %v2158 = vmax.f32 %v2086, 0.0
  %v2159 = vmax.f32 %v2087, 0.0
  %v2160 = vmax.f32 %v2088, 0.0
  %v2161 = vmax.f32 %v2089, 0.0
  %v2162 = vmax.f32 %v2090, 0.0
  %v2163 = vmax.f32 %v2091, 0.0
  %v2164 = vmax.f32 %v2092, 0.0
  %v2165 = vmax.f32 %v2093, 0.0
  %v2166 = vmax.f32 %v2094, 0.0
  %v2167 = vmax.f32 %v2095, 0.0
  %v2168 = vmax.f32 %v2096, 0.0
  %v2169 = vmax.f32 %v2097, 0.0
  %v2170 = vmax.f32 %v2098, 0.0
  %v2171 = vmax.f32 %v2099, 0.0
  %v2172 = vmax.f32 %v2100, 0.0
  %v2173 = vmax.f32 %v2101, 0.0
  %v2174 = vmax.f32 %v2102, 0.0
  %v2175 = vmax.f32 %v2103, 0.0
  %v2176 = vmax.f32 %v2104, 0.0
  %v2177 = vmax.f32 %v2105, 0.0
  %v2178 = vmax.f32 %v2106, 0.0
  %v2179 = vmax.f32 %v2107, 0.0
  %v2180 = vmax.f32 %v2108, 0.0
  %v2181 = vmax.f32 %v2109, 0.0
  %v2182 = vmax.f32 %v2110, 0.0
  %v2183 = vmax.f32 %v2111, 0.0
  %v2184 = vmax.f32 %v2112, 0.0
  %v2185 = vmax.f32 %v2113, 0.0
  %v2186 = vmax.f32 %v2114, 0.0
  %v2187 = vmax.f32 %v2115, 0.0
  %v2188 = vmax.f32 %v2116, 0.0
  %v2189 = vmax.f32 %v2117, 0.0
  %2190 = vst [vmem:[%s3] sm:$0xff] %v2118
  %2191 = vst [vmem:[%s3 + $0x8] sm:$0xff] %v2119
  %2192 = vst [vmem:[%s3 + $0x10] sm:$0xff] %v2120
  %2193 = vst [vmem:[%s3 + $0x18] sm:$0xff] %v2121
  %2194 = vst [vmem:[%s3 + $0x20] sm:$0xff] %v2122
  %2195 = vst [vmem:[%s3 + $0x28] sm:$0xff] %v2123
  %2196 = vst [vmem:[%s3 + $0x30] sm:$0xff] %v2124
  %2197 = vst [vmem:[%s3 + $0x38] sm:$0xff] %v2125
  %2198 = vst [vmem:[%s3 + $0x40] sm:$0xff] %v2126
  %2199 = vst [vmem:[%s3 + $0x48] sm:$0xff] %v2127
  %2200 = vst [vmem:[%s3 + $0x50] sm:$0xff] %v2128
  %2201 = vst [vmem:[%s3 + $0x58] sm:$0xff] %v2129
  %2202 = vst [vmem:[%s3 + $0x60] sm:$0xff] %v2130
  %2203 = vst [vmem:[%s3 + $0x68] sm:$0xff] %v2131
  %2204 = vst [vmem:[%s3 + $0x70] sm:$0xff] %v2132
  %2205 = vst [vmem:[%s3 + $0x78] sm:$0xff] %v2133
  %2206 = vst [vmem:[%s3 + $0x80] sm:$0xff] %v2134
  %2207 = vst [vmem:[%s3 + $0x88] sm:$0xff] %v2135
  %2208 = vst [vmem:[%s3 + $0x90] sm:$0xff] %v2136
  %2209 = vst [vmem:[%s3 + $0x98] sm:$0xff] %v2137
  %2210 = vst [vmem:[%s3 + $0xa0] sm:$0xff] %v2138
  %2211 = vst [vmem:[%s3 + $0xa8] sm:$0xff] %v2139
  %2212 = vst [vmem:[%s3 + $0xb0] sm:$0xff] %v2140
  %2213 = vst [vmem:[%s3 + $0xb8] sm:$0xff] %v2141
  %2214 = vst [vmem:[%s3 + $0xc0] sm:$0xff] %v2142
  %2215 = vst [vmem:[%s3 + $0xc8] sm:$0xff] %v2143
  %2216 = vst [vmem:[%s3 + $0xd0] sm:$0xff] %v2144
  %2217 = vst [vmem:[%s3 + $0xd8] sm:$0xff] %v2145
  %2218 = vst [vmem:[%s3 + $0xe0] sm:$0xff] %v2146
  %2219 = vst [vmem:[%s3 + $0xe8] sm:$0xff] %v2147
  %2220 = vst [vmem:[%s3 + $0xf0] sm:$0xff] %v2148
  %2221 = vst [vmem:[%s3 + $0xf8] sm:$0xff] %v2149
  %2222 = vst [vmem:[%s3 + $0x100] sm:$0xff] %v2150
  %2223 = vst [vmem:[%s3 + $0x108] sm:$0xff] %v2151
  %2224 = vst [vmem:[%s3 + $0x110] sm:$0xff] %v2152
  %2225 = vst [vmem:[%s3 + $0x118] sm:$0xff] %v2153
  %2226 = vst [vmem:[%s3 + $0x120] sm:$0xff] %v2154
  %2227 = vst [vmem:[%s3 + $0x128] sm:$0xff] %v2155
  %2228 = vst [vmem:[%s3 + $0x130] sm:$0xff] %v2156
  %2229 = vst [vmem:[%s3 + $0x138] sm:$0xff] %v2157
  %2230 = vst [vmem:[%s3 + $0x140] sm:$0xff] %v2158
  %2231 = vst [vmem:[%s3 + $0x148] sm:$0xff] %v2159
  %2232 = vst [vmem:[%s3 + $0x150] sm:$0xff] %v2160
  %2233 = vst [vmem:[%s3 + $0x158] sm:$0xff] %v2161
  %2234 = vst [vmem:[%s3 + $0x160] sm:$0xff] %v2162
  %2235 = vst [vmem:[%s3 + $0x168] sm:$0xff] %v2163
  %2236 = vst [vmem:[%s3 + $0x170] sm:$0xff] %v2164
  %2237 = vst [vmem:[%s3 + $0x178] sm:$0xff] %v2165
  %2238 = vst [vmem:[%s3 + $0x180] sm:$0xff] %v2166
  %2239 = vst [vmem:[%s3 + $0x188] sm:$0xff] %v2167
  %2240 = vst [vmem:[%s3 + $0x190] sm:$0xff] %v2168
  %2241 = vst [vmem:[%s3 + $0x198] sm:$0xff] %v2169
  %2242 = vst [vmem:[%s3 + $0x1a0] sm:$0xff] %v2170
  %2243 = vst [vmem:[%s3 + $0x1a8] sm:$0xff] %v2171
  %2244 = vst [vmem:[%s3 + $0x1b0] sm:$0xff] %v2172
  %2245 = vst [vmem:[%s3 + $0x1b8] sm:$0xff] %v2173
  %2246 = vst [vmem:[%s3 + $0x1c0] sm:$0xff] %v2174
  %2247 = vst [vmem:[%s3 + $0x1c8] sm:$0xff] %v2175
  %2248 = vst [vmem:[%s3 + $0x1d0] sm:$0xff] %v2176
  %2249 = vst [vmem:[%s3 + $0x1d8] sm:$0xff] %v2177
  %2250 = vst [vmem:[%s3 + $0x1e0] sm:$0xff] %v2178
  %2251 = vst [vmem:[%s3 + $0x1e8] sm:$0xff] %v2179
  %2252 = vst [vmem:[%s3 + $0x1f0] sm:$0xff] %v2180
  %2253 = vst [vmem:[%s3 + $0x1f8] sm:$0xff] %v2181
  %2254 = vst [vmem:[%s3 + $0x200] sm:$0xff] %v2182
  %2255 = vst [vmem:[%s3 + $0x208] sm:$0xff] %v2183
  %2256 = vst [vmem:[%s3 + $0x210] sm:$0xff] %v2184
  %2257 = vst [vmem:[%s3 + $0x218] sm:$0xff] %v2185
  %2258 = vst [vmem:[%s3 + $0x220] sm:$0xff] %v2186
  %2259 = vst [vmem:[%s3 + $0x228] sm:$0xff] %v2187
  %2260 = vst [vmem:[%s3 + $0x230] sm:$0xff] %v2188
  %2261 = vst [vmem:[%s3 + $0x238] sm:$0xff] %v2189
  // Predicated region
  $region14: #{custom_text_cnn_cat_forward.3} parent=0 // pred_check
    _
  $region15: #{custom_text_cnn_cat_forward.3} parent=0 // pred_check_branch
    %2263 = sbr.rel (0) target = $region17
  $region16: #{custom_text_cnn_cat_forward.3} parent=0 // pred_region
    _
  $region17: #{custom_text_cnn_cat_forward.3} parent=0 // pred_fallthru
    _
  // Predicated region
  $region18: #{custom_text_cnn_cat_forward.3} parent=0 // pred_check
    _
  $region19: #{custom_text_cnn_cat_forward.3} parent=0 // pred_check_branch
    %2265 = sbr.rel (0) target = $region21
  $region20: #{custom_text_cnn_cat_forward.3} parent=0 // pred_region
    _
  $region21: #{custom_text_cnn_cat_forward.3} parent=0 // pred_fallthru
    _

// kernel: custom_text_cnn_cat_forward.4
$region0: #{custom_text_cnn_cat_forward.4}
  #allocation0 [shape = 'u32[]', space=smem, size = 0x4, offset = 0x4, fixed_abs, tag = 'smem constant byte address 0x4 - core index']
  #allocation1 [shape = 'u32[144,128]{1,0:T(1,128)}', space=vmem, size = 0x12000, scoped, tag = 'internal scratch']
  %s0 = inlined_call_operand.vmem [shape: f32[2,4,48,896], index: 0, kind: input, shape index: {}]
  %s1 = inlined_call_operand.vmem [shape: f32[896,128], index: 1, kind: input, shape index: {}]
  %s2 = inlined_call_operand.vmem [shape: f32[1,128], index: 2, kind: input, shape index: {}]
  %s3 = inlined_call_operand.vmem [shape: f32[2,48,128], index: 3, kind: output, shape index: {}]
  %s4 = sld [smem:[#allocation0]]
  $region22: #{custom_text_cnn_cat_forward.4} parent=0
    _
  %s6 = ssub.s32 1, %s4
  %s7 = scalar_select 0, %s6, %s4
  // Predicated region
  $region2: #{custom_text_cnn_cat_forward.4} parent=0 // pred_check
    _
  $region3: #{custom_text_cnn_cat_forward.4} parent=0 // pred_check_branch
    %9 = sbr.rel (0) target = $region5
  $region4: #{custom_text_cnn_cat_forward.4} parent=0 // pred_region
    _
  $region5: #{custom_text_cnn_cat_forward.4} parent=0 // pred_fallthru
    _
  // Predicated region
  $region6: #{custom_text_cnn_cat_forward.4} parent=0 // pred_check
    _
  $region7: #{custom_text_cnn_cat_forward.4} parent=0 // pred_check_branch
    %11 = sbr.rel (0) target = $region9
  $region8: #{custom_text_cnn_cat_forward.4} parent=0 // pred_region
    _
  $region9: #{custom_text_cnn_cat_forward.4} parent=0 // pred_fallthru
    _
  // Predicated region
  $region10: #{custom_text_cnn_cat_forward.4} parent=0 // pred_check
    _
  $region11: #{custom_text_cnn_cat_forward.4} parent=0 // pred_check_branch
    %13 = sbr.rel (0) target = $region13
  $region12: #{custom_text_cnn_cat_forward.4} parent=0 // pred_region
    _
  $region13: #{custom_text_cnn_cat_forward.4} parent=0 // pred_fallthru
    _
  %v14 = vld [vmem:[%s0] sm:$0xff]
  %v15 = vld [vmem:[%s0 + $0x8] sm:$0xff]
  %v16 = vld [vmem:[%s0 + $0x10] sm:$0xff]
  %v17 = vld [vmem:[%s0 + $0x18] sm:$0xff]
  %v18 = vld [vmem:[%s0 + $0x20] sm:$0xff]
  %v19 = vld [vmem:[%s0 + $0x28] sm:$0xff]
  %v20 = vld [vmem:[%s0 + $0x30] sm:$0xff]
  %v21 = vld [vmem:[%s0 + $0x38] sm:$0xff]
  %v22 = vld [vmem:[%s0 + $0x40] sm:$0xff]
  %v23 = vld [vmem:[%s0 + $0x48] sm:$0xff]
  %v24 = vld [vmem:[%s0 + $0x50] sm:$0xff]
  %v25 = vld [vmem:[%s0 + $0x58] sm:$0xff]
  %v26 = vld [vmem:[%s0 + $0x60] sm:$0xff]
  %v27 = vld [vmem:[%s0 + $0x68] sm:$0xff]
  %v28 = vld [vmem:[%s0 + $0x70] sm:$0xff]
  %v29 = vld [vmem:[%s0 + $0x78] sm:$0xff]
  %v30 = vld [vmem:[%s0 + $0x80] sm:$0xff]
  %v31 = vld [vmem:[%s0 + $0x88] sm:$0xff]
  %v32 = vld [vmem:[%s0 + $0x90] sm:$0xff]
  %v33 = vld [vmem:[%s0 + $0x98] sm:$0xff]
  %v34 = vld [vmem:[%s0 + $0xa0] sm:$0xff]
  %v35 = vld [vmem:[%s0 + $0xa8] sm:$0xff]
  %v36 = vld [vmem:[%s0 + $0xb0] sm:$0xff]
  %v37 = vld [vmem:[%s0 + $0xb8] sm:$0xff]
  %v38 = vld [vmem:[%s0 + $0xc0] sm:$0xff]
  %v39 = vld [vmem:[%s0 + $0xc8] sm:$0xff]
  %v40 = vld [vmem:[%s0 + $0xd0] sm:$0xff]
  %v41 = vld [vmem:[%s0 + $0xd8] sm:$0xff]
  %v42 = vld [vmem:[%s0 + $0xe0] sm:$0xff]
  %v43 = vld [vmem:[%s0 + $0xe8] sm:$0xff]
  %v44 = vld [vmem:[%s0 + $0xf0] sm:$0xff]
  %v45 = vld [vmem:[%s0 + $0xf8] sm:$0xff]
  %v46 = vld [vmem:[%s0 + $0x100] sm:$0xff]
  %v47 = vld [vmem:[%s0 + $0x108] sm:$0xff]
  %v48 = vld [vmem:[%s0 + $0x110] sm:$0xff]
  %v49 = vld [vmem:[%s0 + $0x118] sm:$0xff]
  %v50 = vld [vmem:[%s0 + $0x120] sm:$0xff]
  %v51 = vld [vmem:[%s0 + $0x128] sm:$0xff]
  %v52 = vld [vmem:[%s0 + $0x130] sm:$0xff]
  %v53 = vld [vmem:[%s0 + $0x138] sm:$0xff]
  %v54 = vld [vmem:[%s0 + $0x140] sm:$0xff]
  %v55 = vld [vmem:[%s0 + $0x148] sm:$0xff]
  %v56 = vld [vmem:[%s0 + $0x150] sm:$0xff]
  %v57 = vld [vmem:[%s0 + $0x158] sm:$0xff]
  %v58 = vld [vmem:[%s0 + $0x160] sm:$0xff]
  %v59 = vld [vmem:[%s0 + $0x168] sm:$0xff]
  %v60 = vld [vmem:[%s0 + $0x170] sm:$0xff]
  %v61 = vld [vmem:[%s0 + $0x178] sm:$0xff]
  %v62 = vld [vmem:[%s0 + $0x180] sm:$0xff]
  %v63 = vld [vmem:[%s0 + $0x188] sm:$0xff]
  %v64 = vld [vmem:[%s0 + $0x190] sm:$0xff]
  %v65 = vld [vmem:[%s0 + $0x198] sm:$0xff]
  %v66 = vld [vmem:[%s0 + $0x1a0] sm:$0xff]
  %v67 = vld [vmem:[%s0 + $0x1a8] sm:$0xff]
  %v68 = vld [vmem:[%s0 + $0x1b0] sm:$0xff]
  %v69 = vld [vmem:[%s0 + $0x1b8] sm:$0xff]
  %v70 = vld [vmem:[%s0 + $0x1c0] sm:$0xff]
  %v71 = vld [vmem:[%s0 + $0x1c8] sm:$0xff]
  %v72 = vld [vmem:[%s0 + $0x1d0] sm:$0xff]
  %v73 = vld [vmem:[%s0 + $0x1d8] sm:$0xff]
  %v74 = vld [vmem:[%s0 + $0x1e0] sm:$0xff]
  %v75 = vld [vmem:[%s0 + $0x1e8] sm:$0xff]
  %v76 = vld [vmem:[%s0 + $0x1f0] sm:$0xff]
  %v77 = vld [vmem:[%s0 + $0x1f8] sm:$0xff]
  %v78 = vld [vmem:[%s0 + $0x200] sm:$0xff]
  %v79 = vld [vmem:[%s0 + $0x208] sm:$0xff]
  %v80 = vld [vmem:[%s0 + $0x210] sm:$0xff]
  %v81 = vld [vmem:[%s0 + $0x218] sm:$0xff]
  %v82 = vld [vmem:[%s0 + $0x220] sm:$0xff]
  %v83 = vld [vmem:[%s0 + $0x228] sm:$0xff]
  %v84 = vld [vmem:[%s0 + $0x230] sm:$0xff]
  %v85 = vld [vmem:[%s0 + $0x238] sm:$0xff]
  %v86 = vld [vmem:[%s0 + $0x240] sm:$0xff]
  %v87 = vld [vmem:[%s0 + $0x248] sm:$0xff]
  %v88 = vld [vmem:[%s0 + $0x250] sm:$0xff]
  %v89 = vld [vmem:[%s0 + $0x258] sm:$0xff]
  %v90 = vld [vmem:[%s0 + $0x260] sm:$0xff]
  %v91 = vld [vmem:[%s0 + $0x268] sm:$0xff]
  %v92 = vld [vmem:[%s0 + $0x270] sm:$0xff]
  %v93 = vld [vmem:[%s0 + $0x278] sm:$0xff]
  %v94 = vld [vmem:[%s0 + $0x280] sm:$0xff]
  %v95 = vld [vmem:[%s0 + $0x288] sm:$0xff]
  %v96 = vld [vmem:[%s0 + $0x290] sm:$0xff]
  %v97 = vld [vmem:[%s0 + $0x298] sm:$0xff]
  %v98 = vld [vmem:[%s0 + $0x2a0] sm:$0xff]
  %v99 = vld [vmem:[%s0 + $0x2a8] sm:$0xff]
  %v100 = vld [vmem:[%s0 + $0x2b0] sm:$0xff]
  %v101 = vld [vmem:[%s0 + $0x2b8] sm:$0xff]
  %v102 = vld [vmem:[%s0 + $0x2c0] sm:$0xff]
  %v103 = vld [vmem:[%s0 + $0x2c8] sm:$0xff]
  %v104 = vld [vmem:[%s0 + $0x2d0] sm:$0xff]
  %v105 = vld [vmem:[%s0 + $0x2d8] sm:$0xff]
  %v106 = vld [vmem:[%s0 + $0x2e0] sm:$0xff]
  %v107 = vld [vmem:[%s0 + $0x2e8] sm:$0xff]
  %v108 = vld [vmem:[%s0 + $0x2f0] sm:$0xff]
  %v109 = vld [vmem:[%s0 + $0x2f8] sm:$0xff]
  %v110 = vld [vmem:[%s0 + $0x300] sm:$0xff]
  %v111 = vld [vmem:[%s0 + $0x308] sm:$0xff]
  %v112 = vld [vmem:[%s0 + $0x310] sm:$0xff]
  %v113 = vld [vmem:[%s0 + $0x318] sm:$0xff]
  %v114 = vld [vmem:[%s0 + $0x320] sm:$0xff]
  %v115 = vld [vmem:[%s0 + $0x328] sm:$0xff]
  %v116 = vld [vmem:[%s0 + $0x330] sm:$0xff]
  %v117 = vld [vmem:[%s0 + $0x338] sm:$0xff]
  %v118 = vld [vmem:[%s0 + $0x340] sm:$0xff]
  %v119 = vld [vmem:[%s0 + $0x348] sm:$0xff]
  %v120 = vld [vmem:[%s0 + $0x350] sm:$0xff]
  %v121 = vld [vmem:[%s0 + $0x358] sm:$0xff]
  %v122 = vld [vmem:[%s0 + $0x360] sm:$0xff]
  %v123 = vld [vmem:[%s0 + $0x368] sm:$0xff]
  %v124 = vld [vmem:[%s0 + $0x370] sm:$0xff]
  %v125 = vld [vmem:[%s0 + $0x378] sm:$0xff]
  %v126 = vld [vmem:[%s0 + $0x380] sm:$0xff]
  %v127 = vld [vmem:[%s0 + $0x388] sm:$0xff]
  %v128 = vld [vmem:[%s0 + $0x390] sm:$0xff]
  %v129 = vld [vmem:[%s0 + $0x398] sm:$0xff]
  %v130 = vld [vmem:[%s0 + $0x3a0] sm:$0xff]
  %v131 = vld [vmem:[%s0 + $0x3a8] sm:$0xff]
  %v132 = vld [vmem:[%s0 + $0x3b0] sm:$0xff]
  %v133 = vld [vmem:[%s0 + $0x3b8] sm:$0xff]
  %v134 = vld [vmem:[%s0 + $0x3c0] sm:$0xff]
  %v135 = vld [vmem:[%s0 + $0x3c8] sm:$0xff]
  %v136 = vld [vmem:[%s0 + $0x3d0] sm:$0xff]
  %v137 = vld [vmem:[%s0 + $0x3d8] sm:$0xff]
  %v138 = vld [vmem:[%s0 + $0x3e0] sm:$0xff]
  %v139 = vld [vmem:[%s0 + $0x3e8] sm:$0xff]
  %v140 = vld [vmem:[%s0 + $0x3f0] sm:$0xff]
  %v141 = vld [vmem:[%s0 + $0x3f8] sm:$0xff]
  %v142 = vld [vmem:[%s0 + $0x400] sm:$0xff]
  %v143 = vld [vmem:[%s0 + $0x408] sm:$0xff]
  %v144 = vld [vmem:[%s0 + $0x410] sm:$0xff]
  %v145 = vld [vmem:[%s0 + $0x418] sm:$0xff]
  %v146 = vld [vmem:[%s0 + $0x420] sm:$0xff]
  %v147 = vld [vmem:[%s0 + $0x428] sm:$0xff]
  %v148 = vld [vmem:[%s0 + $0x430] sm:$0xff]
  %v149 = vld [vmem:[%s0 + $0x438] sm:$0xff]
  %v150 = vld [vmem:[%s0 + $0x440] sm:$0xff]
  %v151 = vld [vmem:[%s0 + $0x448] sm:$0xff]
  %v152 = vld [vmem:[%s0 + $0x450] sm:$0xff]
  %v153 = vld [vmem:[%s0 + $0x458] sm:$0xff]
  %v154 = vld [vmem:[%s0 + $0x460] sm:$0xff]
  %v155 = vld [vmem:[%s0 + $0x468] sm:$0xff]
  %v156 = vld [vmem:[%s0 + $0x470] sm:$0xff]
  %v157 = vld [vmem:[%s0 + $0x478] sm:$0xff]
  %v158 = vld [vmem:[%s0 + $0x480] sm:$0xff]
  %v159 = vld [vmem:[%s0 + $0x488] sm:$0xff]
  %v160 = vld [vmem:[%s0 + $0x490] sm:$0xff]
  %v161 = vld [vmem:[%s0 + $0x498] sm:$0xff]
  %v162 = vld [vmem:[%s0 + $0x4a0] sm:$0xff]
  %v163 = vld [vmem:[%s0 + $0x4a8] sm:$0xff]
  %v164 = vld [vmem:[%s0 + $0x4b0] sm:$0xff]
  %v165 = vld [vmem:[%s0 + $0x4b8] sm:$0xff]
  %v166 = vld [vmem:[%s0 + $0x4c0] sm:$0xff]
  %v167 = vld [vmem:[%s0 + $0x4c8] sm:$0xff]
  %v168 = vld [vmem:[%s0 + $0x4d0] sm:$0xff]
  %v169 = vld [vmem:[%s0 + $0x4d8] sm:$0xff]
  %v170 = vld [vmem:[%s0 + $0x4e0] sm:$0xff]
  %v171 = vld [vmem:[%s0 + $0x4e8] sm:$0xff]
  %v172 = vld [vmem:[%s0 + $0x4f0] sm:$0xff]
  %v173 = vld [vmem:[%s0 + $0x4f8] sm:$0xff]
  %v174 = vld [vmem:[%s0 + $0x500] sm:$0xff]
  %v175 = vld [vmem:[%s0 + $0x508] sm:$0xff]
  %v176 = vld [vmem:[%s0 + $0x510] sm:$0xff]
  %v177 = vld [vmem:[%s0 + $0x518] sm:$0xff]
  %v178 = vld [vmem:[%s0 + $0x520] sm:$0xff]
  %v179 = vld [vmem:[%s0 + $0x528] sm:$0xff]
  %v180 = vld [vmem:[%s0 + $0x530] sm:$0xff]
  %v181 = vld [vmem:[%s0 + $0x538] sm:$0xff]
  %v182 = vld [vmem:[%s0 + $0x540] sm:$0xff]
  %v183 = vld [vmem:[%s0 + $0x548] sm:$0xff]
  %v184 = vld [vmem:[%s0 + $0x550] sm:$0xff]
  %v185 = vld [vmem:[%s0 + $0x558] sm:$0xff]
  %v186 = vld [vmem:[%s0 + $0x560] sm:$0xff]
  %v187 = vld [vmem:[%s0 + $0x568] sm:$0xff]
  %v188 = vld [vmem:[%s0 + $0x570] sm:$0xff]
  %v189 = vld [vmem:[%s0 + $0x578] sm:$0xff]
  %v190 = vld [vmem:[%s0 + $0x580] sm:$0xff]
  %v191 = vld [vmem:[%s0 + $0x588] sm:$0xff]
  %v192 = vld [vmem:[%s0 + $0x590] sm:$0xff]
  %v193 = vld [vmem:[%s0 + $0x598] sm:$0xff]
  %v194 = vld [vmem:[%s0 + $0x5a0] sm:$0xff]
  %v195 = vld [vmem:[%s0 + $0x5a8] sm:$0xff]
  %v196 = vld [vmem:[%s0 + $0x5b0] sm:$0xff]
  %v197 = vld [vmem:[%s0 + $0x5b8] sm:$0xff]
  %v198 = vld [vmem:[%s0 + $0x5c0] sm:$0xff]
  %v199 = vld [vmem:[%s0 + $0x5c8] sm:$0xff]
  %v200 = vld [vmem:[%s0 + $0x5d0] sm:$0xff]
  %v201 = vld [vmem:[%s0 + $0x5d8] sm:$0xff]
  %v202 = vld [vmem:[%s0 + $0x5e0] sm:$0xff]
  %v203 = vld [vmem:[%s0 + $0x5e8] sm:$0xff]
  %v204 = vld [vmem:[%s0 + $0x5f0] sm:$0xff]
  %v205 = vld [vmem:[%s0 + $0x5f8] sm:$0xff]
  %v206 = vld [vmem:[%s0 + $0x600] sm:$0xff]
  %v207 = vld [vmem:[%s0 + $0x608] sm:$0xff]
  %v208 = vld [vmem:[%s0 + $0x610] sm:$0xff]
  %v209 = vld [vmem:[%s0 + $0x618] sm:$0xff]
  %v210 = vld [vmem:[%s0 + $0x620] sm:$0xff]
  %v211 = vld [vmem:[%s0 + $0x628] sm:$0xff]
  %v212 = vld [vmem:[%s0 + $0x630] sm:$0xff]
  %v213 = vld [vmem:[%s0 + $0x638] sm:$0xff]
  %v214 = vld [vmem:[%s0 + $0x640] sm:$0xff]
  %v215 = vld [vmem:[%s0 + $0x648] sm:$0xff]
  %v216 = vld [vmem:[%s0 + $0x650] sm:$0xff]
  %v217 = vld [vmem:[%s0 + $0x658] sm:$0xff]
  %v218 = vld [vmem:[%s0 + $0x660] sm:$0xff]
  %v219 = vld [vmem:[%s0 + $0x668] sm:$0xff]
  %v220 = vld [vmem:[%s0 + $0x670] sm:$0xff]
  %v221 = vld [vmem:[%s0 + $0x678] sm:$0xff]
  %v222 = vld [vmem:[%s0 + $0x680] sm:$0xff]
  %v223 = vld [vmem:[%s0 + $0x688] sm:$0xff]
  %v224 = vld [vmem:[%s0 + $0x690] sm:$0xff]
  %v225 = vld [vmem:[%s0 + $0x698] sm:$0xff]
  %v226 = vld [vmem:[%s0 + $0x6a0] sm:$0xff]
  %v227 = vld [vmem:[%s0 + $0x6a8] sm:$0xff]
  %v228 = vld [vmem:[%s0 + $0x6b0] sm:$0xff]
  %v229 = vld [vmem:[%s0 + $0x6b8] sm:$0xff]
  %v230 = vld [vmem:[%s0 + $0x6c0] sm:$0xff]
  %v231 = vld [vmem:[%s0 + $0x6c8] sm:$0xff]
  %v232 = vld [vmem:[%s0 + $0x6d0] sm:$0xff]
  %v233 = vld [vmem:[%s0 + $0x6d8] sm:$0xff]
  %v234 = vld [vmem:[%s0 + $0x6e0] sm:$0xff]
  %v235 = vld [vmem:[%s0 + $0x6e8] sm:$0xff]
  %v236 = vld [vmem:[%s0 + $0x6f0] sm:$0xff]
  %v237 = vld [vmem:[%s0 + $0x6f8] sm:$0xff]
  %v238 = vld [vmem:[%s0 + $0x700] sm:$0xff]
  %v239 = vld [vmem:[%s0 + $0x708] sm:$0xff]
  %v240 = vld [vmem:[%s0 + $0x710] sm:$0xff]
  %v241 = vld [vmem:[%s0 + $0x718] sm:$0xff]
  %v242 = vld [vmem:[%s0 + $0x720] sm:$0xff]
  %v243 = vld [vmem:[%s0 + $0x728] sm:$0xff]
  %v244 = vld [vmem:[%s0 + $0x730] sm:$0xff]
  %v245 = vld [vmem:[%s0 + $0x738] sm:$0xff]
  %v246 = vld [vmem:[%s0 + $0x740] sm:$0xff]
  %v247 = vld [vmem:[%s0 + $0x748] sm:$0xff]
  %v248 = vld [vmem:[%s0 + $0x750] sm:$0xff]
  %v249 = vld [vmem:[%s0 + $0x758] sm:$0xff]
  %v250 = vld [vmem:[%s0 + $0x760] sm:$0xff]
  %v251 = vld [vmem:[%s0 + $0x768] sm:$0xff]
  %v252 = vld [vmem:[%s0 + $0x770] sm:$0xff]
  %v253 = vld [vmem:[%s0 + $0x778] sm:$0xff]
  %v254 = vld [vmem:[%s0 + $0x780] sm:$0xff]
  %v255 = vld [vmem:[%s0 + $0x788] sm:$0xff]
  %v256 = vld [vmem:[%s0 + $0x790] sm:$0xff]
  %v257 = vld [vmem:[%s0 + $0x798] sm:$0xff]
  %v258 = vld [vmem:[%s0 + $0x7a0] sm:$0xff]
  %v259 = vld [vmem:[%s0 + $0x7a8] sm:$0xff]
  %v260 = vld [vmem:[%s0 + $0x7b0] sm:$0xff]
  %v261 = vld [vmem:[%s0 + $0x7b8] sm:$0xff]
  %v262 = vld [vmem:[%s0 + $0x7c0] sm:$0xff]
  %v263 = vld [vmem:[%s0 + $0x7c8] sm:$0xff]
  %v264 = vld [vmem:[%s0 + $0x7d0] sm:$0xff]
  %v265 = vld [vmem:[%s0 + $0x7d8] sm:$0xff]
  %v266 = vld [vmem:[%s0 + $0x7e0] sm:$0xff]
  %v267 = vld [vmem:[%s0 + $0x7e8] sm:$0xff]
  %v268 = vld [vmem:[%s0 + $0x7f0] sm:$0xff]
  %v269 = vld [vmem:[%s0 + $0x7f8] sm:$0xff]
  %v270 = vld [vmem:[%s0 + $0x800] sm:$0xff]
  %v271 = vld [vmem:[%s0 + $0x808] sm:$0xff]
  %v272 = vld [vmem:[%s0 + $0x810] sm:$0xff]
  %v273 = vld [vmem:[%s0 + $0x818] sm:$0xff]
  %v274 = vld [vmem:[%s0 + $0x820] sm:$0xff]
  %v275 = vld [vmem:[%s0 + $0x828] sm:$0xff]
  %v276 = vld [vmem:[%s0 + $0x830] sm:$0xff]
  %v277 = vld [vmem:[%s0 + $0x838] sm:$0xff]
  %v278 = vld [vmem:[%s0 + $0x840] sm:$0xff]
  %v279 = vld [vmem:[%s0 + $0x848] sm:$0xff]
  %v280 = vld [vmem:[%s0 + $0x850] sm:$0xff]
  %v281 = vld [vmem:[%s0 + $0x858] sm:$0xff]
  %v282 = vld [vmem:[%s0 + $0x860] sm:$0xff]
  %v283 = vld [vmem:[%s0 + $0x868] sm:$0xff]
  %v284 = vld [vmem:[%s0 + $0x870] sm:$0xff]
  %v285 = vld [vmem:[%s0 + $0x878] sm:$0xff]
  %v286 = vld [vmem:[%s0 + $0x880] sm:$0xff]
  %v287 = vld [vmem:[%s0 + $0x888] sm:$0xff]
  %v288 = vld [vmem:[%s0 + $0x890] sm:$0xff]
  %v289 = vld [vmem:[%s0 + $0x898] sm:$0xff]
  %v290 = vld [vmem:[%s0 + $0x8a0] sm:$0xff]
  %v291 = vld [vmem:[%s0 + $0x8a8] sm:$0xff]
  %v292 = vld [vmem:[%s0 + $0x8b0] sm:$0xff]
  %v293 = vld [vmem:[%s0 + $0x8b8] sm:$0xff]
  %v294 = vld [vmem:[%s0 + $0x8c0] sm:$0xff]
  %v295 = vld [vmem:[%s0 + $0x8c8] sm:$0xff]
  %v296 = vld [vmem:[%s0 + $0x8d0] sm:$0xff]
  %v297 = vld [vmem:[%s0 + $0x8d8] sm:$0xff]
  %v298 = vld [vmem:[%s0 + $0x8e0] sm:$0xff]
  %v299 = vld [vmem:[%s0 + $0x8e8] sm:$0xff]
  %v300 = vld [vmem:[%s0 + $0x8f0] sm:$0xff]
  %v301 = vld [vmem:[%s0 + $0x8f8] sm:$0xff]
  %v302 = vld [vmem:[%s0 + $0x900] sm:$0xff]
  %v303 = vld [vmem:[%s0 + $0x908] sm:$0xff]
  %v304 = vld [vmem:[%s0 + $0x910] sm:$0xff]
  %v305 = vld [vmem:[%s0 + $0x918] sm:$0xff]
  %v306 = vld [vmem:[%s0 + $0x920] sm:$0xff]
  %v307 = vld [vmem:[%s0 + $0x928] sm:$0xff]
  %v308 = vld [vmem:[%s0 + $0x930] sm:$0xff]
  %v309 = vld [vmem:[%s0 + $0x938] sm:$0xff]
  %v310 = vld [vmem:[%s0 + $0x940] sm:$0xff]
  %v311 = vld [vmem:[%s0 + $0x948] sm:$0xff]
  %v312 = vld [vmem:[%s0 + $0x950] sm:$0xff]
  %v313 = vld [vmem:[%s0 + $0x958] sm:$0xff]
  %v314 = vld [vmem:[%s0 + $0x960] sm:$0xff]
  %v315 = vld [vmem:[%s0 + $0x968] sm:$0xff]
  %v316 = vld [vmem:[%s0 + $0x970] sm:$0xff]
  %v317 = vld [vmem:[%s0 + $0x978] sm:$0xff]
  %v318 = vld [vmem:[%s0 + $0x980] sm:$0xff]
  %v319 = vld [vmem:[%s0 + $0x988] sm:$0xff]
  %v320 = vld [vmem:[%s0 + $0x990] sm:$0xff]
  %v321 = vld [vmem:[%s0 + $0x998] sm:$0xff]
  %v322 = vld [vmem:[%s0 + $0x9a0] sm:$0xff]
  %v323 = vld [vmem:[%s0 + $0x9a8] sm:$0xff]
  %v324 = vld [vmem:[%s0 + $0x9b0] sm:$0xff]
  %v325 = vld [vmem:[%s0 + $0x9b8] sm:$0xff]
  %v326 = vld [vmem:[%s0 + $0x9c0] sm:$0xff]
  %v327 = vld [vmem:[%s0 + $0x9c8] sm:$0xff]
  %v328 = vld [vmem:[%s0 + $0x9d0] sm:$0xff]
  %v329 = vld [vmem:[%s0 + $0x9d8] sm:$0xff]
  %v330 = vld [vmem:[%s0 + $0x9e0] sm:$0xff]
  %v331 = vld [vmem:[%s0 + $0x9e8] sm:$0xff]
  %v332 = vld [vmem:[%s0 + $0x9f0] sm:$0xff]
  %v333 = vld [vmem:[%s0 + $0x9f8] sm:$0xff]
  %v334 = vld [vmem:[%s0 + $0xa00] sm:$0xff]
  %v335 = vld [vmem:[%s0 + $0xa08] sm:$0xff]
  %v336 = vld [vmem:[%s0 + $0xa10] sm:$0xff]
  %v337 = vld [vmem:[%s0 + $0xa18] sm:$0xff]
  %v338 = vld [vmem:[%s0 + $0xa20] sm:$0xff]
  %v339 = vld [vmem:[%s0 + $0xa28] sm:$0xff]
  %v340 = vld [vmem:[%s0 + $0xa30] sm:$0xff]
  %v341 = vld [vmem:[%s0 + $0xa38] sm:$0xff]
  %v342 = vld [vmem:[%s0 + $0xa40] sm:$0xff]
  %v343 = vld [vmem:[%s0 + $0xa48] sm:$0xff]
  %v344 = vld [vmem:[%s0 + $0xa50] sm:$0xff]
  %v345 = vld [vmem:[%s0 + $0xa58] sm:$0xff]
  %v346 = vld [vmem:[%s0 + $0xa60] sm:$0xff]
  %v347 = vld [vmem:[%s0 + $0xa68] sm:$0xff]
  %v348 = vld [vmem:[%s0 + $0xa70] sm:$0xff]
  %v349 = vld [vmem:[%s0 + $0xa78] sm:$0xff]
  %v350 = vld [vmem:[%s1] sm:$0xff]
  %v351 = vld [vmem:[%s1 + $0x8] sm:$0xff]
  %v352 = vld [vmem:[%s1 + $0x10] sm:$0xff]
  %v353 = vld [vmem:[%s1 + $0x18] sm:$0xff]
  %v354 = vld [vmem:[%s1 + $0x20] sm:$0xff]
  %v355 = vld [vmem:[%s1 + $0x28] sm:$0xff]
  %v356 = vld [vmem:[%s1 + $0x30] sm:$0xff]
  %v357 = vld [vmem:[%s1 + $0x38] sm:$0xff]
  %v358 = vld [vmem:[%s1 + $0x40] sm:$0xff]
  %v359 = vld [vmem:[%s1 + $0x48] sm:$0xff]
  %v360 = vld [vmem:[%s1 + $0x50] sm:$0xff]
  %v361 = vld [vmem:[%s1 + $0x58] sm:$0xff]
  %v362 = vld [vmem:[%s1 + $0x60] sm:$0xff]
  %v363 = vld [vmem:[%s1 + $0x68] sm:$0xff]
  %v364 = vld [vmem:[%s1 + $0x70] sm:$0xff]
  %v365 = vld [vmem:[%s1 + $0x78] sm:$0xff]
  %v366 = vld [vmem:[%s1 + $0x80] sm:$0xff]
  %v367 = vld [vmem:[%s1 + $0x88] sm:$0xff]
  %v368 = vld [vmem:[%s1 + $0x90] sm:$0xff]
  %v369 = vld [vmem:[%s1 + $0x98] sm:$0xff]
  %v370 = vld [vmem:[%s1 + $0xa0] sm:$0xff]
  %v371 = vld [vmem:[%s1 + $0xa8] sm:$0xff]
  %v372 = vld [vmem:[%s1 + $0xb0] sm:$0xff]
  %v373 = vld [vmem:[%s1 + $0xb8] sm:$0xff]
  %v374 = vld [vmem:[%s1 + $0xc0] sm:$0xff]
  %v375 = vld [vmem:[%s1 + $0xc8] sm:$0xff]
  %v376 = vld [vmem:[%s1 + $0xd0] sm:$0xff]
  %v377 = vld [vmem:[%s1 + $0xd8] sm:$0xff]
  %v378 = vld [vmem:[%s1 + $0xe0] sm:$0xff]
  %v379 = vld [vmem:[%s1 + $0xe8] sm:$0xff]
  %v380 = vld [vmem:[%s1 + $0xf0] sm:$0xff]
  %v381 = vld [vmem:[%s1 + $0xf8] sm:$0xff]
  %v382 = vld [vmem:[%s1 + $0x100] sm:$0xff]
  %v383 = vld [vmem:[%s1 + $0x108] sm:$0xff]
  %v384 = vld [vmem:[%s1 + $0x110] sm:$0xff]
  %v385 = vld [vmem:[%s1 + $0x118] sm:$0xff]
  %v386 = vld [vmem:[%s1 + $0x120] sm:$0xff]
  %v387 = vld [vmem:[%s1 + $0x128] sm:$0xff]
  %v388 = vld [vmem:[%s1 + $0x130] sm:$0xff]
  %v389 = vld [vmem:[%s1 + $0x138] sm:$0xff]
  %v390 = vld [vmem:[%s1 + $0x140] sm:$0xff]
  %v391 = vld [vmem:[%s1 + $0x148] sm:$0xff]
  %v392 = vld [vmem:[%s1 + $0x150] sm:$0xff]
  %v393 = vld [vmem:[%s1 + $0x158] sm:$0xff]
  %v394 = vld [vmem:[%s1 + $0x160] sm:$0xff]
  %v395 = vld [vmem:[%s1 + $0x168] sm:$0xff]
  %v396 = vld [vmem:[%s1 + $0x170] sm:$0xff]
  %v397 = vld [vmem:[%s1 + $0x178] sm:$0xff]
  %v398 = vld [vmem:[%s1 + $0x180] sm:$0xff]
  %v399 = vld [vmem:[%s1 + $0x188] sm:$0xff]
  %v400 = vld [vmem:[%s1 + $0x190] sm:$0xff]
  %v401 = vld [vmem:[%s1 + $0x198] sm:$0xff]
  %v402 = vld [vmem:[%s1 + $0x1a0] sm:$0xff]
  %v403 = vld [vmem:[%s1 + $0x1a8] sm:$0xff]
  %v404 = vld [vmem:[%s1 + $0x1b0] sm:$0xff]
  %v405 = vld [vmem:[%s1 + $0x1b8] sm:$0xff]
  %v406 = vld [vmem:[%s1 + $0x1c0] sm:$0xff]
  %v407 = vld [vmem:[%s1 + $0x1c8] sm:$0xff]
  %v408 = vld [vmem:[%s1 + $0x1d0] sm:$0xff]
  %v409 = vld [vmem:[%s1 + $0x1d8] sm:$0xff]
  %v410 = vld [vmem:[%s1 + $0x1e0] sm:$0xff]
  %v411 = vld [vmem:[%s1 + $0x1e8] sm:$0xff]
  %v412 = vld [vmem:[%s1 + $0x1f0] sm:$0xff]
  %v413 = vld [vmem:[%s1 + $0x1f8] sm:$0xff]
  %v414 = vld [vmem:[%s1 + $0x200] sm:$0xff]
  %v415 = vld [vmem:[%s1 + $0x208] sm:$0xff]
  %v416 = vld [vmem:[%s1 + $0x210] sm:$0xff]
  %v417 = vld [vmem:[%s1 + $0x218] sm:$0xff]
  %v418 = vld [vmem:[%s1 + $0x220] sm:$0xff]
  %v419 = vld [vmem:[%s1 + $0x228] sm:$0xff]
  %v420 = vld [vmem:[%s1 + $0x230] sm:$0xff]
  %v421 = vld [vmem:[%s1 + $0x238] sm:$0xff]
  %v422 = vld [vmem:[%s1 + $0x240] sm:$0xff]
  %v423 = vld [vmem:[%s1 + $0x248] sm:$0xff]
  %v424 = vld [vmem:[%s1 + $0x250] sm:$0xff]
  %v425 = vld [vmem:[%s1 + $0x258] sm:$0xff]
  %v426 = vld [vmem:[%s1 + $0x260] sm:$0xff]
  %v427 = vld [vmem:[%s1 + $0x268] sm:$0xff]
  %v428 = vld [vmem:[%s1 + $0x270] sm:$0xff]
  %v429 = vld [vmem:[%s1 + $0x278] sm:$0xff]
  %v430 = vld [vmem:[%s1 + $0x280] sm:$0xff]
  %v431 = vld [vmem:[%s1 + $0x288] sm:$0xff]
  %v432 = vld [vmem:[%s1 + $0x290] sm:$0xff]
  %v433 = vld [vmem:[%s1 + $0x298] sm:$0xff]
  %v434 = vld [vmem:[%s1 + $0x2a0] sm:$0xff]
  %v435 = vld [vmem:[%s1 + $0x2a8] sm:$0xff]
  %v436 = vld [vmem:[%s1 + $0x2b0] sm:$0xff]
  %v437 = vld [vmem:[%s1 + $0x2b8] sm:$0xff]
  %v438 = vld [vmem:[%s1 + $0x2c0] sm:$0xff]
  %v439 = vld [vmem:[%s1 + $0x2c8] sm:$0xff]
  %v440 = vld [vmem:[%s1 + $0x2d0] sm:$0xff]
  %v441 = vld [vmem:[%s1 + $0x2d8] sm:$0xff]
  %v442 = vld [vmem:[%s1 + $0x2e0] sm:$0xff]
  %v443 = vld [vmem:[%s1 + $0x2e8] sm:$0xff]
  %v444 = vld [vmem:[%s1 + $0x2f0] sm:$0xff]
  %v445 = vld [vmem:[%s1 + $0x2f8] sm:$0xff]
  %v446 = vld [vmem:[%s1 + $0x300] sm:$0xff]
  %v447 = vld [vmem:[%s1 + $0x308] sm:$0xff]
  %v448 = vld [vmem:[%s1 + $0x310] sm:$0xff]
  %v449 = vld [vmem:[%s1 + $0x318] sm:$0xff]
  %v450 = vld [vmem:[%s1 + $0x320] sm:$0xff]
  %v451 = vld [vmem:[%s1 + $0x328] sm:$0xff]
  %v452 = vld [vmem:[%s1 + $0x330] sm:$0xff]
  %v453 = vld [vmem:[%s1 + $0x338] sm:$0xff]
  %v454 = vld [vmem:[%s1 + $0x340] sm:$0xff]
  %v455 = vld [vmem:[%s1 + $0x348] sm:$0xff]
  %v456 = vld [vmem:[%s1 + $0x350] sm:$0xff]
  %v457 = vld [vmem:[%s1 + $0x358] sm:$0xff]
  %v458 = vld [vmem:[%s1 + $0x360] sm:$0xff]
  %v459 = vld [vmem:[%s1 + $0x368] sm:$0xff]
  %v460 = vld [vmem:[%s1 + $0x370] sm:$0xff]
  %v461 = vld [vmem:[%s1 + $0x378] sm:$0xff]
  %462 = vmatprep.subr.mxu0 0.0
  %463 = vmatpush1.msra.mxu0 %v350
  %464 = vmatprep.subr.mxu0 0.0
  %465 = vmatpush1.msra.mxu0 %v351
  %466 = vmatprep.subr.mxu0 0.0
  %467 = vmatpush1.msra.mxu0 %v352
  %468 = vmatprep.subr.mxu0 0.0
  %469 = vmatpush1.msra.mxu0 %v353
  %470 = vmatprep.subr.mxu0 0.0
  %471 = vmatpush1.msra.mxu0 %v354
  %472 = vmatprep.subr.mxu0 0.0
  %473 = vmatpush1.msra.mxu0 %v355
  %474 = vmatprep.subr.mxu0 0.0
  %475 = vmatpush1.msra.mxu0 %v356
  %476 = vmatprep.subr.mxu0 0.0
  %477 = vmatpush1.msra.mxu0 %v357
  %478 = vmatprep.subr.mxu0 0.0
  %479 = vmatpush1.msra.mxu0 %v358
  %480 = vmatprep.subr.mxu0 0.0
  %481 = vmatpush1.msra.mxu0 %v359
  %482 = vmatprep.subr.mxu0 0.0
  %483 = vmatpush1.msra.mxu0 %v360
  %484 = vmatprep.subr.mxu0 0.0
  %485 = vmatpush1.msra.mxu0 %v361
  %486 = vmatprep.subr.mxu0 0.0
  %487 = vmatpush1.msra.mxu0 %v362
  %488 = vmatprep.subr.mxu0 0.0
  %489 = vmatpush1.msra.mxu0 %v363
  %490 = vmatprep.subr.mxu0 0.0
  %491 = vmatpush1.msra.mxu0 %v364
  %492 = vmatprep.subr.mxu0 0.0
  %493 = vmatpush1.msra.mxu0 %v365
  %494 = vmatprep.subr.mxu0 0.0
  %495 = vmatpush1.msra.mxu0 %v366
  %496 = vmatprep.subr.mxu0 0.0
  %497 = vmatpush1.msra.mxu0 %v367
  %498 = vmatprep.subr.mxu0 0.0
  %499 = vmatpush1.msra.mxu0 %v368
  %500 = vmatprep.subr.mxu0 0.0
  %501 = vmatpush1.msra.mxu0 %v369
  %502 = vmatprep.subr.mxu0 0.0
  %503 = vmatpush1.msra.mxu0 %v370
  %504 = vmatprep.subr.mxu0 0.0
  %505 = vmatpush1.msra.mxu0 %v371
  %506 = vmatprep.subr.mxu0 0.0
  %507 = vmatpush1.msra.mxu0 %v372
  %508 = vmatprep.subr.mxu0 0.0
  %509 = vmatpush1.msra.mxu0 %v373
  %510 = vmatprep.subr.mxu0 0.0
  %511 = vmatpush1.msra.mxu0 %v374
  %512 = vmatprep.subr.mxu0 0.0
  %513 = vmatpush1.msra.mxu0 %v375
  %514 = vmatprep.subr.mxu0 0.0
  %515 = vmatpush1.msra.mxu0 %v376
  %516 = vmatprep.subr.mxu0 0.0
  %517 = vmatpush1.msra.mxu0 %v377
  %518 = vmatprep.subr.mxu0 0.0
  %519 = vmatpush1.msra.mxu0 %v378
  %520 = vmatprep.subr.mxu0 0.0
  %521 = vmatpush1.msra.mxu0 %v379
  %522 = vmatprep.subr.mxu0 0.0
  %523 = vmatpush1.msra.mxu0 %v380
  %524 = vmatprep.subr.mxu0 0.0
  %525 = vmatpush1.msra.mxu0 %v381
  %526 = vmatprep.mubr.f32.mxu0 %v15
  %527 = vmatmul.mubr.f32.gmra.mrb[0].mxu0 %v14
  %v528 = vpop.f32.mrb[0].mxu0
  %v529 = vadd.f32 0.0, %v528
  %v530 = vpop.f32.mrb[0].mxu0
  %531 = vmatprep.mubr.f32.mxu0 %v22
  %532 = vmatmul.mubr.f32.gmra.mrb[0].mxu0 %v21
  %v533 = vpop.f32.mrb[0].mxu0
  %v534 = vadd.f32 0.0, %v533
  %v535 = vpop.f32.mrb[0].mxu0
  %536 = vmatprep.mubr.f32.mxu0 %v29
  %537 = vmatmul.mubr.f32.gmra.mrb[0].mxu0 %v28
  %v538 = vpop.f32.mrb[0].mxu0
  %v539 = vadd.f32 0.0, %v538
  %v540 = vpop.f32.mrb[0].mxu0
  %541 = vmatprep.mubr.f32.mxu0 %v36
  %542 = vmatmul.mubr.f32.gmra.mrb[0].mxu0 %v35
  %v543 = vpop.f32.mrb[0].mxu0
  %v544 = vadd.f32 0.0, %v543
  %v545 = vpop.f32.mrb[0].mxu0
  %546 = vmatprep.mubr.f32.mxu0 %v43
  %547 = vmatmul.mubr.f32.gmra.mrb[0].mxu0 %v42
  %v548 = vpop.f32.mrb[0].mxu0
  %v549 = vadd.f32 0.0, %v548
  %v550 = vpop.f32.mrb[0].mxu0
  %551 = vmatprep.mubr.f32.mxu0 %v50
  %552 = vmatmul.mubr.f32.gmra.mrb[0].mxu0 %v49
  %v553 = vpop.f32.mrb[0].mxu0
  %v554 = vadd.f32 0.0, %v553
  %v555 = vpop.f32.mrb[0].mxu0
  %556 = vmatprep.mubr.f32.mxu0 %v57
  %557 = vmatmul.mubr.f32.gmra.mrb[0].mxu0 %v56
  %v558 = vpop.f32.mrb[0].mxu0
  %v559 = vadd.f32 0.0, %v558
  %v560 = vpop.f32.mrb[0].mxu0
  %561 = vmatprep.mubr.f32.mxu0 %v64
  %562 = vmatmul.mubr.f32.gmra.mrb[0].mxu0 %v63
  %v563 = vpop.f32.mrb[0].mxu0
  %v564 = vadd.f32 0.0, %v563
  %v565 = vpop.f32.mrb[0].mxu0
  %566 = vmatprep.mubr.f32.mxu0 %v71
  %567 = vmatmul.mubr.f32.gmra.mrb[0].mxu0 %v70
  %v568 = vpop.f32.mrb[0].mxu0
  %v569 = vadd.f32 0.0, %v568
  %v570 = vpop.f32.mrb[0].mxu0
  %571 = vmatprep.mubr.f32.mxu0 %v78
  %572 = vmatmul.mubr.f32.gmra.mrb[0].mxu0 %v77
  %v573 = vpop.f32.mrb[0].mxu0
  %v574 = vadd.f32 0.0, %v573
  %v575 = vpop.f32.mrb[0].mxu0
  %576 = vmatprep.mubr.f32.mxu0 %v85
  %577 = vmatmul.mubr.f32.gmra.mrb[0].mxu0 %v84
  %v578 = vpop.f32.mrb[0].mxu0
  %v579 = vadd.f32 0.0, %v578
  %v580 = vpop.f32.mrb[0].mxu0
  %581 = vmatprep.mubr.f32.mxu0 %v92
  %582 = vmatmul.mubr.f32.gmra.mrb[0].mxu0 %v91
  %v583 = vpop.f32.mrb[0].mxu0
  %v584 = vadd.f32 0.0, %v583
  %v585 = vpop.f32.mrb[0].mxu0
  %586 = vmatprep.mubr.f32.mxu0 %v99
  %587 = vmatmul.mubr.f32.gmra.mrb[0].mxu0 %v98
  %v588 = vpop.f32.mrb[0].mxu0
  %v589 = vadd.f32 0.0, %v588
  %v590 = vpop.f32.mrb[0].mxu0
  %591 = vmatprep.mubr.f32.mxu0 %v106
  %592 = vmatmul.mubr.f32.gmra.mrb[0].mxu0 %v105
  %v593 = vpop.f32.mrb[0].mxu0
  %v594 = vadd.f32 0.0, %v593
  %v595 = vpop.f32.mrb[0].mxu0
  %596 = vmatprep.mubr.f32.mxu0 %v113
  %597 = vmatmul.mubr.f32.gmra.mrb[0].mxu0 %v112
  %v598 = vpop.f32.mrb[0].mxu0
  %v599 = vadd.f32 0.0, %v598
  %v600 = vpop.f32.mrb[0].mxu0
  %601 = vmatprep.mubr.f32.mxu0 %v120
  %602 = vmatmul.mubr.f32.gmra.mrb[0].mxu0 %v119
  %v603 = vpop.f32.mrb[0].mxu0
  %v604 = vadd.f32 0.0, %v603
  %v605 = vpop.f32.mrb[0].mxu0
  %606 = vmatprep.mubr.f32.mxu0 %v127
  %607 = vmatmul.mubr.f32.gmra.mrb[0].mxu0 %v126
  %v608 = vpop.f32.mrb[0].mxu0
  %v609 = vadd.f32 0.0, %v608
  %v610 = vpop.f32.mrb[0].mxu0
  %611 = vmatprep.mubr.f32.mxu0 %v134
  %612 = vmatmul.mubr.f32.gmra.mrb[0].mxu0 %v133
  %v613 = vpop.f32.mrb[0].mxu0
  %v614 = vadd.f32 0.0, %v613
  %v615 = vpop.f32.mrb[0].mxu0
  %616 = vmatprep.mubr.f32.mxu0 %v141
  %617 = vmatmul.mubr.f32.gmra.mrb[0].mxu0 %v140
  %v618 = vpop.f32.mrb[0].mxu0
  %v619 = vadd.f32 0.0, %v618
  %v620 = vpop.f32.mrb[0].mxu0
  %621 = vmatprep.mubr.f32.mxu0 %v148
  %622 = vmatmul.mubr.f32.gmra.mrb[0].mxu0 %v147
  %v623 = vpop.f32.mrb[0].mxu0
  %v624 = vadd.f32 0.0, %v623
  %v625 = vpop.f32.mrb[0].mxu0
  %626 = vmatprep.mubr.f32.mxu0 %v155
  %627 = vmatmul.mubr.f32.gmra.mrb[0].mxu0 %v154
  %v628 = vpop.f32.mrb[0].mxu0
  %v629 = vadd.f32 0.0, %v628
  %v630 = vpop.f32.mrb[0].mxu0
  %631 = vmatprep.mubr.f32.mxu0 %v162
  %632 = vmatmul.mubr.f32.gmra.mrb[0].mxu0 %v161
  %v633 = vpop.f32.mrb[0].mxu0
  %v634 = vadd.f32 0.0, %v633
  %v635 = vpop.f32.mrb[0].mxu0
  %636 = vmatprep.mubr.f32.mxu0 %v169
  %637 = vmatmul.mubr.f32.gmra.mrb[0].mxu0 %v168
  %v638 = vpop.f32.mrb[0].mxu0
  %v639 = vadd.f32 0.0, %v638
  %v640 = vpop.f32.mrb[0].mxu0
  %641 = vmatprep.mubr.f32.mxu0 %v176
  %642 = vmatmul.mubr.f32.gmra.mrb[0].mxu0 %v175
  %v643 = vpop.f32.mrb[0].mxu0
  %v644 = vadd.f32 0.0, %v643
  %v645 = vpop.f32.mrb[0].mxu0
  %646 = vmatprep.mubr.f32.mxu0 %v183
  %647 = vmatmul.mubr.f32.gmra.mrb[0].mxu0 %v182
  %v648 = vpop.f32.mrb[0].mxu0
  %v649 = vadd.f32 0.0, %v648
  %v650 = vpop.f32.mrb[0].mxu0
  %651 = vmatprep.mubr.f32.mxu0 %v190
  %652 = vmatmul.mubr.f32.gmra.mrb[0].mxu0 %v189
  %v653 = vpop.f32.mrb[0].mxu0
  %v654 = vadd.f32 0.0, %v653
  %v655 = vpop.f32.mrb[0].mxu0
  %656 = vmatprep.mubr.f32.mxu0 %v197
  %657 = vmatmul.mubr.f32.gmra.mrb[0].mxu0 %v196
  %v658 = vpop.f32.mrb[0].mxu0
  %v659 = vadd.f32 0.0, %v658
  %v660 = vpop.f32.mrb[0].mxu0
  %661 = vmatprep.mubr.f32.mxu0 %v204
  %662 = vmatmul.mubr.f32.gmra.mrb[0].mxu0 %v203
  %v663 = vpop.f32.mrb[0].mxu0
  %v664 = vadd.f32 0.0, %v663
  %v665 = vpop.f32.mrb[0].mxu0
  %666 = vmatprep.mubr.f32.mxu0 %v211
  %667 = vmatmul.mubr.f32.gmra.mrb[0].mxu0 %v210
  %v668 = vpop.f32.mrb[0].mxu0
  %v669 = vadd.f32 0.0, %v668
  %v670 = vpop.f32.mrb[0].mxu0
  %671 = vmatprep.mubr.f32.mxu0 %v218
  %672 = vmatmul.mubr.f32.gmra.mrb[0].mxu0 %v217
  %v673 = vpop.f32.mrb[0].mxu0
  %v674 = vadd.f32 0.0, %v673
  %v675 = vpop.f32.mrb[0].mxu0
  %676 = vmatprep.mubr.f32.mxu0 %v225
  %677 = vmatmul.mubr.f32.gmra.mrb[0].mxu0 %v224
  %v678 = vpop.f32.mrb[0].mxu0
  %v679 = vadd.f32 0.0, %v678
  %v680 = vpop.f32.mrb[0].mxu0
  %681 = vmatprep.mubr.f32.mxu0 %v232
  %682 = vmatmul.mubr.f32.gmra.mrb[0].mxu0 %v231
  %v683 = vpop.f32.mrb[0].mxu0
  %v684 = vadd.f32 0.0, %v683
  %v685 = vpop.f32.mrb[0].mxu0
  %686 = vmatprep.mubr.f32.mxu0 %v239
  %687 = vmatmul.mubr.f32.gmra.mrb[0].mxu0 %v238
  %v688 = vpop.f32.mrb[0].mxu0
  %v689 = vadd.f32 0.0, %v688
  %v690 = vpop.f32.mrb[0].mxu0
  %691 = vmatprep.mubr.f32.mxu0 %v246
  %692 = vmatmul.mubr.f32.gmra.mrb[0].mxu0 %v245
  %v693 = vpop.f32.mrb[0].mxu0
  %v694 = vadd.f32 0.0, %v693
  %v695 = vpop.f32.mrb[0].mxu0
  %696 = vmatprep.mubr.f32.mxu0 %v253
  %697 = vmatmul.mubr.f32.gmra.mrb[0].mxu0 %v252
  %v698 = vpop.f32.mrb[0].mxu0
  %v699 = vadd.f32 0.0, %v698
  %v700 = vpop.f32.mrb[0].mxu0
  %701 = vmatprep.mubr.f32.mxu0 %v260
  %702 = vmatmul.mubr.f32.gmra.mrb[0].mxu0 %v259
  %v703 = vpop.f32.mrb[0].mxu0
  %v704 = vadd.f32 0.0, %v703
  %v705 = vpop.f32.mrb[0].mxu0
  %706 = vmatprep.mubr.f32.mxu0 %v267
  %707 = vmatmul.mubr.f32.gmra.mrb[0].mxu0 %v266
  %v708 = vpop.f32.mrb[0].mxu0
  %v709 = vadd.f32 0.0, %v708
  %v710 = vpop.f32.mrb[0].mxu0
  %711 = vmatprep.mubr.f32.mxu0 %v274
  %712 = vmatmul.mubr.f32.gmra.mrb[0].mxu0 %v273
  %v713 = vpop.f32.mrb[0].mxu0
  %v714 = vadd.f32 0.0, %v713
  %v715 = vpop.f32.mrb[0].mxu0
  %716 = vmatprep.mubr.f32.mxu0 %v281
  %717 = vmatmul.mubr.f32.gmra.mrb[0].mxu0 %v280
  %v718 = vpop.f32.mrb[0].mxu0
  %v719 = vadd.f32 0.0, %v718
  %v720 = vpop.f32.mrb[0].mxu0
  %721 = vmatprep.mubr.f32.mxu0 %v288
  %722 = vmatmul.mubr.f32.gmra.mrb[0].mxu0 %v287
  %v723 = vpop.f32.mrb[0].mxu0
  %v724 = vadd.f32 0.0, %v723
  %v725 = vpop.f32.mrb[0].mxu0
  %726 = vmatprep.mubr.f32.mxu0 %v295
  %727 = vmatmul.mubr.f32.gmra.mrb[0].mxu0 %v294
  %v728 = vpop.f32.mrb[0].mxu0
  %v729 = vadd.f32 0.0, %v728
  %v730 = vpop.f32.mrb[0].mxu0
  %731 = vmatprep.mubr.f32.mxu0 %v302
  %732 = vmatmul.mubr.f32.gmra.mrb[0].mxu0 %v301
  %v733 = vpop.f32.mrb[0].mxu0
  %v734 = vadd.f32 0.0, %v733
  %v735 = vpop.f32.mrb[0].mxu0
  %736 = vmatprep.mubr.f32.mxu0 %v309
  %737 = vmatmul.mubr.f32.gmra.mrb[0].mxu0 %v308
  %v738 = vpop.f32.mrb[0].mxu0
  %v739 = vadd.f32 0.0, %v738
  %v740 = vpop.f32.mrb[0].mxu0
  %741 = vmatprep.mubr.f32.mxu0 %v316
  %742 = vmatmul.mubr.f32.gmra.mrb[0].mxu0 %v315
  %v743 = vpop.f32.mrb[0].mxu0
  %v744 = vadd.f32 0.0, %v743
  %v745 = vpop.f32.mrb[0].mxu0
  %746 = vmatprep.mubr.f32.mxu0 %v323
  %747 = vmatmul.mubr.f32.gmra.mrb[0].mxu0 %v322
  %v748 = vpop.f32.mrb[0].mxu0
  %v749 = vadd.f32 0.0, %v748
  %v750 = vpop.f32.mrb[0].mxu0
  %751 = vmatprep.mubr.f32.mxu0 %v330
  %752 = vmatmul.mubr.f32.gmra.mrb[0].mxu0 %v329
  %v753 = vpop.f32.mrb[0].mxu0
  %v754 = vadd.f32 0.0, %v753
  %v755 = vpop.f32.mrb[0].mxu0
  %756 = vmatprep.mubr.f32.mxu0 %v337
  %757 = vmatmul.mubr.f32.gmra.mrb[0].mxu0 %v336
  %v758 = vpop.f32.mrb[0].mxu0
  %v759 = vadd.f32 0.0, %v758
  %v760 = vpop.f32.mrb[0].mxu0
  %761 = vmatprep.mubr.f32.mxu0 %v344
  %762 = vmatmul.mubr.f32.gmra.mrb[0].mxu0 %v343
  %v763 = vpop.f32.mrb[0].mxu0
  %v764 = vadd.f32 0.0, %v763
  %v765 = vpop.f32.mrb[0].mxu0
  %766 = vdwg.mxu0
  %767 = vmatprep.subr.mxu0 0.0
  %768 = vmatpush1.msra.mxu0 %v382
  %769 = vmatprep.subr.mxu0 0.0
  %770 = vmatpush1.msra.mxu0 %v383
  %771 = vmatprep.subr.mxu0 0.0
  %772 = vmatpush1.msra.mxu0 %v384
  %773 = vmatprep.subr.mxu0 0.0
  %774 = vmatpush1.msra.mxu0 %v385
  %775 = vmatprep.subr.mxu0 0.0
  %776 = vmatpush1.msra.mxu0 %v386
  %777 = vmatprep.subr.mxu0 0.0
  %778 = vmatpush1.msra.mxu0 %v387
  %779 = vmatprep.subr.mxu0 0.0
  %780 = vmatpush1.msra.mxu0 %v388
  %781 = vmatprep.subr.mxu0 0.0
  %782 = vmatpush1.msra.mxu0 %v389
  %783 = vmatprep.subr.mxu0 0.0
  %784 = vmatpush1.msra.mxu0 %v390
  %785 = vmatprep.subr.mxu0 0.0
  %786 = vmatpush1.msra.mxu0 %v391
  %787 = vmatprep.subr.mxu0 0.0
  %788 = vmatpush1.msra.mxu0 %v392
  %789 = vmatprep.subr.mxu0 0.0
  %790 = vmatpush1.msra.mxu0 %v393
  %791 = vmatprep.subr.mxu0 0.0
  %792 = vmatpush1.msra.mxu0 %v394
  %793 = vmatprep.subr.mxu0 0.0
  %794 = vmatpush1.msra.mxu0 %v395
  %795 = vmatprep.subr.mxu0 0.0
  %796 = vmatpush1.msra.mxu0 %v396
  %797 = vmatprep.subr.mxu0 0.0
  %798 = vmatpush1.msra.mxu0 %v397
  %799 = vmatprep.subr.mxu0 0.0
  %800 = vmatpush1.msra.mxu0 %v398
  %801 = vmatprep.subr.mxu0 0.0
  %802 = vmatpush1.msra.mxu0 %v399
  %803 = vmatprep.subr.mxu0 0.0
  %804 = vmatpush1.msra.mxu0 %v400
  %805 = vmatprep.subr.mxu0 0.0
  %806 = vmatpush1.msra.mxu0 %v401
  %807 = vmatprep.subr.mxu0 0.0
  %808 = vmatpush1.msra.mxu0 %v402
  %809 = vmatprep.subr.mxu0 0.0
  %810 = vmatpush1.msra.mxu0 %v403
  %811 = vmatprep.subr.mxu0 0.0
  %812 = vmatpush1.msra.mxu0 %v404
  %813 = vmatprep.subr.mxu0 0.0
  %814 = vmatpush1.msra.mxu0 %v405
  %815 = vmatprep.subr.mxu0 0.0
  %816 = vmatpush1.msra.mxu0 %v406
  %817 = vmatprep.subr.mxu0 0.0
  %818 = vmatpush1.msra.mxu0 %v407
  %819 = vmatprep.subr.mxu0 0.0
  %820 = vmatpush1.msra.mxu0 %v408
  %821 = vmatprep.subr.mxu0 0.0
  %822 = vmatpush1.msra.mxu0 %v409
  %823 = vmatprep.subr.mxu0 0.0
  %824 = vmatpush1.msra.mxu0 %v410
  %825 = vmatprep.subr.mxu0 0.0
  %826 = vmatpush1.msra.mxu0 %v411
  %827 = vmatprep.subr.mxu0 0.0
  %828 = vmatpush1.msra.mxu0 %v412
  %829 = vmatprep.subr.mxu0 0.0
  %830 = vmatpush1.msra.mxu0 %v413
  %831 = vmatprep.mubr.f32.mxu0 %v17
  %832 = vmatmul.mubr.f32.gmra.mrb[0].mxu0 %v16
  %v833 = vpop.f32.mrb[0].mxu0
  %v834 = vadd.f32 %v529, %v833
  %v835 = vpop.f32.mrb[0].mxu0
  %836 = vmatprep.mubr.f32.mxu0 %v24
  %837 = vmatmul.mubr.f32.gmra.mrb[0].mxu0 %v23
  %v838 = vpop.f32.mrb[0].mxu0
  %v839 = vadd.f32 %v534, %v838
  %v840 = vpop.f32.mrb[0].mxu0
  %841 = vmatprep.mubr.f32.mxu0 %v31
  %842 = vmatmul.mubr.f32.gmra.mrb[0].mxu0 %v30
  %v843 = vpop.f32.mrb[0].mxu0
  %v844 = vadd.f32 %v539, %v843
  %v845 = vpop.f32.mrb[0].mxu0
  %846 = vmatprep.mubr.f32.mxu0 %v38
  %847 = vmatmul.mubr.f32.gmra.mrb[0].mxu0 %v37
  %v848 = vpop.f32.mrb[0].mxu0
  %v849 = vadd.f32 %v544, %v848
  %v850 = vpop.f32.mrb[0].mxu0
  %851 = vmatprep.mubr.f32.mxu0 %v45
  %852 = vmatmul.mubr.f32.gmra.mrb[0].mxu0 %v44
  %v853 = vpop.f32.mrb[0].mxu0
  %v854 = vadd.f32 %v549, %v853
  %v855 = vpop.f32.mrb[0].mxu0
  %856 = vmatprep.mubr.f32.mxu0 %v52
  %857 = vmatmul.mubr.f32.gmra.mrb[0].mxu0 %v51
  %v858 = vpop.f32.mrb[0].mxu0
  %v859 = vadd.f32 %v554, %v858
  %v860 = vpop.f32.mrb[0].mxu0
  %861 = vmatprep.mubr.f32.mxu0 %v59
  %862 = vmatmul.mubr.f32.gmra.mrb[0].mxu0 %v58
  %v863 = vpop.f32.mrb[0].mxu0
  %v864 = vadd.f32 %v559, %v863
  %v865 = vpop.f32.mrb[0].mxu0
  %866 = vmatprep.mubr.f32.mxu0 %v66
  %867 = vmatmul.mubr.f32.gmra.mrb[0].mxu0 %v65
  %v868 = vpop.f32.mrb[0].mxu0
  %v869 = vadd.f32 %v564, %v868
  %v870 = vpop.f32.mrb[0].mxu0
  %871 = vmatprep.mubr.f32.mxu0 %v73
  %872 = vmatmul.mubr.f32.gmra.mrb[0].mxu0 %v72
  %v873 = vpop.f32.mrb[0].mxu0
  %v874 = vadd.f32 %v569, %v873
  %v875 = vpop.f32.mrb[0].mxu0
  %876 = vmatprep.mubr.f32.mxu0 %v80
  %877 = vmatmul.mubr.f32.gmra.mrb[0].mxu0 %v79
  %v878 = vpop.f32.mrb[0].mxu0
  %v879 = vadd.f32 %v574, %v878
  %v880 = vpop.f32.mrb[0].mxu0
  %881 = vmatprep.mubr.f32.mxu0 %v87
  %882 = vmatmul.mubr.f32.gmra.mrb[0].mxu0 %v86
  %v883 = vpop.f32.mrb[0].mxu0
  %v884 = vadd.f32 %v579, %v883
  %v885 = vpop.f32.mrb[0].mxu0
  %886 = vmatprep.mubr.f32.mxu0 %v94
  %887 = vmatmul.mubr.f32.gmra.mrb[0].mxu0 %v93
  %v888 = vpop.f32.mrb[0].mxu0
  %v889 = vadd.f32 %v584, %v888
  %v890 = vpop.f32.mrb[0].mxu0
  %891 = vmatprep.mubr.f32.mxu0 %v101
  %892 = vmatmul.mubr.f32.gmra.mrb[0].mxu0 %v100
  %v893 = vpop.f32.mrb[0].mxu0
  %v894 = vadd.f32 %v589, %v893
  %v895 = vpop.f32.mrb[0].mxu0
  %896 = vmatprep.mubr.f32.mxu0 %v108
  %897 = vmatmul.mubr.f32.gmra.mrb[0].mxu0 %v107
  %v898 = vpop.f32.mrb[0].mxu0
  %v899 = vadd.f32 %v594, %v898
  %v900 = vpop.f32.mrb[0].mxu0
  %901 = vmatprep.mubr.f32.mxu0 %v115
  %902 = vmatmul.mubr.f32.gmra.mrb[0].mxu0 %v114
  %v903 = vpop.f32.mrb[0].mxu0
  %v904 = vadd.f32 %v599, %v903
  %v905 = vpop.f32.mrb[0].mxu0
  %906 = vmatprep.mubr.f32.mxu0 %v122
  %907 = vmatmul.mubr.f32.gmra.mrb[0].mxu0 %v121
  %v908 = vpop.f32.mrb[0].mxu0
  %v909 = vadd.f32 %v604, %v908
  %v910 = vpop.f32.mrb[0].mxu0
  %911 = vmatprep.mubr.f32.mxu0 %v129
  %912 = vmatmul.mubr.f32.gmra.mrb[0].mxu0 %v128
  %v913 = vpop.f32.mrb[0].mxu0
  %v914 = vadd.f32 %v609, %v913
  %v915 = vpop.f32.mrb[0].mxu0
  %916 = vmatprep.mubr.f32.mxu0 %v136
  %917 = vmatmul.mubr.f32.gmra.mrb[0].mxu0 %v135
  %v918 = vpop.f32.mrb[0].mxu0
  %v919 = vadd.f32 %v614, %v918
  %v920 = vpop.f32.mrb[0].mxu0
  %921 = vmatprep.mubr.f32.mxu0 %v143
  %922 = vmatmul.mubr.f32.gmra.mrb[0].mxu0 %v142
  %v923 = vpop.f32.mrb[0].mxu0
  %v924 = vadd.f32 %v619, %v923
  %v925 = vpop.f32.mrb[0].mxu0
  %926 = vmatprep.mubr.f32.mxu0 %v150
  %927 = vmatmul.mubr.f32.gmra.mrb[0].mxu0 %v149
  %v928 = vpop.f32.mrb[0].mxu0
  %v929 = vadd.f32 %v624, %v928
  %v930 = vpop.f32.mrb[0].mxu0
  %931 = vmatprep.mubr.f32.mxu0 %v157
  %932 = vmatmul.mubr.f32.gmra.mrb[0].mxu0 %v156
  %v933 = vpop.f32.mrb[0].mxu0
  %v934 = vadd.f32 %v629, %v933
  %v935 = vpop.f32.mrb[0].mxu0
  %936 = vmatprep.mubr.f32.mxu0 %v164
  %937 = vmatmul.mubr.f32.gmra.mrb[0].mxu0 %v163
  %v938 = vpop.f32.mrb[0].mxu0
  %v939 = vadd.f32 %v634, %v938
  %v940 = vpop.f32.mrb[0].mxu0
  %941 = vmatprep.mubr.f32.mxu0 %v171
  %942 = vmatmul.mubr.f32.gmra.mrb[0].mxu0 %v170
  %v943 = vpop.f32.mrb[0].mxu0
  %v944 = vadd.f32 %v639, %v943
  %v945 = vpop.f32.mrb[0].mxu0
  %946 = vmatprep.mubr.f32.mxu0 %v178
  %947 = vmatmul.mubr.f32.gmra.mrb[0].mxu0 %v177
  %v948 = vpop.f32.mrb[0].mxu0
  %v949 = vadd.f32 %v644, %v948
  %v950 = vpop.f32.mrb[0].mxu0
  %951 = vmatprep.mubr.f32.mxu0 %v185
  %952 = vmatmul.mubr.f32.gmra.mrb[0].mxu0 %v184
  %v953 = vpop.f32.mrb[0].mxu0
  %v954 = vadd.f32 %v649, %v953
  %v955 = vpop.f32.mrb[0].mxu0
  %956 = vmatprep.mubr.f32.mxu0 %v192
  %957 = vmatmul.mubr.f32.gmra.mrb[0].mxu0 %v191
  %v958 = vpop.f32.mrb[0].mxu0
  %v959 = vadd.f32 %v654, %v958
  %v960 = vpop.f32.mrb[0].mxu0
  %961 = vmatprep.mubr.f32.mxu0 %v199
  %962 = vmatmul.mubr.f32.gmra.mrb[0].mxu0 %v198
  %v963 = vpop.f32.mrb[0].mxu0
  %v964 = vadd.f32 %v659, %v963
  %v965 = vpop.f32.mrb[0].mxu0
  %966 = vmatprep.mubr.f32.mxu0 %v206
  %967 = vmatmul.mubr.f32.gmra.mrb[0].mxu0 %v205
  %v968 = vpop.f32.mrb[0].mxu0
  %v969 = vadd.f32 %v664, %v968
  %v970 = vpop.f32.mrb[0].mxu0
  %971 = vmatprep.mubr.f32.mxu0 %v213
  %972 = vmatmul.mubr.f32.gmra.mrb[0].mxu0 %v212
  %v973 = vpop.f32.mrb[0].mxu0
  %v974 = vadd.f32 %v669, %v973
  %v975 = vpop.f32.mrb[0].mxu0
  %976 = vmatprep.mubr.f32.mxu0 %v220
  %977 = vmatmul.mubr.f32.gmra.mrb[0].mxu0 %v219
  %v978 = vpop.f32.mrb[0].mxu0
  %v979 = vadd.f32 %v674, %v978
  %v980 = vpop.f32.mrb[0].mxu0
  %981 = vmatprep.mubr.f32.mxu0 %v227
  %982 = vmatmul.mubr.f32.gmra.mrb[0].mxu0 %v226
  %v983 = vpop.f32.mrb[0].mxu0
  %v984 = vadd.f32 %v679, %v983
  %v985 = vpop.f32.mrb[0].mxu0
  %986 = vmatprep.mubr.f32.mxu0 %v234
  %987 = vmatmul.mubr.f32.gmra.mrb[0].mxu0 %v233
  %v988 = vpop.f32.mrb[0].mxu0
  %v989 = vadd.f32 %v684, %v988
  %v990 = vpop.f32.mrb[0].mxu0
  %991 = vmatprep.mubr.f32.mxu0 %v241
  %992 = vmatmul.mubr.f32.gmra.mrb[0].mxu0 %v240
  %v993 = vpop.f32.mrb[0].mxu0
  %v994 = vadd.f32 %v689, %v993
  %v995 = vpop.f32.mrb[0].mxu0
  %996 = vmatprep.mubr.f32.mxu0 %v248
  %997 = vmatmul.mubr.f32.gmra.mrb[0].mxu0 %v247
  %v998 = vpop.f32.mrb[0].mxu0
  %v999 = vadd.f32 %v694, %v998
  %v1000 = vpop.f32.mrb[0].mxu0
  %1001 = vmatprep.mubr.f32.mxu0 %v255
  %1002 = vmatmul.mubr.f32.gmra.mrb[0].mxu0 %v254
  %v1003 = vpop.f32.mrb[0].mxu0
  %v1004 = vadd.f32 %v699, %v1003
  %v1005 = vpop.f32.mrb[0].mxu0
  %1006 = vmatprep.mubr.f32.mxu0 %v262
  %1007 = vmatmul.mubr.f32.gmra.mrb[0].mxu0 %v261
  %v1008 = vpop.f32.mrb[0].mxu0
  %v1009 = vadd.f32 %v704, %v1008
  %v1010 = vpop.f32.mrb[0].mxu0
  %1011 = vmatprep.mubr.f32.mxu0 %v269
  %1012 = vmatmul.mubr.f32.gmra.mrb[0].mxu0 %v268
  %v1013 = vpop.f32.mrb[0].mxu0
  %v1014 = vadd.f32 %v709, %v1013
  %v1015 = vpop.f32.mrb[0].mxu0
  %1016 = vmatprep.mubr.f32.mxu0 %v276
  %1017 = vmatmul.mubr.f32.gmra.mrb[0].mxu0 %v275
  %v1018 = vpop.f32.mrb[0].mxu0
  %v1019 = vadd.f32 %v714, %v1018
  %v1020 = vpop.f32.mrb[0].mxu0
  %1021 = vmatprep.mubr.f32.mxu0 %v283
  %1022 = vmatmul.mubr.f32.gmra.mrb[0].mxu0 %v282
  %v1023 = vpop.f32.mrb[0].mxu0
  %v1024 = vadd.f32 %v719, %v1023
  %v1025 = vpop.f32.mrb[0].mxu0
  %1026 = vmatprep.mubr.f32.mxu0 %v290
  %1027 = vmatmul.mubr.f32.gmra.mrb[0].mxu0 %v289
  %v1028 = vpop.f32.mrb[0].mxu0
  %v1029 = vadd.f32 %v724, %v1028
  %v1030 = vpop.f32.mrb[0].mxu0
  %1031 = vmatprep.mubr.f32.mxu0 %v297
  %1032 = vmatmul.mubr.f32.gmra.mrb[0].mxu0 %v296
  %v1033 = vpop.f32.mrb[0].mxu0
  %v1034 = vadd.f32 %v729, %v1033
  %v1035 = vpop.f32.mrb[0].mxu0
  %1036 = vmatprep.mubr.f32.mxu0 %v304
  %1037 = vmatmul.mubr.f32.gmra.mrb[0].mxu0 %v303
  %v1038 = vpop.f32.mrb[0].mxu0
  %v1039 = vadd.f32 %v734, %v1038
  %v1040 = vpop.f32.mrb[0].mxu0
  %1041 = vmatprep.mubr.f32.mxu0 %v311
  %1042 = vmatmul.mubr.f32.gmra.mrb[0].mxu0 %v310
  %v1043 = vpop.f32.mrb[0].mxu0
  %v1044 = vadd.f32 %v739, %v1043
  %v1045 = vpop.f32.mrb[0].mxu0
  %1046 = vmatprep.mubr.f32.mxu0 %v318
  %1047 = vmatmul.mubr.f32.gmra.mrb[0].mxu0 %v317
  %v1048 = vpop.f32.mrb[0].mxu0
  %v1049 = vadd.f32 %v744, %v1048
  %v1050 = vpop.f32.mrb[0].mxu0
  %1051 = vmatprep.mubr.f32.mxu0 %v325
  %1052 = vmatmul.mubr.f32.gmra.mrb[0].mxu0 %v324
  %v1053 = vpop.f32.mrb[0].mxu0
  %v1054 = vadd.f32 %v749, %v1053
  %v1055 = vpop.f32.mrb[0].mxu0
  %1056 = vmatprep.mubr.f32.mxu0 %v332
  %1057 = vmatmul.mubr.f32.gmra.mrb[0].mxu0 %v331
  %v1058 = vpop.f32.mrb[0].mxu0
  %v1059 = vadd.f32 %v754, %v1058
  %v1060 = vpop.f32.mrb[0].mxu0
  %1061 = vmatprep.mubr.f32.mxu0 %v339
  %1062 = vmatmul.mubr.f32.gmra.mrb[0].mxu0 %v338
  %v1063 = vpop.f32.mrb[0].mxu0
  %v1064 = vadd.f32 %v759, %v1063
  %v1065 = vpop.f32.mrb[0].mxu0
  %1066 = vmatprep.mubr.f32.mxu0 %v346
  %1067 = vmatmul.mubr.f32.gmra.mrb[0].mxu0 %v345
  %v1068 = vpop.f32.mrb[0].mxu0
  %v1069 = vadd.f32 %v764, %v1068
  %v1070 = vpop.f32.mrb[0].mxu0
  %1071 = vdwg.mxu0
  %1072 = vmatprep.subr.mxu0 0.0
  %1073 = vmatpush1.msra.mxu0 %v414
  %1074 = vmatprep.subr.mxu0 0.0
  %1075 = vmatpush1.msra.mxu0 %v415
  %1076 = vmatprep.subr.mxu0 0.0
  %1077 = vmatpush1.msra.mxu0 %v416
  %1078 = vmatprep.subr.mxu0 0.0
  %1079 = vmatpush1.msra.mxu0 %v417
  %1080 = vmatprep.subr.mxu0 0.0
  %1081 = vmatpush1.msra.mxu0 %v418
  %1082 = vmatprep.subr.mxu0 0.0
  %1083 = vmatpush1.msra.mxu0 %v419
  %1084 = vmatprep.subr.mxu0 0.0
  %1085 = vmatpush1.msra.mxu0 %v420
  %1086 = vmatprep.subr.mxu0 0.0
  %1087 = vmatpush1.msra.mxu0 %v421
  %1088 = vmatprep.subr.mxu0 0.0
  %1089 = vmatpush1.msra.mxu0 %v422
  %1090 = vmatprep.subr.mxu0 0.0
  %1091 = vmatpush1.msra.mxu0 %v423
  %1092 = vmatprep.subr.mxu0 0.0
  %1093 = vmatpush1.msra.mxu0 %v424
  %1094 = vmatprep.subr.mxu0 0.0
  %1095 = vmatpush1.msra.mxu0 %v425
  %1096 = vmatprep.subr.mxu0 0.0
  %1097 = vmatpush1.msra.mxu0 %v426
  %1098 = vmatprep.subr.mxu0 0.0
  %1099 = vmatpush1.msra.mxu0 %v427
  %1100 = vmatprep.subr.mxu0 0.0
  %1101 = vmatpush1.msra.mxu0 %v428
  %1102 = vmatprep.subr.mxu0 0.0
  %1103 = vmatpush1.msra.mxu0 %v429
  %1104 = vmatprep.subr.mxu0 0.0
  %1105 = vmatpush1.msra.mxu0 %v430
  %1106 = vmatprep.subr.mxu0 0.0
  %1107 = vmatpush1.msra.mxu0 %v431
  %1108 = vmatprep.subr.mxu0 0.0
  %1109 = vmatpush1.msra.mxu0 %v432
  %1110 = vmatprep.subr.mxu0 0.0
  %1111 = vmatpush1.msra.mxu0 %v433
  %1112 = vmatprep.subr.mxu0 0.0
  %1113 = vmatpush1.msra.mxu0 %v434
  %1114 = vmatprep.subr.mxu0 0.0
  %1115 = vmatpush1.msra.mxu0 %v435
  %1116 = vmatprep.subr.mxu0 0.0
  %1117 = vmatpush1.msra.mxu0 %v436
  %1118 = vmatprep.subr.mxu0 0.0
  %1119 = vmatpush1.msra.mxu0 %v437
  %1120 = vmatprep.subr.mxu0 0.0
  %1121 = vmatpush1.msra.mxu0 %v438
  %1122 = vmatprep.subr.mxu0 0.0
  %1123 = vmatpush1.msra.mxu0 %v439
  %1124 = vmatprep.subr.mxu0 0.0
  %1125 = vmatpush1.msra.mxu0 %v440
  %1126 = vmatprep.subr.mxu0 0.0
  %1127 = vmatpush1.msra.mxu0 %v441
  %1128 = vmatprep.subr.mxu0 0.0
  %1129 = vmatpush1.msra.mxu0 %v442
  %1130 = vmatprep.subr.mxu0 0.0
  %1131 = vmatpush1.msra.mxu0 %v443
  %1132 = vmatprep.subr.mxu0 0.0
  %1133 = vmatpush1.msra.mxu0 %v444
  %1134 = vmatprep.subr.mxu0 0.0
  %1135 = vmatpush1.msra.mxu0 %v445
  %1136 = vmatprep.mubr.f32.mxu0 %v19
  %1137 = vmatmul.mubr.f32.gmra.mrb[0].mxu0 %v18
  %v1138 = vpop.f32.mrb[0].mxu0
  %v1139 = vadd.f32 %v834, %v1138
  %v1140 = vpop.f32.mrb[0].mxu0
  %1141 = vmatprep.mubr.f32.mxu0 %v26
  %1142 = vmatmul.mubr.f32.gmra.mrb[0].mxu0 %v25
  %v1143 = vpop.f32.mrb[0].mxu0
  %v1144 = vadd.f32 %v839, %v1143
  %v1145 = vpop.f32.mrb[0].mxu0
  %1146 = vmatprep.mubr.f32.mxu0 %v33
  %1147 = vmatmul.mubr.f32.gmra.mrb[0].mxu0 %v32
  %v1148 = vpop.f32.mrb[0].mxu0
  %v1149 = vadd.f32 %v844, %v1148
  %v1150 = vpop.f32.mrb[0].mxu0
  %1151 = vmatprep.mubr.f32.mxu0 %v40
  %1152 = vmatmul.mubr.f32.gmra.mrb[0].mxu0 %v39
  %v1153 = vpop.f32.mrb[0].mxu0
  %v1154 = vadd.f32 %v849, %v1153
  %v1155 = vpop.f32.mrb[0].mxu0
  %1156 = vmatprep.mubr.f32.mxu0 %v47
  %1157 = vmatmul.mubr.f32.gmra.mrb[0].mxu0 %v46
  %v1158 = vpop.f32.mrb[0].mxu0
  %v1159 = vadd.f32 %v854, %v1158
  %v1160 = vpop.f32.mrb[0].mxu0
  %1161 = vmatprep.mubr.f32.mxu0 %v54
  %1162 = vmatmul.mubr.f32.gmra.mrb[0].mxu0 %v53
  %v1163 = vpop.f32.mrb[0].mxu0
  %v1164 = vadd.f32 %v859, %v1163
  %v1165 = vpop.f32.mrb[0].mxu0
  %1166 = vmatprep.mubr.f32.mxu0 %v61
  %1167 = vmatmul.mubr.f32.gmra.mrb[0].mxu0 %v60
  %v1168 = vpop.f32.mrb[0].mxu0
  %v1169 = vadd.f32 %v864, %v1168
  %v1170 = vpop.f32.mrb[0].mxu0
  %1171 = vmatprep.mubr.f32.mxu0 %v68
  %1172 = vmatmul.mubr.f32.gmra.mrb[0].mxu0 %v67
  %v1173 = vpop.f32.mrb[0].mxu0
  %v1174 = vadd.f32 %v869, %v1173
  %v1175 = vpop.f32.mrb[0].mxu0
  %1176 = vmatprep.mubr.f32.mxu0 %v75
  %1177 = vmatmul.mubr.f32.gmra.mrb[0].mxu0 %v74
  %v1178 = vpop.f32.mrb[0].mxu0
  %v1179 = vadd.f32 %v874, %v1178
  %v1180 = vpop.f32.mrb[0].mxu0
  %1181 = vmatprep.mubr.f32.mxu0 %v82
  %1182 = vmatmul.mubr.f32.gmra.mrb[0].mxu0 %v81
  %v1183 = vpop.f32.mrb[0].mxu0
  %v1184 = vadd.f32 %v879, %v1183
  %v1185 = vpop.f32.mrb[0].mxu0
  %1186 = vmatprep.mubr.f32.mxu0 %v89
  %1187 = vmatmul.mubr.f32.gmra.mrb[0].mxu0 %v88
  %v1188 = vpop.f32.mrb[0].mxu0
  %v1189 = vadd.f32 %v884, %v1188
  %v1190 = vpop.f32.mrb[0].mxu0
  %1191 = vmatprep.mubr.f32.mxu0 %v96
  %1192 = vmatmul.mubr.f32.gmra.mrb[0].mxu0 %v95
  %v1193 = vpop.f32.mrb[0].mxu0
  %v1194 = vadd.f32 %v889, %v1193
  %v1195 = vpop.f32.mrb[0].mxu0
  %1196 = vmatprep.mubr.f32.mxu0 %v103
  %1197 = vmatmul.mubr.f32.gmra.mrb[0].mxu0 %v102
  %v1198 = vpop.f32.mrb[0].mxu0
  %v1199 = vadd.f32 %v894, %v1198
  %v1200 = vpop.f32.mrb[0].mxu0
  %1201 = vmatprep.mubr.f32.mxu0 %v110
  %1202 = vmatmul.mubr.f32.gmra.mrb[0].mxu0 %v109
  %v1203 = vpop.f32.mrb[0].mxu0
  %v1204 = vadd.f32 %v899, %v1203
  %v1205 = vpop.f32.mrb[0].mxu0
  %1206 = vmatprep.mubr.f32.mxu0 %v117
  %1207 = vmatmul.mubr.f32.gmra.mrb[0].mxu0 %v116
  %v1208 = vpop.f32.mrb[0].mxu0
  %v1209 = vadd.f32 %v904, %v1208
  %v1210 = vpop.f32.mrb[0].mxu0
  %1211 = vmatprep.mubr.f32.mxu0 %v124
  %1212 = vmatmul.mubr.f32.gmra.mrb[0].mxu0 %v123
  %v1213 = vpop.f32.mrb[0].mxu0
  %v1214 = vadd.f32 %v909, %v1213
  %v1215 = vpop.f32.mrb[0].mxu0
  %1216 = vmatprep.mubr.f32.mxu0 %v131
  %1217 = vmatmul.mubr.f32.gmra.mrb[0].mxu0 %v130
  %v1218 = vpop.f32.mrb[0].mxu0
  %v1219 = vadd.f32 %v914, %v1218
  %v1220 = vpop.f32.mrb[0].mxu0
  %1221 = vmatprep.mubr.f32.mxu0 %v138
  %1222 = vmatmul.mubr.f32.gmra.mrb[0].mxu0 %v137
  %v1223 = vpop.f32.mrb[0].mxu0
  %v1224 = vadd.f32 %v919, %v1223
  %v1225 = vpop.f32.mrb[0].mxu0
  %1226 = vmatprep.mubr.f32.mxu0 %v145
  %1227 = vmatmul.mubr.f32.gmra.mrb[0].mxu0 %v144
  %v1228 = vpop.f32.mrb[0].mxu0
  %v1229 = vadd.f32 %v924, %v1228
  %v1230 = vpop.f32.mrb[0].mxu0
  %1231 = vmatprep.mubr.f32.mxu0 %v152
  %1232 = vmatmul.mubr.f32.gmra.mrb[0].mxu0 %v151
  %v1233 = vpop.f32.mrb[0].mxu0
  %v1234 = vadd.f32 %v929, %v1233
  %v1235 = vpop.f32.mrb[0].mxu0
  %1236 = vmatprep.mubr.f32.mxu0 %v159
  %1237 = vmatmul.mubr.f32.gmra.mrb[0].mxu0 %v158
  %v1238 = vpop.f32.mrb[0].mxu0
  %v1239 = vadd.f32 %v934, %v1238
  %v1240 = vpop.f32.mrb[0].mxu0
  %1241 = vmatprep.mubr.f32.mxu0 %v166
  %1242 = vmatmul.mubr.f32.gmra.mrb[0].mxu0 %v165
  %v1243 = vpop.f32.mrb[0].mxu0
  %v1244 = vadd.f32 %v939, %v1243
  %v1245 = vpop.f32.mrb[0].mxu0
  %1246 = vmatprep.mubr.f32.mxu0 %v173
  %1247 = vmatmul.mubr.f32.gmra.mrb[0].mxu0 %v172
  %v1248 = vpop.f32.mrb[0].mxu0
  %v1249 = vadd.f32 %v944, %v1248
  %v1250 = vpop.f32.mrb[0].mxu0
  %1251 = vmatprep.mubr.f32.mxu0 %v180
  %1252 = vmatmul.mubr.f32.gmra.mrb[0].mxu0 %v179
  %v1253 = vpop.f32.mrb[0].mxu0
  %v1254 = vadd.f32 %v949, %v1253
  %v1255 = vpop.f32.mrb[0].mxu0
  %1256 = vmatprep.mubr.f32.mxu0 %v187
  %1257 = vmatmul.mubr.f32.gmra.mrb[0].mxu0 %v186
  %v1258 = vpop.f32.mrb[0].mxu0
  %v1259 = vadd.f32 %v954, %v1258
  %v1260 = vpop.f32.mrb[0].mxu0
  %1261 = vmatprep.mubr.f32.mxu0 %v194
  %1262 = vmatmul.mubr.f32.gmra.mrb[0].mxu0 %v193
  %v1263 = vpop.f32.mrb[0].mxu0
  %v1264 = vadd.f32 %v959, %v1263
  %v1265 = vpop.f32.mrb[0].mxu0
  %1266 = vmatprep.mubr.f32.mxu0 %v201
  %1267 = vmatmul.mubr.f32.gmra.mrb[0].mxu0 %v200
  %v1268 = vpop.f32.mrb[0].mxu0
  %v1269 = vadd.f32 %v964, %v1268
  %v1270 = vpop.f32.mrb[0].mxu0
  %1271 = vmatprep.mubr.f32.mxu0 %v208
  %1272 = vmatmul.mubr.f32.gmra.mrb[0].mxu0 %v207
  %v1273 = vpop.f32.mrb[0].mxu0
  %v1274 = vadd.f32 %v969, %v1273
  %v1275 = vpop.f32.mrb[0].mxu0
  %1276 = vmatprep.mubr.f32.mxu0 %v215
  %1277 = vmatmul.mubr.f32.gmra.mrb[0].mxu0 %v214
  %v1278 = vpop.f32.mrb[0].mxu0
  %v1279 = vadd.f32 %v974, %v1278
  %v1280 = vpop.f32.mrb[0].mxu0
  %1281 = vmatprep.mubr.f32.mxu0 %v222
  %1282 = vmatmul.mubr.f32.gmra.mrb[0].mxu0 %v221
  %v1283 = vpop.f32.mrb[0].mxu0
  %v1284 = vadd.f32 %v979, %v1283
  %v1285 = vpop.f32.mrb[0].mxu0
  %1286 = vmatprep.mubr.f32.mxu0 %v229
  %1287 = vmatmul.mubr.f32.gmra.mrb[0].mxu0 %v228
  %v1288 = vpop.f32.mrb[0].mxu0
  %v1289 = vadd.f32 %v984, %v1288
  %v1290 = vpop.f32.mrb[0].mxu0
  %1291 = vmatprep.mubr.f32.mxu0 %v236
  %1292 = vmatmul.mubr.f32.gmra.mrb[0].mxu0 %v235
  %v1293 = vpop.f32.mrb[0].mxu0
  %v1294 = vadd.f32 %v989, %v1293
  %v1295 = vpop.f32.mrb[0].mxu0
  %1296 = vmatprep.mubr.f32.mxu0 %v243
  %1297 = vmatmul.mubr.f32.gmra.mrb[0].mxu0 %v242
  %v1298 = vpop.f32.mrb[0].mxu0
  %v1299 = vadd.f32 %v994, %v1298
  %v1300 = vpop.f32.mrb[0].mxu0
  %1301 = vmatprep.mubr.f32.mxu0 %v250
  %1302 = vmatmul.mubr.f32.gmra.mrb[0].mxu0 %v249
  %v1303 = vpop.f32.mrb[0].mxu0
  %v1304 = vadd.f32 %v999, %v1303
  %v1305 = vpop.f32.mrb[0].mxu0
  %1306 = vmatprep.mubr.f32.mxu0 %v257
  %1307 = vmatmul.mubr.f32.gmra.mrb[0].mxu0 %v256
  %v1308 = vpop.f32.mrb[0].mxu0
  %v1309 = vadd.f32 %v1004, %v1308
  %v1310 = vpop.f32.mrb[0].mxu0
  %1311 = vmatprep.mubr.f32.mxu0 %v264
  %1312 = vmatmul.mubr.f32.gmra.mrb[0].mxu0 %v263
  %v1313 = vpop.f32.mrb[0].mxu0
  %v1314 = vadd.f32 %v1009, %v1313
  %v1315 = vpop.f32.mrb[0].mxu0
  %1316 = vmatprep.mubr.f32.mxu0 %v271
  %1317 = vmatmul.mubr.f32.gmra.mrb[0].mxu0 %v270
  %v1318 = vpop.f32.mrb[0].mxu0
  %v1319 = vadd.f32 %v1014, %v1318
  %v1320 = vpop.f32.mrb[0].mxu0
  %1321 = vmatprep.mubr.f32.mxu0 %v278
  %1322 = vmatmul.mubr.f32.gmra.mrb[0].mxu0 %v277
  %v1323 = vpop.f32.mrb[0].mxu0
  %v1324 = vadd.f32 %v1019, %v1323
  %v1325 = vpop.f32.mrb[0].mxu0
  %1326 = vmatprep.mubr.f32.mxu0 %v285
  %1327 = vmatmul.mubr.f32.gmra.mrb[0].mxu0 %v284
  %v1328 = vpop.f32.mrb[0].mxu0
  %v1329 = vadd.f32 %v1024, %v1328
  %v1330 = vpop.f32.mrb[0].mxu0
  %1331 = vmatprep.mubr.f32.mxu0 %v292
  %1332 = vmatmul.mubr.f32.gmra.mrb[0].mxu0 %v291
  %v1333 = vpop.f32.mrb[0].mxu0
  %v1334 = vadd.f32 %v1029, %v1333
  %v1335 = vpop.f32.mrb[0].mxu0
  %1336 = vmatprep.mubr.f32.mxu0 %v299
  %1337 = vmatmul.mubr.f32.gmra.mrb[0].mxu0 %v298
  %v1338 = vpop.f32.mrb[0].mxu0
  %v1339 = vadd.f32 %v1034, %v1338
  %v1340 = vpop.f32.mrb[0].mxu0
  %1341 = vmatprep.mubr.f32.mxu0 %v306
  %1342 = vmatmul.mubr.f32.gmra.mrb[0].mxu0 %v305
  %v1343 = vpop.f32.mrb[0].mxu0
  %v1344 = vadd.f32 %v1039, %v1343
  %v1345 = vpop.f32.mrb[0].mxu0
  %1346 = vmatprep.mubr.f32.mxu0 %v313
  %1347 = vmatmul.mubr.f32.gmra.mrb[0].mxu0 %v312
  %v1348 = vpop.f32.mrb[0].mxu0
  %v1349 = vadd.f32 %v1044, %v1348
  %v1350 = vpop.f32.mrb[0].mxu0
  %1351 = vmatprep.mubr.f32.mxu0 %v320
  %1352 = vmatmul.mubr.f32.gmra.mrb[0].mxu0 %v319
  %v1353 = vpop.f32.mrb[0].mxu0
  %v1354 = vadd.f32 %v1049, %v1353
  %v1355 = vpop.f32.mrb[0].mxu0
  %1356 = vmatprep.mubr.f32.mxu0 %v327
  %1357 = vmatmul.mubr.f32.gmra.mrb[0].mxu0 %v326
  %v1358 = vpop.f32.mrb[0].mxu0
  %v1359 = vadd.f32 %v1054, %v1358
  %v1360 = vpop.f32.mrb[0].mxu0
  %1361 = vmatprep.mubr.f32.mxu0 %v334
  %1362 = vmatmul.mubr.f32.gmra.mrb[0].mxu0 %v333
  %v1363 = vpop.f32.mrb[0].mxu0
  %v1364 = vadd.f32 %v1059, %v1363
  %v1365 = vpop.f32.mrb[0].mxu0
  %1366 = vmatprep.mubr.f32.mxu0 %v341
  %1367 = vmatmul.mubr.f32.gmra.mrb[0].mxu0 %v340
  %v1368 = vpop.f32.mrb[0].mxu0
  %v1369 = vadd.f32 %v1064, %v1368
  %v1370 = vpop.f32.mrb[0].mxu0
  %1371 = vmatprep.mubr.f32.mxu0 %v348
  %1372 = vmatmul.mubr.f32.gmra.mrb[0].mxu0 %v347
  %v1373 = vpop.f32.mrb[0].mxu0
  %v1374 = vadd.f32 %v1069, %v1373
  %v1375 = vpop.f32.mrb[0].mxu0
  %1376 = vdwg.mxu0
  %1377 = vmatprep.subr.mxu0 0.0
  %1378 = vmatpush1.msra.mxu0 %v446
  %1379 = vmatprep.subr.mxu0 0.0
  %1380 = vmatpush1.msra.mxu0 %v447
  %1381 = vmatprep.subr.mxu0 0.0
  %1382 = vmatpush1.msra.mxu0 %v448
  %1383 = vmatprep.subr.mxu0 0.0
  %1384 = vmatpush1.msra.mxu0 %v449
  %1385 = vmatprep.subr.mxu0 0.0
  %1386 = vmatpush1.msra.mxu0 %v450
  %1387 = vmatprep.subr.mxu0 0.0
  %1388 = vmatpush1.msra.mxu0 %v451
  %1389 = vmatprep.subr.mxu0 0.0
  %1390 = vmatpush1.msra.mxu0 %v452
  %1391 = vmatprep.subr.mxu0 0.0
  %1392 = vmatpush1.msra.mxu0 %v453
  %1393 = vmatprep.subr.mxu0 0.0
  %1394 = vmatpush1.msra.mxu0 %v454
  %1395 = vmatprep.subr.mxu0 0.0
  %1396 = vmatpush1.msra.mxu0 %v455
  %1397 = vmatprep.subr.mxu0 0.0
  %1398 = vmatpush1.msra.mxu0 %v456
  %1399 = vmatprep.subr.mxu0 0.0
  %1400 = vmatpush1.msra.mxu0 %v457
  %1401 = vmatprep.subr.mxu0 0.0
  %1402 = vmatpush1.msra.mxu0 %v458
  %1403 = vmatprep.subr.mxu0 0.0
  %1404 = vmatpush1.msra.mxu0 %v459
  %1405 = vmatprep.subr.mxu0 0.0
  %1406 = vmatpush1.msra.mxu0 %v460
  %1407 = vmatprep.subr.mxu0 0.0
  %1408 = vmatpush1.msra.mxu0 %v461
  %1409 = vmatprep.subr.mxu0 0.0
  %1410 = vmatpush1.msra.mxu0 0.0
  %1411 = vmatprep.subr.mxu0 0.0
  %1412 = vmatpush1.msra.mxu0 0.0
  %1413 = vmatprep.subr.mxu0 0.0
  %1414 = vmatpush1.msra.mxu0 0.0
  %1415 = vmatprep.subr.mxu0 0.0
  %1416 = vmatpush1.msra.mxu0 0.0
  %1417 = vmatprep.subr.mxu0 0.0
  %1418 = vmatpush1.msra.mxu0 0.0
  %1419 = vmatprep.subr.mxu0 0.0
  %1420 = vmatpush1.msra.mxu0 0.0
  %1421 = vmatprep.subr.mxu0 0.0
  %1422 = vmatpush1.msra.mxu0 0.0
  %1423 = vmatprep.subr.mxu0 0.0
  %1424 = vmatpush1.msra.mxu0 0.0
  %1425 = vmatprep.subr.mxu0 0.0
  %1426 = vmatpush1.msra.mxu0 0.0
  %1427 = vmatprep.subr.mxu0 0.0
  %1428 = vmatpush1.msra.mxu0 0.0
  %1429 = vmatprep.subr.mxu0 0.0
  %1430 = vmatpush1.msra.mxu0 0.0
  %1431 = vmatprep.subr.mxu0 0.0
  %1432 = vmatpush1.msra.mxu0 0.0
  %1433 = vmatprep.subr.mxu0 0.0
  %1434 = vmatpush1.msra.mxu0 0.0
  %1435 = vmatprep.subr.mxu0 0.0
  %1436 = vmatpush1.msra.mxu0 0.0
  %1437 = vmatprep.subr.mxu0 0.0
  %1438 = vmatpush1.msra.mxu0 0.0
  %1439 = vmatprep.subr.mxu0 0.0
  %1440 = vmatpush1.msra.mxu0 0.0
  %1441 = vmatprep.mubr.f32.mxu0 0.0
  %1442 = vmatmul.mubr.f32.gmra.mrb[0].mxu0 %v20
  %v1443 = vpop.f32.mrb[0].mxu0
  %v1444 = vadd.f32 %v1139, %v1443
  %v1445 = vpop.f32.mrb[0].mxu0
  %1446 = vmatprep.mubr.f32.mxu0 0.0
  %1447 = vmatmul.mubr.f32.gmra.mrb[0].mxu0 %v27
  %v1448 = vpop.f32.mrb[0].mxu0
  %v1449 = vadd.f32 %v1144, %v1448
  %v1450 = vpop.f32.mrb[0].mxu0
  %1451 = vmatprep.mubr.f32.mxu0 0.0
  %1452 = vmatmul.mubr.f32.gmra.mrb[0].mxu0 %v34
  %v1453 = vpop.f32.mrb[0].mxu0
  %v1454 = vadd.f32 %v1149, %v1453
  %v1455 = vpop.f32.mrb[0].mxu0
  %1456 = vmatprep.mubr.f32.mxu0 0.0
  %1457 = vmatmul.mubr.f32.gmra.mrb[0].mxu0 %v41
  %v1458 = vpop.f32.mrb[0].mxu0
  %v1459 = vadd.f32 %v1154, %v1458
  %v1460 = vpop.f32.mrb[0].mxu0
  %1461 = vmatprep.mubr.f32.mxu0 0.0
  %1462 = vmatmul.mubr.f32.gmra.mrb[0].mxu0 %v48
  %v1463 = vpop.f32.mrb[0].mxu0
  %v1464 = vadd.f32 %v1159, %v1463
  %v1465 = vpop.f32.mrb[0].mxu0
  %1466 = vmatprep.mubr.f32.mxu0 0.0
  %1467 = vmatmul.mubr.f32.gmra.mrb[0].mxu0 %v55
  %v1468 = vpop.f32.mrb[0].mxu0
  %v1469 = vadd.f32 %v1164, %v1468
  %v1470 = vpop.f32.mrb[0].mxu0
  %1471 = vmatprep.mubr.f32.mxu0 0.0
  %1472 = vmatmul.mubr.f32.gmra.mrb[0].mxu0 %v62
  %v1473 = vpop.f32.mrb[0].mxu0
  %v1474 = vadd.f32 %v1169, %v1473
  %v1475 = vpop.f32.mrb[0].mxu0
  %1476 = vmatprep.mubr.f32.mxu0 0.0
  %1477 = vmatmul.mubr.f32.gmra.mrb[0].mxu0 %v69
  %v1478 = vpop.f32.mrb[0].mxu0
  %v1479 = vadd.f32 %v1174, %v1478
  %v1480 = vpop.f32.mrb[0].mxu0
  %1481 = vmatprep.mubr.f32.mxu0 0.0
  %1482 = vmatmul.mubr.f32.gmra.mrb[0].mxu0 %v76
  %v1483 = vpop.f32.mrb[0].mxu0
  %v1484 = vadd.f32 %v1179, %v1483
  %v1485 = vpop.f32.mrb[0].mxu0
  %1486 = vmatprep.mubr.f32.mxu0 0.0
  %1487 = vmatmul.mubr.f32.gmra.mrb[0].mxu0 %v83
  %v1488 = vpop.f32.mrb[0].mxu0
  %v1489 = vadd.f32 %v1184, %v1488
  %v1490 = vpop.f32.mrb[0].mxu0
  %1491 = vmatprep.mubr.f32.mxu0 0.0
  %1492 = vmatmul.mubr.f32.gmra.mrb[0].mxu0 %v90
  %v1493 = vpop.f32.mrb[0].mxu0
  %v1494 = vadd.f32 %v1189, %v1493
  %v1495 = vpop.f32.mrb[0].mxu0
  %1496 = vmatprep.mubr.f32.mxu0 0.0
  %1497 = vmatmul.mubr.f32.gmra.mrb[0].mxu0 %v97
  %v1498 = vpop.f32.mrb[0].mxu0
  %v1499 = vadd.f32 %v1194, %v1498
  %v1500 = vpop.f32.mrb[0].mxu0
  %1501 = vmatprep.mubr.f32.mxu0 0.0
  %1502 = vmatmul.mubr.f32.gmra.mrb[0].mxu0 %v104
  %v1503 = vpop.f32.mrb[0].mxu0
  %v1504 = vadd.f32 %v1199, %v1503
  %v1505 = vpop.f32.mrb[0].mxu0
  %1506 = vmatprep.mubr.f32.mxu0 0.0
  %1507 = vmatmul.mubr.f32.gmra.mrb[0].mxu0 %v111
  %v1508 = vpop.f32.mrb[0].mxu0
  %v1509 = vadd.f32 %v1204, %v1508
  %v1510 = vpop.f32.mrb[0].mxu0
  %1511 = vmatprep.mubr.f32.mxu0 0.0
  %1512 = vmatmul.mubr.f32.gmra.mrb[0].mxu0 %v118
  %v1513 = vpop.f32.mrb[0].mxu0
  %v1514 = vadd.f32 %v1209, %v1513
  %v1515 = vpop.f32.mrb[0].mxu0
  %1516 = vmatprep.mubr.f32.mxu0 0.0
  %1517 = vmatmul.mubr.f32.gmra.mrb[0].mxu0 %v125
  %v1518 = vpop.f32.mrb[0].mxu0
  %v1519 = vadd.f32 %v1214, %v1518
  %v1520 = vpop.f32.mrb[0].mxu0
  %1521 = vmatprep.mubr.f32.mxu0 0.0
  %1522 = vmatmul.mubr.f32.gmra.mrb[0].mxu0 %v132
  %v1523 = vpop.f32.mrb[0].mxu0
  %v1524 = vadd.f32 %v1219, %v1523
  %v1525 = vpop.f32.mrb[0].mxu0
  %1526 = vmatprep.mubr.f32.mxu0 0.0
  %1527 = vmatmul.mubr.f32.gmra.mrb[0].mxu0 %v139
  %v1528 = vpop.f32.mrb[0].mxu0
  %v1529 = vadd.f32 %v1224, %v1528
  %v1530 = vpop.f32.mrb[0].mxu0
  %1531 = vmatprep.mubr.f32.mxu0 0.0
  %1532 = vmatmul.mubr.f32.gmra.mrb[0].mxu0 %v146
  %v1533 = vpop.f32.mrb[0].mxu0
  %v1534 = vadd.f32 %v1229, %v1533
  %v1535 = vpop.f32.mrb[0].mxu0
  %1536 = vmatprep.mubr.f32.mxu0 0.0
  %1537 = vmatmul.mubr.f32.gmra.mrb[0].mxu0 %v153
  %v1538 = vpop.f32.mrb[0].mxu0
  %v1539 = vadd.f32 %v1234, %v1538
  %v1540 = vpop.f32.mrb[0].mxu0
  %1541 = vmatprep.mubr.f32.mxu0 0.0
  %1542 = vmatmul.mubr.f32.gmra.mrb[0].mxu0 %v160
  %v1543 = vpop.f32.mrb[0].mxu0
  %v1544 = vadd.f32 %v1239, %v1543
  %v1545 = vpop.f32.mrb[0].mxu0
  %1546 = vmatprep.mubr.f32.mxu0 0.0
  %1547 = vmatmul.mubr.f32.gmra.mrb[0].mxu0 %v167
  %v1548 = vpop.f32.mrb[0].mxu0
  %v1549 = vadd.f32 %v1244, %v1548
  %v1550 = vpop.f32.mrb[0].mxu0
  %1551 = vmatprep.mubr.f32.mxu0 0.0
  %1552 = vmatmul.mubr.f32.gmra.mrb[0].mxu0 %v174
  %v1553 = vpop.f32.mrb[0].mxu0
  %v1554 = vadd.f32 %v1249, %v1553
  %v1555 = vpop.f32.mrb[0].mxu0
  %1556 = vmatprep.mubr.f32.mxu0 0.0
  %1557 = vmatmul.mubr.f32.gmra.mrb[0].mxu0 %v181
  %v1558 = vpop.f32.mrb[0].mxu0
  %v1559 = vadd.f32 %v1254, %v1558
  %v1560 = vpop.f32.mrb[0].mxu0
  %1561 = vmatprep.mubr.f32.mxu0 0.0
  %1562 = vmatmul.mubr.f32.gmra.mrb[0].mxu0 %v188
  %v1563 = vpop.f32.mrb[0].mxu0
  %v1564 = vadd.f32 %v1259, %v1563
  %v1565 = vpop.f32.mrb[0].mxu0
  %1566 = vmatprep.mubr.f32.mxu0 0.0
  %1567 = vmatmul.mubr.f32.gmra.mrb[0].mxu0 %v195
  %v1568 = vpop.f32.mrb[0].mxu0
  %v1569 = vadd.f32 %v1264, %v1568
  %v1570 = vpop.f32.mrb[0].mxu0
  %1571 = vmatprep.mubr.f32.mxu0 0.0
  %1572 = vmatmul.mubr.f32.gmra.mrb[0].mxu0 %v202
  %v1573 = vpop.f32.mrb[0].mxu0
  %v1574 = vadd.f32 %v1269, %v1573
  %v1575 = vpop.f32.mrb[0].mxu0
  %1576 = vmatprep.mubr.f32.mxu0 0.0
  %1577 = vmatmul.mubr.f32.gmra.mrb[0].mxu0 %v209
  %v1578 = vpop.f32.mrb[0].mxu0
  %v1579 = vadd.f32 %v1274, %v1578
  %v1580 = vpop.f32.mrb[0].mxu0
  %1581 = vmatprep.mubr.f32.mxu0 0.0
  %1582 = vmatmul.mubr.f32.gmra.mrb[0].mxu0 %v216
  %v1583 = vpop.f32.mrb[0].mxu0
  %v1584 = vadd.f32 %v1279, %v1583
  %v1585 = vpop.f32.mrb[0].mxu0
  %1586 = vmatprep.mubr.f32.mxu0 0.0
  %1587 = vmatmul.mubr.f32.gmra.mrb[0].mxu0 %v223
  %v1588 = vpop.f32.mrb[0].mxu0
  %v1589 = vadd.f32 %v1284, %v1588
  %v1590 = vpop.f32.mrb[0].mxu0
  %1591 = vmatprep.mubr.f32.mxu0 0.0
  %1592 = vmatmul.mubr.f32.gmra.mrb[0].mxu0 %v230
  %v1593 = vpop.f32.mrb[0].mxu0
  %v1594 = vadd.f32 %v1289, %v1593
  %v1595 = vpop.f32.mrb[0].mxu0
  %1596 = vmatprep.mubr.f32.mxu0 0.0
  %1597 = vmatmul.mubr.f32.gmra.mrb[0].mxu0 %v237
  %v1598 = vpop.f32.mrb[0].mxu0
  %v1599 = vadd.f32 %v1294, %v1598
  %v1600 = vpop.f32.mrb[0].mxu0
  %1601 = vmatprep.mubr.f32.mxu0 0.0
  %1602 = vmatmul.mubr.f32.gmra.mrb[0].mxu0 %v244
  %v1603 = vpop.f32.mrb[0].mxu0
  %v1604 = vadd.f32 %v1299, %v1603
  %v1605 = vpop.f32.mrb[0].mxu0
  %1606 = vmatprep.mubr.f32.mxu0 0.0
  %1607 = vmatmul.mubr.f32.gmra.mrb[0].mxu0 %v251
  %v1608 = vpop.f32.mrb[0].mxu0
  %v1609 = vadd.f32 %v1304, %v1608
  %v1610 = vpop.f32.mrb[0].mxu0
  %1611 = vmatprep.mubr.f32.mxu0 0.0
  %1612 = vmatmul.mubr.f32.gmra.mrb[0].mxu0 %v258
  %v1613 = vpop.f32.mrb[0].mxu0
  %v1614 = vadd.f32 %v1309, %v1613
  %v1615 = vpop.f32.mrb[0].mxu0
  %1616 = vmatprep.mubr.f32.mxu0 0.0
  %1617 = vmatmul.mubr.f32.gmra.mrb[0].mxu0 %v265
  %v1618 = vpop.f32.mrb[0].mxu0
  %v1619 = vadd.f32 %v1314, %v1618
  %v1620 = vpop.f32.mrb[0].mxu0
  %1621 = vmatprep.mubr.f32.mxu0 0.0
  %1622 = vmatmul.mubr.f32.gmra.mrb[0].mxu0 %v272
  %v1623 = vpop.f32.mrb[0].mxu0
  %v1624 = vadd.f32 %v1319, %v1623
  %v1625 = vpop.f32.mrb[0].mxu0
  %1626 = vmatprep.mubr.f32.mxu0 0.0
  %1627 = vmatmul.mubr.f32.gmra.mrb[0].mxu0 %v279
  %v1628 = vpop.f32.mrb[0].mxu0
  %v1629 = vadd.f32 %v1324, %v1628
  %v1630 = vpop.f32.mrb[0].mxu0
  %1631 = vmatprep.mubr.f32.mxu0 0.0
  %1632 = vmatmul.mubr.f32.gmra.mrb[0].mxu0 %v286
  %v1633 = vpop.f32.mrb[0].mxu0
  %v1634 = vadd.f32 %v1329, %v1633
  %v1635 = vpop.f32.mrb[0].mxu0
  %1636 = vmatprep.mubr.f32.mxu0 0.0
  %1637 = vmatmul.mubr.f32.gmra.mrb[0].mxu0 %v293
  %v1638 = vpop.f32.mrb[0].mxu0
  %v1639 = vadd.f32 %v1334, %v1638
  %v1640 = vpop.f32.mrb[0].mxu0
  %1641 = vmatprep.mubr.f32.mxu0 0.0
  %1642 = vmatmul.mubr.f32.gmra.mrb[0].mxu0 %v300
  %v1643 = vpop.f32.mrb[0].mxu0
  %v1644 = vadd.f32 %v1339, %v1643
  %v1645 = vpop.f32.mrb[0].mxu0
  %1646 = vmatprep.mubr.f32.mxu0 0.0
  %1647 = vmatmul.mubr.f32.gmra.mrb[0].mxu0 %v307
  %v1648 = vpop.f32.mrb[0].mxu0
  %v1649 = vadd.f32 %v1344, %v1648
  %v1650 = vpop.f32.mrb[0].mxu0
  %1651 = vmatprep.mubr.f32.mxu0 0.0
  %1652 = vmatmul.mubr.f32.gmra.mrb[0].mxu0 %v314
  %v1653 = vpop.f32.mrb[0].mxu0
  %v1654 = vadd.f32 %v1349, %v1653
  %v1655 = vpop.f32.mrb[0].mxu0
  %1656 = vmatprep.mubr.f32.mxu0 0.0
  %1657 = vmatmul.mubr.f32.gmra.mrb[0].mxu0 %v321
  %v1658 = vpop.f32.mrb[0].mxu0
  %v1659 = vadd.f32 %v1354, %v1658
  %v1660 = vpop.f32.mrb[0].mxu0
  %1661 = vmatprep.mubr.f32.mxu0 0.0
  %1662 = vmatmul.mubr.f32.gmra.mrb[0].mxu0 %v328
  %v1663 = vpop.f32.mrb[0].mxu0
  %v1664 = vadd.f32 %v1359, %v1663
  %v1665 = vpop.f32.mrb[0].mxu0
  %1666 = vmatprep.mubr.f32.mxu0 0.0
  %1667 = vmatmul.mubr.f32.gmra.mrb[0].mxu0 %v335
  %v1668 = vpop.f32.mrb[0].mxu0
  %v1669 = vadd.f32 %v1364, %v1668
  %v1670 = vpop.f32.mrb[0].mxu0
  %1671 = vmatprep.mubr.f32.mxu0 0.0
  %1672 = vmatmul.mubr.f32.gmra.mrb[0].mxu0 %v342
  %v1673 = vpop.f32.mrb[0].mxu0
  %v1674 = vadd.f32 %v1369, %v1673
  %v1675 = vpop.f32.mrb[0].mxu0
  %1676 = vmatprep.mubr.f32.mxu0 0.0
  %1677 = vmatmul.mubr.f32.gmra.mrb[0].mxu0 %v349
  %v1678 = vpop.f32.mrb[0].mxu0
  %v1679 = vadd.f32 %v1374, %v1678
  %v1680 = vpop.f32.mrb[0].mxu0
  %1681 = vdwg.mxu0
  %v1682 = vmax.f32 %v1444, %v1474
  %v1683 = vmax.f32 %v1449, %v1479
  %v1684 = vmax.f32 %v1454, %v1484
  %v1685 = vmax.f32 %v1459, %v1489
  %v1686 = vmax.f32 %v1464, %v1494
  %v1687 = vmax.f32 %v1469, %v1499
  %v1688 = vmax.f32 %v1564, %v1594
  %v1689 = vmax.f32 %v1569, %v1599
  %v1690 = vmax.f32 %v1574, %v1604
  %v1691 = vmax.f32 %v1579, %v1609
  %v1692 = vmax.f32 %v1584, %v1614
  %v1693 = vmax.f32 %v1589, %v1619
  %v1694 = vmax.f32 %v1504, %v1534
  %v1695 = vmax.f32 %v1509, %v1539
  %v1696 = vmax.f32 %v1514, %v1544
  %v1697 = vmax.f32 %v1519, %v1549
  %v1698 = vmax.f32 %v1524, %v1554
  %v1699 = vmax.f32 %v1529, %v1559
  %v1700 = vmax.f32 %v1624, %v1654
  %v1701 = vmax.f32 %v1629, %v1659
  %v1702 = vmax.f32 %v1634, %v1664
  %v1703 = vmax.f32 %v1639, %v1669
  %v1704 = vmax.f32 %v1644, %v1674
  %v1705 = vmax.f32 %v1649, %v1679
  %v1706 = vmax.f32 %v1682, %v1694
  %v1707 = vmax.f32 %v1683, %v1695
  %v1708 = vmax.f32 %v1684, %v1696
  %v1709 = vmax.f32 %v1685, %v1697
  %v1710 = vmax.f32 %v1686, %v1698
  %v1711 = vmax.f32 %v1687, %v1699
  %v1712 = vmax.f32 %v1688, %v1700
  %v1713 = vmax.f32 %v1689, %v1701
  %v1714 = vmax.f32 %v1690, %v1702
  %v1715 = vmax.f32 %v1691, %v1703
  %v1716 = vmax.f32 %v1692, %v1704
  %v1717 = vmax.f32 %v1693, %v1705
  %v1718 = vld [vmem:[%s2] sm:$0x1]
  %v1720 = vlaneseq
  %v1721 = vshrl.u32 %v1720, 7
  %v1722 = vsub.s32 0, %v1721
  %v1723 = vrot.slane %v1718, %v1722
  %v1725 = vadd.f32 %v1706, %v1723
  %v1726 = vadd.f32 %v1707, %v1723
  %v1727 = vadd.f32 %v1708, %v1723
  %v1728 = vadd.f32 %v1709, %v1723
  %v1729 = vadd.f32 %v1710, %v1723
  %v1730 = vadd.f32 %v1711, %v1723
  %v1731 = vadd.f32 %v1712, %v1723
  %v1732 = vadd.f32 %v1713, %v1723
  %v1733 = vadd.f32 %v1714, %v1723
  %v1734 = vadd.f32 %v1715, %v1723
  %v1735 = vadd.f32 %v1716, %v1723
  %v1736 = vadd.f32 %v1717, %v1723
  %v1737 = vmax.f32 %v1725, 0.0
  %v1738 = vmax.f32 %v1726, 0.0
  %v1739 = vmax.f32 %v1727, 0.0
  %v1740 = vmax.f32 %v1728, 0.0
  %v1741 = vmax.f32 %v1729, 0.0
  %v1742 = vmax.f32 %v1730, 0.0
  %v1743 = vmax.f32 %v1731, 0.0
  %v1744 = vmax.f32 %v1732, 0.0
  %v1745 = vmax.f32 %v1733, 0.0
  %v1746 = vmax.f32 %v1734, 0.0
  %v1747 = vmax.f32 %v1735, 0.0
  %v1748 = vmax.f32 %v1736, 0.0
  %1749 = vst [vmem:[%s3] sm:$0xff] %v1737
  %1750 = vst [vmem:[%s3 + $0x8] sm:$0xff] %v1738
  %1751 = vst [vmem:[%s3 + $0x10] sm:$0xff] %v1739
  %1752 = vst [vmem:[%s3 + $0x18] sm:$0xff] %v1740
  %1753 = vst [vmem:[%s3 + $0x20] sm:$0xff] %v1741
  %1754 = vst [vmem:[%s3 + $0x28] sm:$0xff] %v1742
  %1755 = vst [vmem:[%s3 + $0x30] sm:$0xff] %v1743
  %1756 = vst [vmem:[%s3 + $0x38] sm:$0xff] %v1744
  %1757 = vst [vmem:[%s3 + $0x40] sm:$0xff] %v1745
  %1758 = vst [vmem:[%s3 + $0x48] sm:$0xff] %v1746
  %1759 = vst [vmem:[%s3 + $0x50] sm:$0xff] %v1747
  %1760 = vst [vmem:[%s3 + $0x58] sm:$0xff] %v1748
  // Predicated region
  $region14: #{custom_text_cnn_cat_forward.4} parent=0 // pred_check
    _
  $region15: #{custom_text_cnn_cat_forward.4} parent=0 // pred_check_branch
    %1762 = sbr.rel (0) target = $region17
  $region16: #{custom_text_cnn_cat_forward.4} parent=0 // pred_region
    _
  $region17: #{custom_text_cnn_cat_forward.4} parent=0 // pred_fallthru
    _
  // Predicated region
  $region18: #{custom_text_cnn_cat_forward.4} parent=0 // pred_check
    _
  $region19: #{custom_text_cnn_cat_forward.4} parent=0 // pred_check_branch
    %1764 = sbr.rel (0) target = $region21
  $region20: #{custom_text_cnn_cat_forward.4} parent=0 // pred_region
    _
  $region21: #{custom_text_cnn_cat_forward.4} parent=0 // pred_fallthru
    _

// kernel: custom-call.2
$region0: #{custom-call.2}
  %s0 = inlined_call_operand.vmem [shape: u32[12], index: 0, kind: output, shape index: {}]

// kernel: custom_text_cnn_cat_forward.5
$region0: #{custom_text_cnn_cat_forward.5}
  #allocation0 [shape = 'u32[]', space=smem, size = 0x4, offset = 0x4, fixed_abs, tag = 'smem constant byte address 0x4 - core index']
  #allocation1 [shape = 'u32[144,128]{1,0:T(1,128)}', space=vmem, size = 0x12000, scoped, tag = 'internal scratch']
  %s0 = inlined_call_operand.vmem [shape: bf16[8,50], index: 0, kind: input, shape index: {}]
  %s1 = inlined_call_operand.vmem [shape: bf16[50,32], index: 1, kind: input, shape index: {}]
  %s2 = inlined_call_operand.vmem [shape: f32[32,5], index: 2, kind: input, shape index: {}]
  %s3 = inlined_call_operand.vmem [shape: f32[1,5], index: 3, kind: input, shape index: {}]
  %s4 = inlined_call_operand.vmem [shape: f32[8,6144], index: 4, kind: input, shape index: {}]
  %s5 = inlined_call_operand.vmem [shape: f32[6144,50], index: 5, kind: input, shape index: {}]
  %s6 = inlined_call_operand.vmem [shape: f32[1,50], index: 6, kind: input, shape index: {}]
  %s7 = inlined_call_operand.vmem [shape: f32[50,5], index: 7, kind: input, shape index: {}]
  %s8 = inlined_call_operand.vmem [shape: f32[1,5], index: 8, kind: input, shape index: {}]
  %s9 = inlined_call_operand.vmem [shape: f32[1,5], index: 9, kind: input, shape index: {}]
  %s10 = inlined_call_operand.vmem [shape: f32[1,5], index: 10, kind: input, shape index: {}]
  %s11 = inlined_call_operand.vmem [shape: f32[1,5], index: 11, kind: input, shape index: {}]
  %s12 = inlined_call_operand.vmem [shape: f32[1,5], index: 12, kind: input, shape index: {}]
  %s13 = inlined_call_operand.vmem [shape: f32[5,128], index: 13, kind: input, shape index: {}]
  %s14 = inlined_call_operand.vmem [shape: f32[5,128], index: 14, kind: input, shape index: {}]
  %s15 = inlined_call_operand.vmem [shape: f32[1,128], index: 15, kind: input, shape index: {}]
  %s16 = inlined_call_operand.vmem [shape: f32[8,128], index: 16, kind: output, shape index: {}]
  %s17 = sld [smem:[#allocation0]]
  $region74: #{custom_text_cnn_cat_forward.5} parent=0
    _
  %s19 = ssub.s32 1, %s17
  %s20 = scalar_select 0, %s19, %s17
  // Predicated region
  $region2: #{custom_text_cnn_cat_forward.5} parent=0 // pred_check
    _
  $region3: #{custom_text_cnn_cat_forward.5} parent=0 // pred_check_branch
    %22 = sbr.rel (0) target = $region5
  $region4: #{custom_text_cnn_cat_forward.5} parent=0 // pred_region
    _
  $region5: #{custom_text_cnn_cat_forward.5} parent=0 // pred_fallthru
    _
  // Predicated region
  $region6: #{custom_text_cnn_cat_forward.5} parent=0 // pred_check
    _
  $region7: #{custom_text_cnn_cat_forward.5} parent=0 // pred_check_branch
    %24 = sbr.rel (0) target = $region9
  $region8: #{custom_text_cnn_cat_forward.5} parent=0 // pred_region
    _
  $region9: #{custom_text_cnn_cat_forward.5} parent=0 // pred_fallthru
    _
  // Predicated region
  $region10: #{custom_text_cnn_cat_forward.5} parent=0 // pred_check
    _
  $region11: #{custom_text_cnn_cat_forward.5} parent=0 // pred_check_branch
    %26 = sbr.rel (0) target = $region13
  $region12: #{custom_text_cnn_cat_forward.5} parent=0 // pred_region
    _
  $region13: #{custom_text_cnn_cat_forward.5} parent=0 // pred_fallthru
    _
  // Predicated region
  $region14: #{custom_text_cnn_cat_forward.5} parent=0 // pred_check
    _
  $region15: #{custom_text_cnn_cat_forward.5} parent=0 // pred_check_branch
    %28 = sbr.rel (0) target = $region17
  $region16: #{custom_text_cnn_cat_forward.5} parent=0 // pred_region
    _
  $region17: #{custom_text_cnn_cat_forward.5} parent=0 // pred_fallthru
    _
  // Predicated region
  $region18: #{custom_text_cnn_cat_forward.5} parent=0 // pred_check
    _
  $region19: #{custom_text_cnn_cat_forward.5} parent=0 // pred_check_branch
    %30 = sbr.rel (0) target = $region21
  $region20: #{custom_text_cnn_cat_forward.5} parent=0 // pred_region
    _
  $region21: #{custom_text_cnn_cat_forward.5} parent=0 // pred_fallthru
    _
  // Predicated region
  $region22: #{custom_text_cnn_cat_forward.5} parent=0 // pred_check
    _
  $region23: #{custom_text_cnn_cat_forward.5} parent=0 // pred_check_branch
    %32 = sbr.rel (0) target = $region25
  $region24: #{custom_text_cnn_cat_forward.5} parent=0 // pred_region
    _
  $region25: #{custom_text_cnn_cat_forward.5} parent=0 // pred_fallthru
    _
  // Predicated region
  $region26: #{custom_text_cnn_cat_forward.5} parent=0 // pred_check
    _
  $region27: #{custom_text_cnn_cat_forward.5} parent=0 // pred_check_branch
    %34 = sbr.rel (0) target = $region29
  $region28: #{custom_text_cnn_cat_forward.5} parent=0 // pred_region
    _
  $region29: #{custom_text_cnn_cat_forward.5} parent=0 // pred_fallthru
    _
  // Predicated region
  $region30: #{custom_text_cnn_cat_forward.5} parent=0 // pred_check
    _
  $region31: #{custom_text_cnn_cat_forward.5} parent=0 // pred_check_branch
    %36 = sbr.rel (0) target = $region33
  $region32: #{custom_text_cnn_cat_forward.5} parent=0 // pred_region
    _
  $region33: #{custom_text_cnn_cat_forward.5} parent=0 // pred_fallthru
    _
  // Predicated region
  $region34: #{custom_text_cnn_cat_forward.5} parent=0 // pred_check
    _
  $region35: #{custom_text_cnn_cat_forward.5} parent=0 // pred_check_branch
    %38 = sbr.rel (0) target = $region37
  $region36: #{custom_text_cnn_cat_forward.5} parent=0 // pred_region
    _
  $region37: #{custom_text_cnn_cat_forward.5} parent=0 // pred_fallthru
    _
  // Predicated region
  $region38: #{custom_text_cnn_cat_forward.5} parent=0 // pred_check
    _
  $region39: #{custom_text_cnn_cat_forward.5} parent=0 // pred_check_branch
    %40 = sbr.rel (0) target = $region41
  $region40: #{custom_text_cnn_cat_forward.5} parent=0 // pred_region
    _
  $region41: #{custom_text_cnn_cat_forward.5} parent=0 // pred_fallthru
    _
  // Predicated region
  $region42: #{custom_text_cnn_cat_forward.5} parent=0 // pred_check
    _
  $region43: #{custom_text_cnn_cat_forward.5} parent=0 // pred_check_branch
    %42 = sbr.rel (0) target = $region45
  $region44: #{custom_text_cnn_cat_forward.5} parent=0 // pred_region
    _
  $region45: #{custom_text_cnn_cat_forward.5} parent=0 // pred_fallthru
    _
  // Predicated region
  $region46: #{custom_text_cnn_cat_forward.5} parent=0 // pred_check
    _
  $region47: #{custom_text_cnn_cat_forward.5} parent=0 // pred_check_branch
    %44 = sbr.rel (0) target = $region49
  $region48: #{custom_text_cnn_cat_forward.5} parent=0 // pred_region
    _
  $region49: #{custom_text_cnn_cat_forward.5} parent=0 // pred_fallthru
    _
  // Predicated region
  $region50: #{custom_text_cnn_cat_forward.5} parent=0 // pred_check
    _
  $region51: #{custom_text_cnn_cat_forward.5} parent=0 // pred_check_branch
    %46 = sbr.rel (0) target = $region53
  $region52: #{custom_text_cnn_cat_forward.5} parent=0 // pred_region
    _
  $region53: #{custom_text_cnn_cat_forward.5} parent=0 // pred_fallthru
    _
  // Predicated region
  $region54: #{custom_text_cnn_cat_forward.5} parent=0 // pred_check
    _
  $region55: #{custom_text_cnn_cat_forward.5} parent=0 // pred_check_branch
    %48 = sbr.rel (0) target = $region57
  $region56: #{custom_text_cnn_cat_forward.5} parent=0 // pred_region
    _
  $region57: #{custom_text_cnn_cat_forward.5} parent=0 // pred_fallthru
    _
  // Predicated region
  $region58: #{custom_text_cnn_cat_forward.5} parent=0 // pred_check
    _
  $region59: #{custom_text_cnn_cat_forward.5} parent=0 // pred_check_branch
    %50 = sbr.rel (0) target = $region61
  $region60: #{custom_text_cnn_cat_forward.5} parent=0 // pred_region
    _
  $region61: #{custom_text_cnn_cat_forward.5} parent=0 // pred_fallthru
    _
  // Predicated region
  $region62: #{custom_text_cnn_cat_forward.5} parent=0 // pred_check
    _
  $region63: #{custom_text_cnn_cat_forward.5} parent=0 // pred_check_branch
    %52 = sbr.rel (0) target = $region65
  $region64: #{custom_text_cnn_cat_forward.5} parent=0 // pred_region
    _
  $region65: #{custom_text_cnn_cat_forward.5} parent=0 // pred_fallthru
    _
  %v54 = vld [vmem:[%s0] sm:$0xf]
  %v55 = vld [vmem:[%s1] sm:$0xf]
  %v56 = vld [vmem:[%s1 + $0x4] sm:$0xf]
  %v57 = vld [vmem:[%s1 + $0x8] sm:$0xf]
  %v58 = vld [vmem:[%s1 + $0xc] sm:$0xf]
  %v59 = vld [vmem:[%s1 + $0x10] sm:$0xf]
  %v60 = vld [vmem:[%s1 + $0x14] sm:$0xf]
  %v61 = vld [vmem:[%s1 + $0x18] sm:$0x1]
  %v69 = vunpack.c.l.b16 %v55
  %v70 = vunpack.c.l.b16 %v56
  %v71 = vunpack.c.l.b16 %v57
  %v72 = vunpack.c.l.b16 %v58
  %v73 = vunpack.c.l.b16 %v59
  %v74 = vunpack.c.l.b16 %v60
  %v75 = vunpack.c.l.b16 %v61
  %v76 = vpack.c.b16 %v70, %v69
  %v77 = vpack.c.b16 %v72, %v71
  %v78 = vpack.c.b16 %v74, %v73
  %v79 = vpack.c.b16 %v75, %v75
  %vm83 = vcmask 408576
  %v85 = vsel %vm83, %v54, 0
  %vm87 = vcmask 1040384
  %v89 = vsel %vm87, %v79, 0
  %91 = vmatprep.subr.bf16.mxu0 0
  %92 = vmatpush1.bf16.msra.mxu0 %v76
  %93 = vmatprep.subr.bf16.mxu0 0
  %94 = vmatpush1.bf16.msra.mxu0 %v77
  %95 = vmatprep.subr.bf16.mxu0 0
  %96 = vmatpush1.bf16.msra.mxu0 %v78
  %97 = vmatprep.subr.bf16.mxu0 0
  %98 = vmatpush1.bf16.msra.mxu0 %v89
  %99 = vmatprep.subr.bf16.mxu0 0
  %100 = vmatpush1.bf16.msra.mxu0 0
  %101 = vmatprep.subr.bf16.mxu0 0
  %102 = vmatpush1.bf16.msra.mxu0 0
  %103 = vmatprep.subr.bf16.mxu0 0
  %104 = vmatpush1.bf16.msra.mxu0 0
  %105 = vmatprep.subr.bf16.mxu0 0
  %106 = vmatpush1.bf16.msra.mxu0 0
  %107 = vmatprep.subr.bf16.mxu0 0
  %108 = vmatpush1.bf16.msra.mxu0 0
  %109 = vmatprep.subr.bf16.mxu0 0
  %110 = vmatpush1.bf16.msra.mxu0 0
  %111 = vmatprep.subr.bf16.mxu0 0
  %112 = vmatpush1.bf16.msra.mxu0 0
  %113 = vmatprep.subr.bf16.mxu0 0
  %114 = vmatpush1.bf16.msra.mxu0 0
  %115 = vmatprep.subr.bf16.mxu0 0
  %116 = vmatpush1.bf16.msra.mxu0 0
  %117 = vmatprep.subr.bf16.mxu0 0
  %118 = vmatpush1.bf16.msra.mxu0 0
  %119 = vmatprep.subr.bf16.mxu0 0
  %120 = vmatpush1.bf16.msra.mxu0 0
  %121 = vmatprep.subr.bf16.mxu0 0
  %122 = vmatpush1.bf16.msra.mxu0 0
  %123 = vmatprep.mubr.bf16.mxu0 0
  %124 = vmatmul.mubr.bf16.gmra.mrb[0].mxu0 %v85
  %v125 = vpop.f32.mrb[0].mxu0
  %v126 = vadd.f32 0.0, %v125
  %v127 = vpop.f32.mrb[0].mxu0
  %v128 = vpop.f32.mrb[0].mxu0
  %v129 = vpop.f32.mrb[0].mxu0
  %130 = vdwg.mxu0
  %v131 = vunpack.c.l.bf16 %v54
  %v132 = vsel %vm83, %v131, 0.0
  %133 = vadd.xlane.f32.xlu0 %v132
  %v134 = vpop.xlane.xlu0 %133
  %v135 = vmax.f32 %v134, 1.0
  %v136 = vrcp.pop %v135
  %v137 = vmul.f32 %v126, %v136
  %v138 = vld [vmem:[%s2] sm:$0xff]
  %v139 = vld [vmem:[%s2 + $0x8] sm:$0xff]
  %v140 = vld [vmem:[%s2 + $0x10] sm:$0xff]
  %v141 = vld [vmem:[%s2 + $0x18] sm:$0xff]
  %v142 = vld [vmem:[%s3] sm:$0x1]
  %v144 = vlaneseq
  %v145 = vshrl.u32 %v144, 7
  %v146 = vsub.s32 0, %v145
  %v147 = vrot.slane %v142, %v146
  %vm149 = vcmask 261120
  %v151 = vsel %vm149, %v137, 0
  %153 = vmatprep.subr.mxu0 0.0
  %154 = vmatpush1.msra.mxu0 %v138
  %155 = vmatprep.subr.mxu0 0.0
  %156 = vmatpush1.msra.mxu0 %v139
  %157 = vmatprep.subr.mxu0 0.0
  %158 = vmatpush1.msra.mxu0 %v140
  %159 = vmatprep.subr.mxu0 0.0
  %160 = vmatpush1.msra.mxu0 %v141
  %161 = vmatprep.subr.mxu0 0.0
  %162 = vmatpush1.msra.mxu0 0.0
  %163 = vmatprep.subr.mxu0 0.0
  %164 = vmatpush1.msra.mxu0 0.0
  %165 = vmatprep.subr.mxu0 0.0
  %166 = vmatpush1.msra.mxu0 0.0
  %167 = vmatprep.subr.mxu0 0.0
  %168 = vmatpush1.msra.mxu0 0.0
  %169 = vmatprep.subr.mxu0 0.0
  %170 = vmatpush1.msra.mxu0 0.0
  %171 = vmatprep.subr.mxu0 0.0
  %172 = vmatpush1.msra.mxu0 0.0
  %173 = vmatprep.subr.mxu0 0.0
  %174 = vmatpush1.msra.mxu0 0.0
  %175 = vmatprep.subr.mxu0 0.0
  %176 = vmatpush1.msra.mxu0 0.0
  %177 = vmatprep.subr.mxu0 0.0
  %178 = vmatpush1.msra.mxu0 0.0
  %179 = vmatprep.subr.mxu0 0.0
  %180 = vmatpush1.msra.mxu0 0.0
  %181 = vmatprep.subr.mxu0 0.0
  %182 = vmatpush1.msra.mxu0 0.0
  %183 = vmatprep.subr.mxu0 0.0
  %184 = vmatpush1.msra.mxu0 0.0
  %185 = vmatprep.subr.mxu0 0.0
  %186 = vmatpush1.msra.mxu0 0.0
  %187 = vmatprep.subr.mxu0 0.0
  %188 = vmatpush1.msra.mxu0 0.0
  %189 = vmatprep.subr.mxu0 0.0
  %190 = vmatpush1.msra.mxu0 0.0
  %191 = vmatprep.subr.mxu0 0.0
  %192 = vmatpush1.msra.mxu0 0.0
  %193 = vmatprep.subr.mxu0 0.0
  %194 = vmatpush1.msra.mxu0 0.0
  %195 = vmatprep.subr.mxu0 0.0
  %196 = vmatpush1.msra.mxu0 0.0
  %197 = vmatprep.subr.mxu0 0.0
  %198 = vmatpush1.msra.mxu0 0.0
  %199 = vmatprep.subr.mxu0 0.0
  %200 = vmatpush1.msra.mxu0 0.0
  %201 = vmatprep.subr.mxu0 0.0
  %202 = vmatpush1.msra.mxu0 0.0
  %203 = vmatprep.subr.mxu0 0.0
  %204 = vmatpush1.msra.mxu0 0.0
  %205 = vmatprep.subr.mxu0 0.0
  %206 = vmatpush1.msra.mxu0 0.0
  %207 = vmatprep.subr.mxu0 0.0
  %208 = vmatpush1.msra.mxu0 0.0
  %209 = vmatprep.subr.mxu0 0.0
  %210 = vmatpush1.msra.mxu0 0.0
  %211 = vmatprep.subr.mxu0 0.0
  %212 = vmatpush1.msra.mxu0 0.0
  %213 = vmatprep.subr.mxu0 0.0
  %214 = vmatpush1.msra.mxu0 0.0
  %215 = vmatprep.subr.mxu0 0.0
  %216 = vmatpush1.msra.mxu0 0.0
  %217 = vmatprep.mubr.f32.mxu0 0.0
  %218 = vmatmul.mubr.f32.gmra.mrb[0].mxu0 %v151
  %v219 = vpop.f32.mrb[0].mxu0
  %v220 = vadd.f32 %v147, %v219
  %v221 = vpop.f32.mrb[0].mxu0
  %222 = vdwg.mxu0
  %v223 = vld [vmem:[%s4] sm:$0xff]
  %v224 = vld [vmem:[%s4 + $0x8] sm:$0xff]
  %v225 = vld [vmem:[%s4 + $0x10] sm:$0xff]
  %v226 = vld [vmem:[%s4 + $0x18] sm:$0xff]
  %v227 = vld [vmem:[%s4 + $0x20] sm:$0xff]
  %v228 = vld [vmem:[%s4 + $0x28] sm:$0xff]
  %v229 = vld [vmem:[%s4 + $0x30] sm:$0xff]
  %v230 = vld [vmem:[%s4 + $0x38] sm:$0xff]
  %v231 = vld [vmem:[%s4 + $0x40] sm:$0xff]
  %v232 = vld [vmem:[%s4 + $0x48] sm:$0xff]
  %v233 = vld [vmem:[%s4 + $0x50] sm:$0xff]
  %v234 = vld [vmem:[%s4 + $0x58] sm:$0xff]
  %v235 = vld [vmem:[%s4 + $0x60] sm:$0xff]
  %v236 = vld [vmem:[%s4 + $0x68] sm:$0xff]
  %v237 = vld [vmem:[%s4 + $0x70] sm:$0xff]
  %v238 = vld [vmem:[%s4 + $0x78] sm:$0xff]
  %v239 = vld [vmem:[%s4 + $0x80] sm:$0xff]
  %v240 = vld [vmem:[%s4 + $0x88] sm:$0xff]
  %v241 = vld [vmem:[%s4 + $0x90] sm:$0xff]
  %v242 = vld [vmem:[%s4 + $0x98] sm:$0xff]
  %v243 = vld [vmem:[%s4 + $0xa0] sm:$0xff]
  %v244 = vld [vmem:[%s4 + $0xa8] sm:$0xff]
  %v245 = vld [vmem:[%s4 + $0xb0] sm:$0xff]
  %v246 = vld [vmem:[%s4 + $0xb8] sm:$0xff]
  %v247 = vld [vmem:[%s4 + $0xc0] sm:$0xff]
  %v248 = vld [vmem:[%s4 + $0xc8] sm:$0xff]
  %v249 = vld [vmem:[%s4 + $0xd0] sm:$0xff]
  %v250 = vld [vmem:[%s4 + $0xd8] sm:$0xff]
  %v251 = vld [vmem:[%s4 + $0xe0] sm:$0xff]
  %v252 = vld [vmem:[%s4 + $0xe8] sm:$0xff]
  %v253 = vld [vmem:[%s4 + $0xf0] sm:$0xff]
  %v254 = vld [vmem:[%s4 + $0xf8] sm:$0xff]
  %v255 = vld [vmem:[%s4 + $0x100] sm:$0xff]
  %v256 = vld [vmem:[%s4 + $0x108] sm:$0xff]
  %v257 = vld [vmem:[%s4 + $0x110] sm:$0xff]
  %v258 = vld [vmem:[%s4 + $0x118] sm:$0xff]
  %v259 = vld [vmem:[%s4 + $0x120] sm:$0xff]
  %v260 = vld [vmem:[%s4 + $0x128] sm:$0xff]
  %v261 = vld [vmem:[%s4 + $0x130] sm:$0xff]
  %v262 = vld [vmem:[%s4 + $0x138] sm:$0xff]
  %v263 = vld [vmem:[%s4 + $0x140] sm:$0xff]
  %v264 = vld [vmem:[%s4 + $0x148] sm:$0xff]
  %v265 = vld [vmem:[%s4 + $0x150] sm:$0xff]
  %v266 = vld [vmem:[%s4 + $0x158] sm:$0xff]
  %v267 = vld [vmem:[%s4 + $0x160] sm:$0xff]
  %v268 = vld [vmem:[%s4 + $0x168] sm:$0xff]
  %v269 = vld [vmem:[%s4 + $0x170] sm:$0xff]
  %v270 = vld [vmem:[%s4 + $0x178] sm:$0xff]
  %v271 = vld [vmem:[%s5] sm:$0xff]
  %v272 = vld [vmem:[%s5 + $0x8] sm:$0xff]
  %v273 = vld [vmem:[%s5 + $0x10] sm:$0xff]
  %v274 = vld [vmem:[%s5 + $0x18] sm:$0xff]
  %v275 = vld [vmem:[%s5 + $0x20] sm:$0xff]
  %v276 = vld [vmem:[%s5 + $0x28] sm:$0xff]
  %v277 = vld [vmem:[%s5 + $0x30] sm:$0xff]
  %v278 = vld [vmem:[%s5 + $0x38] sm:$0xff]
  %v279 = vld [vmem:[%s5 + $0x40] sm:$0xff]
  %v280 = vld [vmem:[%s5 + $0x48] sm:$0xff]
  %v281 = vld [vmem:[%s5 + $0x50] sm:$0xff]
  %v282 = vld [vmem:[%s5 + $0x58] sm:$0xff]
  %v283 = vld [vmem:[%s5 + $0x60] sm:$0xff]
  %v284 = vld [vmem:[%s5 + $0x68] sm:$0xff]
  %v285 = vld [vmem:[%s5 + $0x70] sm:$0xff]
  %v286 = vld [vmem:[%s5 + $0x78] sm:$0xff]
  %v287 = vld [vmem:[%s5 + $0x80] sm:$0xff]
  %v288 = vld [vmem:[%s5 + $0x88] sm:$0xff]
  %v289 = vld [vmem:[%s5 + $0x90] sm:$0xff]
  %v290 = vld [vmem:[%s5 + $0x98] sm:$0xff]
  %v291 = vld [vmem:[%s5 + $0xa0] sm:$0xff]
  %v292 = vld [vmem:[%s5 + $0xa8] sm:$0xff]
  %v293 = vld [vmem:[%s5 + $0xb0] sm:$0xff]
  %v294 = vld [vmem:[%s5 + $0xb8] sm:$0xff]
  %v295 = vld [vmem:[%s5 + $0xc0] sm:$0xff]
  %v296 = vld [vmem:[%s5 + $0xc8] sm:$0xff]
  %v297 = vld [vmem:[%s5 + $0xd0] sm:$0xff]
  %v298 = vld [vmem:[%s5 + $0xd8] sm:$0xff]
  %v299 = vld [vmem:[%s5 + $0xe0] sm:$0xff]
  %v300 = vld [vmem:[%s5 + $0xe8] sm:$0xff]
  %v301 = vld [vmem:[%s5 + $0xf0] sm:$0xff]
  %v302 = vld [vmem:[%s5 + $0xf8] sm:$0xff]
  %v303 = vld [vmem:[%s5 + $0x100] sm:$0xff]
  %v304 = vld [vmem:[%s5 + $0x108] sm:$0xff]
  %v305 = vld [vmem:[%s5 + $0x110] sm:$0xff]
  %v306 = vld [vmem:[%s5 + $0x118] sm:$0xff]
  %v307 = vld [vmem:[%s5 + $0x120] sm:$0xff]
  %v308 = vld [vmem:[%s5 + $0x128] sm:$0xff]
  %v309 = vld [vmem:[%s5 + $0x130] sm:$0xff]
  %v310 = vld [vmem:[%s5 + $0x138] sm:$0xff]
  %v311 = vld [vmem:[%s5 + $0x140] sm:$0xff]
  %v312 = vld [vmem:[%s5 + $0x148] sm:$0xff]
  %v313 = vld [vmem:[%s5 + $0x150] sm:$0xff]
  %v314 = vld [vmem:[%s5 + $0x158] sm:$0xff]
  %v315 = vld [vmem:[%s5 + $0x160] sm:$0xff]
  %v316 = vld [vmem:[%s5 + $0x168] sm:$0xff]
  %v317 = vld [vmem:[%s5 + $0x170] sm:$0xff]
  %v318 = vld [vmem:[%s5 + $0x178] sm:$0xff]
  %v319 = vld [vmem:[%s5 + $0x180] sm:$0xff]
  %v320 = vld [vmem:[%s5 + $0x188] sm:$0xff]
  %v321 = vld [vmem:[%s5 + $0x190] sm:$0xff]
  %v322 = vld [vmem:[%s5 + $0x198] sm:$0xff]
  %v323 = vld [vmem:[%s5 + $0x1a0] sm:$0xff]
  %v324 = vld [vmem:[%s5 + $0x1a8] sm:$0xff]
  %v325 = vld [vmem:[%s5 + $0x1b0] sm:$0xff]
  %v326 = vld [vmem:[%s5 + $0x1b8] sm:$0xff]
  %v327 = vld [vmem:[%s5 + $0x1c0] sm:$0xff]
  %v328 = vld [vmem:[%s5 + $0x1c8] sm:$0xff]
  %v329 = vld [vmem:[%s5 + $0x1d0] sm:$0xff]
  %v330 = vld [vmem:[%s5 + $0x1d8] sm:$0xff]
  %v331 = vld [vmem:[%s5 + $0x1e0] sm:$0xff]
  %v332 = vld [vmem:[%s5 + $0x1e8] sm:$0xff]
  %v333 = vld [vmem:[%s5 + $0x1f0] sm:$0xff]
  %v334 = vld [vmem:[%s5 + $0x1f8] sm:$0xff]
  %v335 = vld [vmem:[%s5 + $0x200] sm:$0xff]
  %v336 = vld [vmem:[%s5 + $0x208] sm:$0xff]
  %v337 = vld [vmem:[%s5 + $0x210] sm:$0xff]
  %v338 = vld [vmem:[%s5 + $0x218] sm:$0xff]
  %v339 = vld [vmem:[%s5 + $0x220] sm:$0xff]
  %v340 = vld [vmem:[%s5 + $0x228] sm:$0xff]
  %v341 = vld [vmem:[%s5 + $0x230] sm:$0xff]
  %v342 = vld [vmem:[%s5 + $0x238] sm:$0xff]
  %v343 = vld [vmem:[%s5 + $0x240] sm:$0xff]
  %v344 = vld [vmem:[%s5 + $0x248] sm:$0xff]
  %v345 = vld [vmem:[%s5 + $0x250] sm:$0xff]
  %v346 = vld [vmem:[%s5 + $0x258] sm:$0xff]
  %v347 = vld [vmem:[%s5 + $0x260] sm:$0xff]
  %v348 = vld [vmem:[%s5 + $0x268] sm:$0xff]
  %v349 = vld [vmem:[%s5 + $0x270] sm:$0xff]
  %v350 = vld [vmem:[%s5 + $0x278] sm:$0xff]
  %v351 = vld [vmem:[%s5 + $0x280] sm:$0xff]
  %v352 = vld [vmem:[%s5 + $0x288] sm:$0xff]
  %v353 = vld [vmem:[%s5 + $0x290] sm:$0xff]
  %v354 = vld [vmem:[%s5 + $0x298] sm:$0xff]
  %v355 = vld [vmem:[%s5 + $0x2a0] sm:$0xff]
  %v356 = vld [vmem:[%s5 + $0x2a8] sm:$0xff]
  %v357 = vld [vmem:[%s5 + $0x2b0] sm:$0xff]
  %v358 = vld [vmem:[%s5 + $0x2b8] sm:$0xff]
  %v359 = vld [vmem:[%s5 + $0x2c0] sm:$0xff]
  %v360 = vld [vmem:[%s5 + $0x2c8] sm:$0xff]
  %v361 = vld [vmem:[%s5 + $0x2d0] sm:$0xff]
  %v362 = vld [vmem:[%s5 + $0x2d8] sm:$0xff]
  %v363 = vld [vmem:[%s5 + $0x2e0] sm:$0xff]
  %v364 = vld [vmem:[%s5 + $0x2e8] sm:$0xff]
  %v365 = vld [vmem:[%s5 + $0x2f0] sm:$0xff]
  %v366 = vld [vmem:[%s5 + $0x2f8] sm:$0xff]
  %v367 = vld [vmem:[%s5 + $0x300] sm:$0xff]
  %v368 = vld [vmem:[%s5 + $0x308] sm:$0xff]
  %v369 = vld [vmem:[%s5 + $0x310] sm:$0xff]
  %v370 = vld [vmem:[%s5 + $0x318] sm:$0xff]
  %v371 = vld [vmem:[%s5 + $0x320] sm:$0xff]
  %v372 = vld [vmem:[%s5 + $0x328] sm:$0xff]
  %v373 = vld [vmem:[%s5 + $0x330] sm:$0xff]
  %v374 = vld [vmem:[%s5 + $0x338] sm:$0xff]
  %v375 = vld [vmem:[%s5 + $0x340] sm:$0xff]
  %v376 = vld [vmem:[%s5 + $0x348] sm:$0xff]
  %v377 = vld [vmem:[%s5 + $0x350] sm:$0xff]
  %v378 = vld [vmem:[%s5 + $0x358] sm:$0xff]
  %v379 = vld [vmem:[%s5 + $0x360] sm:$0xff]
  %v380 = vld [vmem:[%s5 + $0x368] sm:$0xff]
  %v381 = vld [vmem:[%s5 + $0x370] sm:$0xff]
  %v382 = vld [vmem:[%s5 + $0x378] sm:$0xff]
  %v383 = vld [vmem:[%s5 + $0x380] sm:$0xff]
  %v384 = vld [vmem:[%s5 + $0x388] sm:$0xff]
  %v385 = vld [vmem:[%s5 + $0x390] sm:$0xff]
  %v386 = vld [vmem:[%s5 + $0x398] sm:$0xff]
  %v387 = vld [vmem:[%s5 + $0x3a0] sm:$0xff]
  %v388 = vld [vmem:[%s5 + $0x3a8] sm:$0xff]
  %v389 = vld [vmem:[%s5 + $0x3b0] sm:$0xff]
  %v390 = vld [vmem:[%s5 + $0x3b8] sm:$0xff]
  %v391 = vld [vmem:[%s5 + $0x3c0] sm:$0xff]
  %v392 = vld [vmem:[%s5 + $0x3c8] sm:$0xff]
  %v393 = vld [vmem:[%s5 + $0x3d0] sm:$0xff]
  %v394 = vld [vmem:[%s5 + $0x3d8] sm:$0xff]
  %v395 = vld [vmem:[%s5 + $0x3e0] sm:$0xff]
  %v396 = vld [vmem:[%s5 + $0x3e8] sm:$0xff]
  %v397 = vld [vmem:[%s5 + $0x3f0] sm:$0xff]
  %v398 = vld [vmem:[%s5 + $0x3f8] sm:$0xff]
  %v399 = vld [vmem:[%s5 + $0x400] sm:$0xff]
  %v400 = vld [vmem:[%s5 + $0x408] sm:$0xff]
  %v401 = vld [vmem:[%s5 + $0x410] sm:$0xff]
  %v402 = vld [vmem:[%s5 + $0x418] sm:$0xff]
  %v403 = vld [vmem:[%s5 + $0x420] sm:$0xff]
  %v404 = vld [vmem:[%s5 + $0x428] sm:$0xff]
  %v405 = vld [vmem:[%s5 + $0x430] sm:$0xff]
  %v406 = vld [vmem:[%s5 + $0x438] sm:$0xff]
  %v407 = vld [vmem:[%s5 + $0x440] sm:$0xff]
  %v408 = vld [vmem:[%s5 + $0x448] sm:$0xff]
  %v409 = vld [vmem:[%s5 + $0x450] sm:$0xff]
  %v410 = vld [vmem:[%s5 + $0x458] sm:$0xff]
  %v411 = vld [vmem:[%s5 + $0x460] sm:$0xff]
  %v412 = vld [vmem:[%s5 + $0x468] sm:$0xff]
  %v413 = vld [vmem:[%s5 + $0x470] sm:$0xff]
  %v414 = vld [vmem:[%s5 + $0x478] sm:$0xff]
  %v415 = vld [vmem:[%s5 + $0x480] sm:$0xff]
  %v416 = vld [vmem:[%s5 + $0x488] sm:$0xff]
  %v417 = vld [vmem:[%s5 + $0x490] sm:$0xff]
  %v418 = vld [vmem:[%s5 + $0x498] sm:$0xff]
  %v419 = vld [vmem:[%s5 + $0x4a0] sm:$0xff]
  %v420 = vld [vmem:[%s5 + $0x4a8] sm:$0xff]
  %v421 = vld [vmem:[%s5 + $0x4b0] sm:$0xff]
  %v422 = vld [vmem:[%s5 + $0x4b8] sm:$0xff]
  %v423 = vld [vmem:[%s5 + $0x4c0] sm:$0xff]
  %v424 = vld [vmem:[%s5 + $0x4c8] sm:$0xff]
  %v425 = vld [vmem:[%s5 + $0x4d0] sm:$0xff]
  %v426 = vld [vmem:[%s5 + $0x4d8] sm:$0xff]
  %v427 = vld [vmem:[%s5 + $0x4e0] sm:$0xff]
  %v428 = vld [vmem:[%s5 + $0x4e8] sm:$0xff]
  %v429 = vld [vmem:[%s5 + $0x4f0] sm:$0xff]
  %v430 = vld [vmem:[%s5 + $0x4f8] sm:$0xff]
  %v431 = vld [vmem:[%s5 + $0x500] sm:$0xff]
  %v432 = vld [vmem:[%s5 + $0x508] sm:$0xff]
  %v433 = vld [vmem:[%s5 + $0x510] sm:$0xff]
  %v434 = vld [vmem:[%s5 + $0x518] sm:$0xff]
  %v435 = vld [vmem:[%s5 + $0x520] sm:$0xff]
  %v436 = vld [vmem:[%s5 + $0x528] sm:$0xff]
  %v437 = vld [vmem:[%s5 + $0x530] sm:$0xff]
  %v438 = vld [vmem:[%s5 + $0x538] sm:$0xff]
  %v439 = vld [vmem:[%s5 + $0x540] sm:$0xff]
  %v440 = vld [vmem:[%s5 + $0x548] sm:$0xff]
  %v441 = vld [vmem:[%s5 + $0x550] sm:$0xff]
  %v442 = vld [vmem:[%s5 + $0x558] sm:$0xff]
  %v443 = vld [vmem:[%s5 + $0x560] sm:$0xff]
  %v444 = vld [vmem:[%s5 + $0x568] sm:$0xff]
  %v445 = vld [vmem:[%s5 + $0x570] sm:$0xff]
  %v446 = vld [vmem:[%s5 + $0x578] sm:$0xff]
  %v447 = vld [vmem:[%s5 + $0x580] sm:$0xff]
  %v448 = vld [vmem:[%s5 + $0x588] sm:$0xff]
  %v449 = vld [vmem:[%s5 + $0x590] sm:$0xff]
  %v450 = vld [vmem:[%s5 + $0x598] sm:$0xff]
  %v451 = vld [vmem:[%s5 + $0x5a0] sm:$0xff]
  %v452 = vld [vmem:[%s5 + $0x5a8] sm:$0xff]
  %v453 = vld [vmem:[%s5 + $0x5b0] sm:$0xff]
  %v454 = vld [vmem:[%s5 + $0x5b8] sm:$0xff]
  %v455 = vld [vmem:[%s5 + $0x5c0] sm:$0xff]
  %v456 = vld [vmem:[%s5 + $0x5c8] sm:$0xff]
  %v457 = vld [vmem:[%s5 + $0x5d0] sm:$0xff]
  %v458 = vld [vmem:[%s5 + $0x5d8] sm:$0xff]
  %v459 = vld [vmem:[%s5 + $0x5e0] sm:$0xff]
  %v460 = vld [vmem:[%s5 + $0x5e8] sm:$0xff]
  %v461 = vld [vmem:[%s5 + $0x5f0] sm:$0xff]
  %v462 = vld [vmem:[%s5 + $0x5f8] sm:$0xff]
  %v463 = vld [vmem:[%s5 + $0x600] sm:$0xff]
  %v464 = vld [vmem:[%s5 + $0x608] sm:$0xff]
  %v465 = vld [vmem:[%s5 + $0x610] sm:$0xff]
  %v466 = vld [vmem:[%s5 + $0x618] sm:$0xff]
  %v467 = vld [vmem:[%s5 + $0x620] sm:$0xff]
  %v468 = vld [vmem:[%s5 + $0x628] sm:$0xff]
  %v469 = vld [vmem:[%s5 + $0x630] sm:$0xff]
  %v470 = vld [vmem:[%s5 + $0x638] sm:$0xff]
  %v471 = vld [vmem:[%s5 + $0x640] sm:$0xff]
  %v472 = vld [vmem:[%s5 + $0x648] sm:$0xff]
  %v473 = vld [vmem:[%s5 + $0x650] sm:$0xff]
  %v474 = vld [vmem:[%s5 + $0x658] sm:$0xff]
  %v475 = vld [vmem:[%s5 + $0x660] sm:$0xff]
  %v476 = vld [vmem:[%s5 + $0x668] sm:$0xff]
  %v477 = vld [vmem:[%s5 + $0x670] sm:$0xff]
  %v478 = vld [vmem:[%s5 + $0x678] sm:$0xff]
  %v479 = vld [vmem:[%s5 + $0x680] sm:$0xff]
  %v480 = vld [vmem:[%s5 + $0x688] sm:$0xff]
  %v481 = vld [vmem:[%s5 + $0x690] sm:$0xff]
  %v482 = vld [vmem:[%s5 + $0x698] sm:$0xff]
  %v483 = vld [vmem:[%s5 + $0x6a0] sm:$0xff]
  %v484 = vld [vmem:[%s5 + $0x6a8] sm:$0xff]
  %v485 = vld [vmem:[%s5 + $0x6b0] sm:$0xff]
  %v486 = vld [vmem:[%s5 + $0x6b8] sm:$0xff]
  %v487 = vld [vmem:[%s5 + $0x6c0] sm:$0xff]
  %v488 = vld [vmem:[%s5 + $0x6c8] sm:$0xff]
  %v489 = vld [vmem:[%s5 + $0x6d0] sm:$0xff]
  %v490 = vld [vmem:[%s5 + $0x6d8] sm:$0xff]
  %v491 = vld [vmem:[%s5 + $0x6e0] sm:$0xff]
  %v492 = vld [vmem:[%s5 + $0x6e8] sm:$0xff]
  %v493 = vld [vmem:[%s5 + $0x6f0] sm:$0xff]
  %v494 = vld [vmem:[%s5 + $0x6f8] sm:$0xff]
  %v495 = vld [vmem:[%s5 + $0x700] sm:$0xff]
  %v496 = vld [vmem:[%s5 + $0x708] sm:$0xff]
  %v497 = vld [vmem:[%s5 + $0x710] sm:$0xff]
  %v498 = vld [vmem:[%s5 + $0x718] sm:$0xff]
  %v499 = vld [vmem:[%s5 + $0x720] sm:$0xff]
  %v500 = vld [vmem:[%s5 + $0x728] sm:$0xff]
  %v501 = vld [vmem:[%s5 + $0x730] sm:$0xff]
  %v502 = vld [vmem:[%s5 + $0x738] sm:$0xff]
  %v503 = vld [vmem:[%s5 + $0x740] sm:$0xff]
  %v504 = vld [vmem:[%s5 + $0x748] sm:$0xff]
  %v505 = vld [vmem:[%s5 + $0x750] sm:$0xff]
  %v506 = vld [vmem:[%s5 + $0x758] sm:$0xff]
  %v507 = vld [vmem:[%s5 + $0x760] sm:$0xff]
  %v508 = vld [vmem:[%s5 + $0x768] sm:$0xff]
  %v509 = vld [vmem:[%s5 + $0x770] sm:$0xff]
  %v510 = vld [vmem:[%s5 + $0x778] sm:$0xff]
  %v511 = vld [vmem:[%s5 + $0x780] sm:$0xff]
  %v512 = vld [vmem:[%s5 + $0x788] sm:$0xff]
  %v513 = vld [vmem:[%s5 + $0x790] sm:$0xff]
  %v514 = vld [vmem:[%s5 + $0x798] sm:$0xff]
  %v515 = vld [vmem:[%s5 + $0x7a0] sm:$0xff]
  %v516 = vld [vmem:[%s5 + $0x7a8] sm:$0xff]
  %v517 = vld [vmem:[%s5 + $0x7b0] sm:$0xff]
  %v518 = vld [vmem:[%s5 + $0x7b8] sm:$0xff]
  %v519 = vld [vmem:[%s5 + $0x7c0] sm:$0xff]
  %v520 = vld [vmem:[%s5 + $0x7c8] sm:$0xff]
  %v521 = vld [vmem:[%s5 + $0x7d0] sm:$0xff]
  %v522 = vld [vmem:[%s5 + $0x7d8] sm:$0xff]
  %v523 = vld [vmem:[%s5 + $0x7e0] sm:$0xff]
  %v524 = vld [vmem:[%s5 + $0x7e8] sm:$0xff]
  %v525 = vld [vmem:[%s5 + $0x7f0] sm:$0xff]
  %v526 = vld [vmem:[%s5 + $0x7f8] sm:$0xff]
  %v527 = vld [vmem:[%s5 + $0x800] sm:$0xff]
  %v528 = vld [vmem:[%s5 + $0x808] sm:$0xff]
  %v529 = vld [vmem:[%s5 + $0x810] sm:$0xff]
  %v530 = vld [vmem:[%s5 + $0x818] sm:$0xff]
  %v531 = vld [vmem:[%s5 + $0x820] sm:$0xff]
  %v532 = vld [vmem:[%s5 + $0x828] sm:$0xff]
  %v533 = vld [vmem:[%s5 + $0x830] sm:$0xff]
  %v534 = vld [vmem:[%s5 + $0x838] sm:$0xff]
  %v535 = vld [vmem:[%s5 + $0x840] sm:$0xff]
  %v536 = vld [vmem:[%s5 + $0x848] sm:$0xff]
  %v537 = vld [vmem:[%s5 + $0x850] sm:$0xff]
  %v538 = vld [vmem:[%s5 + $0x858] sm:$0xff]
  %v539 = vld [vmem:[%s5 + $0x860] sm:$0xff]
  %v540 = vld [vmem:[%s5 + $0x868] sm:$0xff]
  %v541 = vld [vmem:[%s5 + $0x870] sm:$0xff]
  %v542 = vld [vmem:[%s5 + $0x878] sm:$0xff]
  %v543 = vld [vmem:[%s5 + $0x880] sm:$0xff]
  %v544 = vld [vmem:[%s5 + $0x888] sm:$0xff]
  %v545 = vld [vmem:[%s5 + $0x890] sm:$0xff]
  %v546 = vld [vmem:[%s5 + $0x898] sm:$0xff]
  %v547 = vld [vmem:[%s5 + $0x8a0] sm:$0xff]
  %v548 = vld [vmem:[%s5 + $0x8a8] sm:$0xff]
  %v549 = vld [vmem:[%s5 + $0x8b0] sm:$0xff]
  %v550 = vld [vmem:[%s5 + $0x8b8] sm:$0xff]
  %v551 = vld [vmem:[%s5 + $0x8c0] sm:$0xff]
  %v552 = vld [vmem:[%s5 + $0x8c8] sm:$0xff]
  %v553 = vld [vmem:[%s5 + $0x8d0] sm:$0xff]
  %v554 = vld [vmem:[%s5 + $0x8d8] sm:$0xff]
  %v555 = vld [vmem:[%s5 + $0x8e0] sm:$0xff]
  %v556 = vld [vmem:[%s5 + $0x8e8] sm:$0xff]
  %v557 = vld [vmem:[%s5 + $0x8f0] sm:$0xff]
  %v558 = vld [vmem:[%s5 + $0x8f8] sm:$0xff]
  %v559 = vld [vmem:[%s5 + $0x900] sm:$0xff]
  %v560 = vld [vmem:[%s5 + $0x908] sm:$0xff]
  %v561 = vld [vmem:[%s5 + $0x910] sm:$0xff]
  %v562 = vld [vmem:[%s5 + $0x918] sm:$0xff]
  %v563 = vld [vmem:[%s5 + $0x920] sm:$0xff]
  %v564 = vld [vmem:[%s5 + $0x928] sm:$0xff]
  %v565 = vld [vmem:[%s5 + $0x930] sm:$0xff]
  %v566 = vld [vmem:[%s5 + $0x938] sm:$0xff]
  %v567 = vld [vmem:[%s5 + $0x940] sm:$0xff]
  %v568 = vld [vmem:[%s5 + $0x948] sm:$0xff]
  %v569 = vld [vmem:[%s5 + $0x950] sm:$0xff]
  %v570 = vld [vmem:[%s5 + $0x958] sm:$0xff]
  %v571 = vld [vmem:[%s5 + $0x960] sm:$0xff]
  %v572 = vld [vmem:[%s5 + $0x968] sm:$0xff]
  %v573 = vld [vmem:[%s5 + $0x970] sm:$0xff]
  %v574 = vld [vmem:[%s5 + $0x978] sm:$0xff]
  %v575 = vld [vmem:[%s5 + $0x980] sm:$0xff]
  %v576 = vld [vmem:[%s5 + $0x988] sm:$0xff]
  %v577 = vld [vmem:[%s5 + $0x990] sm:$0xff]
  %v578 = vld [vmem:[%s5 + $0x998] sm:$0xff]
  %v579 = vld [vmem:[%s5 + $0x9a0] sm:$0xff]
  %v580 = vld [vmem:[%s5 + $0x9a8] sm:$0xff]
  %v581 = vld [vmem:[%s5 + $0x9b0] sm:$0xff]
  %v582 = vld [vmem:[%s5 + $0x9b8] sm:$0xff]
  %v583 = vld [vmem:[%s5 + $0x9c0] sm:$0xff]
  %v584 = vld [vmem:[%s5 + $0x9c8] sm:$0xff]
  %v585 = vld [vmem:[%s5 + $0x9d0] sm:$0xff]
  %v586 = vld [vmem:[%s5 + $0x9d8] sm:$0xff]
  %v587 = vld [vmem:[%s5 + $0x9e0] sm:$0xff]
  %v588 = vld [vmem:[%s5 + $0x9e8] sm:$0xff]
  %v589 = vld [vmem:[%s5 + $0x9f0] sm:$0xff]
  %v590 = vld [vmem:[%s5 + $0x9f8] sm:$0xff]
  %v591 = vld [vmem:[%s5 + $0xa00] sm:$0xff]
  %v592 = vld [vmem:[%s5 + $0xa08] sm:$0xff]
  %v593 = vld [vmem:[%s5 + $0xa10] sm:$0xff]
  %v594 = vld [vmem:[%s5 + $0xa18] sm:$0xff]
  %v595 = vld [vmem:[%s5 + $0xa20] sm:$0xff]
  %v596 = vld [vmem:[%s5 + $0xa28] sm:$0xff]
  %v597 = vld [vmem:[%s5 + $0xa30] sm:$0xff]
  %v598 = vld [vmem:[%s5 + $0xa38] sm:$0xff]
  %v599 = vld [vmem:[%s5 + $0xa40] sm:$0xff]
  %v600 = vld [vmem:[%s5 + $0xa48] sm:$0xff]
  %v601 = vld [vmem:[%s5 + $0xa50] sm:$0xff]
  %v602 = vld [vmem:[%s5 + $0xa58] sm:$0xff]
  %v603 = vld [vmem:[%s5 + $0xa60] sm:$0xff]
  %v604 = vld [vmem:[%s5 + $0xa68] sm:$0xff]
  %v605 = vld [vmem:[%s5 + $0xa70] sm:$0xff]
  %v606 = vld [vmem:[%s5 + $0xa78] sm:$0xff]
  %v607 = vld [vmem:[%s5 + $0xa80] sm:$0xff]
  %v608 = vld [vmem:[%s5 + $0xa88] sm:$0xff]
  %v609 = vld [vmem:[%s5 + $0xa90] sm:$0xff]
  %v610 = vld [vmem:[%s5 + $0xa98] sm:$0xff]
  %v611 = vld [vmem:[%s5 + $0xaa0] sm:$0xff]
  %v612 = vld [vmem:[%s5 + $0xaa8] sm:$0xff]
  %v613 = vld [vmem:[%s5 + $0xab0] sm:$0xff]
  %v614 = vld [vmem:[%s5 + $0xab8] sm:$0xff]
  %v615 = vld [vmem:[%s5 + $0xac0] sm:$0xff]
  %v616 = vld [vmem:[%s5 + $0xac8] sm:$0xff]
  %v617 = vld [vmem:[%s5 + $0xad0] sm:$0xff]
  %v618 = vld [vmem:[%s5 + $0xad8] sm:$0xff]
  %v619 = vld [vmem:[%s5 + $0xae0] sm:$0xff]
  %v620 = vld [vmem:[%s5 + $0xae8] sm:$0xff]
  %v621 = vld [vmem:[%s5 + $0xaf0] sm:$0xff]
  %v622 = vld [vmem:[%s5 + $0xaf8] sm:$0xff]
  %v623 = vld [vmem:[%s5 + $0xb00] sm:$0xff]
  %v624 = vld [vmem:[%s5 + $0xb08] sm:$0xff]
  %v625 = vld [vmem:[%s5 + $0xb10] sm:$0xff]
  %v626 = vld [vmem:[%s5 + $0xb18] sm:$0xff]
  %v627 = vld [vmem:[%s5 + $0xb20] sm:$0xff]
  %v628 = vld [vmem:[%s5 + $0xb28] sm:$0xff]
  %v629 = vld [vmem:[%s5 + $0xb30] sm:$0xff]
  %v630 = vld [vmem:[%s5 + $0xb38] sm:$0xff]
  %v631 = vld [vmem:[%s5 + $0xb40] sm:$0xff]
  %v632 = vld [vmem:[%s5 + $0xb48] sm:$0xff]
  %v633 = vld [vmem:[%s5 + $0xb50] sm:$0xff]
  %v634 = vld [vmem:[%s5 + $0xb58] sm:$0xff]
  %v635 = vld [vmem:[%s5 + $0xb60] sm:$0xff]
  %v636 = vld [vmem:[%s5 + $0xb68] sm:$0xff]
  %v637 = vld [vmem:[%s5 + $0xb70] sm:$0xff]
  %v638 = vld [vmem:[%s5 + $0xb78] sm:$0xff]
  %v639 = vld [vmem:[%s5 + $0xb80] sm:$0xff]
  %v640 = vld [vmem:[%s5 + $0xb88] sm:$0xff]
  %v641 = vld [vmem:[%s5 + $0xb90] sm:$0xff]
  %v642 = vld [vmem:[%s5 + $0xb98] sm:$0xff]
  %v643 = vld [vmem:[%s5 + $0xba0] sm:$0xff]
  %v644 = vld [vmem:[%s5 + $0xba8] sm:$0xff]
  %v645 = vld [vmem:[%s5 + $0xbb0] sm:$0xff]
  %v646 = vld [vmem:[%s5 + $0xbb8] sm:$0xff]
  %v647 = vld [vmem:[%s5 + $0xbc0] sm:$0xff]
  %v648 = vld [vmem:[%s5 + $0xbc8] sm:$0xff]
  %v649 = vld [vmem:[%s5 + $0xbd0] sm:$0xff]
  %v650 = vld [vmem:[%s5 + $0xbd8] sm:$0xff]
  %v651 = vld [vmem:[%s5 + $0xbe0] sm:$0xff]
  %v652 = vld [vmem:[%s5 + $0xbe8] sm:$0xff]
  %v653 = vld [vmem:[%s5 + $0xbf0] sm:$0xff]
  %v654 = vld [vmem:[%s5 + $0xbf8] sm:$0xff]
  %v655 = vld [vmem:[%s5 + $0xc00] sm:$0xff]
  %v656 = vld [vmem:[%s5 + $0xc08] sm:$0xff]
  %v657 = vld [vmem:[%s5 + $0xc10] sm:$0xff]
  %v658 = vld [vmem:[%s5 + $0xc18] sm:$0xff]
  %v659 = vld [vmem:[%s5 + $0xc20] sm:$0xff]
  %v660 = vld [vmem:[%s5 + $0xc28] sm:$0xff]
  %v661 = vld [vmem:[%s5 + $0xc30] sm:$0xff]
  %v662 = vld [vmem:[%s5 + $0xc38] sm:$0xff]
  %v663 = vld [vmem:[%s5 + $0xc40] sm:$0xff]
  %v664 = vld [vmem:[%s5 + $0xc48] sm:$0xff]
  %v665 = vld [vmem:[%s5 + $0xc50] sm:$0xff]
  %v666 = vld [vmem:[%s5 + $0xc58] sm:$0xff]
  %v667 = vld [vmem:[%s5 + $0xc60] sm:$0xff]
  %v668 = vld [vmem:[%s5 + $0xc68] sm:$0xff]
  %v669 = vld [vmem:[%s5 + $0xc70] sm:$0xff]
  %v670 = vld [vmem:[%s5 + $0xc78] sm:$0xff]
  %v671 = vld [vmem:[%s5 + $0xc80] sm:$0xff]
  %v672 = vld [vmem:[%s5 + $0xc88] sm:$0xff]
  %v673 = vld [vmem:[%s5 + $0xc90] sm:$0xff]
  %v674 = vld [vmem:[%s5 + $0xc98] sm:$0xff]
  %v675 = vld [vmem:[%s5 + $0xca0] sm:$0xff]
  %v676 = vld [vmem:[%s5 + $0xca8] sm:$0xff]
  %v677 = vld [vmem:[%s5 + $0xcb0] sm:$0xff]
  %v678 = vld [vmem:[%s5 + $0xcb8] sm:$0xff]
  %v679 = vld [vmem:[%s5 + $0xcc0] sm:$0xff]
  %v680 = vld [vmem:[%s5 + $0xcc8] sm:$0xff]
  %v681 = vld [vmem:[%s5 + $0xcd0] sm:$0xff]
  %v682 = vld [vmem:[%s5 + $0xcd8] sm:$0xff]
  %v683 = vld [vmem:[%s5 + $0xce0] sm:$0xff]
  %v684 = vld [vmem:[%s5 + $0xce8] sm:$0xff]
  %v685 = vld [vmem:[%s5 + $0xcf0] sm:$0xff]
  %v686 = vld [vmem:[%s5 + $0xcf8] sm:$0xff]
  %v687 = vld [vmem:[%s5 + $0xd00] sm:$0xff]
  %v688 = vld [vmem:[%s5 + $0xd08] sm:$0xff]
  %v689 = vld [vmem:[%s5 + $0xd10] sm:$0xff]
  %v690 = vld [vmem:[%s5 + $0xd18] sm:$0xff]
  %v691 = vld [vmem:[%s5 + $0xd20] sm:$0xff]
  %v692 = vld [vmem:[%s5 + $0xd28] sm:$0xff]
  %v693 = vld [vmem:[%s5 + $0xd30] sm:$0xff]
  %v694 = vld [vmem:[%s5 + $0xd38] sm:$0xff]
  %v695 = vld [vmem:[%s5 + $0xd40] sm:$0xff]
  %v696 = vld [vmem:[%s5 + $0xd48] sm:$0xff]
  %v697 = vld [vmem:[%s5 + $0xd50] sm:$0xff]
  %v698 = vld [vmem:[%s5 + $0xd58] sm:$0xff]
  %v699 = vld [vmem:[%s5 + $0xd60] sm:$0xff]
  %v700 = vld [vmem:[%s5 + $0xd68] sm:$0xff]
  %v701 = vld [vmem:[%s5 + $0xd70] sm:$0xff]
  %v702 = vld [vmem:[%s5 + $0xd78] sm:$0xff]
  %v703 = vld [vmem:[%s5 + $0xd80] sm:$0xff]
  %v704 = vld [vmem:[%s5 + $0xd88] sm:$0xff]
  %v705 = vld [vmem:[%s5 + $0xd90] sm:$0xff]
  %v706 = vld [vmem:[%s5 + $0xd98] sm:$0xff]
  %v707 = vld [vmem:[%s5 + $0xda0] sm:$0xff]
  %v708 = vld [vmem:[%s5 + $0xda8] sm:$0xff]
  %v709 = vld [vmem:[%s5 + $0xdb0] sm:$0xff]
  %v710 = vld [vmem:[%s5 + $0xdb8] sm:$0xff]
  %v711 = vld [vmem:[%s5 + $0xdc0] sm:$0xff]
  %v712 = vld [vmem:[%s5 + $0xdc8] sm:$0xff]
  %v713 = vld [vmem:[%s5 + $0xdd0] sm:$0xff]
  %v714 = vld [vmem:[%s5 + $0xdd8] sm:$0xff]
  %v715 = vld [vmem:[%s5 + $0xde0] sm:$0xff]
  %v716 = vld [vmem:[%s5 + $0xde8] sm:$0xff]
  %v717 = vld [vmem:[%s5 + $0xdf0] sm:$0xff]
  %v718 = vld [vmem:[%s5 + $0xdf8] sm:$0xff]
  %v719 = vld [vmem:[%s5 + $0xe00] sm:$0xff]
  %v720 = vld [vmem:[%s5 + $0xe08] sm:$0xff]
  %v721 = vld [vmem:[%s5 + $0xe10] sm:$0xff]
  %v722 = vld [vmem:[%s5 + $0xe18] sm:$0xff]
  %v723 = vld [vmem:[%s5 + $0xe20] sm:$0xff]
  %v724 = vld [vmem:[%s5 + $0xe28] sm:$0xff]
  %v725 = vld [vmem:[%s5 + $0xe30] sm:$0xff]
  %v726 = vld [vmem:[%s5 + $0xe38] sm:$0xff]
  %v727 = vld [vmem:[%s5 + $0xe40] sm:$0xff]
  %v728 = vld [vmem:[%s5 + $0xe48] sm:$0xff]
  %v729 = vld [vmem:[%s5 + $0xe50] sm:$0xff]
  %v730 = vld [vmem:[%s5 + $0xe58] sm:$0xff]
  %v731 = vld [vmem:[%s5 + $0xe60] sm:$0xff]
  %v732 = vld [vmem:[%s5 + $0xe68] sm:$0xff]
  %v733 = vld [vmem:[%s5 + $0xe70] sm:$0xff]
  %v734 = vld [vmem:[%s5 + $0xe78] sm:$0xff]
  %v735 = vld [vmem:[%s5 + $0xe80] sm:$0xff]
  %v736 = vld [vmem:[%s5 + $0xe88] sm:$0xff]
  %v737 = vld [vmem:[%s5 + $0xe90] sm:$0xff]
  %v738 = vld [vmem:[%s5 + $0xe98] sm:$0xff]
  %v739 = vld [vmem:[%s5 + $0xea0] sm:$0xff]
  %v740 = vld [vmem:[%s5 + $0xea8] sm:$0xff]
  %v741 = vld [vmem:[%s5 + $0xeb0] sm:$0xff]
  %v742 = vld [vmem:[%s5 + $0xeb8] sm:$0xff]
  %v743 = vld [vmem:[%s5 + $0xec0] sm:$0xff]
  %v744 = vld [vmem:[%s5 + $0xec8] sm:$0xff]
  %v745 = vld [vmem:[%s5 + $0xed0] sm:$0xff]
  %v746 = vld [vmem:[%s5 + $0xed8] sm:$0xff]
  %v747 = vld [vmem:[%s5 + $0xee0] sm:$0xff]
  %v748 = vld [vmem:[%s5 + $0xee8] sm:$0xff]
  %v749 = vld [vmem:[%s5 + $0xef0] sm:$0xff]
  %v750 = vld [vmem:[%s5 + $0xef8] sm:$0xff]
  %v751 = vld [vmem:[%s5 + $0xf00] sm:$0xff]
  %v752 = vld [vmem:[%s5 + $0xf08] sm:$0xff]
  %v753 = vld [vmem:[%s5 + $0xf10] sm:$0xff]
  %v754 = vld [vmem:[%s5 + $0xf18] sm:$0xff]
  %v755 = vld [vmem:[%s5 + $0xf20] sm:$0xff]
  %v756 = vld [vmem:[%s5 + $0xf28] sm:$0xff]
  %v757 = vld [vmem:[%s5 + $0xf30] sm:$0xff]
  %v758 = vld [vmem:[%s5 + $0xf38] sm:$0xff]
  %v759 = vld [vmem:[%s5 + $0xf40] sm:$0xff]
  %v760 = vld [vmem:[%s5 + $0xf48] sm:$0xff]
  %v761 = vld [vmem:[%s5 + $0xf50] sm:$0xff]
  %v762 = vld [vmem:[%s5 + $0xf58] sm:$0xff]
  %v763 = vld [vmem:[%s5 + $0xf60] sm:$0xff]
  %v764 = vld [vmem:[%s5 + $0xf68] sm:$0xff]
  %v765 = vld [vmem:[%s5 + $0xf70] sm:$0xff]
  %v766 = vld [vmem:[%s5 + $0xf78] sm:$0xff]
  %v767 = vld [vmem:[%s5 + $0xf80] sm:$0xff]
  %v768 = vld [vmem:[%s5 + $0xf88] sm:$0xff]
  %v769 = vld [vmem:[%s5 + $0xf90] sm:$0xff]
  %v770 = vld [vmem:[%s5 + $0xf98] sm:$0xff]
  %v771 = vld [vmem:[%s5 + $0xfa0] sm:$0xff]
  %v772 = vld [vmem:[%s5 + $0xfa8] sm:$0xff]
  %v773 = vld [vmem:[%s5 + $0xfb0] sm:$0xff]
  %v774 = vld [vmem:[%s5 + $0xfb8] sm:$0xff]
  %v775 = vld [vmem:[%s5 + $0xfc0] sm:$0xff]
  %v776 = vld [vmem:[%s5 + $0xfc8] sm:$0xff]
  %v777 = vld [vmem:[%s5 + $0xfd0] sm:$0xff]
  %v778 = vld [vmem:[%s5 + $0xfd8] sm:$0xff]
  %v779 = vld [vmem:[%s5 + $0xfe0] sm:$0xff]
  %v780 = vld [vmem:[%s5 + $0xfe8] sm:$0xff]
  %v781 = vld [vmem:[%s5 + $0xff0] sm:$0xff]
  %v782 = vld [vmem:[%s5 + $0xff8] sm:$0xff]
  %v783 = vld [vmem:[%s5 + $0x1000] sm:$0xff]
  %v784 = vld [vmem:[%s5 + $0x1008] sm:$0xff]
  %v785 = vld [vmem:[%s5 + $0x1010] sm:$0xff]
  %v786 = vld [vmem:[%s5 + $0x1018] sm:$0xff]
  %v787 = vld [vmem:[%s5 + $0x1020] sm:$0xff]
  %v788 = vld [vmem:[%s5 + $0x1028] sm:$0xff]
  %v789 = vld [vmem:[%s5 + $0x1030] sm:$0xff]
  %v790 = vld [vmem:[%s5 + $0x1038] sm:$0xff]
  %v791 = vld [vmem:[%s5 + $0x1040] sm:$0xff]
  %v792 = vld [vmem:[%s5 + $0x1048] sm:$0xff]
  %v793 = vld [vmem:[%s5 + $0x1050] sm:$0xff]
  %v794 = vld [vmem:[%s5 + $0x1058] sm:$0xff]
  %v795 = vld [vmem:[%s5 + $0x1060] sm:$0xff]
  %v796 = vld [vmem:[%s5 + $0x1068] sm:$0xff]
  %v797 = vld [vmem:[%s5 + $0x1070] sm:$0xff]
  %v798 = vld [vmem:[%s5 + $0x1078] sm:$0xff]
  %v799 = vld [vmem:[%s5 + $0x1080] sm:$0xff]
  %v800 = vld [vmem:[%s5 + $0x1088] sm:$0xff]
  %v801 = vld [vmem:[%s5 + $0x1090] sm:$0xff]
  %v802 = vld [vmem:[%s5 + $0x1098] sm:$0xff]
  %v803 = vld [vmem:[%s5 + $0x10a0] sm:$0xff]
  %v804 = vld [vmem:[%s5 + $0x10a8] sm:$0xff]
  %v805 = vld [vmem:[%s5 + $0x10b0] sm:$0xff]
  %v806 = vld [vmem:[%s5 + $0x10b8] sm:$0xff]
  %v807 = vld [vmem:[%s5 + $0x10c0] sm:$0xff]
  %v808 = vld [vmem:[%s5 + $0x10c8] sm:$0xff]
  %v809 = vld [vmem:[%s5 + $0x10d0] sm:$0xff]
  %v810 = vld [vmem:[%s5 + $0x10d8] sm:$0xff]
  %v811 = vld [vmem:[%s5 + $0x10e0] sm:$0xff]
  %v812 = vld [vmem:[%s5 + $0x10e8] sm:$0xff]
  %v813 = vld [vmem:[%s5 + $0x10f0] sm:$0xff]
  %v814 = vld [vmem:[%s5 + $0x10f8] sm:$0xff]
  %v815 = vld [vmem:[%s5 + $0x1100] sm:$0xff]
  %v816 = vld [vmem:[%s5 + $0x1108] sm:$0xff]
  %v817 = vld [vmem:[%s5 + $0x1110] sm:$0xff]
  %v818 = vld [vmem:[%s5 + $0x1118] sm:$0xff]
  %v819 = vld [vmem:[%s5 + $0x1120] sm:$0xff]
  %v820 = vld [vmem:[%s5 + $0x1128] sm:$0xff]
  %v821 = vld [vmem:[%s5 + $0x1130] sm:$0xff]
  %v822 = vld [vmem:[%s5 + $0x1138] sm:$0xff]
  %v823 = vld [vmem:[%s5 + $0x1140] sm:$0xff]
  %v824 = vld [vmem:[%s5 + $0x1148] sm:$0xff]
  %v825 = vld [vmem:[%s5 + $0x1150] sm:$0xff]
  %v826 = vld [vmem:[%s5 + $0x1158] sm:$0xff]
  %v827 = vld [vmem:[%s5 + $0x1160] sm:$0xff]
  %v828 = vld [vmem:[%s5 + $0x1168] sm:$0xff]
  %v829 = vld [vmem:[%s5 + $0x1170] sm:$0xff]
  %v830 = vld [vmem:[%s5 + $0x1178] sm:$0xff]
  %v831 = vld [vmem:[%s5 + $0x1180] sm:$0xff]
  %v832 = vld [vmem:[%s5 + $0x1188] sm:$0xff]
  %v833 = vld [vmem:[%s5 + $0x1190] sm:$0xff]
  %v834 = vld [vmem:[%s5 + $0x1198] sm:$0xff]
  %v835 = vld [vmem:[%s5 + $0x11a0] sm:$0xff]
  %v836 = vld [vmem:[%s5 + $0x11a8] sm:$0xff]
  %v837 = vld [vmem:[%s5 + $0x11b0] sm:$0xff]
  %v838 = vld [vmem:[%s5 + $0x11b8] sm:$0xff]
  %v839 = vld [vmem:[%s5 + $0x11c0] sm:$0xff]
  %v840 = vld [vmem:[%s5 + $0x11c8] sm:$0xff]
  %v841 = vld [vmem:[%s5 + $0x11d0] sm:$0xff]
  %v842 = vld [vmem:[%s5 + $0x11d8] sm:$0xff]
  %v843 = vld [vmem:[%s5 + $0x11e0] sm:$0xff]
  %v844 = vld [vmem:[%s5 + $0x11e8] sm:$0xff]
  %v845 = vld [vmem:[%s5 + $0x11f0] sm:$0xff]
  %v846 = vld [vmem:[%s5 + $0x11f8] sm:$0xff]
  %v847 = vld [vmem:[%s5 + $0x1200] sm:$0xff]
  %v848 = vld [vmem:[%s5 + $0x1208] sm:$0xff]
  %v849 = vld [vmem:[%s5 + $0x1210] sm:$0xff]
  %v850 = vld [vmem:[%s5 + $0x1218] sm:$0xff]
  %v851 = vld [vmem:[%s5 + $0x1220] sm:$0xff]
  %v852 = vld [vmem:[%s5 + $0x1228] sm:$0xff]
  %v853 = vld [vmem:[%s5 + $0x1230] sm:$0xff]
  %v854 = vld [vmem:[%s5 + $0x1238] sm:$0xff]
  %v855 = vld [vmem:[%s5 + $0x1240] sm:$0xff]
  %v856 = vld [vmem:[%s5 + $0x1248] sm:$0xff]
  %v857 = vld [vmem:[%s5 + $0x1250] sm:$0xff]
  %v858 = vld [vmem:[%s5 + $0x1258] sm:$0xff]
  %v859 = vld [vmem:[%s5 + $0x1260] sm:$0xff]
  %v860 = vld [vmem:[%s5 + $0x1268] sm:$0xff]
  %v861 = vld [vmem:[%s5 + $0x1270] sm:$0xff]
  %v862 = vld [vmem:[%s5 + $0x1278] sm:$0xff]
  %v863 = vld [vmem:[%s5 + $0x1280] sm:$0xff]
  %v864 = vld [vmem:[%s5 + $0x1288] sm:$0xff]
  %v865 = vld [vmem:[%s5 + $0x1290] sm:$0xff]
  %v866 = vld [vmem:[%s5 + $0x1298] sm:$0xff]
  %v867 = vld [vmem:[%s5 + $0x12a0] sm:$0xff]
  %v868 = vld [vmem:[%s5 + $0x12a8] sm:$0xff]
  %v869 = vld [vmem:[%s5 + $0x12b0] sm:$0xff]
  %v870 = vld [vmem:[%s5 + $0x12b8] sm:$0xff]
  %v871 = vld [vmem:[%s5 + $0x12c0] sm:$0xff]
  %v872 = vld [vmem:[%s5 + $0x12c8] sm:$0xff]
  %v873 = vld [vmem:[%s5 + $0x12d0] sm:$0xff]
  %v874 = vld [vmem:[%s5 + $0x12d8] sm:$0xff]
  %v875 = vld [vmem:[%s5 + $0x12e0] sm:$0xff]
  %v876 = vld [vmem:[%s5 + $0x12e8] sm:$0xff]
  %v877 = vld [vmem:[%s5 + $0x12f0] sm:$0xff]
  %v878 = vld [vmem:[%s5 + $0x12f8] sm:$0xff]
  %v879 = vld [vmem:[%s5 + $0x1300] sm:$0xff]
  %v880 = vld [vmem:[%s5 + $0x1308] sm:$0xff]
  %v881 = vld [vmem:[%s5 + $0x1310] sm:$0xff]
  %v882 = vld [vmem:[%s5 + $0x1318] sm:$0xff]
  %v883 = vld [vmem:[%s5 + $0x1320] sm:$0xff]
  %v884 = vld [vmem:[%s5 + $0x1328] sm:$0xff]
  %v885 = vld [vmem:[%s5 + $0x1330] sm:$0xff]
  %v886 = vld [vmem:[%s5 + $0x1338] sm:$0xff]
  %v887 = vld [vmem:[%s5 + $0x1340] sm:$0xff]
  %v888 = vld [vmem:[%s5 + $0x1348] sm:$0xff]
  %v889 = vld [vmem:[%s5 + $0x1350] sm:$0xff]
  %v890 = vld [vmem:[%s5 + $0x1358] sm:$0xff]
  %v891 = vld [vmem:[%s5 + $0x1360] sm:$0xff]
  %v892 = vld [vmem:[%s5 + $0x1368] sm:$0xff]
  %v893 = vld [vmem:[%s5 + $0x1370] sm:$0xff]
  %v894 = vld [vmem:[%s5 + $0x1378] sm:$0xff]
  %v895 = vld [vmem:[%s5 + $0x1380] sm:$0xff]
  %v896 = vld [vmem:[%s5 + $0x1388] sm:$0xff]
  %v897 = vld [vmem:[%s5 + $0x1390] sm:$0xff]
  %v898 = vld [vmem:[%s5 + $0x1398] sm:$0xff]
  %v899 = vld [vmem:[%s5 + $0x13a0] sm:$0xff]
  %v900 = vld [vmem:[%s5 + $0x13a8] sm:$0xff]
  %v901 = vld [vmem:[%s5 + $0x13b0] sm:$0xff]
  %v902 = vld [vmem:[%s5 + $0x13b8] sm:$0xff]
  %v903 = vld [vmem:[%s5 + $0x13c0] sm:$0xff]
  %v904 = vld [vmem:[%s5 + $0x13c8] sm:$0xff]
  %v905 = vld [vmem:[%s5 + $0x13d0] sm:$0xff]
  %v906 = vld [vmem:[%s5 + $0x13d8] sm:$0xff]
  %v907 = vld [vmem:[%s5 + $0x13e0] sm:$0xff]
  %v908 = vld [vmem:[%s5 + $0x13e8] sm:$0xff]
  %v909 = vld [vmem:[%s5 + $0x13f0] sm:$0xff]
  %v910 = vld [vmem:[%s5 + $0x13f8] sm:$0xff]
  %v911 = vld [vmem:[%s5 + $0x1400] sm:$0xff]
  %v912 = vld [vmem:[%s5 + $0x1408] sm:$0xff]
  %v913 = vld [vmem:[%s5 + $0x1410] sm:$0xff]
  %v914 = vld [vmem:[%s5 + $0x1418] sm:$0xff]
  %v915 = vld [vmem:[%s5 + $0x1420] sm:$0xff]
  %v916 = vld [vmem:[%s5 + $0x1428] sm:$0xff]
  %v917 = vld [vmem:[%s5 + $0x1430] sm:$0xff]
  %v918 = vld [vmem:[%s5 + $0x1438] sm:$0xff]
  %v919 = vld [vmem:[%s5 + $0x1440] sm:$0xff]
  %v920 = vld [vmem:[%s5 + $0x1448] sm:$0xff]
  %v921 = vld [vmem:[%s5 + $0x1450] sm:$0xff]
  %v922 = vld [vmem:[%s5 + $0x1458] sm:$0xff]
  %v923 = vld [vmem:[%s5 + $0x1460] sm:$0xff]
  %v924 = vld [vmem:[%s5 + $0x1468] sm:$0xff]
  %v925 = vld [vmem:[%s5 + $0x1470] sm:$0xff]
  %v926 = vld [vmem:[%s5 + $0x1478] sm:$0xff]
  %v927 = vld [vmem:[%s5 + $0x1480] sm:$0xff]
  %v928 = vld [vmem:[%s5 + $0x1488] sm:$0xff]
  %v929 = vld [vmem:[%s5 + $0x1490] sm:$0xff]
  %v930 = vld [vmem:[%s5 + $0x1498] sm:$0xff]
  %v931 = vld [vmem:[%s5 + $0x14a0] sm:$0xff]
  %v932 = vld [vmem:[%s5 + $0x14a8] sm:$0xff]
  %v933 = vld [vmem:[%s5 + $0x14b0] sm:$0xff]
  %v934 = vld [vmem:[%s5 + $0x14b8] sm:$0xff]
  %v935 = vld [vmem:[%s5 + $0x14c0] sm:$0xff]
  %v936 = vld [vmem:[%s5 + $0x14c8] sm:$0xff]
  %v937 = vld [vmem:[%s5 + $0x14d0] sm:$0xff]
  %v938 = vld [vmem:[%s5 + $0x14d8] sm:$0xff]
  %v939 = vld [vmem:[%s5 + $0x14e0] sm:$0xff]
  %v940 = vld [vmem:[%s5 + $0x14e8] sm:$0xff]
  %v941 = vld [vmem:[%s5 + $0x14f0] sm:$0xff]
  %v942 = vld [vmem:[%s5 + $0x14f8] sm:$0xff]
  %v943 = vld [vmem:[%s5 + $0x1500] sm:$0xff]
  %v944 = vld [vmem:[%s5 + $0x1508] sm:$0xff]
  %v945 = vld [vmem:[%s5 + $0x1510] sm:$0xff]
  %v946 = vld [vmem:[%s5 + $0x1518] sm:$0xff]
  %v947 = vld [vmem:[%s5 + $0x1520] sm:$0xff]
  %v948 = vld [vmem:[%s5 + $0x1528] sm:$0xff]
  %v949 = vld [vmem:[%s5 + $0x1530] sm:$0xff]
  %v950 = vld [vmem:[%s5 + $0x1538] sm:$0xff]
  %v951 = vld [vmem:[%s5 + $0x1540] sm:$0xff]
  %v952 = vld [vmem:[%s5 + $0x1548] sm:$0xff]
  %v953 = vld [vmem:[%s5 + $0x1550] sm:$0xff]
  %v954 = vld [vmem:[%s5 + $0x1558] sm:$0xff]
  %v955 = vld [vmem:[%s5 + $0x1560] sm:$0xff]
  %v956 = vld [vmem:[%s5 + $0x1568] sm:$0xff]
  %v957 = vld [vmem:[%s5 + $0x1570] sm:$0xff]
  %v958 = vld [vmem:[%s5 + $0x1578] sm:$0xff]
  %v959 = vld [vmem:[%s5 + $0x1580] sm:$0xff]
  %v960 = vld [vmem:[%s5 + $0x1588] sm:$0xff]
  %v961 = vld [vmem:[%s5 + $0x1590] sm:$0xff]
  %v962 = vld [vmem:[%s5 + $0x1598] sm:$0xff]
  %v963 = vld [vmem:[%s5 + $0x15a0] sm:$0xff]
  %v964 = vld [vmem:[%s5 + $0x15a8] sm:$0xff]
  %v965 = vld [vmem:[%s5 + $0x15b0] sm:$0xff]
  %v966 = vld [vmem:[%s5 + $0x15b8] sm:$0xff]
  %v967 = vld [vmem:[%s5 + $0x15c0] sm:$0xff]
  %v968 = vld [vmem:[%s5 + $0x15c8] sm:$0xff]
  %v969 = vld [vmem:[%s5 + $0x15d0] sm:$0xff]
  %v970 = vld [vmem:[%s5 + $0x15d8] sm:$0xff]
  %v971 = vld [vmem:[%s5 + $0x15e0] sm:$0xff]
  %v972 = vld [vmem:[%s5 + $0x15e8] sm:$0xff]
  %v973 = vld [vmem:[%s5 + $0x15f0] sm:$0xff]
  %v974 = vld [vmem:[%s5 + $0x15f8] sm:$0xff]
  %v975 = vld [vmem:[%s5 + $0x1600] sm:$0xff]
  %v976 = vld [vmem:[%s5 + $0x1608] sm:$0xff]
  %v977 = vld [vmem:[%s5 + $0x1610] sm:$0xff]
  %v978 = vld [vmem:[%s5 + $0x1618] sm:$0xff]
  %v979 = vld [vmem:[%s5 + $0x1620] sm:$0xff]
  %v980 = vld [vmem:[%s5 + $0x1628] sm:$0xff]
  %v981 = vld [vmem:[%s5 + $0x1630] sm:$0xff]
  %v982 = vld [vmem:[%s5 + $0x1638] sm:$0xff]
  %v983 = vld [vmem:[%s5 + $0x1640] sm:$0xff]
  %v984 = vld [vmem:[%s5 + $0x1648] sm:$0xff]
  %v985 = vld [vmem:[%s5 + $0x1650] sm:$0xff]
  %v986 = vld [vmem:[%s5 + $0x1658] sm:$0xff]
  %v987 = vld [vmem:[%s5 + $0x1660] sm:$0xff]
  %v988 = vld [vmem:[%s5 + $0x1668] sm:$0xff]
  %v989 = vld [vmem:[%s5 + $0x1670] sm:$0xff]
  %v990 = vld [vmem:[%s5 + $0x1678] sm:$0xff]
  %v991 = vld [vmem:[%s5 + $0x1680] sm:$0xff]
  %v992 = vld [vmem:[%s5 + $0x1688] sm:$0xff]
  %v993 = vld [vmem:[%s5 + $0x1690] sm:$0xff]
  %v994 = vld [vmem:[%s5 + $0x1698] sm:$0xff]
  %v995 = vld [vmem:[%s5 + $0x16a0] sm:$0xff]
  %v996 = vld [vmem:[%s5 + $0x16a8] sm:$0xff]
  %v997 = vld [vmem:[%s5 + $0x16b0] sm:$0xff]
  %v998 = vld [vmem:[%s5 + $0x16b8] sm:$0xff]
  %v999 = vld [vmem:[%s5 + $0x16c0] sm:$0xff]
  %v1000 = vld [vmem:[%s5 + $0x16c8] sm:$0xff]
  %v1001 = vld [vmem:[%s5 + $0x16d0] sm:$0xff]
  %v1002 = vld [vmem:[%s5 + $0x16d8] sm:$0xff]
  %v1003 = vld [vmem:[%s5 + $0x16e0] sm:$0xff]
  %v1004 = vld [vmem:[%s5 + $0x16e8] sm:$0xff]
  %v1005 = vld [vmem:[%s5 + $0x16f0] sm:$0xff]
  %v1006 = vld [vmem:[%s5 + $0x16f8] sm:$0xff]
  %v1007 = vld [vmem:[%s5 + $0x1700] sm:$0xff]
  %v1008 = vld [vmem:[%s5 + $0x1708] sm:$0xff]
  %v1009 = vld [vmem:[%s5 + $0x1710] sm:$0xff]
  %v1010 = vld [vmem:[%s5 + $0x1718] sm:$0xff]
  %v1011 = vld [vmem:[%s5 + $0x1720] sm:$0xff]
  %v1012 = vld [vmem:[%s5 + $0x1728] sm:$0xff]
  %v1013 = vld [vmem:[%s5 + $0x1730] sm:$0xff]
  %v1014 = vld [vmem:[%s5 + $0x1738] sm:$0xff]
  %v1015 = vld [vmem:[%s5 + $0x1740] sm:$0xff]
  %v1016 = vld [vmem:[%s5 + $0x1748] sm:$0xff]
  %v1017 = vld [vmem:[%s5 + $0x1750] sm:$0xff]
  %v1018 = vld [vmem:[%s5 + $0x1758] sm:$0xff]
  %v1019 = vld [vmem:[%s5 + $0x1760] sm:$0xff]
  %v1020 = vld [vmem:[%s5 + $0x1768] sm:$0xff]
  %v1021 = vld [vmem:[%s5 + $0x1770] sm:$0xff]
  %v1022 = vld [vmem:[%s5 + $0x1778] sm:$0xff]
  %v1023 = vld [vmem:[%s5 + $0x1780] sm:$0xff]
  %v1024 = vld [vmem:[%s5 + $0x1788] sm:$0xff]
  %v1025 = vld [vmem:[%s5 + $0x1790] sm:$0xff]
  %v1026 = vld [vmem:[%s5 + $0x1798] sm:$0xff]
  %v1027 = vld [vmem:[%s5 + $0x17a0] sm:$0xff]
  %v1028 = vld [vmem:[%s5 + $0x17a8] sm:$0xff]
  %v1029 = vld [vmem:[%s5 + $0x17b0] sm:$0xff]
  %v1030 = vld [vmem:[%s5 + $0x17b8] sm:$0xff]
  %v1031 = vld [vmem:[%s5 + $0x17c0] sm:$0xff]
  %v1032 = vld [vmem:[%s5 + $0x17c8] sm:$0xff]
  %v1033 = vld [vmem:[%s5 + $0x17d0] sm:$0xff]
  %v1034 = vld [vmem:[%s5 + $0x17d8] sm:$0xff]
  %v1035 = vld [vmem:[%s5 + $0x17e0] sm:$0xff]
  %v1036 = vld [vmem:[%s5 + $0x17e8] sm:$0xff]
  %v1037 = vld [vmem:[%s5 + $0x17f0] sm:$0xff]
  %v1038 = vld [vmem:[%s5 + $0x17f8] sm:$0xff]
  %v1039 = vld [vmem:[%s6] sm:$0x1]
  %v1041 = vlaneseq
  %v1042 = vshrl.u32 %v1041, 7
  %v1043 = vsub.s32 0, %v1042
  %v1044 = vrot.slane %v1039, %v1043
  %1046 = vmatprep.subr.mxu0 0.0
  %1047 = vmatpush1.msra.mxu0 %v271
  %1048 = vmatprep.subr.mxu0 0.0
  %1049 = vmatpush1.msra.mxu0 %v272
  %1050 = vmatprep.subr.mxu0 0.0
  %1051 = vmatpush1.msra.mxu0 %v273
  %1052 = vmatprep.subr.mxu0 0.0
  %1053 = vmatpush1.msra.mxu0 %v274
  %1054 = vmatprep.subr.mxu0 0.0
  %1055 = vmatpush1.msra.mxu0 %v275
  %1056 = vmatprep.subr.mxu0 0.0
  %1057 = vmatpush1.msra.mxu0 %v276
  %1058 = vmatprep.subr.mxu0 0.0
  %1059 = vmatpush1.msra.mxu0 %v277
  %1060 = vmatprep.subr.mxu0 0.0
  %1061 = vmatpush1.msra.mxu0 %v278
  %1062 = vmatprep.subr.mxu0 0.0
  %1063 = vmatpush1.msra.mxu0 %v279
  %1064 = vmatprep.subr.mxu0 0.0
  %1065 = vmatpush1.msra.mxu0 %v280
  %1066 = vmatprep.subr.mxu0 0.0
  %1067 = vmatpush1.msra.mxu0 %v281
  %1068 = vmatprep.subr.mxu0 0.0
  %1069 = vmatpush1.msra.mxu0 %v282
  %1070 = vmatprep.subr.mxu0 0.0
  %1071 = vmatpush1.msra.mxu0 %v283
  %1072 = vmatprep.subr.mxu0 0.0
  %1073 = vmatpush1.msra.mxu0 %v284
  %1074 = vmatprep.subr.mxu0 0.0
  %1075 = vmatpush1.msra.mxu0 %v285
  %1076 = vmatprep.subr.mxu0 0.0
  %1077 = vmatpush1.msra.mxu0 %v286
  %1078 = vmatprep.subr.mxu0 0.0
  %1079 = vmatpush1.msra.mxu0 %v287
  %1080 = vmatprep.subr.mxu0 0.0
  %1081 = vmatpush1.msra.mxu0 %v288
  %1082 = vmatprep.subr.mxu0 0.0
  %1083 = vmatpush1.msra.mxu0 %v289
  %1084 = vmatprep.subr.mxu0 0.0
  %1085 = vmatpush1.msra.mxu0 %v290
  %1086 = vmatprep.subr.mxu0 0.0
  %1087 = vmatpush1.msra.mxu0 %v291
  %1088 = vmatprep.subr.mxu0 0.0
  %1089 = vmatpush1.msra.mxu0 %v292
  %1090 = vmatprep.subr.mxu0 0.0
  %1091 = vmatpush1.msra.mxu0 %v293
  %1092 = vmatprep.subr.mxu0 0.0
  %1093 = vmatpush1.msra.mxu0 %v294
  %1094 = vmatprep.subr.mxu0 0.0
  %1095 = vmatpush1.msra.mxu0 %v295
  %1096 = vmatprep.subr.mxu0 0.0
  %1097 = vmatpush1.msra.mxu0 %v296
  %1098 = vmatprep.subr.mxu0 0.0
  %1099 = vmatpush1.msra.mxu0 %v297
  %1100 = vmatprep.subr.mxu0 0.0
  %1101 = vmatpush1.msra.mxu0 %v298
  %1102 = vmatprep.subr.mxu0 0.0
  %1103 = vmatpush1.msra.mxu0 %v299
  %1104 = vmatprep.subr.mxu0 0.0
  %1105 = vmatpush1.msra.mxu0 %v300
  %1106 = vmatprep.subr.mxu0 0.0
  %1107 = vmatpush1.msra.mxu0 %v301
  %1108 = vmatprep.subr.mxu0 0.0
  %1109 = vmatpush1.msra.mxu0 %v302
  %1110 = vmatprep.mubr.f32.mxu0 %v224
  %1111 = vmatmul.mubr.f32.gmra.mrb[0].mxu0 %v223
  %v1112 = vpop.f32.mrb[0].mxu0
  %v1113 = vadd.f32 %v1044, %v1112
  %v1114 = vpop.f32.mrb[0].mxu0
  %1115 = vdwg.mxu0
  %1116 = vmatprep.subr.mxu0 0.0
  %1117 = vmatpush1.msra.mxu0 %v303
  %1118 = vmatprep.subr.mxu0 0.0
  %1119 = vmatpush1.msra.mxu0 %v304
  %1120 = vmatprep.subr.mxu0 0.0
  %1121 = vmatpush1.msra.mxu0 %v305
  %1122 = vmatprep.subr.mxu0 0.0
  %1123 = vmatpush1.msra.mxu0 %v306
  %1124 = vmatprep.subr.mxu0 0.0
  %1125 = vmatpush1.msra.mxu0 %v307
  %1126 = vmatprep.subr.mxu0 0.0
  %1127 = vmatpush1.msra.mxu0 %v308
  %1128 = vmatprep.subr.mxu0 0.0
  %1129 = vmatpush1.msra.mxu0 %v309
  %1130 = vmatprep.subr.mxu0 0.0
  %1131 = vmatpush1.msra.mxu0 %v310
  %1132 = vmatprep.subr.mxu0 0.0
  %1133 = vmatpush1.msra.mxu0 %v311
  %1134 = vmatprep.subr.mxu0 0.0
  %1135 = vmatpush1.msra.mxu0 %v312
  %1136 = vmatprep.subr.mxu0 0.0
  %1137 = vmatpush1.msra.mxu0 %v313
  %1138 = vmatprep.subr.mxu0 0.0
  %1139 = vmatpush1.msra.mxu0 %v314
  %1140 = vmatprep.subr.mxu0 0.0
  %1141 = vmatpush1.msra.mxu0 %v315
  %1142 = vmatprep.subr.mxu0 0.0
  %1143 = vmatpush1.msra.mxu0 %v316
  %1144 = vmatprep.subr.mxu0 0.0
  %1145 = vmatpush1.msra.mxu0 %v317
  %1146 = vmatprep.subr.mxu0 0.0
  %1147 = vmatpush1.msra.mxu0 %v318
  %1148 = vmatprep.subr.mxu0 0.0
  %1149 = vmatpush1.msra.mxu0 %v319
  %1150 = vmatprep.subr.mxu0 0.0
  %1151 = vmatpush1.msra.mxu0 %v320
  %1152 = vmatprep.subr.mxu0 0.0
  %1153 = vmatpush1.msra.mxu0 %v321
  %1154 = vmatprep.subr.mxu0 0.0
  %1155 = vmatpush1.msra.mxu0 %v322
  %1156 = vmatprep.subr.mxu0 0.0
  %1157 = vmatpush1.msra.mxu0 %v323
  %1158 = vmatprep.subr.mxu0 0.0
  %1159 = vmatpush1.msra.mxu0 %v324
  %1160 = vmatprep.subr.mxu0 0.0
  %1161 = vmatpush1.msra.mxu0 %v325
  %1162 = vmatprep.subr.mxu0 0.0
  %1163 = vmatpush1.msra.mxu0 %v326
  %1164 = vmatprep.subr.mxu0 0.0
  %1165 = vmatpush1.msra.mxu0 %v327
  %1166 = vmatprep.subr.mxu0 0.0
  %1167 = vmatpush1.msra.mxu0 %v328
  %1168 = vmatprep.subr.mxu0 0.0
  %1169 = vmatpush1.msra.mxu0 %v329
  %1170 = vmatprep.subr.mxu0 0.0
  %1171 = vmatpush1.msra.mxu0 %v330
  %1172 = vmatprep.subr.mxu0 0.0
  %1173 = vmatpush1.msra.mxu0 %v331
  %1174 = vmatprep.subr.mxu0 0.0
  %1175 = vmatpush1.msra.mxu0 %v332
  %1176 = vmatprep.subr.mxu0 0.0
  %1177 = vmatpush1.msra.mxu0 %v333
  %1178 = vmatprep.subr.mxu0 0.0
  %1179 = vmatpush1.msra.mxu0 %v334
  %1180 = vmatprep.mubr.f32.mxu0 %v226
  %1181 = vmatmul.mubr.f32.gmra.mrb[0].mxu0 %v225
  %v1182 = vpop.f32.mrb[0].mxu0
  %v1183 = vadd.f32 %v1113, %v1182
  %v1184 = vpop.f32.mrb[0].mxu0
  %1185 = vdwg.mxu0
  %1186 = vmatprep.subr.mxu0 0.0
  %1187 = vmatpush1.msra.mxu0 %v335
  %1188 = vmatprep.subr.mxu0 0.0
  %1189 = vmatpush1.msra.mxu0 %v336
  %1190 = vmatprep.subr.mxu0 0.0
  %1191 = vmatpush1.msra.mxu0 %v337
  %1192 = vmatprep.subr.mxu0 0.0
  %1193 = vmatpush1.msra.mxu0 %v338
  %1194 = vmatprep.subr.mxu0 0.0
  %1195 = vmatpush1.msra.mxu0 %v339
  %1196 = vmatprep.subr.mxu0 0.0
  %1197 = vmatpush1.msra.mxu0 %v340
  %1198 = vmatprep.subr.mxu0 0.0
  %1199 = vmatpush1.msra.mxu0 %v341
  %1200 = vmatprep.subr.mxu0 0.0
  %1201 = vmatpush1.msra.mxu0 %v342
  %1202 = vmatprep.subr.mxu0 0.0
  %1203 = vmatpush1.msra.mxu0 %v343
  %1204 = vmatprep.subr.mxu0 0.0
  %1205 = vmatpush1.msra.mxu0 %v344
  %1206 = vmatprep.subr.mxu0 0.0
  %1207 = vmatpush1.msra.mxu0 %v345
  %1208 = vmatprep.subr.mxu0 0.0
  %1209 = vmatpush1.msra.mxu0 %v346
  %1210 = vmatprep.subr.mxu0 0.0
  %1211 = vmatpush1.msra.mxu0 %v347
  %1212 = vmatprep.subr.mxu0 0.0
  %1213 = vmatpush1.msra.mxu0 %v348
  %1214 = vmatprep.subr.mxu0 0.0
  %1215 = vmatpush1.msra.mxu0 %v349
  %1216 = vmatprep.subr.mxu0 0.0
  %1217 = vmatpush1.msra.mxu0 %v350
  %1218 = vmatprep.subr.mxu0 0.0
  %1219 = vmatpush1.msra.mxu0 %v351
  %1220 = vmatprep.subr.mxu0 0.0
  %1221 = vmatpush1.msra.mxu0 %v352
  %1222 = vmatprep.subr.mxu0 0.0
  %1223 = vmatpush1.msra.mxu0 %v353
  %1224 = vmatprep.subr.mxu0 0.0
  %1225 = vmatpush1.msra.mxu0 %v354
  %1226 = vmatprep.subr.mxu0 0.0
  %1227 = vmatpush1.msra.mxu0 %v355
  %1228 = vmatprep.subr.mxu0 0.0
  %1229 = vmatpush1.msra.mxu0 %v356
  %1230 = vmatprep.subr.mxu0 0.0
  %1231 = vmatpush1.msra.mxu0 %v357
  %1232 = vmatprep.subr.mxu0 0.0
  %1233 = vmatpush1.msra.mxu0 %v358
  %1234 = vmatprep.subr.mxu0 0.0
  %1235 = vmatpush1.msra.mxu0 %v359
  %1236 = vmatprep.subr.mxu0 0.0
  %1237 = vmatpush1.msra.mxu0 %v360
  %1238 = vmatprep.subr.mxu0 0.0
  %1239 = vmatpush1.msra.mxu0 %v361
  %1240 = vmatprep.subr.mxu0 0.0
  %1241 = vmatpush1.msra.mxu0 %v362
  %1242 = vmatprep.subr.mxu0 0.0
  %1243 = vmatpush1.msra.mxu0 %v363
  %1244 = vmatprep.subr.mxu0 0.0
  %1245 = vmatpush1.msra.mxu0 %v364
  %1246 = vmatprep.subr.mxu0 0.0
  %1247 = vmatpush1.msra.mxu0 %v365
  %1248 = vmatprep.subr.mxu0 0.0
  %1249 = vmatpush1.msra.mxu0 %v366
  %1250 = vmatprep.mubr.f32.mxu0 %v228
  %1251 = vmatmul.mubr.f32.gmra.mrb[0].mxu0 %v227
  %v1252 = vpop.f32.mrb[0].mxu0
  %v1253 = vadd.f32 %v1183, %v1252
  %v1254 = vpop.f32.mrb[0].mxu0
  %1255 = vdwg.mxu0
  %1256 = vmatprep.subr.mxu0 0.0
  %1257 = vmatpush1.msra.mxu0 %v367
  %1258 = vmatprep.subr.mxu0 0.0
  %1259 = vmatpush1.msra.mxu0 %v368
  %1260 = vmatprep.subr.mxu0 0.0
  %1261 = vmatpush1.msra.mxu0 %v369
  %1262 = vmatprep.subr.mxu0 0.0
  %1263 = vmatpush1.msra.mxu0 %v370
  %1264 = vmatprep.subr.mxu0 0.0
  %1265 = vmatpush1.msra.mxu0 %v371
  %1266 = vmatprep.subr.mxu0 0.0
  %1267 = vmatpush1.msra.mxu0 %v372
  %1268 = vmatprep.subr.mxu0 0.0
  %1269 = vmatpush1.msra.mxu0 %v373
  %1270 = vmatprep.subr.mxu0 0.0
  %1271 = vmatpush1.msra.mxu0 %v374
  %1272 = vmatprep.subr.mxu0 0.0
  %1273 = vmatpush1.msra.mxu0 %v375
  %1274 = vmatprep.subr.mxu0 0.0
  %1275 = vmatpush1.msra.mxu0 %v376
  %1276 = vmatprep.subr.mxu0 0.0
  %1277 = vmatpush1.msra.mxu0 %v377
  %1278 = vmatprep.subr.mxu0 0.0
  %1279 = vmatpush1.msra.mxu0 %v378
  %1280 = vmatprep.subr.mxu0 0.0
  %1281 = vmatpush1.msra.mxu0 %v379
  %1282 = vmatprep.subr.mxu0 0.0
  %1283 = vmatpush1.msra.mxu0 %v380
  %1284 = vmatprep.subr.mxu0 0.0
  %1285 = vmatpush1.msra.mxu0 %v381
  %1286 = vmatprep.subr.mxu0 0.0
  %1287 = vmatpush1.msra.mxu0 %v382
  %1288 = vmatprep.subr.mxu0 0.0
  %1289 = vmatpush1.msra.mxu0 %v383
  %1290 = vmatprep.subr.mxu0 0.0
  %1291 = vmatpush1.msra.mxu0 %v384
  %1292 = vmatprep.subr.mxu0 0.0
  %1293 = vmatpush1.msra.mxu0 %v385
  %1294 = vmatprep.subr.mxu0 0.0
  %1295 = vmatpush1.msra.mxu0 %v386
  %1296 = vmatprep.subr.mxu0 0.0
  %1297 = vmatpush1.msra.mxu0 %v387
  %1298 = vmatprep.subr.mxu0 0.0
  %1299 = vmatpush1.msra.mxu0 %v388
  %1300 = vmatprep.subr.mxu0 0.0
  %1301 = vmatpush1.msra.mxu0 %v389
  %1302 = vmatprep.subr.mxu0 0.0
  %1303 = vmatpush1.msra.mxu0 %v390
  %1304 = vmatprep.subr.mxu0 0.0
  %1305 = vmatpush1.msra.mxu0 %v391
  %1306 = vmatprep.subr.mxu0 0.0
  %1307 = vmatpush1.msra.mxu0 %v392
  %1308 = vmatprep.subr.mxu0 0.0
  %1309 = vmatpush1.msra.mxu0 %v393
  %1310 = vmatprep.subr.mxu0 0.0
  %1311 = vmatpush1.msra.mxu0 %v394
  %1312 = vmatprep.subr.mxu0 0.0
  %1313 = vmatpush1.msra.mxu0 %v395
  %1314 = vmatprep.subr.mxu0 0.0
  %1315 = vmatpush1.msra.mxu0 %v396
  %1316 = vmatprep.subr.mxu0 0.0
  %1317 = vmatpush1.msra.mxu0 %v397
  %1318 = vmatprep.subr.mxu0 0.0
  %1319 = vmatpush1.msra.mxu0 %v398
  %1320 = vmatprep.mubr.f32.mxu0 %v230
  %1321 = vmatmul.mubr.f32.gmra.mrb[0].mxu0 %v229
  %v1322 = vpop.f32.mrb[0].mxu0
  %v1323 = vadd.f32 %v1253, %v1322
  %v1324 = vpop.f32.mrb[0].mxu0
  %1325 = vdwg.mxu0
  %1326 = vmatprep.subr.mxu0 0.0
  %1327 = vmatpush1.msra.mxu0 %v399
  %1328 = vmatprep.subr.mxu0 0.0
  %1329 = vmatpush1.msra.mxu0 %v400
  %1330 = vmatprep.subr.mxu0 0.0
  %1331 = vmatpush1.msra.mxu0 %v401
  %1332 = vmatprep.subr.mxu0 0.0
  %1333 = vmatpush1.msra.mxu0 %v402
  %1334 = vmatprep.subr.mxu0 0.0
  %1335 = vmatpush1.msra.mxu0 %v403
  %1336 = vmatprep.subr.mxu0 0.0
  %1337 = vmatpush1.msra.mxu0 %v404
  %1338 = vmatprep.subr.mxu0 0.0
  %1339 = vmatpush1.msra.mxu0 %v405
  %1340 = vmatprep.subr.mxu0 0.0
  %1341 = vmatpush1.msra.mxu0 %v406
  %1342 = vmatprep.subr.mxu0 0.0
  %1343 = vmatpush1.msra.mxu0 %v407
  %1344 = vmatprep.subr.mxu0 0.0
  %1345 = vmatpush1.msra.mxu0 %v408
  %1346 = vmatprep.subr.mxu0 0.0
  %1347 = vmatpush1.msra.mxu0 %v409
  %1348 = vmatprep.subr.mxu0 0.0
  %1349 = vmatpush1.msra.mxu0 %v410
  %1350 = vmatprep.subr.mxu0 0.0
  %1351 = vmatpush1.msra.mxu0 %v411
  %1352 = vmatprep.subr.mxu0 0.0
  %1353 = vmatpush1.msra.mxu0 %v412
  %1354 = vmatprep.subr.mxu0 0.0
  %1355 = vmatpush1.msra.mxu0 %v413
  %1356 = vmatprep.subr.mxu0 0.0
  %1357 = vmatpush1.msra.mxu0 %v414
  %1358 = vmatprep.subr.mxu0 0.0
  %1359 = vmatpush1.msra.mxu0 %v415
  %1360 = vmatprep.subr.mxu0 0.0
  %1361 = vmatpush1.msra.mxu0 %v416
  %1362 = vmatprep.subr.mxu0 0.0
  %1363 = vmatpush1.msra.mxu0 %v417
  %1364 = vmatprep.subr.mxu0 0.0
  %1365 = vmatpush1.msra.mxu0 %v418
  %1366 = vmatprep.subr.mxu0 0.0
  %1367 = vmatpush1.msra.mxu0 %v419
  %1368 = vmatprep.subr.mxu0 0.0
  %1369 = vmatpush1.msra.mxu0 %v420
  %1370 = vmatprep.subr.mxu0 0.0
  %1371 = vmatpush1.msra.mxu0 %v421
  %1372 = vmatprep.subr.mxu0 0.0
  %1373 = vmatpush1.msra.mxu0 %v422
  %1374 = vmatprep.subr.mxu0 0.0
  %1375 = vmatpush1.msra.mxu0 %v423
  %1376 = vmatprep.subr.mxu0 0.0
  %1377 = vmatpush1.msra.mxu0 %v424
  %1378 = vmatprep.subr.mxu0 0.0
  %1379 = vmatpush1.msra.mxu0 %v425
  %1380 = vmatprep.subr.mxu0 0.0
  %1381 = vmatpush1.msra.mxu0 %v426
  %1382 = vmatprep.subr.mxu0 0.0
  %1383 = vmatpush1.msra.mxu0 %v427
  %1384 = vmatprep.subr.mxu0 0.0
  %1385 = vmatpush1.msra.mxu0 %v428
  %1386 = vmatprep.subr.mxu0 0.0
  %1387 = vmatpush1.msra.mxu0 %v429
  %1388 = vmatprep.subr.mxu0 0.0
  %1389 = vmatpush1.msra.mxu0 %v430
  %1390 = vmatprep.mubr.f32.mxu0 %v232
  %1391 = vmatmul.mubr.f32.gmra.mrb[0].mxu0 %v231
  %v1392 = vpop.f32.mrb[0].mxu0
  %v1393 = vadd.f32 %v1323, %v1392
  %v1394 = vpop.f32.mrb[0].mxu0
  %1395 = vdwg.mxu0
  %1396 = vmatprep.subr.mxu0 0.0
  %1397 = vmatpush1.msra.mxu0 %v431
  %1398 = vmatprep.subr.mxu0 0.0
  %1399 = vmatpush1.msra.mxu0 %v432
  %1400 = vmatprep.subr.mxu0 0.0
  %1401 = vmatpush1.msra.mxu0 %v433
  %1402 = vmatprep.subr.mxu0 0.0
  %1403 = vmatpush1.msra.mxu0 %v434
  %1404 = vmatprep.subr.mxu0 0.0
  %1405 = vmatpush1.msra.mxu0 %v435
  %1406 = vmatprep.subr.mxu0 0.0
  %1407 = vmatpush1.msra.mxu0 %v436
  %1408 = vmatprep.subr.mxu0 0.0
  %1409 = vmatpush1.msra.mxu0 %v437
  %1410 = vmatprep.subr.mxu0 0.0
  %1411 = vmatpush1.msra.mxu0 %v438
  %1412 = vmatprep.subr.mxu0 0.0
  %1413 = vmatpush1.msra.mxu0 %v439
  %1414 = vmatprep.subr.mxu0 0.0
  %1415 = vmatpush1.msra.mxu0 %v440
  %1416 = vmatprep.subr.mxu0 0.0
  %1417 = vmatpush1.msra.mxu0 %v441
  %1418 = vmatprep.subr.mxu0 0.0
  %1419 = vmatpush1.msra.mxu0 %v442
  %1420 = vmatprep.subr.mxu0 0.0
  %1421 = vmatpush1.msra.mxu0 %v443
  %1422 = vmatprep.subr.mxu0 0.0
  %1423 = vmatpush1.msra.mxu0 %v444
  %1424 = vmatprep.subr.mxu0 0.0
  %1425 = vmatpush1.msra.mxu0 %v445
  %1426 = vmatprep.subr.mxu0 0.0
  %1427 = vmatpush1.msra.mxu0 %v446
  %1428 = vmatprep.subr.mxu0 0.0
  %1429 = vmatpush1.msra.mxu0 %v447
  %1430 = vmatprep.subr.mxu0 0.0
  %1431 = vmatpush1.msra.mxu0 %v448
  %1432 = vmatprep.subr.mxu0 0.0
  %1433 = vmatpush1.msra.mxu0 %v449
  %1434 = vmatprep.subr.mxu0 0.0
  %1435 = vmatpush1.msra.mxu0 %v450
  %1436 = vmatprep.subr.mxu0 0.0
  %1437 = vmatpush1.msra.mxu0 %v451
  %1438 = vmatprep.subr.mxu0 0.0
  %1439 = vmatpush1.msra.mxu0 %v452
  %1440 = vmatprep.subr.mxu0 0.0
  %1441 = vmatpush1.msra.mxu0 %v453
  %1442 = vmatprep.subr.mxu0 0.0
  %1443 = vmatpush1.msra.mxu0 %v454
  %1444 = vmatprep.subr.mxu0 0.0
  %1445 = vmatpush1.msra.mxu0 %v455
  %1446 = vmatprep.subr.mxu0 0.0
  %1447 = vmatpush1.msra.mxu0 %v456
  %1448 = vmatprep.subr.mxu0 0.0
  %1449 = vmatpush1.msra.mxu0 %v457
  %1450 = vmatprep.subr.mxu0 0.0
  %1451 = vmatpush1.msra.mxu0 %v458
  %1452 = vmatprep.subr.mxu0 0.0
  %1453 = vmatpush1.msra.mxu0 %v459
  %1454 = vmatprep.subr.mxu0 0.0
  %1455 = vmatpush1.msra.mxu0 %v460
  %1456 = vmatprep.subr.mxu0 0.0
  %1457 = vmatpush1.msra.mxu0 %v461
  %1458 = vmatprep.subr.mxu0 0.0
  %1459 = vmatpush1.msra.mxu0 %v462
  %1460 = vmatprep.mubr.f32.mxu0 %v234
  %1461 = vmatmul.mubr.f32.gmra.mrb[0].mxu0 %v233
  %v1462 = vpop.f32.mrb[0].mxu0
  %v1463 = vadd.f32 %v1393, %v1462
  %v1464 = vpop.f32.mrb[0].mxu0
  %1465 = vdwg.mxu0
  %1466 = vmatprep.subr.mxu0 0.0
  %1467 = vmatpush1.msra.mxu0 %v463
  %1468 = vmatprep.subr.mxu0 0.0
  %1469 = vmatpush1.msra.mxu0 %v464
  %1470 = vmatprep.subr.mxu0 0.0
  %1471 = vmatpush1.msra.mxu0 %v465
  %1472 = vmatprep.subr.mxu0 0.0
  %1473 = vmatpush1.msra.mxu0 %v466
  %1474 = vmatprep.subr.mxu0 0.0
  %1475 = vmatpush1.msra.mxu0 %v467
  %1476 = vmatprep.subr.mxu0 0.0
  %1477 = vmatpush1.msra.mxu0 %v468
  %1478 = vmatprep.subr.mxu0 0.0
  %1479 = vmatpush1.msra.mxu0 %v469
  %1480 = vmatprep.subr.mxu0 0.0
  %1481 = vmatpush1.msra.mxu0 %v470
  %1482 = vmatprep.subr.mxu0 0.0
  %1483 = vmatpush1.msra.mxu0 %v471
  %1484 = vmatprep.subr.mxu0 0.0
  %1485 = vmatpush1.msra.mxu0 %v472
  %1486 = vmatprep.subr.mxu0 0.0
  %1487 = vmatpush1.msra.mxu0 %v473
  %1488 = vmatprep.subr.mxu0 0.0
  %1489 = vmatpush1.msra.mxu0 %v474
  %1490 = vmatprep.subr.mxu0 0.0
  %1491 = vmatpush1.msra.mxu0 %v475
  %1492 = vmatprep.subr.mxu0 0.0
  %1493 = vmatpush1.msra.mxu0 %v476
  %1494 = vmatprep.subr.mxu0 0.0
  %1495 = vmatpush1.msra.mxu0 %v477
  %1496 = vmatprep.subr.mxu0 0.0
  %1497 = vmatpush1.msra.mxu0 %v478
  %1498 = vmatprep.subr.mxu0 0.0
  %1499 = vmatpush1.msra.mxu0 %v479
  %1500 = vmatprep.subr.mxu0 0.0
  %1501 = vmatpush1.msra.mxu0 %v480
  %1502 = vmatprep.subr.mxu0 0.0
  %1503 = vmatpush1.msra.mxu0 %v481
  %1504 = vmatprep.subr.mxu0 0.0
  %1505 = vmatpush1.msra.mxu0 %v482
  %1506 = vmatprep.subr.mxu0 0.0
  %1507 = vmatpush1.msra.mxu0 %v483
  %1508 = vmatprep.subr.mxu0 0.0
  %1509 = vmatpush1.msra.mxu0 %v484
  %1510 = vmatprep.subr.mxu0 0.0
  %1511 = vmatpush1.msra.mxu0 %v485
  %1512 = vmatprep.subr.mxu0 0.0
  %1513 = vmatpush1.msra.mxu0 %v486
  %1514 = vmatprep.subr.mxu0 0.0
  %1515 = vmatpush1.msra.mxu0 %v487
  %1516 = vmatprep.subr.mxu0 0.0
  %1517 = vmatpush1.msra.mxu0 %v488
  %1518 = vmatprep.subr.mxu0 0.0
  %1519 = vmatpush1.msra.mxu0 %v489
  %1520 = vmatprep.subr.mxu0 0.0
  %1521 = vmatpush1.msra.mxu0 %v490
  %1522 = vmatprep.subr.mxu0 0.0
  %1523 = vmatpush1.msra.mxu0 %v491
  %1524 = vmatprep.subr.mxu0 0.0
  %1525 = vmatpush1.msra.mxu0 %v492
  %1526 = vmatprep.subr.mxu0 0.0
  %1527 = vmatpush1.msra.mxu0 %v493
  %1528 = vmatprep.subr.mxu0 0.0
  %1529 = vmatpush1.msra.mxu0 %v494
  %1530 = vmatprep.mubr.f32.mxu0 %v236
  %1531 = vmatmul.mubr.f32.gmra.mrb[0].mxu0 %v235
  %v1532 = vpop.f32.mrb[0].mxu0
  %v1533 = vadd.f32 %v1463, %v1532
  %v1534 = vpop.f32.mrb[0].mxu0
  %1535 = vdwg.mxu0
  %1536 = vmatprep.subr.mxu0 0.0
  %1537 = vmatpush1.msra.mxu0 %v495
  %1538 = vmatprep.subr.mxu0 0.0
  %1539 = vmatpush1.msra.mxu0 %v496
  %1540 = vmatprep.subr.mxu0 0.0
  %1541 = vmatpush1.msra.mxu0 %v497
  %1542 = vmatprep.subr.mxu0 0.0
  %1543 = vmatpush1.msra.mxu0 %v498
  %1544 = vmatprep.subr.mxu0 0.0
  %1545 = vmatpush1.msra.mxu0 %v499
  %1546 = vmatprep.subr.mxu0 0.0
  %1547 = vmatpush1.msra.mxu0 %v500
  %1548 = vmatprep.subr.mxu0 0.0
  %1549 = vmatpush1.msra.mxu0 %v501
  %1550 = vmatprep.subr.mxu0 0.0
  %1551 = vmatpush1.msra.mxu0 %v502
  %1552 = vmatprep.subr.mxu0 0.0
  %1553 = vmatpush1.msra.mxu0 %v503
  %1554 = vmatprep.subr.mxu0 0.0
  %1555 = vmatpush1.msra.mxu0 %v504
  %1556 = vmatprep.subr.mxu0 0.0
  %1557 = vmatpush1.msra.mxu0 %v505
  %1558 = vmatprep.subr.mxu0 0.0
  %1559 = vmatpush1.msra.mxu0 %v506
  %1560 = vmatprep.subr.mxu0 0.0
  %1561 = vmatpush1.msra.mxu0 %v507
  %1562 = vmatprep.subr.mxu0 0.0
  %1563 = vmatpush1.msra.mxu0 %v508
  %1564 = vmatprep.subr.mxu0 0.0
  %1565 = vmatpush1.msra.mxu0 %v509
  %1566 = vmatprep.subr.mxu0 0.0
  %1567 = vmatpush1.msra.mxu0 %v510
  %1568 = vmatprep.subr.mxu0 0.0
  %1569 = vmatpush1.msra.mxu0 %v511
  %1570 = vmatprep.subr.mxu0 0.0
  %1571 = vmatpush1.msra.mxu0 %v512
  %1572 = vmatprep.subr.mxu0 0.0
  %1573 = vmatpush1.msra.mxu0 %v513
  %1574 = vmatprep.subr.mxu0 0.0
  %1575 = vmatpush1.msra.mxu0 %v514
  %1576 = vmatprep.subr.mxu0 0.0
  %1577 = vmatpush1.msra.mxu0 %v515
  %1578 = vmatprep.subr.mxu0 0.0
  %1579 = vmatpush1.msra.mxu0 %v516
  %1580 = vmatprep.subr.mxu0 0.0
  %1581 = vmatpush1.msra.mxu0 %v517
  %1582 = vmatprep.subr.mxu0 0.0
  %1583 = vmatpush1.msra.mxu0 %v518
  %1584 = vmatprep.subr.mxu0 0.0
  %1585 = vmatpush1.msra.mxu0 %v519
  %1586 = vmatprep.subr.mxu0 0.0
  %1587 = vmatpush1.msra.mxu0 %v520
  %1588 = vmatprep.subr.mxu0 0.0
  %1589 = vmatpush1.msra.mxu0 %v521
  %1590 = vmatprep.subr.mxu0 0.0
  %1591 = vmatpush1.msra.mxu0 %v522
  %1592 = vmatprep.subr.mxu0 0.0
  %1593 = vmatpush1.msra.mxu0 %v523
  %1594 = vmatprep.subr.mxu0 0.0
  %1595 = vmatpush1.msra.mxu0 %v524
  %1596 = vmatprep.subr.mxu0 0.0
  %1597 = vmatpush1.msra.mxu0 %v525
  %1598 = vmatprep.subr.mxu0 0.0
  %1599 = vmatpush1.msra.mxu0 %v526
  %1600 = vmatprep.mubr.f32.mxu0 %v238
  %1601 = vmatmul.mubr.f32.gmra.mrb[0].mxu0 %v237
  %v1602 = vpop.f32.mrb[0].mxu0
  %v1603 = vadd.f32 %v1533, %v1602
  %v1604 = vpop.f32.mrb[0].mxu0
  %1605 = vdwg.mxu0
  %1606 = vmatprep.subr.mxu0 0.0
  %1607 = vmatpush1.msra.mxu0 %v527
  %1608 = vmatprep.subr.mxu0 0.0
  %1609 = vmatpush1.msra.mxu0 %v528
  %1610 = vmatprep.subr.mxu0 0.0
  %1611 = vmatpush1.msra.mxu0 %v529
  %1612 = vmatprep.subr.mxu0 0.0
  %1613 = vmatpush1.msra.mxu0 %v530
  %1614 = vmatprep.subr.mxu0 0.0
  %1615 = vmatpush1.msra.mxu0 %v531
  %1616 = vmatprep.subr.mxu0 0.0
  %1617 = vmatpush1.msra.mxu0 %v532
  %1618 = vmatprep.subr.mxu0 0.0
  %1619 = vmatpush1.msra.mxu0 %v533
  %1620 = vmatprep.subr.mxu0 0.0
  %1621 = vmatpush1.msra.mxu0 %v534
  %1622 = vmatprep.subr.mxu0 0.0
  %1623 = vmatpush1.msra.mxu0 %v535
  %1624 = vmatprep.subr.mxu0 0.0
  %1625 = vmatpush1.msra.mxu0 %v536
  %1626 = vmatprep.subr.mxu0 0.0
  %1627 = vmatpush1.msra.mxu0 %v537
  %1628 = vmatprep.subr.mxu0 0.0
  %1629 = vmatpush1.msra.mxu0 %v538
  %1630 = vmatprep.subr.mxu0 0.0
  %1631 = vmatpush1.msra.mxu0 %v539
  %1632 = vmatprep.subr.mxu0 0.0
  %1633 = vmatpush1.msra.mxu0 %v540
  %1634 = vmatprep.subr.mxu0 0.0
  %1635 = vmatpush1.msra.mxu0 %v541
  %1636 = vmatprep.subr.mxu0 0.0
  %1637 = vmatpush1.msra.mxu0 %v542
  %1638 = vmatprep.subr.mxu0 0.0
  %1639 = vmatpush1.msra.mxu0 %v543
  %1640 = vmatprep.subr.mxu0 0.0
  %1641 = vmatpush1.msra.mxu0 %v544
  %1642 = vmatprep.subr.mxu0 0.0
  %1643 = vmatpush1.msra.mxu0 %v545
  %1644 = vmatprep.subr.mxu0 0.0
  %1645 = vmatpush1.msra.mxu0 %v546
  %1646 = vmatprep.subr.mxu0 0.0
  %1647 = vmatpush1.msra.mxu0 %v547
  %1648 = vmatprep.subr.mxu0 0.0
  %1649 = vmatpush1.msra.mxu0 %v548
  %1650 = vmatprep.subr.mxu0 0.0
  %1651 = vmatpush1.msra.mxu0 %v549
  %1652 = vmatprep.subr.mxu0 0.0
  %1653 = vmatpush1.msra.mxu0 %v550
  %1654 = vmatprep.subr.mxu0 0.0
  %1655 = vmatpush1.msra.mxu0 %v551
  %1656 = vmatprep.subr.mxu0 0.0
  %1657 = vmatpush1.msra.mxu0 %v552
  %1658 = vmatprep.subr.mxu0 0.0
  %1659 = vmatpush1.msra.mxu0 %v553
  %1660 = vmatprep.subr.mxu0 0.0
  %1661 = vmatpush1.msra.mxu0 %v554
  %1662 = vmatprep.subr.mxu0 0.0
  %1663 = vmatpush1.msra.mxu0 %v555
  %1664 = vmatprep.subr.mxu0 0.0
  %1665 = vmatpush1.msra.mxu0 %v556
  %1666 = vmatprep.subr.mxu0 0.0
  %1667 = vmatpush1.msra.mxu0 %v557
  %1668 = vmatprep.subr.mxu0 0.0
  %1669 = vmatpush1.msra.mxu0 %v558
  %1670 = vmatprep.mubr.f32.mxu0 %v240
  %1671 = vmatmul.mubr.f32.gmra.mrb[0].mxu0 %v239
  %v1672 = vpop.f32.mrb[0].mxu0
  %v1673 = vadd.f32 %v1603, %v1672
  %v1674 = vpop.f32.mrb[0].mxu0
  %1675 = vdwg.mxu0
  %1676 = vmatprep.subr.mxu0 0.0
  %1677 = vmatpush1.msra.mxu0 %v559
  %1678 = vmatprep.subr.mxu0 0.0
  %1679 = vmatpush1.msra.mxu0 %v560
  %1680 = vmatprep.subr.mxu0 0.0
  %1681 = vmatpush1.msra.mxu0 %v561
  %1682 = vmatprep.subr.mxu0 0.0
  %1683 = vmatpush1.msra.mxu0 %v562
  %1684 = vmatprep.subr.mxu0 0.0
  %1685 = vmatpush1.msra.mxu0 %v563
  %1686 = vmatprep.subr.mxu0 0.0
  %1687 = vmatpush1.msra.mxu0 %v564
  %1688 = vmatprep.subr.mxu0 0.0
  %1689 = vmatpush1.msra.mxu0 %v565
  %1690 = vmatprep.subr.mxu0 0.0
  %1691 = vmatpush1.msra.mxu0 %v566
  %1692 = vmatprep.subr.mxu0 0.0
  %1693 = vmatpush1.msra.mxu0 %v567
  %1694 = vmatprep.subr.mxu0 0.0
  %1695 = vmatpush1.msra.mxu0 %v568
  %1696 = vmatprep.subr.mxu0 0.0
  %1697 = vmatpush1.msra.mxu0 %v569
  %1698 = vmatprep.subr.mxu0 0.0
  %1699 = vmatpush1.msra.mxu0 %v570
  %1700 = vmatprep.subr.mxu0 0.0
  %1701 = vmatpush1.msra.mxu0 %v571
  %1702 = vmatprep.subr.mxu0 0.0
  %1703 = vmatpush1.msra.mxu0 %v572
  %1704 = vmatprep.subr.mxu0 0.0
  %1705 = vmatpush1.msra.mxu0 %v573
  %1706 = vmatprep.subr.mxu0 0.0
  %1707 = vmatpush1.msra.mxu0 %v574
  %1708 = vmatprep.subr.mxu0 0.0
  %1709 = vmatpush1.msra.mxu0 %v575
  %1710 = vmatprep.subr.mxu0 0.0
  %1711 = vmatpush1.msra.mxu0 %v576
  %1712 = vmatprep.subr.mxu0 0.0
  %1713 = vmatpush1.msra.mxu0 %v577
  %1714 = vmatprep.subr.mxu0 0.0
  %1715 = vmatpush1.msra.mxu0 %v578
  %1716 = vmatprep.subr.mxu0 0.0
  %1717 = vmatpush1.msra.mxu0 %v579
  %1718 = vmatprep.subr.mxu0 0.0
  %1719 = vmatpush1.msra.mxu0 %v580
  %1720 = vmatprep.subr.mxu0 0.0
  %1721 = vmatpush1.msra.mxu0 %v581
  %1722 = vmatprep.subr.mxu0 0.0
  %1723 = vmatpush1.msra.mxu0 %v582
  %1724 = vmatprep.subr.mxu0 0.0
  %1725 = vmatpush1.msra.mxu0 %v583
  %1726 = vmatprep.subr.mxu0 0.0
  %1727 = vmatpush1.msra.mxu0 %v584
  %1728 = vmatprep.subr.mxu0 0.0
  %1729 = vmatpush1.msra.mxu0 %v585
  %1730 = vmatprep.subr.mxu0 0.0
  %1731 = vmatpush1.msra.mxu0 %v586
  %1732 = vmatprep.subr.mxu0 0.0
  %1733 = vmatpush1.msra.mxu0 %v587
  %1734 = vmatprep.subr.mxu0 0.0
  %1735 = vmatpush1.msra.mxu0 %v588
  %1736 = vmatprep.subr.mxu0 0.0
  %1737 = vmatpush1.msra.mxu0 %v589
  %1738 = vmatprep.subr.mxu0 0.0
  %1739 = vmatpush1.msra.mxu0 %v590
  %1740 = vmatprep.mubr.f32.mxu0 %v242
  %1741 = vmatmul.mubr.f32.gmra.mrb[0].mxu0 %v241
  %v1742 = vpop.f32.mrb[0].mxu0
  %v1743 = vadd.f32 %v1673, %v1742
  %v1744 = vpop.f32.mrb[0].mxu0
  %1745 = vdwg.mxu0
  %1746 = vmatprep.subr.mxu0 0.0
  %1747 = vmatpush1.msra.mxu0 %v591
  %1748 = vmatprep.subr.mxu0 0.0
  %1749 = vmatpush1.msra.mxu0 %v592
  %1750 = vmatprep.subr.mxu0 0.0
  %1751 = vmatpush1.msra.mxu0 %v593
  %1752 = vmatprep.subr.mxu0 0.0
  %1753 = vmatpush1.msra.mxu0 %v594
  %1754 = vmatprep.subr.mxu0 0.0
  %1755 = vmatpush1.msra.mxu0 %v595
  %1756 = vmatprep.subr.mxu0 0.0
  %1757 = vmatpush1.msra.mxu0 %v596
  %1758 = vmatprep.subr.mxu0 0.0
  %1759 = vmatpush1.msra.mxu0 %v597
  %1760 = vmatprep.subr.mxu0 0.0
  %1761 = vmatpush1.msra.mxu0 %v598
  %1762 = vmatprep.subr.mxu0 0.0
  %1763 = vmatpush1.msra.mxu0 %v599
  %1764 = vmatprep.subr.mxu0 0.0
  %1765 = vmatpush1.msra.mxu0 %v600
  %1766 = vmatprep.subr.mxu0 0.0
  %1767 = vmatpush1.msra.mxu0 %v601
  %1768 = vmatprep.subr.mxu0 0.0
  %1769 = vmatpush1.msra.mxu0 %v602
  %1770 = vmatprep.subr.mxu0 0.0
  %1771 = vmatpush1.msra.mxu0 %v603
  %1772 = vmatprep.subr.mxu0 0.0
  %1773 = vmatpush1.msra.mxu0 %v604
  %1774 = vmatprep.subr.mxu0 0.0
  %1775 = vmatpush1.msra.mxu0 %v605
  %1776 = vmatprep.subr.mxu0 0.0
  %1777 = vmatpush1.msra.mxu0 %v606
  %1778 = vmatprep.subr.mxu0 0.0
  %1779 = vmatpush1.msra.mxu0 %v607
  %1780 = vmatprep.subr.mxu0 0.0
  %1781 = vmatpush1.msra.mxu0 %v608
  %1782 = vmatprep.subr.mxu0 0.0
  %1783 = vmatpush1.msra.mxu0 %v609
  %1784 = vmatprep.subr.mxu0 0.0
  %1785 = vmatpush1.msra.mxu0 %v610
  %1786 = vmatprep.subr.mxu0 0.0
  %1787 = vmatpush1.msra.mxu0 %v611
  %1788 = vmatprep.subr.mxu0 0.0
  %1789 = vmatpush1.msra.mxu0 %v612
  %1790 = vmatprep.subr.mxu0 0.0
  %1791 = vmatpush1.msra.mxu0 %v613
  %1792 = vmatprep.subr.mxu0 0.0
  %1793 = vmatpush1.msra.mxu0 %v614
  %1794 = vmatprep.subr.mxu0 0.0
  %1795 = vmatpush1.msra.mxu0 %v615
  %1796 = vmatprep.subr.mxu0 0.0
  %1797 = vmatpush1.msra.mxu0 %v616
  %1798 = vmatprep.subr.mxu0 0.0
  %1799 = vmatpush1.msra.mxu0 %v617
  %1800 = vmatprep.subr.mxu0 0.0
  %1801 = vmatpush1.msra.mxu0 %v618
  %1802 = vmatprep.subr.mxu0 0.0
  %1803 = vmatpush1.msra.mxu0 %v619
  %1804 = vmatprep.subr.mxu0 0.0
  %1805 = vmatpush1.msra.mxu0 %v620
  %1806 = vmatprep.subr.mxu0 0.0
  %1807 = vmatpush1.msra.mxu0 %v621
  %1808 = vmatprep.subr.mxu0 0.0
  %1809 = vmatpush1.msra.mxu0 %v622
  %1810 = vmatprep.mubr.f32.mxu0 %v244
  %1811 = vmatmul.mubr.f32.gmra.mrb[0].mxu0 %v243
  %v1812 = vpop.f32.mrb[0].mxu0
  %v1813 = vadd.f32 %v1743, %v1812
  %v1814 = vpop.f32.mrb[0].mxu0
  %1815 = vdwg.mxu0
  %1816 = vmatprep.subr.mxu0 0.0
  %1817 = vmatpush1.msra.mxu0 %v623
  %1818 = vmatprep.subr.mxu0 0.0
  %1819 = vmatpush1.msra.mxu0 %v624
  %1820 = vmatprep.subr.mxu0 0.0
  %1821 = vmatpush1.msra.mxu0 %v625
  %1822 = vmatprep.subr.mxu0 0.0
  %1823 = vmatpush1.msra.mxu0 %v626
  %1824 = vmatprep.subr.mxu0 0.0
  %1825 = vmatpush1.msra.mxu0 %v627
  %1826 = vmatprep.subr.mxu0 0.0
  %1827 = vmatpush1.msra.mxu0 %v628
  %1828 = vmatprep.subr.mxu0 0.0
  %1829 = vmatpush1.msra.mxu0 %v629
  %1830 = vmatprep.subr.mxu0 0.0
  %1831 = vmatpush1.msra.mxu0 %v630
  %1832 = vmatprep.subr.mxu0 0.0
  %1833 = vmatpush1.msra.mxu0 %v631
  %1834 = vmatprep.subr.mxu0 0.0
  %1835 = vmatpush1.msra.mxu0 %v632
  %1836 = vmatprep.subr.mxu0 0.0
  %1837 = vmatpush1.msra.mxu0 %v633
  %1838 = vmatprep.subr.mxu0 0.0
  %1839 = vmatpush1.msra.mxu0 %v634
  %1840 = vmatprep.subr.mxu0 0.0
  %1841 = vmatpush1.msra.mxu0 %v635
  %1842 = vmatprep.subr.mxu0 0.0
  %1843 = vmatpush1.msra.mxu0 %v636
  %1844 = vmatprep.subr.mxu0 0.0
  %1845 = vmatpush1.msra.mxu0 %v637
  %1846 = vmatprep.subr.mxu0 0.0
  %1847 = vmatpush1.msra.mxu0 %v638
  %1848 = vmatprep.subr.mxu0 0.0
  %1849 = vmatpush1.msra.mxu0 %v639
  %1850 = vmatprep.subr.mxu0 0.0
  %1851 = vmatpush1.msra.mxu0 %v640
  %1852 = vmatprep.subr.mxu0 0.0
  %1853 = vmatpush1.msra.mxu0 %v641
  %1854 = vmatprep.subr.mxu0 0.0
  %1855 = vmatpush1.msra.mxu0 %v642
  %1856 = vmatprep.subr.mxu0 0.0
  %1857 = vmatpush1.msra.mxu0 %v643
  %1858 = vmatprep.subr.mxu0 0.0
  %1859 = vmatpush1.msra.mxu0 %v644
  %1860 = vmatprep.subr.mxu0 0.0
  %1861 = vmatpush1.msra.mxu0 %v645
  %1862 = vmatprep.subr.mxu0 0.0
  %1863 = vmatpush1.msra.mxu0 %v646
  %1864 = vmatprep.subr.mxu0 0.0
  %1865 = vmatpush1.msra.mxu0 %v647
  %1866 = vmatprep.subr.mxu0 0.0
  %1867 = vmatpush1.msra.mxu0 %v648
  %1868 = vmatprep.subr.mxu0 0.0
  %1869 = vmatpush1.msra.mxu0 %v649
  %1870 = vmatprep.subr.mxu0 0.0
  %1871 = vmatpush1.msra.mxu0 %v650
  %1872 = vmatprep.subr.mxu0 0.0
  %1873 = vmatpush1.msra.mxu0 %v651
  %1874 = vmatprep.subr.mxu0 0.0
  %1875 = vmatpush1.msra.mxu0 %v652
  %1876 = vmatprep.subr.mxu0 0.0
  %1877 = vmatpush1.msra.mxu0 %v653
  %1878 = vmatprep.subr.mxu0 0.0
  %1879 = vmatpush1.msra.mxu0 %v654
  %1880 = vmatprep.mubr.f32.mxu0 %v246
  %1881 = vmatmul.mubr.f32.gmra.mrb[0].mxu0 %v245
  %v1882 = vpop.f32.mrb[0].mxu0
  %v1883 = vadd.f32 %v1813, %v1882
  %v1884 = vpop.f32.mrb[0].mxu0
  %1885 = vdwg.mxu0
  %1886 = vmatprep.subr.mxu0 0.0
  %1887 = vmatpush1.msra.mxu0 %v655
  %1888 = vmatprep.subr.mxu0 0.0
  %1889 = vmatpush1.msra.mxu0 %v656
  %1890 = vmatprep.subr.mxu0 0.0
  %1891 = vmatpush1.msra.mxu0 %v657
  %1892 = vmatprep.subr.mxu0 0.0
  %1893 = vmatpush1.msra.mxu0 %v658
  %1894 = vmatprep.subr.mxu0 0.0
  %1895 = vmatpush1.msra.mxu0 %v659
  %1896 = vmatprep.subr.mxu0 0.0
  %1897 = vmatpush1.msra.mxu0 %v660
  %1898 = vmatprep.subr.mxu0 0.0
  %1899 = vmatpush1.msra.mxu0 %v661
  %1900 = vmatprep.subr.mxu0 0.0
  %1901 = vmatpush1.msra.mxu0 %v662
  %1902 = vmatprep.subr.mxu0 0.0
  %1903 = vmatpush1.msra.mxu0 %v663
  %1904 = vmatprep.subr.mxu0 0.0
  %1905 = vmatpush1.msra.mxu0 %v664
  %1906 = vmatprep.subr.mxu0 0.0
  %1907 = vmatpush1.msra.mxu0 %v665
  %1908 = vmatprep.subr.mxu0 0.0
  %1909 = vmatpush1.msra.mxu0 %v666
  %1910 = vmatprep.subr.mxu0 0.0
  %1911 = vmatpush1.msra.mxu0 %v667
  %1912 = vmatprep.subr.mxu0 0.0
  %1913 = vmatpush1.msra.mxu0 %v668
  %1914 = vmatprep.subr.mxu0 0.0
  %1915 = vmatpush1.msra.mxu0 %v669
  %1916 = vmatprep.subr.mxu0 0.0
  %1917 = vmatpush1.msra.mxu0 %v670
  %1918 = vmatprep.subr.mxu0 0.0
  %1919 = vmatpush1.msra.mxu0 %v671
  %1920 = vmatprep.subr.mxu0 0.0
  %1921 = vmatpush1.msra.mxu0 %v672
  %1922 = vmatprep.subr.mxu0 0.0
  %1923 = vmatpush1.msra.mxu0 %v673
  %1924 = vmatprep.subr.mxu0 0.0
  %1925 = vmatpush1.msra.mxu0 %v674
  %1926 = vmatprep.subr.mxu0 0.0
  %1927 = vmatpush1.msra.mxu0 %v675
  %1928 = vmatprep.subr.mxu0 0.0
  %1929 = vmatpush1.msra.mxu0 %v676
  %1930 = vmatprep.subr.mxu0 0.0
  %1931 = vmatpush1.msra.mxu0 %v677
  %1932 = vmatprep.subr.mxu0 0.0
  %1933 = vmatpush1.msra.mxu0 %v678
  %1934 = vmatprep.subr.mxu0 0.0
  %1935 = vmatpush1.msra.mxu0 %v679
  %1936 = vmatprep.subr.mxu0 0.0
  %1937 = vmatpush1.msra.mxu0 %v680
  %1938 = vmatprep.subr.mxu0 0.0
  %1939 = vmatpush1.msra.mxu0 %v681
  %1940 = vmatprep.subr.mxu0 0.0
  %1941 = vmatpush1.msra.mxu0 %v682
  %1942 = vmatprep.subr.mxu0 0.0
  %1943 = vmatpush1.msra.mxu0 %v683
  %1944 = vmatprep.subr.mxu0 0.0
  %1945 = vmatpush1.msra.mxu0 %v684
  %1946 = vmatprep.subr.mxu0 0.0
  %1947 = vmatpush1.msra.mxu0 %v685
  %1948 = vmatprep.subr.mxu0 0.0
  %1949 = vmatpush1.msra.mxu0 %v686
  %1950 = vmatprep.mubr.f32.mxu0 %v248
  %1951 = vmatmul.mubr.f32.gmra.mrb[0].mxu0 %v247
  %v1952 = vpop.f32.mrb[0].mxu0
  %v1953 = vadd.f32 %v1883, %v1952
  %v1954 = vpop.f32.mrb[0].mxu0
  %1955 = vdwg.mxu0
  %1956 = vmatprep.subr.mxu0 0.0
  %1957 = vmatpush1.msra.mxu0 %v687
  %1958 = vmatprep.subr.mxu0 0.0
  %1959 = vmatpush1.msra.mxu0 %v688
  %1960 = vmatprep.subr.mxu0 0.0
  %1961 = vmatpush1.msra.mxu0 %v689
  %1962 = vmatprep.subr.mxu0 0.0
  %1963 = vmatpush1.msra.mxu0 %v690
  %1964 = vmatprep.subr.mxu0 0.0
  %1965 = vmatpush1.msra.mxu0 %v691
  %1966 = vmatprep.subr.mxu0 0.0
  %1967 = vmatpush1.msra.mxu0 %v692
  %1968 = vmatprep.subr.mxu0 0.0
  %1969 = vmatpush1.msra.mxu0 %v693
  %1970 = vmatprep.subr.mxu0 0.0
  %1971 = vmatpush1.msra.mxu0 %v694
  %1972 = vmatprep.subr.mxu0 0.0
  %1973 = vmatpush1.msra.mxu0 %v695
  %1974 = vmatprep.subr.mxu0 0.0
  %1975 = vmatpush1.msra.mxu0 %v696
  %1976 = vmatprep.subr.mxu0 0.0
  %1977 = vmatpush1.msra.mxu0 %v697
  %1978 = vmatprep.subr.mxu0 0.0
  %1979 = vmatpush1.msra.mxu0 %v698
  %1980 = vmatprep.subr.mxu0 0.0
  %1981 = vmatpush1.msra.mxu0 %v699
  %1982 = vmatprep.subr.mxu0 0.0
  %1983 = vmatpush1.msra.mxu0 %v700
  %1984 = vmatprep.subr.mxu0 0.0
  %1985 = vmatpush1.msra.mxu0 %v701
  %1986 = vmatprep.subr.mxu0 0.0
  %1987 = vmatpush1.msra.mxu0 %v702
  %1988 = vmatprep.subr.mxu0 0.0
  %1989 = vmatpush1.msra.mxu0 %v703
  %1990 = vmatprep.subr.mxu0 0.0
  %1991 = vmatpush1.msra.mxu0 %v704
  %1992 = vmatprep.subr.mxu0 0.0
  %1993 = vmatpush1.msra.mxu0 %v705
  %1994 = vmatprep.subr.mxu0 0.0
  %1995 = vmatpush1.msra.mxu0 %v706
  %1996 = vmatprep.subr.mxu0 0.0
  %1997 = vmatpush1.msra.mxu0 %v707
  %1998 = vmatprep.subr.mxu0 0.0
  %1999 = vmatpush1.msra.mxu0 %v708
  %2000 = vmatprep.subr.mxu0 0.0
  %2001 = vmatpush1.msra.mxu0 %v709
  %2002 = vmatprep.subr.mxu0 0.0
  %2003 = vmatpush1.msra.mxu0 %v710
  %2004 = vmatprep.subr.mxu0 0.0
  %2005 = vmatpush1.msra.mxu0 %v711
  %2006 = vmatprep.subr.mxu0 0.0
  %2007 = vmatpush1.msra.mxu0 %v712
  %2008 = vmatprep.subr.mxu0 0.0
  %2009 = vmatpush1.msra.mxu0 %v713
  %2010 = vmatprep.subr.mxu0 0.0
  %2011 = vmatpush1.msra.mxu0 %v714
  %2012 = vmatprep.subr.mxu0 0.0
  %2013 = vmatpush1.msra.mxu0 %v715
  %2014 = vmatprep.subr.mxu0 0.0
  %2015 = vmatpush1.msra.mxu0 %v716
  %2016 = vmatprep.subr.mxu0 0.0
  %2017 = vmatpush1.msra.mxu0 %v717
  %2018 = vmatprep.subr.mxu0 0.0
  %2019 = vmatpush1.msra.mxu0 %v718
  %2020 = vmatprep.mubr.f32.mxu0 %v250
  %2021 = vmatmul.mubr.f32.gmra.mrb[0].mxu0 %v249
  %v2022 = vpop.f32.mrb[0].mxu0
  %v2023 = vadd.f32 %v1953, %v2022
  %v2024 = vpop.f32.mrb[0].mxu0
  %2025 = vdwg.mxu0
  %2026 = vmatprep.subr.mxu0 0.0
  %2027 = vmatpush1.msra.mxu0 %v719
  %2028 = vmatprep.subr.mxu0 0.0
  %2029 = vmatpush1.msra.mxu0 %v720
  %2030 = vmatprep.subr.mxu0 0.0
  %2031 = vmatpush1.msra.mxu0 %v721
  %2032 = vmatprep.subr.mxu0 0.0
  %2033 = vmatpush1.msra.mxu0 %v722
  %2034 = vmatprep.subr.mxu0 0.0
  %2035 = vmatpush1.msra.mxu0 %v723
  %2036 = vmatprep.subr.mxu0 0.0
  %2037 = vmatpush1.msra.mxu0 %v724
  %2038 = vmatprep.subr.mxu0 0.0
  %2039 = vmatpush1.msra.mxu0 %v725
  %2040 = vmatprep.subr.mxu0 0.0
  %2041 = vmatpush1.msra.mxu0 %v726
  %2042 = vmatprep.subr.mxu0 0.0
  %2043 = vmatpush1.msra.mxu0 %v727
  %2044 = vmatprep.subr.mxu0 0.0
  %2045 = vmatpush1.msra.mxu0 %v728
  %2046 = vmatprep.subr.mxu0 0.0
  %2047 = vmatpush1.msra.mxu0 %v729
  %2048 = vmatprep.subr.mxu0 0.0
  %2049 = vmatpush1.msra.mxu0 %v730
  %2050 = vmatprep.subr.mxu0 0.0
  %2051 = vmatpush1.msra.mxu0 %v731
  %2052 = vmatprep.subr.mxu0 0.0
  %2053 = vmatpush1.msra.mxu0 %v732
  %2054 = vmatprep.subr.mxu0 0.0
  %2055 = vmatpush1.msra.mxu0 %v733
  %2056 = vmatprep.subr.mxu0 0.0
  %2057 = vmatpush1.msra.mxu0 %v734
  %2058 = vmatprep.subr.mxu0 0.0
  %2059 = vmatpush1.msra.mxu0 %v735
  %2060 = vmatprep.subr.mxu0 0.0
  %2061 = vmatpush1.msra.mxu0 %v736
  %2062 = vmatprep.subr.mxu0 0.0
  %2063 = vmatpush1.msra.mxu0 %v737
  %2064 = vmatprep.subr.mxu0 0.0
  %2065 = vmatpush1.msra.mxu0 %v738
  %2066 = vmatprep.subr.mxu0 0.0
  %2067 = vmatpush1.msra.mxu0 %v739
  %2068 = vmatprep.subr.mxu0 0.0
  %2069 = vmatpush1.msra.mxu0 %v740
  %2070 = vmatprep.subr.mxu0 0.0
  %2071 = vmatpush1.msra.mxu0 %v741
  %2072 = vmatprep.subr.mxu0 0.0
  %2073 = vmatpush1.msra.mxu0 %v742
  %2074 = vmatprep.subr.mxu0 0.0
  %2075 = vmatpush1.msra.mxu0 %v743
  %2076 = vmatprep.subr.mxu0 0.0
  %2077 = vmatpush1.msra.mxu0 %v744
  %2078 = vmatprep.subr.mxu0 0.0
  %2079 = vmatpush1.msra.mxu0 %v745
  %2080 = vmatprep.subr.mxu0 0.0
  %2081 = vmatpush1.msra.mxu0 %v746
  %2082 = vmatprep.subr.mxu0 0.0
  %2083 = vmatpush1.msra.mxu0 %v747
  %2084 = vmatprep.subr.mxu0 0.0
  %2085 = vmatpush1.msra.mxu0 %v748
  %2086 = vmatprep.subr.mxu0 0.0
  %2087 = vmatpush1.msra.mxu0 %v749
  %2088 = vmatprep.subr.mxu0 0.0
  %2089 = vmatpush1.msra.mxu0 %v750
  %2090 = vmatprep.mubr.f32.mxu0 %v252
  %2091 = vmatmul.mubr.f32.gmra.mrb[0].mxu0 %v251
  %v2092 = vpop.f32.mrb[0].mxu0
  %v2093 = vadd.f32 %v2023, %v2092
  %v2094 = vpop.f32.mrb[0].mxu0
  %2095 = vdwg.mxu0
  %2096 = vmatprep.subr.mxu0 0.0
  %2097 = vmatpush1.msra.mxu0 %v751
  %2098 = vmatprep.subr.mxu0 0.0
  %2099 = vmatpush1.msra.mxu0 %v752
  %2100 = vmatprep.subr.mxu0 0.0
  %2101 = vmatpush1.msra.mxu0 %v753
  %2102 = vmatprep.subr.mxu0 0.0
  %2103 = vmatpush1.msra.mxu0 %v754
  %2104 = vmatprep.subr.mxu0 0.0
  %2105 = vmatpush1.msra.mxu0 %v755
  %2106 = vmatprep.subr.mxu0 0.0
  %2107 = vmatpush1.msra.mxu0 %v756
  %2108 = vmatprep.subr.mxu0 0.0
  %2109 = vmatpush1.msra.mxu0 %v757
  %2110 = vmatprep.subr.mxu0 0.0
  %2111 = vmatpush1.msra.mxu0 %v758
  %2112 = vmatprep.subr.mxu0 0.0
  %2113 = vmatpush1.msra.mxu0 %v759
  %2114 = vmatprep.subr.mxu0 0.0
  %2115 = vmatpush1.msra.mxu0 %v760
  %2116 = vmatprep.subr.mxu0 0.0
  %2117 = vmatpush1.msra.mxu0 %v761
  %2118 = vmatprep.subr.mxu0 0.0
  %2119 = vmatpush1.msra.mxu0 %v762
  %2120 = vmatprep.subr.mxu0 0.0
  %2121 = vmatpush1.msra.mxu0 %v763
  %2122 = vmatprep.subr.mxu0 0.0
  %2123 = vmatpush1.msra.mxu0 %v764
  %2124 = vmatprep.subr.mxu0 0.0
  %2125 = vmatpush1.msra.mxu0 %v765
  %2126 = vmatprep.subr.mxu0 0.0
  %2127 = vmatpush1.msra.mxu0 %v766
  %2128 = vmatprep.subr.mxu0 0.0
  %2129 = vmatpush1.msra.mxu0 %v767
  %2130 = vmatprep.subr.mxu0 0.0
  %2131 = vmatpush1.msra.mxu0 %v768
  %2132 = vmatprep.subr.mxu0 0.0
  %2133 = vmatpush1.msra.mxu0 %v769
  %2134 = vmatprep.subr.mxu0 0.0
  %2135 = vmatpush1.msra.mxu0 %v770
  %2136 = vmatprep.subr.mxu0 0.0
  %2137 = vmatpush1.msra.mxu0 %v771
  %2138 = vmatprep.subr.mxu0 0.0
  %2139 = vmatpush1.msra.mxu0 %v772
  %2140 = vmatprep.subr.mxu0 0.0
  %2141 = vmatpush1.msra.mxu0 %v773
  %2142 = vmatprep.subr.mxu0 0.0
  %2143 = vmatpush1.msra.mxu0 %v774
  %2144 = vmatprep.subr.mxu0 0.0
  %2145 = vmatpush1.msra.mxu0 %v775
  %2146 = vmatprep.subr.mxu0 0.0
  %2147 = vmatpush1.msra.mxu0 %v776
  %2148 = vmatprep.subr.mxu0 0.0
  %2149 = vmatpush1.msra.mxu0 %v777
  %2150 = vmatprep.subr.mxu0 0.0
  %2151 = vmatpush1.msra.mxu0 %v778
  %2152 = vmatprep.subr.mxu0 0.0
  %2153 = vmatpush1.msra.mxu0 %v779
  %2154 = vmatprep.subr.mxu0 0.0
  %2155 = vmatpush1.msra.mxu0 %v780
  %2156 = vmatprep.subr.mxu0 0.0
  %2157 = vmatpush1.msra.mxu0 %v781
  %2158 = vmatprep.subr.mxu0 0.0
  %2159 = vmatpush1.msra.mxu0 %v782
  %2160 = vmatprep.mubr.f32.mxu0 %v254
  %2161 = vmatmul.mubr.f32.gmra.mrb[0].mxu0 %v253
  %v2162 = vpop.f32.mrb[0].mxu0
  %v2163 = vadd.f32 %v2093, %v2162
  %v2164 = vpop.f32.mrb[0].mxu0
  %2165 = vdwg.mxu0
  %2166 = vmatprep.subr.mxu0 0.0
  %2167 = vmatpush1.msra.mxu0 %v783
  %2168 = vmatprep.subr.mxu0 0.0
  %2169 = vmatpush1.msra.mxu0 %v784
  %2170 = vmatprep.subr.mxu0 0.0
  %2171 = vmatpush1.msra.mxu0 %v785
  %2172 = vmatprep.subr.mxu0 0.0
  %2173 = vmatpush1.msra.mxu0 %v786
  %2174 = vmatprep.subr.mxu0 0.0
  %2175 = vmatpush1.msra.mxu0 %v787
  %2176 = vmatprep.subr.mxu0 0.0
  %2177 = vmatpush1.msra.mxu0 %v788
  %2178 = vmatprep.subr.mxu0 0.0
  %2179 = vmatpush1.msra.mxu0 %v789
  %2180 = vmatprep.subr.mxu0 0.0
  %2181 = vmatpush1.msra.mxu0 %v790
  %2182 = vmatprep.subr.mxu0 0.0
  %2183 = vmatpush1.msra.mxu0 %v791
  %2184 = vmatprep.subr.mxu0 0.0
  %2185 = vmatpush1.msra.mxu0 %v792
  %2186 = vmatprep.subr.mxu0 0.0
  %2187 = vmatpush1.msra.mxu0 %v793
  %2188 = vmatprep.subr.mxu0 0.0
  %2189 = vmatpush1.msra.mxu0 %v794
  %2190 = vmatprep.subr.mxu0 0.0
  %2191 = vmatpush1.msra.mxu0 %v795
  %2192 = vmatprep.subr.mxu0 0.0
  %2193 = vmatpush1.msra.mxu0 %v796
  %2194 = vmatprep.subr.mxu0 0.0
  %2195 = vmatpush1.msra.mxu0 %v797
  %2196 = vmatprep.subr.mxu0 0.0
  %2197 = vmatpush1.msra.mxu0 %v798
  %2198 = vmatprep.subr.mxu0 0.0
  %2199 = vmatpush1.msra.mxu0 %v799
  %2200 = vmatprep.subr.mxu0 0.0
  %2201 = vmatpush1.msra.mxu0 %v800
  %2202 = vmatprep.subr.mxu0 0.0
  %2203 = vmatpush1.msra.mxu0 %v801
  %2204 = vmatprep.subr.mxu0 0.0
  %2205 = vmatpush1.msra.mxu0 %v802
  %2206 = vmatprep.subr.mxu0 0.0
  %2207 = vmatpush1.msra.mxu0 %v803
  %2208 = vmatprep.subr.mxu0 0.0
  %2209 = vmatpush1.msra.mxu0 %v804
  %2210 = vmatprep.subr.mxu0 0.0
  %2211 = vmatpush1.msra.mxu0 %v805
  %2212 = vmatprep.subr.mxu0 0.0
  %2213 = vmatpush1.msra.mxu0 %v806
  %2214 = vmatprep.subr.mxu0 0.0
  %2215 = vmatpush1.msra.mxu0 %v807
  %2216 = vmatprep.subr.mxu0 0.0
  %2217 = vmatpush1.msra.mxu0 %v808
  %2218 = vmatprep.subr.mxu0 0.0
  %2219 = vmatpush1.msra.mxu0 %v809
  %2220 = vmatprep.subr.mxu0 0.0
  %2221 = vmatpush1.msra.mxu0 %v810
  %2222 = vmatprep.subr.mxu0 0.0
  %2223 = vmatpush1.msra.mxu0 %v811
  %2224 = vmatprep.subr.mxu0 0.0
  %2225 = vmatpush1.msra.mxu0 %v812
  %2226 = vmatprep.subr.mxu0 0.0
  %2227 = vmatpush1.msra.mxu0 %v813
  %2228 = vmatprep.subr.mxu0 0.0
  %2229 = vmatpush1.msra.mxu0 %v814
  %2230 = vmatprep.mubr.f32.mxu0 %v256
  %2231 = vmatmul.mubr.f32.gmra.mrb[0].mxu0 %v255
  %v2232 = vpop.f32.mrb[0].mxu0
  %v2233 = vadd.f32 %v2163, %v2232
  %v2234 = vpop.f32.mrb[0].mxu0
  %2235 = vdwg.mxu0
  %2236 = vmatprep.subr.mxu0 0.0
  %2237 = vmatpush1.msra.mxu0 %v815
  %2238 = vmatprep.subr.mxu0 0.0
  %2239 = vmatpush1.msra.mxu0 %v816
  %2240 = vmatprep.subr.mxu0 0.0
  %2241 = vmatpush1.msra.mxu0 %v817
  %2242 = vmatprep.subr.mxu0 0.0
  %2243 = vmatpush1.msra.mxu0 %v818
  %2244 = vmatprep.subr.mxu0 0.0
  %2245 = vmatpush1.msra.mxu0 %v819
  %2246 = vmatprep.subr.mxu0 0.0
  %2247 = vmatpush1.msra.mxu0 %v820
  %2248 = vmatprep.subr.mxu0 0.0
  %2249 = vmatpush1.msra.mxu0 %v821
  %2250 = vmatprep.subr.mxu0 0.0
  %2251 = vmatpush1.msra.mxu0 %v822
  %2252 = vmatprep.subr.mxu0 0.0
  %2253 = vmatpush1.msra.mxu0 %v823
  %2254 = vmatprep.subr.mxu0 0.0
  %2255 = vmatpush1.msra.mxu0 %v824
  %2256 = vmatprep.subr.mxu0 0.0
  %2257 = vmatpush1.msra.mxu0 %v825
  %2258 = vmatprep.subr.mxu0 0.0
  %2259 = vmatpush1.msra.mxu0 %v826
  %2260 = vmatprep.subr.mxu0 0.0
  %2261 = vmatpush1.msra.mxu0 %v827
  %2262 = vmatprep.subr.mxu0 0.0
  %2263 = vmatpush1.msra.mxu0 %v828
  %2264 = vmatprep.subr.mxu0 0.0
  %2265 = vmatpush1.msra.mxu0 %v829
  %2266 = vmatprep.subr.mxu0 0.0
  %2267 = vmatpush1.msra.mxu0 %v830
  %2268 = vmatprep.subr.mxu0 0.0
  %2269 = vmatpush1.msra.mxu0 %v831
  %2270 = vmatprep.subr.mxu0 0.0
  %2271 = vmatpush1.msra.mxu0 %v832
  %2272 = vmatprep.subr.mxu0 0.0
  %2273 = vmatpush1.msra.mxu0 %v833
  %2274 = vmatprep.subr.mxu0 0.0
  %2275 = vmatpush1.msra.mxu0 %v834
  %2276 = vmatprep.subr.mxu0 0.0
  %2277 = vmatpush1.msra.mxu0 %v835
  %2278 = vmatprep.subr.mxu0 0.0
  %2279 = vmatpush1.msra.mxu0 %v836
  %2280 = vmatprep.subr.mxu0 0.0
  %2281 = vmatpush1.msra.mxu0 %v837
  %2282 = vmatprep.subr.mxu0 0.0
  %2283 = vmatpush1.msra.mxu0 %v838
  %2284 = vmatprep.subr.mxu0 0.0
  %2285 = vmatpush1.msra.mxu0 %v839
  %2286 = vmatprep.subr.mxu0 0.0
  %2287 = vmatpush1.msra.mxu0 %v840
  %2288 = vmatprep.subr.mxu0 0.0
  %2289 = vmatpush1.msra.mxu0 %v841
  %2290 = vmatprep.subr.mxu0 0.0
  %2291 = vmatpush1.msra.mxu0 %v842
  %2292 = vmatprep.subr.mxu0 0.0
  %2293 = vmatpush1.msra.mxu0 %v843
  %2294 = vmatprep.subr.mxu0 0.0
  %2295 = vmatpush1.msra.mxu0 %v844
  %2296 = vmatprep.subr.mxu0 0.0
  %2297 = vmatpush1.msra.mxu0 %v845
  %2298 = vmatprep.subr.mxu0 0.0
  %2299 = vmatpush1.msra.mxu0 %v846
  %2300 = vmatprep.mubr.f32.mxu0 %v258
  %2301 = vmatmul.mubr.f32.gmra.mrb[0].mxu0 %v257
  %v2302 = vpop.f32.mrb[0].mxu0
  %v2303 = vadd.f32 %v2233, %v2302
  %v2304 = vpop.f32.mrb[0].mxu0
  %2305 = vdwg.mxu0
  %2306 = vmatprep.subr.mxu0 0.0
  %2307 = vmatpush1.msra.mxu0 %v847
  %2308 = vmatprep.subr.mxu0 0.0
  %2309 = vmatpush1.msra.mxu0 %v848
  %2310 = vmatprep.subr.mxu0 0.0
  %2311 = vmatpush1.msra.mxu0 %v849
  %2312 = vmatprep.subr.mxu0 0.0
  %2313 = vmatpush1.msra.mxu0 %v850
  %2314 = vmatprep.subr.mxu0 0.0
  %2315 = vmatpush1.msra.mxu0 %v851
  %2316 = vmatprep.subr.mxu0 0.0
  %2317 = vmatpush1.msra.mxu0 %v852
  %2318 = vmatprep.subr.mxu0 0.0
  %2319 = vmatpush1.msra.mxu0 %v853
  %2320 = vmatprep.subr.mxu0 0.0
  %2321 = vmatpush1.msra.mxu0 %v854
  %2322 = vmatprep.subr.mxu0 0.0
  %2323 = vmatpush1.msra.mxu0 %v855
  %2324 = vmatprep.subr.mxu0 0.0
  %2325 = vmatpush1.msra.mxu0 %v856
  %2326 = vmatprep.subr.mxu0 0.0
  %2327 = vmatpush1.msra.mxu0 %v857
  %2328 = vmatprep.subr.mxu0 0.0
  %2329 = vmatpush1.msra.mxu0 %v858
  %2330 = vmatprep.subr.mxu0 0.0
  %2331 = vmatpush1.msra.mxu0 %v859
  %2332 = vmatprep.subr.mxu0 0.0
  %2333 = vmatpush1.msra.mxu0 %v860
  %2334 = vmatprep.subr.mxu0 0.0
  %2335 = vmatpush1.msra.mxu0 %v861
  %2336 = vmatprep.subr.mxu0 0.0
  %2337 = vmatpush1.msra.mxu0 %v862
  %2338 = vmatprep.subr.mxu0 0.0
  %2339 = vmatpush1.msra.mxu0 %v863
  %2340 = vmatprep.subr.mxu0 0.0
  %2341 = vmatpush1.msra.mxu0 %v864
  %2342 = vmatprep.subr.mxu0 0.0
  %2343 = vmatpush1.msra.mxu0 %v865
  %2344 = vmatprep.subr.mxu0 0.0
  %2345 = vmatpush1.msra.mxu0 %v866
  %2346 = vmatprep.subr.mxu0 0.0
  %2347 = vmatpush1.msra.mxu0 %v867
  %2348 = vmatprep.subr.mxu0 0.0
  %2349 = vmatpush1.msra.mxu0 %v868
  %2350 = vmatprep.subr.mxu0 0.0
  %2351 = vmatpush1.msra.mxu0 %v869
  %2352 = vmatprep.subr.mxu0 0.0
  %2353 = vmatpush1.msra.mxu0 %v870
  %2354 = vmatprep.subr.mxu0 0.0
  %2355 = vmatpush1.msra.mxu0 %v871
  %2356 = vmatprep.subr.mxu0 0.0
  %2357 = vmatpush1.msra.mxu0 %v872
  %2358 = vmatprep.subr.mxu0 0.0
  %2359 = vmatpush1.msra.mxu0 %v873
  %2360 = vmatprep.subr.mxu0 0.0
  %2361 = vmatpush1.msra.mxu0 %v874
  %2362 = vmatprep.subr.mxu0 0.0
  %2363 = vmatpush1.msra.mxu0 %v875
  %2364 = vmatprep.subr.mxu0 0.0
  %2365 = vmatpush1.msra.mxu0 %v876
  %2366 = vmatprep.subr.mxu0 0.0
  %2367 = vmatpush1.msra.mxu0 %v877
  %2368 = vmatprep.subr.mxu0 0.0
  %2369 = vmatpush1.msra.mxu0 %v878
  %2370 = vmatprep.mubr.f32.mxu0 %v260
  %2371 = vmatmul.mubr.f32.gmra.mrb[0].mxu0 %v259
  %v2372 = vpop.f32.mrb[0].mxu0
  %v2373 = vadd.f32 %v2303, %v2372
  %v2374 = vpop.f32.mrb[0].mxu0
  %2375 = vdwg.mxu0
  %2376 = vmatprep.subr.mxu0 0.0
  %2377 = vmatpush1.msra.mxu0 %v879
  %2378 = vmatprep.subr.mxu0 0.0
  %2379 = vmatpush1.msra.mxu0 %v880
  %2380 = vmatprep.subr.mxu0 0.0
  %2381 = vmatpush1.msra.mxu0 %v881
  %2382 = vmatprep.subr.mxu0 0.0
  %2383 = vmatpush1.msra.mxu0 %v882
  %2384 = vmatprep.subr.mxu0 0.0
  %2385 = vmatpush1.msra.mxu0 %v883
  %2386 = vmatprep.subr.mxu0 0.0
  %2387 = vmatpush1.msra.mxu0 %v884
  %2388 = vmatprep.subr.mxu0 0.0
  %2389 = vmatpush1.msra.mxu0 %v885
  %2390 = vmatprep.subr.mxu0 0.0
  %2391 = vmatpush1.msra.mxu0 %v886
  %2392 = vmatprep.subr.mxu0 0.0
  %2393 = vmatpush1.msra.mxu0 %v887
  %2394 = vmatprep.subr.mxu0 0.0
  %2395 = vmatpush1.msra.mxu0 %v888
  %2396 = vmatprep.subr.mxu0 0.0
  %2397 = vmatpush1.msra.mxu0 %v889
  %2398 = vmatprep.subr.mxu0 0.0
  %2399 = vmatpush1.msra.mxu0 %v890
  %2400 = vmatprep.subr.mxu0 0.0
  %2401 = vmatpush1.msra.mxu0 %v891
  %2402 = vmatprep.subr.mxu0 0.0
  %2403 = vmatpush1.msra.mxu0 %v892
  %2404 = vmatprep.subr.mxu0 0.0
  %2405 = vmatpush1.msra.mxu0 %v893
  %2406 = vmatprep.subr.mxu0 0.0
  %2407 = vmatpush1.msra.mxu0 %v894
  %2408 = vmatprep.subr.mxu0 0.0
  %2409 = vmatpush1.msra.mxu0 %v895
  %2410 = vmatprep.subr.mxu0 0.0
  %2411 = vmatpush1.msra.mxu0 %v896
  %2412 = vmatprep.subr.mxu0 0.0
  %2413 = vmatpush1.msra.mxu0 %v897
  %2414 = vmatprep.subr.mxu0 0.0
  %2415 = vmatpush1.msra.mxu0 %v898
  %2416 = vmatprep.subr.mxu0 0.0
  %2417 = vmatpush1.msra.mxu0 %v899
  %2418 = vmatprep.subr.mxu0 0.0
  %2419 = vmatpush1.msra.mxu0 %v900
  %2420 = vmatprep.subr.mxu0 0.0
  %2421 = vmatpush1.msra.mxu0 %v901
  %2422 = vmatprep.subr.mxu0 0.0
  %2423 = vmatpush1.msra.mxu0 %v902
  %2424 = vmatprep.subr.mxu0 0.0
  %2425 = vmatpush1.msra.mxu0 %v903
  %2426 = vmatprep.subr.mxu0 0.0
  %2427 = vmatpush1.msra.mxu0 %v904
  %2428 = vmatprep.subr.mxu0 0.0
  %2429 = vmatpush1.msra.mxu0 %v905
  %2430 = vmatprep.subr.mxu0 0.0
  %2431 = vmatpush1.msra.mxu0 %v906
  %2432 = vmatprep.subr.mxu0 0.0
  %2433 = vmatpush1.msra.mxu0 %v907
  %2434 = vmatprep.subr.mxu0 0.0
  %2435 = vmatpush1.msra.mxu0 %v908
  %2436 = vmatprep.subr.mxu0 0.0
  %2437 = vmatpush1.msra.mxu0 %v909
  %2438 = vmatprep.subr.mxu0 0.0
  %2439 = vmatpush1.msra.mxu0 %v910
  %2440 = vmatprep.mubr.f32.mxu0 %v262
  %2441 = vmatmul.mubr.f32.gmra.mrb[0].mxu0 %v261
  %v2442 = vpop.f32.mrb[0].mxu0
  %v2443 = vadd.f32 %v2373, %v2442
  %v2444 = vpop.f32.mrb[0].mxu0
  %2445 = vdwg.mxu0
  %2446 = vmatprep.subr.mxu0 0.0
  %2447 = vmatpush1.msra.mxu0 %v911
  %2448 = vmatprep.subr.mxu0 0.0
  %2449 = vmatpush1.msra.mxu0 %v912
  %2450 = vmatprep.subr.mxu0 0.0
  %2451 = vmatpush1.msra.mxu0 %v913
  %2452 = vmatprep.subr.mxu0 0.0
  %2453 = vmatpush1.msra.mxu0 %v914
  %2454 = vmatprep.subr.mxu0 0.0
  %2455 = vmatpush1.msra.mxu0 %v915
  %2456 = vmatprep.subr.mxu0 0.0
  %2457 = vmatpush1.msra.mxu0 %v916
  %2458 = vmatprep.subr.mxu0 0.0
  %2459 = vmatpush1.msra.mxu0 %v917
  %2460 = vmatprep.subr.mxu0 0.0
  %2461 = vmatpush1.msra.mxu0 %v918
  %2462 = vmatprep.subr.mxu0 0.0
  %2463 = vmatpush1.msra.mxu0 %v919
  %2464 = vmatprep.subr.mxu0 0.0
  %2465 = vmatpush1.msra.mxu0 %v920
  %2466 = vmatprep.subr.mxu0 0.0
  %2467 = vmatpush1.msra.mxu0 %v921
  %2468 = vmatprep.subr.mxu0 0.0
  %2469 = vmatpush1.msra.mxu0 %v922
  %2470 = vmatprep.subr.mxu0 0.0
  %2471 = vmatpush1.msra.mxu0 %v923
  %2472 = vmatprep.subr.mxu0 0.0
  %2473 = vmatpush1.msra.mxu0 %v924
  %2474 = vmatprep.subr.mxu0 0.0
  %2475 = vmatpush1.msra.mxu0 %v925
  %2476 = vmatprep.subr.mxu0 0.0
  %2477 = vmatpush1.msra.mxu0 %v926
  %2478 = vmatprep.subr.mxu0 0.0
  %2479 = vmatpush1.msra.mxu0 %v927
  %2480 = vmatprep.subr.mxu0 0.0
  %2481 = vmatpush1.msra.mxu0 %v928
  %2482 = vmatprep.subr.mxu0 0.0
  %2483 = vmatpush1.msra.mxu0 %v929
  %2484 = vmatprep.subr.mxu0 0.0
  %2485 = vmatpush1.msra.mxu0 %v930
  %2486 = vmatprep.subr.mxu0 0.0
  %2487 = vmatpush1.msra.mxu0 %v931
  %2488 = vmatprep.subr.mxu0 0.0
  %2489 = vmatpush1.msra.mxu0 %v932
  %2490 = vmatprep.subr.mxu0 0.0
  %2491 = vmatpush1.msra.mxu0 %v933
  %2492 = vmatprep.subr.mxu0 0.0
  %2493 = vmatpush1.msra.mxu0 %v934
  %2494 = vmatprep.subr.mxu0 0.0
  %2495 = vmatpush1.msra.mxu0 %v935
  %2496 = vmatprep.subr.mxu0 0.0
  %2497 = vmatpush1.msra.mxu0 %v936
  %2498 = vmatprep.subr.mxu0 0.0
  %2499 = vmatpush1.msra.mxu0 %v937
  %2500 = vmatprep.subr.mxu0 0.0
  %2501 = vmatpush1.msra.mxu0 %v938
  %2502 = vmatprep.subr.mxu0 0.0
  %2503 = vmatpush1.msra.mxu0 %v939
  %2504 = vmatprep.subr.mxu0 0.0
  %2505 = vmatpush1.msra.mxu0 %v940
  %2506 = vmatprep.subr.mxu0 0.0
  %2507 = vmatpush1.msra.mxu0 %v941
  %2508 = vmatprep.subr.mxu0 0.0
  %2509 = vmatpush1.msra.mxu0 %v942
  %2510 = vmatprep.mubr.f32.mxu0 %v264
  %2511 = vmatmul.mubr.f32.gmra.mrb[0].mxu0 %v263
  %v2512 = vpop.f32.mrb[0].mxu0
  %v2513 = vadd.f32 %v2443, %v2512
  %v2514 = vpop.f32.mrb[0].mxu0
  %2515 = vdwg.mxu0
  %2516 = vmatprep.subr.mxu0 0.0
  %2517 = vmatpush1.msra.mxu0 %v943
  %2518 = vmatprep.subr.mxu0 0.0
  %2519 = vmatpush1.msra.mxu0 %v944
  %2520 = vmatprep.subr.mxu0 0.0
  %2521 = vmatpush1.msra.mxu0 %v945
  %2522 = vmatprep.subr.mxu0 0.0
  %2523 = vmatpush1.msra.mxu0 %v946
  %2524 = vmatprep.subr.mxu0 0.0
  %2525 = vmatpush1.msra.mxu0 %v947
  %2526 = vmatprep.subr.mxu0 0.0
  %2527 = vmatpush1.msra.mxu0 %v948
  %2528 = vmatprep.subr.mxu0 0.0
  %2529 = vmatpush1.msra.mxu0 %v949
  %2530 = vmatprep.subr.mxu0 0.0
  %2531 = vmatpush1.msra.mxu0 %v950
  %2532 = vmatprep.subr.mxu0 0.0
  %2533 = vmatpush1.msra.mxu0 %v951
  %2534 = vmatprep.subr.mxu0 0.0
  %2535 = vmatpush1.msra.mxu0 %v952
  %2536 = vmatprep.subr.mxu0 0.0
  %2537 = vmatpush1.msra.mxu0 %v953
  %2538 = vmatprep.subr.mxu0 0.0
  %2539 = vmatpush1.msra.mxu0 %v954
  %2540 = vmatprep.subr.mxu0 0.0
  %2541 = vmatpush1.msra.mxu0 %v955
  %2542 = vmatprep.subr.mxu0 0.0
  %2543 = vmatpush1.msra.mxu0 %v956
  %2544 = vmatprep.subr.mxu0 0.0
  %2545 = vmatpush1.msra.mxu0 %v957
  %2546 = vmatprep.subr.mxu0 0.0
  %2547 = vmatpush1.msra.mxu0 %v958
  %2548 = vmatprep.subr.mxu0 0.0
  %2549 = vmatpush1.msra.mxu0 %v959
  %2550 = vmatprep.subr.mxu0 0.0
  %2551 = vmatpush1.msra.mxu0 %v960
  %2552 = vmatprep.subr.mxu0 0.0
  %2553 = vmatpush1.msra.mxu0 %v961
  %2554 = vmatprep.subr.mxu0 0.0
  %2555 = vmatpush1.msra.mxu0 %v962
  %2556 = vmatprep.subr.mxu0 0.0
  %2557 = vmatpush1.msra.mxu0 %v963
  %2558 = vmatprep.subr.mxu0 0.0
  %2559 = vmatpush1.msra.mxu0 %v964
  %2560 = vmatprep.subr.mxu0 0.0
  %2561 = vmatpush1.msra.mxu0 %v965
  %2562 = vmatprep.subr.mxu0 0.0
  %2563 = vmatpush1.msra.mxu0 %v966
  %2564 = vmatprep.subr.mxu0 0.0
  %2565 = vmatpush1.msra.mxu0 %v967
  %2566 = vmatprep.subr.mxu0 0.0
  %2567 = vmatpush1.msra.mxu0 %v968
  %2568 = vmatprep.subr.mxu0 0.0
  %2569 = vmatpush1.msra.mxu0 %v969
  %2570 = vmatprep.subr.mxu0 0.0
  %2571 = vmatpush1.msra.mxu0 %v970
  %2572 = vmatprep.subr.mxu0 0.0
  %2573 = vmatpush1.msra.mxu0 %v971
  %2574 = vmatprep.subr.mxu0 0.0
  %2575 = vmatpush1.msra.mxu0 %v972
  %2576 = vmatprep.subr.mxu0 0.0
  %2577 = vmatpush1.msra.mxu0 %v973
  %2578 = vmatprep.subr.mxu0 0.0
  %2579 = vmatpush1.msra.mxu0 %v974
  %2580 = vmatprep.mubr.f32.mxu0 %v266
  %2581 = vmatmul.mubr.f32.gmra.mrb[0].mxu0 %v265
  %v2582 = vpop.f32.mrb[0].mxu0
  %v2583 = vadd.f32 %v2513, %v2582
  %v2584 = vpop.f32.mrb[0].mxu0
  %2585 = vdwg.mxu0
  %2586 = vmatprep.subr.mxu0 0.0
  %2587 = vmatpush1.msra.mxu0 %v975
  %2588 = vmatprep.subr.mxu0 0.0
  %2589 = vmatpush1.msra.mxu0 %v976
  %2590 = vmatprep.subr.mxu0 0.0
  %2591 = vmatpush1.msra.mxu0 %v977
  %2592 = vmatprep.subr.mxu0 0.0
  %2593 = vmatpush1.msra.mxu0 %v978
  %2594 = vmatprep.subr.mxu0 0.0
  %2595 = vmatpush1.msra.mxu0 %v979
  %2596 = vmatprep.subr.mxu0 0.0
  %2597 = vmatpush1.msra.mxu0 %v980
  %2598 = vmatprep.subr.mxu0 0.0
  %2599 = vmatpush1.msra.mxu0 %v981
  %2600 = vmatprep.subr.mxu0 0.0
  %2601 = vmatpush1.msra.mxu0 %v982
  %2602 = vmatprep.subr.mxu0 0.0
  %2603 = vmatpush1.msra.mxu0 %v983
  %2604 = vmatprep.subr.mxu0 0.0
  %2605 = vmatpush1.msra.mxu0 %v984
  %2606 = vmatprep.subr.mxu0 0.0
  %2607 = vmatpush1.msra.mxu0 %v985
  %2608 = vmatprep.subr.mxu0 0.0
  %2609 = vmatpush1.msra.mxu0 %v986
  %2610 = vmatprep.subr.mxu0 0.0
  %2611 = vmatpush1.msra.mxu0 %v987
  %2612 = vmatprep.subr.mxu0 0.0
  %2613 = vmatpush1.msra.mxu0 %v988
  %2614 = vmatprep.subr.mxu0 0.0
  %2615 = vmatpush1.msra.mxu0 %v989
  %2616 = vmatprep.subr.mxu0 0.0
  %2617 = vmatpush1.msra.mxu0 %v990
  %2618 = vmatprep.subr.mxu0 0.0
  %2619 = vmatpush1.msra.mxu0 %v991
  %2620 = vmatprep.subr.mxu0 0.0
  %2621 = vmatpush1.msra.mxu0 %v992
  %2622 = vmatprep.subr.mxu0 0.0
  %2623 = vmatpush1.msra.mxu0 %v993
  %2624 = vmatprep.subr.mxu0 0.0
  %2625 = vmatpush1.msra.mxu0 %v994
  %2626 = vmatprep.subr.mxu0 0.0
  %2627 = vmatpush1.msra.mxu0 %v995
  %2628 = vmatprep.subr.mxu0 0.0
  %2629 = vmatpush1.msra.mxu0 %v996
  %2630 = vmatprep.subr.mxu0 0.0
  %2631 = vmatpush1.msra.mxu0 %v997
  %2632 = vmatprep.subr.mxu0 0.0
  %2633 = vmatpush1.msra.mxu0 %v998
  %2634 = vmatprep.subr.mxu0 0.0
  %2635 = vmatpush1.msra.mxu0 %v999
  %2636 = vmatprep.subr.mxu0 0.0
  %2637 = vmatpush1.msra.mxu0 %v1000
  %2638 = vmatprep.subr.mxu0 0.0
  %2639 = vmatpush1.msra.mxu0 %v1001
  %2640 = vmatprep.subr.mxu0 0.0
  %2641 = vmatpush1.msra.mxu0 %v1002
  %2642 = vmatprep.subr.mxu0 0.0
  %2643 = vmatpush1.msra.mxu0 %v1003
  %2644 = vmatprep.subr.mxu0 0.0
  %2645 = vmatpush1.msra.mxu0 %v1004
  %2646 = vmatprep.subr.mxu0 0.0
  %2647 = vmatpush1.msra.mxu0 %v1005
  %2648 = vmatprep.subr.mxu0 0.0
  %2649 = vmatpush1.msra.mxu0 %v1006
  %2650 = vmatprep.mubr.f32.mxu0 %v268
  %2651 = vmatmul.mubr.f32.gmra.mrb[0].mxu0 %v267
  %v2652 = vpop.f32.mrb[0].mxu0
  %v2653 = vadd.f32 %v2583, %v2652
  %v2654 = vpop.f32.mrb[0].mxu0
  %2655 = vdwg.mxu0
  %2656 = vmatprep.subr.mxu0 0.0
  %2657 = vmatpush1.msra.mxu0 %v1007
  %2658 = vmatprep.subr.mxu0 0.0
  %2659 = vmatpush1.msra.mxu0 %v1008
  %2660 = vmatprep.subr.mxu0 0.0
  %2661 = vmatpush1.msra.mxu0 %v1009
  %2662 = vmatprep.subr.mxu0 0.0
  %2663 = vmatpush1.msra.mxu0 %v1010
  %2664 = vmatprep.subr.mxu0 0.0
  %2665 = vmatpush1.msra.mxu0 %v1011
  %2666 = vmatprep.subr.mxu0 0.0
  %2667 = vmatpush1.msra.mxu0 %v1012
  %2668 = vmatprep.subr.mxu0 0.0
  %2669 = vmatpush1.msra.mxu0 %v1013
  %2670 = vmatprep.subr.mxu0 0.0
  %2671 = vmatpush1.msra.mxu0 %v1014
  %2672 = vmatprep.subr.mxu0 0.0
  %2673 = vmatpush1.msra.mxu0 %v1015
  %2674 = vmatprep.subr.mxu0 0.0
  %2675 = vmatpush1.msra.mxu0 %v1016
  %2676 = vmatprep.subr.mxu0 0.0
  %2677 = vmatpush1.msra.mxu0 %v1017
  %2678 = vmatprep.subr.mxu0 0.0
  %2679 = vmatpush1.msra.mxu0 %v1018
  %2680 = vmatprep.subr.mxu0 0.0
  %2681 = vmatpush1.msra.mxu0 %v1019
  %2682 = vmatprep.subr.mxu0 0.0
  %2683 = vmatpush1.msra.mxu0 %v1020
  %2684 = vmatprep.subr.mxu0 0.0
  %2685 = vmatpush1.msra.mxu0 %v1021
  %2686 = vmatprep.subr.mxu0 0.0
  %2687 = vmatpush1.msra.mxu0 %v1022
  %2688 = vmatprep.subr.mxu0 0.0
  %2689 = vmatpush1.msra.mxu0 %v1023
  %2690 = vmatprep.subr.mxu0 0.0
  %2691 = vmatpush1.msra.mxu0 %v1024
  %2692 = vmatprep.subr.mxu0 0.0
  %2693 = vmatpush1.msra.mxu0 %v1025
  %2694 = vmatprep.subr.mxu0 0.0
  %2695 = vmatpush1.msra.mxu0 %v1026
  %2696 = vmatprep.subr.mxu0 0.0
  %2697 = vmatpush1.msra.mxu0 %v1027
  %2698 = vmatprep.subr.mxu0 0.0
  %2699 = vmatpush1.msra.mxu0 %v1028
  %2700 = vmatprep.subr.mxu0 0.0
  %2701 = vmatpush1.msra.mxu0 %v1029
  %2702 = vmatprep.subr.mxu0 0.0
  %2703 = vmatpush1.msra.mxu0 %v1030
  %2704 = vmatprep.subr.mxu0 0.0
  %2705 = vmatpush1.msra.mxu0 %v1031
  %2706 = vmatprep.subr.mxu0 0.0
  %2707 = vmatpush1.msra.mxu0 %v1032
  %2708 = vmatprep.subr.mxu0 0.0
  %2709 = vmatpush1.msra.mxu0 %v1033
  %2710 = vmatprep.subr.mxu0 0.0
  %2711 = vmatpush1.msra.mxu0 %v1034
  %2712 = vmatprep.subr.mxu0 0.0
  %2713 = vmatpush1.msra.mxu0 %v1035
  %2714 = vmatprep.subr.mxu0 0.0
  %2715 = vmatpush1.msra.mxu0 %v1036
  %2716 = vmatprep.subr.mxu0 0.0
  %2717 = vmatpush1.msra.mxu0 %v1037
  %2718 = vmatprep.subr.mxu0 0.0
  %2719 = vmatpush1.msra.mxu0 %v1038
  %2720 = vmatprep.mubr.f32.mxu0 %v270
  %2721 = vmatmul.mubr.f32.gmra.mrb[0].mxu0 %v269
  %v2722 = vpop.f32.mrb[0].mxu0
  %v2723 = vadd.f32 %v2653, %v2722
  %v2724 = vpop.f32.mrb[0].mxu0
  %2725 = vdwg.mxu0
  %v2726 = vmax.f32 %v2723, 0.0
  %v2727 = vld [vmem:[%s7] sm:$0xff]
  %v2728 = vld [vmem:[%s7 + $0x8] sm:$0xff]
  %v2729 = vld [vmem:[%s7 + $0x10] sm:$0xff]
  %v2730 = vld [vmem:[%s7 + $0x18] sm:$0xff]
  %v2731 = vld [vmem:[%s7 + $0x20] sm:$0xff]
  %v2732 = vld [vmem:[%s7 + $0x28] sm:$0xff]
  %v2733 = vld [vmem:[%s7 + $0x30] sm:$0x3]
  %v2734 = vld [vmem:[%s8] sm:$0x1]
  %v2736 = vlaneseq
  %v2737 = vshrl.u32 %v2736, 7
  %v2738 = vsub.s32 0, %v2737
  %v2739 = vrot.slane %v2734, %v2738
  %v2742 = vsel %vm83, %v2726, 0
  %vm2744 = vcmask 1041408
  %v2746 = vsel %vm2744, %v2733, 0
  %2748 = vmatprep.subr.mxu0 0.0
  %2749 = vmatpush1.msra.mxu0 %v2727
  %2750 = vmatprep.subr.mxu0 0.0
  %2751 = vmatpush1.msra.mxu0 %v2728
  %2752 = vmatprep.subr.mxu0 0.0
  %2753 = vmatpush1.msra.mxu0 %v2729
  %2754 = vmatprep.subr.mxu0 0.0
  %2755 = vmatpush1.msra.mxu0 %v2730
  %2756 = vmatprep.subr.mxu0 0.0
  %2757 = vmatpush1.msra.mxu0 %v2731
  %2758 = vmatprep.subr.mxu0 0.0
  %2759 = vmatpush1.msra.mxu0 %v2732
  %2760 = vmatprep.subr.mxu0 0.0
  %2761 = vmatpush1.msra.mxu0 %v2746
  %2762 = vmatprep.subr.mxu0 0.0
  %2763 = vmatpush1.msra.mxu0 0.0
  %2764 = vmatprep.subr.mxu0 0.0
  %2765 = vmatpush1.msra.mxu0 0.0
  %2766 = vmatprep.subr.mxu0 0.0
  %2767 = vmatpush1.msra.mxu0 0.0
  %2768 = vmatprep.subr.mxu0 0.0
  %2769 = vmatpush1.msra.mxu0 0.0
  %2770 = vmatprep.subr.mxu0 0.0
  %2771 = vmatpush1.msra.mxu0 0.0
  %2772 = vmatprep.subr.mxu0 0.0
  %2773 = vmatpush1.msra.mxu0 0.0
  %2774 = vmatprep.subr.mxu0 0.0
  %2775 = vmatpush1.msra.mxu0 0.0
  %2776 = vmatprep.subr.mxu0 0.0
  %2777 = vmatpush1.msra.mxu0 0.0
  %2778 = vmatprep.subr.mxu0 0.0
  %2779 = vmatpush1.msra.mxu0 0.0
  %2780 = vmatprep.subr.mxu0 0.0
  %2781 = vmatpush1.msra.mxu0 0.0
  %2782 = vmatprep.subr.mxu0 0.0
  %2783 = vmatpush1.msra.mxu0 0.0
  %2784 = vmatprep.subr.mxu0 0.0
  %2785 = vmatpush1.msra.mxu0 0.0
  %2786 = vmatprep.subr.mxu0 0.0
  %2787 = vmatpush1.msra.mxu0 0.0
  %2788 = vmatprep.subr.mxu0 0.0
  %2789 = vmatpush1.msra.mxu0 0.0
  %2790 = vmatprep.subr.mxu0 0.0
  %2791 = vmatpush1.msra.mxu0 0.0
  %2792 = vmatprep.subr.mxu0 0.0
  %2793 = vmatpush1.msra.mxu0 0.0
  %2794 = vmatprep.subr.mxu0 0.0
  %2795 = vmatpush1.msra.mxu0 0.0
  %2796 = vmatprep.subr.mxu0 0.0
  %2797 = vmatpush1.msra.mxu0 0.0
  %2798 = vmatprep.subr.mxu0 0.0
  %2799 = vmatpush1.msra.mxu0 0.0
  %2800 = vmatprep.subr.mxu0 0.0
  %2801 = vmatpush1.msra.mxu0 0.0
  %2802 = vmatprep.subr.mxu0 0.0
  %2803 = vmatpush1.msra.mxu0 0.0
  %2804 = vmatprep.subr.mxu0 0.0
  %2805 = vmatpush1.msra.mxu0 0.0
  %2806 = vmatprep.subr.mxu0 0.0
  %2807 = vmatpush1.msra.mxu0 0.0
  %2808 = vmatprep.subr.mxu0 0.0
  %2809 = vmatpush1.msra.mxu0 0.0
  %2810 = vmatprep.subr.mxu0 0.0
  %2811 = vmatpush1.msra.mxu0 0.0
  %2812 = vmatprep.mubr.f32.mxu0 0.0
  %2813 = vmatmul.mubr.f32.gmra.mrb[0].mxu0 %v2742
  %v2814 = vpop.f32.mrb[0].mxu0
  %v2815 = vadd.f32 %v2739, %v2814
  %v2816 = vpop.f32.mrb[0].mxu0
  %2817 = vdwg.mxu0
  %v2818 = vmax.f32 %v2815, 0.0
  %v2819 = vld [vmem:[%s9] sm:$0x1]
  %v2820 = vld [vmem:[%s10] sm:$0x1]
  %vm2821 = vcmask 39936
  %v2822 = vsel %vm2821, %v220, 0.0
  %2823 = vadd.xlane.f32.xlu0 %v2822
  %v2824 = vpop.xlane.xlu0 %2823
  %v2825 = vrcp.pop 5.0
  %v2826 = vmul.f32 %v2824, %v2825
  %v2827 = vsub.f32 %v220, %v2826
  %v2828 = vmul.f32 %v2827, %v2827
  %v2829 = vsel %vm2821, %v2828, 0.0
  %2830 = vadd.xlane.f32.xlu0 %v2829
  %v2831 = vpop.xlane.xlu0 %2830
  %v2832 = vmul.f32 %v2831, %v2825
  %v2833 = vadd.f32 %v2832, 1e-05
  %v2834 = vrsqrt.pop %v2833
  %v2835 = vmul.f32 %v2827, %v2834
  %v2837 = vlaneseq
  %v2838 = vshrl.u32 %v2837, 7
  %v2839 = vsub.s32 0, %v2838
  %v2840 = vrot.slane %v2819, %v2839
  %v2842 = vmul.f32 %v2835, %v2840
  %v2844 = vlaneseq
  %v2845 = vshrl.u32 %v2844, 7
  %v2846 = vsub.s32 0, %v2845
  %v2847 = vrot.slane %v2820, %v2846
  %v2849 = vadd.f32 %v2842, %v2847
  %v2850 = vld [vmem:[%s11] sm:$0x1]
  %v2851 = vld [vmem:[%s12] sm:$0x1]
  %v2852 = vsel %vm2821, %v2818, 0.0
  %2853 = vadd.xlane.f32.xlu0 %v2852
  %v2854 = vpop.xlane.xlu0 %2853
  %v2855 = vmul.f32 %v2854, %v2825
  %v2856 = vsub.f32 %v2818, %v2855
  %v2857 = vmul.f32 %v2856, %v2856
  %v2858 = vsel %vm2821, %v2857, 0.0
  %2859 = vadd.xlane.f32.xlu0 %v2858
  %v2860 = vpop.xlane.xlu0 %2859
  %v2861 = vmul.f32 %v2860, %v2825
  %v2862 = vadd.f32 %v2861, 1e-05
  %v2863 = vrsqrt.pop %v2862
  %v2864 = vmul.f32 %v2856, %v2863
  %v2866 = vlaneseq
  %v2867 = vshrl.u32 %v2866, 7
  %v2868 = vsub.s32 0, %v2867
  %v2869 = vrot.slane %v2850, %v2868
  %v2871 = vmul.f32 %v2864, %v2869
  %v2873 = vlaneseq
  %v2874 = vshrl.u32 %v2873, 7
  %v2875 = vsub.s32 0, %v2874
  %v2876 = vrot.slane %v2851, %v2875
  %v2878 = vadd.f32 %v2871, %v2876
  %v2879 = vld [vmem:[%s13] sm:$0x1f]
  %v2880 = vld [vmem:[%s14] sm:$0x1f]
  %v2882 = vsel %vm2821, %v2878, 0
  %vm2884 = vcmask 1044480
  %v2886 = vsel %vm2884, %v2880, 0
  %2888 = vmatprep.subr.mxu0 0.0
  %2889 = vmatpush1.msra.mxu0 %v2886
  %2890 = vmatprep.subr.mxu0 0.0
  %2891 = vmatpush1.msra.mxu0 0.0
  %2892 = vmatprep.subr.mxu0 0.0
  %2893 = vmatpush1.msra.mxu0 0.0
  %2894 = vmatprep.subr.mxu0 0.0
  %2895 = vmatpush1.msra.mxu0 0.0
  %2896 = vmatprep.subr.mxu0 0.0
  %2897 = vmatpush1.msra.mxu0 0.0
  %2898 = vmatprep.subr.mxu0 0.0
  %2899 = vmatpush1.msra.mxu0 0.0
  %2900 = vmatprep.subr.mxu0 0.0
  %2901 = vmatpush1.msra.mxu0 0.0
  %2902 = vmatprep.subr.mxu0 0.0
  %2903 = vmatpush1.msra.mxu0 0.0
  %2904 = vmatprep.subr.mxu0 0.0
  %2905 = vmatpush1.msra.mxu0 0.0
  %2906 = vmatprep.subr.mxu0 0.0
  %2907 = vmatpush1.msra.mxu0 0.0
  %2908 = vmatprep.subr.mxu0 0.0
  %2909 = vmatpush1.msra.mxu0 0.0
  %2910 = vmatprep.subr.mxu0 0.0
  %2911 = vmatpush1.msra.mxu0 0.0
  %2912 = vmatprep.subr.mxu0 0.0
  %2913 = vmatpush1.msra.mxu0 0.0
  %2914 = vmatprep.subr.mxu0 0.0
  %2915 = vmatpush1.msra.mxu0 0.0
  %2916 = vmatprep.subr.mxu0 0.0
  %2917 = vmatpush1.msra.mxu0 0.0
  %2918 = vmatprep.subr.mxu0 0.0
  %2919 = vmatpush1.msra.mxu0 0.0
  %2920 = vmatprep.subr.mxu0 0.0
  %2921 = vmatpush1.msra.mxu0 0.0
  %2922 = vmatprep.subr.mxu0 0.0
  %2923 = vmatpush1.msra.mxu0 0.0
  %2924 = vmatprep.subr.mxu0 0.0
  %2925 = vmatpush1.msra.mxu0 0.0
  %2926 = vmatprep.subr.mxu0 0.0
  %2927 = vmatpush1.msra.mxu0 0.0
  %2928 = vmatprep.subr.mxu0 0.0
  %2929 = vmatpush1.msra.mxu0 0.0
  %2930 = vmatprep.subr.mxu0 0.0
  %2931 = vmatpush1.msra.mxu0 0.0
  %2932 = vmatprep.subr.mxu0 0.0
  %2933 = vmatpush1.msra.mxu0 0.0
  %2934 = vmatprep.subr.mxu0 0.0
  %2935 = vmatpush1.msra.mxu0 0.0
  %2936 = vmatprep.subr.mxu0 0.0
  %2937 = vmatpush1.msra.mxu0 0.0
  %2938 = vmatprep.subr.mxu0 0.0
  %2939 = vmatpush1.msra.mxu0 0.0
  %2940 = vmatprep.subr.mxu0 0.0
  %2941 = vmatpush1.msra.mxu0 0.0
  %2942 = vmatprep.subr.mxu0 0.0
  %2943 = vmatpush1.msra.mxu0 0.0
  %2944 = vmatprep.subr.mxu0 0.0
  %2945 = vmatpush1.msra.mxu0 0.0
  %2946 = vmatprep.subr.mxu0 0.0
  %2947 = vmatpush1.msra.mxu0 0.0
  %2948 = vmatprep.subr.mxu0 0.0
  %2949 = vmatpush1.msra.mxu0 0.0
  %2950 = vmatprep.subr.mxu0 0.0
  %2951 = vmatpush1.msra.mxu0 0.0
  %2952 = vmatprep.mubr.f32.mxu0 0.0
  %2953 = vmatmul.mubr.f32.gmra.mrb[0].mxu0 %v2882
  %v2954 = vpop.f32.mrb[0].mxu0
  %v2955 = vadd.f32 0.0, %v2954
  %v2956 = vpop.f32.mrb[0].mxu0
  %2957 = vdwg.mxu0
  %v2959 = vsel %vm2821, %v2849, 0
  %v2962 = vsel %vm2884, %v2879, 0
  %2964 = vmatprep.subr.mxu0 0.0
  %2965 = vmatpush1.msra.mxu0 %v2962
  %2966 = vmatprep.subr.mxu0 0.0
  %2967 = vmatpush1.msra.mxu0 0.0
  %2968 = vmatprep.subr.mxu0 0.0
  %2969 = vmatpush1.msra.mxu0 0.0
  %2970 = vmatprep.subr.mxu0 0.0
  %2971 = vmatpush1.msra.mxu0 0.0
  %2972 = vmatprep.subr.mxu0 0.0
  %2973 = vmatpush1.msra.mxu0 0.0
  %2974 = vmatprep.subr.mxu0 0.0
  %2975 = vmatpush1.msra.mxu0 0.0
  %2976 = vmatprep.subr.mxu0 0.0
  %2977 = vmatpush1.msra.mxu0 0.0
  %2978 = vmatprep.subr.mxu0 0.0
  %2979 = vmatpush1.msra.mxu0 0.0
  %2980 = vmatprep.subr.mxu0 0.0
  %2981 = vmatpush1.msra.mxu0 0.0
  %2982 = vmatprep.subr.mxu0 0.0
  %2983 = vmatpush1.msra.mxu0 0.0
  %2984 = vmatprep.subr.mxu0 0.0
  %2985 = vmatpush1.msra.mxu0 0.0
  %2986 = vmatprep.subr.mxu0 0.0
  %2987 = vmatpush1.msra.mxu0 0.0
  %2988 = vmatprep.subr.mxu0 0.0
  %2989 = vmatpush1.msra.mxu0 0.0
  %2990 = vmatprep.subr.mxu0 0.0
  %2991 = vmatpush1.msra.mxu0 0.0
  %2992 = vmatprep.subr.mxu0 0.0
  %2993 = vmatpush1.msra.mxu0 0.0
  %2994 = vmatprep.subr.mxu0 0.0
  %2995 = vmatpush1.msra.mxu0 0.0
  %2996 = vmatprep.subr.mxu0 0.0
  %2997 = vmatpush1.msra.mxu0 0.0
  %2998 = vmatprep.subr.mxu0 0.0
  %2999 = vmatpush1.msra.mxu0 0.0
  %3000 = vmatprep.subr.mxu0 0.0
  %3001 = vmatpush1.msra.mxu0 0.0
  %3002 = vmatprep.subr.mxu0 0.0
  %3003 = vmatpush1.msra.mxu0 0.0
  %3004 = vmatprep.subr.mxu0 0.0
  %3005 = vmatpush1.msra.mxu0 0.0
  %3006 = vmatprep.subr.mxu0 0.0
  %3007 = vmatpush1.msra.mxu0 0.0
  %3008 = vmatprep.subr.mxu0 0.0
  %3009 = vmatpush1.msra.mxu0 0.0
  %3010 = vmatprep.subr.mxu0 0.0
  %3011 = vmatpush1.msra.mxu0 0.0
  %3012 = vmatprep.subr.mxu0 0.0
  %3013 = vmatpush1.msra.mxu0 0.0
  %3014 = vmatprep.subr.mxu0 0.0
  %3015 = vmatpush1.msra.mxu0 0.0
  %3016 = vmatprep.subr.mxu0 0.0
  %3017 = vmatpush1.msra.mxu0 0.0
  %3018 = vmatprep.subr.mxu0 0.0
  %3019 = vmatpush1.msra.mxu0 0.0
  %3020 = vmatprep.subr.mxu0 0.0
  %3021 = vmatpush1.msra.mxu0 0.0
  %3022 = vmatprep.subr.mxu0 0.0
  %3023 = vmatpush1.msra.mxu0 0.0
  %3024 = vmatprep.subr.mxu0 0.0
  %3025 = vmatpush1.msra.mxu0 0.0
  %3026 = vmatprep.subr.mxu0 0.0
  %3027 = vmatpush1.msra.mxu0 0.0
  %3028 = vmatprep.mubr.f32.mxu0 0.0
  %3029 = vmatmul.mubr.f32.gmra.mrb[0].mxu0 %v2959
  %v3030 = vpop.f32.mrb[0].mxu0
  %v3031 = vadd.f32 %v2955, %v3030
  %v3032 = vpop.f32.mrb[0].mxu0
  %3033 = vdwg.mxu0
  %v3034 = vld [vmem:[%s15] sm:$0x1]
  %v3036 = vlaneseq
  %v3037 = vshrl.u32 %v3036, 7
  %v3038 = vsub.s32 0, %v3037
  %v3039 = vrot.slane %v3034, %v3038
  %v3041 = vadd.f32 %v3031, %v3039
  %v3042 = vmax.f32 %v3041, 0.0
  %3043 = vst [vmem:[%s16] sm:$0xff] %v3042
  // Predicated region
  $region66: #{custom_text_cnn_cat_forward.5} parent=0 // pred_check
    _
  $region67: #{custom_text_cnn_cat_forward.5} parent=0 // pred_check_branch
    %3045 = sbr.rel (0) target = $region69
  $region68: #{custom_text_cnn_cat_forward.5} parent=0 // pred_region
    _
  $region69: #{custom_text_cnn_cat_forward.5} parent=0 // pred_fallthru
    _
  // Predicated region
  $region70: #{custom_text_cnn_cat_forward.5} parent=0 // pred_check
    _
  $region71: #{custom_text_cnn_cat_forward.5} parent=0 // pred_check_branch
    %3047 = sbr.rel (0) target = $region73
  $region72: #{custom_text_cnn_cat_forward.5} parent=0 // pred_region
    _
  $region73: #{custom_text_cnn_cat_forward.5} parent=0 // pred_fallthru
    _

</llo_original>
